<compile_context>
chip_gen: v5e
topology: v5e:2x2
jax: 0.10.0
libtpu: 0.0.40
codegen_flags: <defaults>
</compile_context>

<pallas_src>
import functools
import math

import jax
import jax.numpy as jnp
from jax.experimental import pallas as pl
from jax.experimental.pallas import tpu as pltpu

BN_EPS = 1e-5


def _detect_two_tensorcores():
    # v7x has 2 TensorCores per chip; on v5e/v6e the grid is a serial loop and
    # extra grid steps are pure overhead for this tiny, launch-bound workload.
    try:
        kind = jax.devices()[0].device_kind.lower()
    except Exception:
        return False
    return ("v7" in kind) or ("7x" in kind)


_MULTI_TC = _detect_two_tensorcores()


# ----------------------------- Pallas kernel ------------------------------
def _fused_matmul_kernel(w_ref, p_ref, b_ref, o_ref, *, relu):
    # w_ref: (R, K) bf16, p_ref: (K, tcol) bf16, b_ref: (R, 1) f32,
    # o_ref: (R, tcol) f32.   out = maybe_relu(W @ P + b), f32 accumulate.
    y = jnp.dot(w_ref[...], p_ref[...], preferred_element_type=jnp.float32)
    y = y + b_ref[...]
    if relu:
        y = jnp.maximum(y, 0.0)
    o_ref[...] = y.astype(o_ref.dtype)


def fused_matmul(w, patches, bias, relu):
    """out[r, m] = maybe_relu(sum_k w[r, k] * patches[k, m] + bias[r]).

    w: (R, K), patches: (K, M), bias: (R,) -> (R, M) float32.
    Operands are fed to the MXU in bf16; accumulation + epilogue stay f32.
    """
    R, K = w.shape
    Kp, M = patches.shape
    assert K == Kp
    n_col = 2 if (_MULTI_TC and M >= 512 and M % 256 == 0) else 1
    tcol = M // n_col

    return pl.pallas_call(
        functools.partial(_fused_matmul_kernel, relu=relu),
        out_shape=jax.ShapeDtypeStruct((R, M), jnp.float32),
        grid_spec=pltpu.PrefetchScalarGridSpec(
            num_scalar_prefetch=0,
            grid=(n_col,),
            in_specs=[
                pl.BlockSpec((R, K), lambda j: (0, 0)),
                pl.BlockSpec((K, tcol), lambda j: (0, j)),
                pl.BlockSpec((R, 1), lambda j: (0, 0)),
            ],
            out_specs=pl.BlockSpec((R, tcol), lambda j: (0, j)),
        ),
        compiler_params=pltpu.CompilerParams(
            dimension_semantics=("parallel",),
        ),
    )(
        w.astype(jnp.bfloat16),
        patches.astype(jnp.bfloat16),
        bias.reshape(R, 1).astype(jnp.float32),
    )


# ------------------------------ JAX glue -----------------------------------
# TODO(synk): the im2col / sub-pixel gathers below stay as static-index XLA
# glue around the Pallas matmuls; they are not fused into the kernels.
def im2col_cf(x, k):
    """x: (C, N, H, W) -> (k*k*C, N*H*W) for a stride-1 'same' conv (odd k).

    Feature (K) ordering is (ky, kx, c); pixel (M) ordering is (n, h, w)."""
    C, N, H, W = x.shape
    pad = (k - 1) // 2
    xp = jnp.pad(x, ((0, 0), (0, 0), (pad, pad), (pad, pad))) if pad else x
    slabs = [xp[:, :, dy:dy + H, dx:dx + W] for dy in range(k) for dx in range(k)]
    return jnp.stack(slabs, axis=0).reshape(k * k * C, N * H * W)


def conv_bn_relu(params, x):
    """Conv2d(k, stride=1, pad=(k-1)//2) + BatchNorm2d(eval) + ReLU as one
    fused Pallas matmul with the BN scale folded into the weights."""
    W, b = params["W"], params["b"]                  # W: (Cout, Cin, kh, kw)
    gamma, beta, mean, var = params["bn"]
    Cout, Cin, kh, kw = W.shape
    _, N, H, Wsp = x.shape
    patches = im2col_cf(x, kh)                       # (kh*kw*Cin, N*H*W)
    w_flat = W.transpose(0, 2, 3, 1).reshape(Cout, kh * kw * Cin)
    s = gamma * jax.lax.rsqrt(var + BN_EPS)
    w_fold = w_flat * s[:, None]                     # fold BN scale into weights
    b_fold = (b - mean) * s + beta                   # fold conv bias + BN shift
    y = fused_matmul(w_fold, patches, b_fold, relu=True)
    return y.reshape(Cout, N, H, Wsp)


def conv1x1(params, x):
    """Plain Conv2d 1x1 with bias (final logits layer).  x: (Cin, N, H, W)."""
    W, b = params["W"], params["b"]                  # (Cout, Cin, 1, 1)
    Cout, Cin = W.shape[0], W.shape[1]
    _, N, H, Wsp = x.shape
    y = fused_matmul(W.reshape(Cout, Cin), x.reshape(Cin, N * H * Wsp), b,
                     relu=False)
    return y.reshape(Cout, N, H, Wsp)


def conv_transpose_same(params, x, k, s, out_size):
    """ConvTranspose2d(k, stride=s, padding=((F-1)s + k - F)//2).  x: (Cin,N,H,W).

    Polyphase lowering: output pixel (oy, ox) with t = oy + p has phase
    ry = t % s and only sees taps ky = ry + jy*s (jy < ceil(k/s)) applied to
    input rows qy - jy with qy = t // s.  So the whole layer is one small
    dense matmul over all s*s phases plus a static sub-pixel gather."""
    Wt, b = params["Wt"], params["b"]                # Wt: (Cin, Cout, k, k)
    Cin, Cout = Wt.shape[0], Wt.shape[1]
    _, N, Hin, Win = x.shape
    assert Hin == Win
    p = ((out_size - 1) * s + k - out_size) // 2
    Hout = (Hin - 1) * s - 2 * p + k                 # PyTorch output size
    assert Hout == out_size, ("'same' padding formula inexact", Hout, out_size)
    Lm = -(-k // s)                                  # ceil(k/s): taps per phase

    # Phase weights A[(ry,rx,co), (jy,jx,ci)] = Wt[ci, co, ry + jy*s, rx + jx*s]
    kp = s * Lm
    Wt_ext = jnp.pad(Wt, ((0, 0), (0, 0), (0, kp - k), (0, kp - k)))
    Wp = Wt_ext.reshape(Cin, Cout, Lm, s, Lm, s)     # (ci, co, jy, ry, jx, rx)
    A = Wp.transpose(3, 5, 1, 2, 4, 0).reshape(s * s * Cout, Lm * Lm * Cin)

    # Gathered input G[(jy,jx,ci), (n,u,v)] = x[ci, n, u - jy, v - jx]
    # with u = (oy + p)//s restricted to the range actually used.
    u_min, u_max = p // s, (Hout - 1 + p) // s
    Hy = u_max - u_min + 1
    lo = u_min - (Lm - 1)
    pad_lo, pad_hi = max(0, -lo), max(0, u_max - (Hin - 1))
    xe = jnp.pad(x, ((0, 0), (0, 0), (pad_lo, pad_hi), (pad_lo, pad_hi)))
    base = lo + pad_lo
    ext = (Lm - 1) + Hy
    xs = xe[:, :, base:base + ext, base:base + ext]
    slabs = [xs[:, :, Lm - 1 - jy:Lm - 1 - jy + Hy, Lm - 1 - jx:Lm - 1 - jx + Hy]
             for jy in range(Lm) for jx in range(Lm)]
    G = jnp.stack(slabs, axis=0).reshape(Lm * Lm * Cin, N * Hy * Hy)

    # One dense matmul for every phase, then pick each pixel's phase.
    Y = fused_matmul(A, G, jnp.tile(b, s * s), relu=False)   # (s*s*Cout, N*Hy*Hy)
    Y6 = Y.reshape(s, s, Cout, N, Hy, Hy)
    Yr = Y6.transpose(2, 3, 0, 4, 1, 5).reshape(Cout, N, s * Hy, s * Hy)
    idx = jnp.asarray([((o + p) % s) * Hy + ((o + p) // s - u_min)
                       for o in range(Hout)], dtype=jnp.int32)
    return jnp.take(jnp.take(Yr, idx, axis=2), idx, axis=3)  # (Cout, N, F, F)


def seq_cbr(plist, x):
    for p in plist:
        x = conv_bn_relu(p, x)
    return x


# --------------------------- parameter init --------------------------------
def _init_conv(key, cin, cout, k):
    k1, k2 = jax.random.split(key)
    W = jax.random.normal(k1, (cout, cin, k, k), jnp.float32) / math.sqrt(cin * k * k)
    b = 0.01 * jax.random.normal(k2, (cout,), jnp.float32)
    return W, b


def _init_bn(key, c):
    k1, k2, k3, k4 = jax.random.split(key, 4)
    gamma = 1.0 + 0.1 * jax.random.normal(k1, (c,), jnp.float32)
    beta = 0.1 * jax.random.normal(k2, (c,), jnp.float32)
    mean = 0.1 * jax.random.normal(k3, (c,), jnp.float32)
    var = 0.5 + jax.random.uniform(k4, (c,), jnp.float32)
    return (gamma, beta, mean, var)


def init_cbr(key, cin, cout, k=3):
    k1, k2 = jax.random.split(key)
    W, b = _init_conv(k1, cin, cout, k)
    return {"W": W, "b": b, "bn": _init_bn(k2, cout)}


def init_convt(key, cin, cout, k):
    k1, k2 = jax.random.split(key)
    Wt = jax.random.normal(k1, (cin, cout, k, k), jnp.float32) / math.sqrt(cin * k * k)
    b = 0.01 * jax.random.normal(k2, (cout,), jnp.float32)
    return {"Wt": Wt, "b": b}


def init_params(key, cfg):
    ic, nc = cfg["in_channels"], cfg["n_classes"]
    nf, up, fc = cfg["n_filters"], cfg["up_conv_filter"], cfg["final_conv_filter"]
    keys = iter(jax.random.split(key, 64))
    params = {
        "block1": [init_cbr(next(keys), ic, nf[0]), init_cbr(next(keys), nf[0], nf[0])],
        "block2": [init_cbr(next(keys), nf[0], nf[1]), init_cbr(next(keys), nf[1], nf[1])],
        "block3": [init_cbr(next(keys), nf[1], nf[2]), init_cbr(next(keys), nf[2], nf[2]),
                   init_cbr(next(keys), nf[2], nf[2])],
        "block4": [init_cbr(next(keys), nf[2], nf[3]), init_cbr(next(keys), nf[3], nf[3]),
                   init_cbr(next(keys), nf[3], nf[3])],
        "block5": [init_cbr(next(keys), nf[3], nf[4]), init_cbr(next(keys), nf[4], nf[4]),
                   init_cbr(next(keys), nf[4], nf[4])],
        "block1_up": {"cbr": init_cbr(next(keys), nf[0], up)},
        "block2_up": {"cbr": init_cbr(next(keys), nf[1], up), "ct": init_convt(next(keys), up, up, 4)},
        "block3_up": {"cbr": init_cbr(next(keys), nf[2], up), "ct": init_convt(next(keys), up, up, 8)},
        "block4_up": {"cbr": init_cbr(next(keys), nf[3], up), "ct": init_convt(next(keys), up, up, 15)},
        "block5_up": {"cbr": init_cbr(next(keys), nf[4], up), "ct": init_convt(next(keys), up, up, 31)},
        "final": [init_cbr(next(keys), 5 * up, fc), init_cbr(next(keys), fc, fc)],
        "final_conv": dict(zip(("W", "b"), _init_conv(next(keys), fc, nc * ic, 1))),
    }
    return params


# ------------------------------- forward -----------------------------------
def forward(cfg, params, x_nchw):
    ic, nc, F = cfg["in_channels"], cfg["n_classes"], cfg["feature_size"]
    N = x_nchw.shape[0]
    x = jnp.transpose(x_nchw, (1, 0, 2, 3)).astype(jnp.float32)   # (C, N, H, W)

    conv1 = seq_cbr(params["block1"], x)
    conv2 = seq_cbr(params["block2"], conv1)
    conv3 = seq_cbr(params["block3"], conv2)
    conv4 = seq_cbr(params["block4"], conv3)
    conv5 = seq_cbr(params["block5"], conv4)

    conv1_up = conv_bn_relu(params["block1_up"]["cbr"], conv1)
    conv2_up = conv_transpose_same(params["block2_up"]["ct"],
                                   conv_bn_relu(params["block2_up"]["cbr"], conv2), 4, 2, F)
    conv3_up = conv_transpose_same(params["block3_up"]["ct"],
                                   conv_bn_relu(params["block3_up"]["cbr"], conv3), 8, 4, F)
    conv4_up = conv_transpose_same(params["block4_up"]["ct"],
                                   conv_bn_relu(params["block4_up"]["cbr"], conv4), 15, 7, F)
    conv5_up = conv_transpose_same(params["block5_up"]["ct"],
                                   conv_bn_relu(params["block5_up"]["cbr"], conv5), 31, 15, F)

    xcat = jnp.concatenate([conv1_up, conv2_up, conv3_up, conv4_up, conv5_up], axis=0)
    y = conv_bn_relu(params["final"][0], xcat)
    y = conv_bn_relu(params["final"][1], y)
    logits = conv1x1(params["final_conv"], y)                      # (nc*ic, N, F, F)

    logits_nchw = jnp.transpose(logits, (1, 0, 2, 3))              # (N, nc*ic, F, F)
    return logits_nchw.reshape(N, nc, ic, F, F)


# --------------------------------- main -------------------------------------
if __name__ == "__main__":
    cfg = {
        "in_channels": 4,
        "n_classes": 3,
        "n_filters": [8, 8, 16, 16, 16],
        "up_conv_filter": 8,
        "final_conv_filter": 16,
        "feature_size": 16,
    }
    key = jax.random.PRNGKey(0)
    kp, kx = jax.random.split(key)
    params = init_params(kp, cfg)

    batch = 2
    x = jax.random.normal(kx, (batch, cfg["in_channels"],
                               cfg["feature_size"], cfg["feature_size"]), jnp.float32)

    fwd = jax.jit(lambda p, xx: forward(cfg, p, xx))
    out = fwd(params, x)
    out = jax.block_until_ready(out)

    expected = (batch, cfg["n_classes"], cfg["in_channels"],
                cfg["feature_size"], cfg["feature_size"])
    assert out.shape == expected, (out.shape, expected)
    assert bool(jnp.all(jnp.isfinite(out)))
    print("KERNEL_OK")
</pallas_src>

<mosaic_0001>
module attributes {stable_mosaic.version = 11 : i64} {
  func.func @_fused_matmul_kernel(%arg0: i32, %arg1: memref<8x36xbf16, #tpu.memory_space<vmem>>, %arg2: memref<36x512xbf16, #tpu.memory_space<vmem>>, %arg3: memref<8x1xf32, #tpu.memory_space<vmem>>, %arg4: memref<8x512xf32, #tpu.memory_space<vmem>>) attributes {dimension_semantics = [#tpu.dimension_semantics<parallel>], iteration_bounds = array<i64: 1>, scalar_prefetch = 0 : i64, scratch_operands = 0 : i64, tpu.core_type = #tpu.core_type<tc>, window_params = [{pipeline_mode = #tpu.pipeline_mode<synchronous>, transform_indices = @transform_0, window_bounds = array<i64: 8, 36>}, {transform_indices = @transform_1, window_bounds = array<i64: 36, 512>}, {pipeline_mode = #tpu.pipeline_mode<synchronous>, transform_indices = @transform_2, window_bounds = array<i64: 8, 1>}, {transform_indices = @transform_3, window_bounds = array<i64: 8, 512>}]} {
    %c0 = arith.constant 0 : index
    %c0_0 = arith.constant 0 : index
    %0 = vector.load %arg1[%c0, %c0_0] : memref<8x36xbf16, #tpu.memory_space<vmem>>, vector<8x36xbf16>
    %c0_1 = arith.constant 0 : index
    %c0_2 = arith.constant 0 : index
    %1 = vector.load %arg2[%c0_1, %c0_2] : memref<36x512xbf16, #tpu.memory_space<vmem>>, vector<36x512xbf16>
    %cst = arith.constant dense<0.000000e+00> : vector<8x512xf32>
    %2 = tpu.matmul %0, %1, %cst {dimension_numbers = #tpu.dot_dimension_numbers<[1], [0], [0], [1], [0, 0, 1, 1], [], []>} : vector<8x36xbf16>, vector<36x512xbf16>, vector<8x512xf32> -> vector<8x512xf32>
    %c0_3 = arith.constant 0 : index
    %c0_4 = arith.constant 0 : index
    %3 = vector.load %arg3[%c0_3, %c0_4] : memref<8x1xf32, #tpu.memory_space<vmem>>, vector<8x1xf32>
    %4 = vector.broadcast %3 : vector<8x1xf32> to vector<8x512xf32>
    %5 = arith.addf %2, %4 : vector<8x512xf32>
    %cst_5 = arith.constant 0.000000e+00 : f32
    %6 = vector.broadcast %cst_5 : f32 to vector<8x512xf32>
    %7 = arith.maximumf %5, %6 : vector<8x512xf32>
    %c0_6 = arith.constant 0 : index
    %c0_7 = arith.constant 0 : index
    %8 = vector.load %arg4[%c0_6, %c0_7] : memref<8x512xf32, #tpu.memory_space<vmem>>, vector<8x512xf32>
    tpu.vector_store %arg4[%c0_6, %c0_7], %7 {strides = array<i32>} : memref<8x512xf32, #tpu.memory_space<vmem>>, vector<8x512xf32>,
    return
  }
  func.func @transform_0(%arg0: i32) -> (i32, i32) {
    %c0_i32 = arith.constant 0 : i32
    %c0_i32_0 = arith.constant 0 : i32
    %c0_i32_1 = arith.constant 0 : i32
    return %c0_i32, %c0_i32_0 : i32, i32
  }
  func.func @transform_1(%arg0: i32) -> (i32, i32) {
    %c0_i32 = arith.constant 0 : i32
    %c0_i32_0 = arith.constant 0 : i32
    return %c0_i32, %arg0 : i32, i32
  }
  func.func @transform_2(%arg0: i32) -> (i32, i32) {
    %c0_i32 = arith.constant 0 : i32
    %c0_i32_0 = arith.constant 0 : i32
    %c0_i32_1 = arith.constant 0 : i32
    return %c0_i32, %c0_i32_0 : i32, i32
  }
  func.func @transform_3(%arg0: i32) -> (i32, i32) {
    %c0_i32 = arith.constant 0 : i32
    %c0_i32_0 = arith.constant 0 : i32
    return %c0_i32, %arg0 : i32, i32
  }
}

module attributes {stable_mosaic.version = 11 : i64} {
  func.func @_fused_matmul_kernel(%arg0: i32, %arg1: memref<8x72xbf16, #tpu.memory_space<vmem>>, %arg2: memref<72x512xbf16, #tpu.memory_space<vmem>>, %arg3: memref<8x1xf32, #tpu.memory_space<vmem>>, %arg4: memref<8x512xf32, #tpu.memory_space<vmem>>) attributes {dimension_semantics = [#tpu.dimension_semantics<parallel>], iteration_bounds = array<i64: 1>, scalar_prefetch = 0 : i64, scratch_operands = 0 : i64, tpu.core_type = #tpu.core_type<tc>, window_params = [{pipeline_mode = #tpu.pipeline_mode<synchronous>, transform_indices = @transform_0, window_bounds = array<i64: 8, 72>}, {transform_indices = @transform_1, window_bounds = array<i64: 72, 512>}, {pipeline_mode = #tpu.pipeline_mode<synchronous>, transform_indices = @transform_2, window_bounds = array<i64: 8, 1>}, {transform_indices = @transform_3, window_bounds = array<i64: 8, 512>}]} {
    %c0 = arith.constant 0 : index
    %c0_0 = arith.constant 0 : index
    %0 = vector.load %arg1[%c0, %c0_0] : memref<8x72xbf16, #tpu.memory_space<vmem>>, vector<8x72xbf16>
    %c0_1 = arith.constant 0 : index
    %c0_2 = arith.constant 0 : index
    %1 = vector.load %arg2[%c0_1, %c0_2] : memref<72x512xbf16, #tpu.memory_space<vmem>>, vector<72x512xbf16>
    %cst = arith.constant dense<0.000000e+00> : vector<8x512xf32>
    %2 = tpu.matmul %0, %1, %cst {dimension_numbers = #tpu.dot_dimension_numbers<[1], [0], [0], [1], [0, 0, 1, 1], [], []>} : vector<8x72xbf16>, vector<72x512xbf16>, vector<8x512xf32> -> vector<8x512xf32>
    %c0_3 = arith.constant 0 : index
    %c0_4 = arith.constant 0 : index
    %3 = vector.load %arg3[%c0_3, %c0_4] : memref<8x1xf32, #tpu.memory_space<vmem>>, vector<8x1xf32>
    %4 = vector.broadcast %3 : vector<8x1xf32> to vector<8x512xf32>
    %5 = arith.addf %2, %4 : vector<8x512xf32>
    %cst_5 = arith.constant 0.000000e+00 : f32
    %6 = vector.broadcast %cst_5 : f32 to vector<8x512xf32>
    %7 = arith.maximumf %5, %6 : vector<8x512xf32>
    %c0_6 = arith.constant 0 : index
    %c0_7 = arith.constant 0 : index
    %8 = vector.load %arg4[%c0_6, %c0_7] : memref<8x512xf32, #tpu.memory_space<vmem>>, vector<8x512xf32>
    tpu.vector_store %arg4[%c0_6, %c0_7], %7 {strides = array<i32>} : memref<8x512xf32, #tpu.memory_space<vmem>>, vector<8x512xf32>,
    return
  }
  func.func @transform_0(%arg0: i32) -> (i32, i32) {
    %c0_i32 = arith.constant 0 : i32
    %c0_i32_0 = arith.constant 0 : i32
    %c0_i32_1 = arith.constant 0 : i32
    return %c0_i32, %c0_i32_0 : i32, i32
  }
  func.func @transform_1(%arg0: i32) -> (i32, i32) {
    %c0_i32 = arith.constant 0 : i32
    %c0_i32_0 = arith.constant 0 : i32
    return %c0_i32, %arg0 : i32, i32
  }
  func.func @transform_2(%arg0: i32) -> (i32, i32) {
    %c0_i32 = arith.constant 0 : i32
    %c0_i32_0 = arith.constant 0 : i32
    %c0_i32_1 = arith.constant 0 : i32
    return %c0_i32, %c0_i32_0 : i32, i32
  }
  func.func @transform_3(%arg0: i32) -> (i32, i32) {
    %c0_i32 = arith.constant 0 : i32
    %c0_i32_0 = arith.constant 0 : i32
    return %c0_i32, %arg0 : i32, i32
  }
}

module attributes {stable_mosaic.version = 11 : i64} {
  func.func @_fused_matmul_kernel(%arg0: i32, %arg1: memref<16x72xbf16, #tpu.memory_space<vmem>>, %arg2: memref<72x512xbf16, #tpu.memory_space<vmem>>, %arg3: memref<16x1xf32, #tpu.memory_space<vmem>>, %arg4: memref<16x512xf32, #tpu.memory_space<vmem>>) attributes {dimension_semantics = [#tpu.dimension_semantics<parallel>], iteration_bounds = array<i64: 1>, scalar_prefetch = 0 : i64, scratch_operands = 0 : i64, tpu.core_type = #tpu.core_type<tc>, window_params = [{pipeline_mode = #tpu.pipeline_mode<synchronous>, transform_indices = @transform_0, window_bounds = array<i64: 16, 72>}, {transform_indices = @transform_1, window_bounds = array<i64: 72, 512>}, {pipeline_mode = #tpu.pipeline_mode<synchronous>, transform_indices = @transform_2, window_bounds = array<i64: 16, 1>}, {transform_indices = @transform_3, window_bounds = array<i64: 16, 512>}]} {
    %c0 = arith.constant 0 : index
    %c0_0 = arith.constant 0 : index
    %0 = vector.load %arg1[%c0, %c0_0] : memref<16x72xbf16, #tpu.memory_space<vmem>>, vector<16x72xbf16>
    %c0_1 = arith.constant 0 : index
    %c0_2 = arith.constant 0 : index
    %1 = vector.load %arg2[%c0_1, %c0_2] : memref<72x512xbf16, #tpu.memory_space<vmem>>, vector<72x512xbf16>
    %cst = arith.constant dense<0.000000e+00> : vector<16x512xf32>
    %2 = tpu.matmul %0, %1, %cst {dimension_numbers = #tpu.dot_dimension_numbers<[1], [0], [0], [1], [0, 0, 1, 1], [], []>} : vector<16x72xbf16>, vector<72x512xbf16>, vector<16x512xf32> -> vector<16x512xf32>
    %c0_3 = arith.constant 0 : index
    %c0_4 = arith.constant 0 : index
    %3 = vector.load %arg3[%c0_3, %c0_4] : memref<16x1xf32, #tpu.memory_space<vmem>>, vector<16x1xf32>
    %4 = vector.broadcast %3 : vector<16x1xf32> to vector<16x512xf32>
    %5 = arith.addf %2, %4 : vector<16x512xf32>
    %cst_5 = arith.constant 0.000000e+00 : f32
    %6 = vector.broadcast %cst_5 : f32 to vector<16x512xf32>
    %7 = arith.maximumf %5, %6 : vector<16x512xf32>
    %c0_6 = arith.constant 0 : index
    %c0_7 = arith.constant 0 : index
    %8 = vector.load %arg4[%c0_6, %c0_7] : memref<16x512xf32, #tpu.memory_space<vmem>>, vector<16x512xf32>
    tpu.vector_store %arg4[%c0_6, %c0_7], %7 {strides = array<i32>} : memref<16x512xf32, #tpu.memory_space<vmem>>, vector<16x512xf32>,
    return
  }
  func.func @transform_0(%arg0: i32) -> (i32, i32) {
    %c0_i32 = arith.constant 0 : i32
    %c0_i32_0 = arith.constant 0 : i32
    %c0_i32_1 = arith.constant 0 : i32
    return %c0_i32, %c0_i32_0 : i32, i32
  }
  func.func @transform_1(%arg0: i32) -> (i32, i32) {
    %c0_i32 = arith.constant 0 : i32
    %c0_i32_0 = arith.constant 0 : i32
    return %c0_i32, %arg0 : i32, i32
  }
  func.func @transform_2(%arg0: i32) -> (i32, i32) {
    %c0_i32 = arith.constant 0 : i32
    %c0_i32_0 = arith.constant 0 : i32
    %c0_i32_1 = arith.constant 0 : i32
    return %c0_i32, %c0_i32_0 : i32, i32
  }
  func.func @transform_3(%arg0: i32) -> (i32, i32) {
    %c0_i32 = arith.constant 0 : i32
    %c0_i32_0 = arith.constant 0 : i32
    return %c0_i32, %arg0 : i32, i32
  }
}

module attributes {stable_mosaic.version = 11 : i64} {
  func.func @_fused_matmul_kernel(%arg0: i32, %arg1: memref<16x144xbf16, #tpu.memory_space<vmem>>, %arg2: memref<144x512xbf16, #tpu.memory_space<vmem>>, %arg3: memref<16x1xf32, #tpu.memory_space<vmem>>, %arg4: memref<16x512xf32, #tpu.memory_space<vmem>>) attributes {dimension_semantics = [#tpu.dimension_semantics<parallel>], iteration_bounds = array<i64: 1>, scalar_prefetch = 0 : i64, scratch_operands = 0 : i64, tpu.core_type = #tpu.core_type<tc>, window_params = [{pipeline_mode = #tpu.pipeline_mode<synchronous>, transform_indices = @transform_0, window_bounds = array<i64: 16, 144>}, {transform_indices = @transform_1, window_bounds = array<i64: 144, 512>}, {pipeline_mode = #tpu.pipeline_mode<synchronous>, transform_indices = @transform_2, window_bounds = array<i64: 16, 1>}, {transform_indices = @transform_3, window_bounds = array<i64: 16, 512>}]} {
    %c0 = arith.constant 0 : index
    %c0_0 = arith.constant 0 : index
    %0 = vector.load %arg1[%c0, %c0_0] : memref<16x144xbf16, #tpu.memory_space<vmem>>, vector<16x144xbf16>
    %c0_1 = arith.constant 0 : index
    %c0_2 = arith.constant 0 : index
    %1 = vector.load %arg2[%c0_1, %c0_2] : memref<144x512xbf16, #tpu.memory_space<vmem>>, vector<144x512xbf16>
    %cst = arith.constant dense<0.000000e+00> : vector<16x512xf32>
    %2 = tpu.matmul %0, %1, %cst {dimension_numbers = #tpu.dot_dimension_numbers<[1], [0], [0], [1], [0, 0, 1, 1], [], []>} : vector<16x144xbf16>, vector<144x512xbf16>, vector<16x512xf32> -> vector<16x512xf32>
    %c0_3 = arith.constant 0 : index
    %c0_4 = arith.constant 0 : index
    %3 = vector.load %arg3[%c0_3, %c0_4] : memref<16x1xf32, #tpu.memory_space<vmem>>, vector<16x1xf32>
    %4 = vector.broadcast %3 : vector<16x1xf32> to vector<16x512xf32>
    %5 = arith.addf %2, %4 : vector<16x512xf32>
    %cst_5 = arith.constant 0.000000e+00 : f32
    %6 = vector.broadcast %cst_5 : f32 to vector<16x512xf32>
    %7 = arith.maximumf %5, %6 : vector<16x512xf32>
    %c0_6 = arith.constant 0 : index
    %c0_7 = arith.constant 0 : index
    %8 = vector.load %arg4[%c0_6, %c0_7] : memref<16x512xf32, #tpu.memory_space<vmem>>, vector<16x512xf32>
    tpu.vector_store %arg4[%c0_6, %c0_7], %7 {strides = array<i32>} : memref<16x512xf32, #tpu.memory_space<vmem>>, vector<16x512xf32>,
    return
  }
  func.func @transform_0(%arg0: i32) -> (i32, i32) {
    %c0_i32 = arith.constant 0 : i32
    %c0_i32_0 = arith.constant 0 : i32
    %c0_i32_1 = arith.constant 0 : i32
    return %c0_i32, %c0_i32_0 : i32, i32
  }
  func.func @transform_1(%arg0: i32) -> (i32, i32) {
    %c0_i32 = arith.constant 0 : i32
    %c0_i32_0 = arith.constant 0 : i32
    return %c0_i32, %arg0 : i32, i32
  }
  func.func @transform_2(%arg0: i32) -> (i32, i32) {
    %c0_i32 = arith.constant 0 : i32
    %c0_i32_0 = arith.constant 0 : i32
    %c0_i32_1 = arith.constant 0 : i32
    return %c0_i32, %c0_i32_0 : i32, i32
  }
  func.func @transform_3(%arg0: i32) -> (i32, i32) {
    %c0_i32 = arith.constant 0 : i32
    %c0_i32_0 = arith.constant 0 : i32
    return %c0_i32, %arg0 : i32, i32
  }
}

module attributes {stable_mosaic.version = 11 : i64} {
  func.func @_fused_matmul_kernel(%arg0: i32, %arg1: memref<8x144xbf16, #tpu.memory_space<vmem>>, %arg2: memref<144x512xbf16, #tpu.memory_space<vmem>>, %arg3: memref<8x1xf32, #tpu.memory_space<vmem>>, %arg4: memref<8x512xf32, #tpu.memory_space<vmem>>) attributes {dimension_semantics = [#tpu.dimension_semantics<parallel>], iteration_bounds = array<i64: 1>, scalar_prefetch = 0 : i64, scratch_operands = 0 : i64, tpu.core_type = #tpu.core_type<tc>, window_params = [{pipeline_mode = #tpu.pipeline_mode<synchronous>, transform_indices = @transform_0, window_bounds = array<i64: 8, 144>}, {transform_indices = @transform_1, window_bounds = array<i64: 144, 512>}, {pipeline_mode = #tpu.pipeline_mode<synchronous>, transform_indices = @transform_2, window_bounds = array<i64: 8, 1>}, {transform_indices = @transform_3, window_bounds = array<i64: 8, 512>}]} {
    %c0 = arith.constant 0 : index
    %c0_0 = arith.constant 0 : index
    %0 = vector.load %arg1[%c0, %c0_0] : memref<8x144xbf16, #tpu.memory_space<vmem>>, vector<8x144xbf16>
    %c0_1 = arith.constant 0 : index
    %c0_2 = arith.constant 0 : index
    %1 = vector.load %arg2[%c0_1, %c0_2] : memref<144x512xbf16, #tpu.memory_space<vmem>>, vector<144x512xbf16>
    %cst = arith.constant dense<0.000000e+00> : vector<8x512xf32>
    %2 = tpu.matmul %0, %1, %cst {dimension_numbers = #tpu.dot_dimension_numbers<[1], [0], [0], [1], [0, 0, 1, 1], [], []>} : vector<8x144xbf16>, vector<144x512xbf16>, vector<8x512xf32> -> vector<8x512xf32>
    %c0_3 = arith.constant 0 : index
    %c0_4 = arith.constant 0 : index
    %3 = vector.load %arg3[%c0_3, %c0_4] : memref<8x1xf32, #tpu.memory_space<vmem>>, vector<8x1xf32>
    %4 = vector.broadcast %3 : vector<8x1xf32> to vector<8x512xf32>
    %5 = arith.addf %2, %4 : vector<8x512xf32>
    %cst_5 = arith.constant 0.000000e+00 : f32
    %6 = vector.broadcast %cst_5 : f32 to vector<8x512xf32>
    %7 = arith.maximumf %5, %6 : vector<8x512xf32>
    %c0_6 = arith.constant 0 : index
    %c0_7 = arith.constant 0 : index
    %8 = vector.load %arg4[%c0_6, %c0_7] : memref<8x512xf32, #tpu.memory_space<vmem>>, vector<8x512xf32>
    tpu.vector_store %arg4[%c0_6, %c0_7], %7 {strides = array<i32>} : memref<8x512xf32, #tpu.memory_space<vmem>>, vector<8x512xf32>,
    return
  }
  func.func @transform_0(%arg0: i32) -> (i32, i32) {
    %c0_i32 = arith.constant 0 : i32
    %c0_i32_0 = arith.constant 0 : i32
    %c0_i32_1 = arith.constant 0 : i32
    return %c0_i32, %c0_i32_0 : i32, i32
  }
  func.func @transform_1(%arg0: i32) -> (i32, i32) {
    %c0_i32 = arith.constant 0 : i32
    %c0_i32_0 = arith.constant 0 : i32
    return %c0_i32, %arg0 : i32, i32
  }
  func.func @transform_2(%arg0: i32) -> (i32, i32) {
    %c0_i32 = arith.constant 0 : i32
    %c0_i32_0 = arith.constant 0 : i32
    %c0_i32_1 = arith.constant 0 : i32
    return %c0_i32, %c0_i32_0 : i32, i32
  }
  func.func @transform_3(%arg0: i32) -> (i32, i32) {
    %c0_i32 = arith.constant 0 : i32
    %c0_i32_0 = arith.constant 0 : i32
    return %c0_i32, %arg0 : i32, i32
  }
}

module attributes {stable_mosaic.version = 11 : i64} {
  func.func @_fused_matmul_kernel(%arg0: i32, %arg1: memref<1800x72xbf16, #tpu.memory_space<vmem>>, %arg2: memref<72x8xbf16, #tpu.memory_space<vmem>>, %arg3: memref<1800x1xf32, #tpu.memory_space<vmem>>, %arg4: memref<1800x8xf32, #tpu.memory_space<vmem>>) attributes {dimension_semantics = [#tpu.dimension_semantics<parallel>], iteration_bounds = array<i64: 1>, scalar_prefetch = 0 : i64, scratch_operands = 0 : i64, tpu.core_type = #tpu.core_type<tc>, window_params = [{pipeline_mode = #tpu.pipeline_mode<synchronous>, transform_indices = @transform_0, window_bounds = array<i64: 1800, 72>}, {transform_indices = @transform_1, window_bounds = array<i64: 72, 8>}, {pipeline_mode = #tpu.pipeline_mode<synchronous>, transform_indices = @transform_2, window_bounds = array<i64: 1800, 1>}, {transform_indices = @transform_3, window_bounds = array<i64: 1800, 8>}]} {
    %c0 = arith.constant 0 : index
    %c0_0 = arith.constant 0 : index
    %0 = vector.load %arg1[%c0, %c0_0] : memref<1800x72xbf16, #tpu.memory_space<vmem>>, vector<1800x72xbf16>
    %c0_1 = arith.constant 0 : index
    %c0_2 = arith.constant 0 : index
    %1 = vector.load %arg2[%c0_1, %c0_2] : memref<72x8xbf16, #tpu.memory_space<vmem>>, vector<72x8xbf16>
    %cst = arith.constant dense<0.000000e+00> : vector<1800x8xf32>
    %2 = tpu.matmul %0, %1, %cst {dimension_numbers = #tpu.dot_dimension_numbers<[1], [0], [0], [1], [0, 0, 1, 1], [], []>} : vector<1800x72xbf16>, vector<72x8xbf16>, vector<1800x8xf32> -> vector<1800x8xf32>
    %c0_3 = arith.constant 0 : index
    %c0_4 = arith.constant 0 : index
    %3 = vector.load %arg3[%c0_3, %c0_4] : memref<1800x1xf32, #tpu.memory_space<vmem>>, vector<1800x1xf32>
    %4 = vector.broadcast %3 : vector<1800x1xf32> to vector<1800x8xf32>
    %5 = arith.addf %2, %4 : vector<1800x8xf32>
    %c0_5 = arith.constant 0 : index
    %c0_6 = arith.constant 0 : index
    %6 = vector.load %arg4[%c0_5, %c0_6] : memref<1800x8xf32, #tpu.memory_space<vmem>>, vector<1800x8xf32>
    tpu.vector_store %arg4[%c0_5, %c0_6], %5 {strides = array<i32>} : memref<1800x8xf32, #tpu.memory_space<vmem>>, vector<1800x8xf32>,
    return
  }
  func.func @transform_0(%arg0: i32) -> (i32, i32) {
    %c0_i32 = arith.constant 0 : i32
    %c0_i32_0 = arith.constant 0 : i32
    %c0_i32_1 = arith.constant 0 : i32
    return %c0_i32, %c0_i32_0 : i32, i32
  }
  func.func @transform_1(%arg0: i32) -> (i32, i32) {
    %c0_i32 = arith.constant 0 : i32
    %c0_i32_0 = arith.constant 0 : i32
    return %c0_i32, %arg0 : i32, i32
  }
  func.func @transform_2(%arg0: i32) -> (i32, i32) {
    %c0_i32 = arith.constant 0 : i32
    %c0_i32_0 = arith.constant 0 : i32
    %c0_i32_1 = arith.constant 0 : i32
    return %c0_i32, %c0_i32_0 : i32, i32
  }
  func.func @transform_3(%arg0: i32) -> (i32, i32) {
    %c0_i32 = arith.constant 0 : i32
    %c0_i32_0 = arith.constant 0 : i32
    return %c0_i32, %arg0 : i32, i32
  }
}

module attributes {stable_mosaic.version = 11 : i64} {
  func.func @_fused_matmul_kernel(%arg0: i32, %arg1: memref<392x72xbf16, #tpu.memory_space<vmem>>, %arg2: memref<72x18xbf16, #tpu.memory_space<vmem>>, %arg3: memref<392x1xf32, #tpu.memory_space<vmem>>, %arg4: memref<392x18xf32, #tpu.memory_space<vmem>>) attributes {dimension_semantics = [#tpu.dimension_semantics<parallel>], iteration_bounds = array<i64: 1>, scalar_prefetch = 0 : i64, scratch_operands = 0 : i64, tpu.core_type = #tpu.core_type<tc>, window_params = [{pipeline_mode = #tpu.pipeline_mode<synchronous>, transform_indices = @transform_0, window_bounds = array<i64: 392, 72>}, {transform_indices = @transform_1, window_bounds = array<i64: 72, 18>}, {pipeline_mode = #tpu.pipeline_mode<synchronous>, transform_indices = @transform_2, window_bounds = array<i64: 392, 1>}, {transform_indices = @transform_3, window_bounds = array<i64: 392, 18>}]} {
    %c0 = arith.constant 0 : index
    %c0_0 = arith.constant 0 : index
    %0 = vector.load %arg1[%c0, %c0_0] : memref<392x72xbf16, #tpu.memory_space<vmem>>, vector<392x72xbf16>
    %c0_1 = arith.constant 0 : index
    %c0_2 = arith.constant 0 : index
    %1 = vector.load %arg2[%c0_1, %c0_2] : memref<72x18xbf16, #tpu.memory_space<vmem>>, vector<72x18xbf16>
    %cst = arith.constant dense<0.000000e+00> : vector<392x18xf32>
    %2 = tpu.matmul %0, %1, %cst {dimension_numbers = #tpu.dot_dimension_numbers<[1], [0], [0], [1], [0, 0, 1, 1], [], []>} : vector<392x72xbf16>, vector<72x18xbf16>, vector<392x18xf32> -> vector<392x18xf32>
    %c0_3 = arith.constant 0 : index
    %c0_4 = arith.constant 0 : index
    %3 = vector.load %arg3[%c0_3, %c0_4] : memref<392x1xf32, #tpu.memory_space<vmem>>, vector<392x1xf32>
    %4 = vector.broadcast %3 : vector<392x1xf32> to vector<392x18xf32>
    %5 = arith.addf %2, %4 : vector<392x18xf32>
    %c0_5 = arith.constant 0 : index
    %c0_6 = arith.constant 0 : index
    %6 = vector.load %arg4[%c0_5, %c0_6] : memref<392x18xf32, #tpu.memory_space<vmem>>, vector<392x18xf32>
    tpu.vector_store %arg4[%c0_5, %c0_6], %5 {strides = array<i32>} : memref<392x18xf32, #tpu.memory_space<vmem>>, vector<392x18xf32>,
    return
  }
  func.func @transform_0(%arg0: i32) -> (i32, i32) {
    %c0_i32 = arith.constant 0 : i32
    %c0_i32_0 = arith.constant 0 : i32
    %c0_i32_1 = arith.constant 0 : i32
    return %c0_i32, %c0_i32_0 : i32, i32
  }
  func.func @transform_1(%arg0: i32) -> (i32, i32) {
    %c0_i32 = arith.constant 0 : i32
    %c0_i32_0 = arith.constant 0 : i32
    return %c0_i32, %arg0 : i32, i32
  }
  func.func @transform_2(%arg0: i32) -> (i32, i32) {
    %c0_i32 = arith.constant 0 : i32
    %c0_i32_0 = arith.constant 0 : i32
    %c0_i32_1 = arith.constant 0 : i32
    return %c0_i32, %c0_i32_0 : i32, i32
  }
  func.func @transform_3(%arg0: i32) -> (i32, i32) {
    %c0_i32 = arith.constant 0 : i32
    %c0_i32_0 = arith.constant 0 : i32
    return %c0_i32, %arg0 : i32, i32
  }
}

module attributes {stable_mosaic.version = 11 : i64} {
  func.func @_fused_matmul_kernel(%arg0: i32, %arg1: memref<128x32xbf16, #tpu.memory_space<vmem>>, %arg2: memref<32x50xbf16, #tpu.memory_space<vmem>>, %arg3: memref<128x1xf32, #tpu.memory_space<vmem>>, %arg4: memref<128x50xf32, #tpu.memory_space<vmem>>) attributes {dimension_semantics = [#tpu.dimension_semantics<parallel>], iteration_bounds = array<i64: 1>, scalar_prefetch = 0 : i64, scratch_operands = 0 : i64, tpu.core_type = #tpu.core_type<tc>, window_params = [{pipeline_mode = #tpu.pipeline_mode<synchronous>, transform_indices = @transform_0, window_bounds = array<i64: 128, 32>}, {transform_indices = @transform_1, window_bounds = array<i64: 32, 50>}, {pipeline_mode = #tpu.pipeline_mode<synchronous>, transform_indices = @transform_2, window_bounds = array<i64: 128, 1>}, {transform_indices = @transform_3, window_bounds = array<i64: 128, 50>}]} {
    %c0 = arith.constant 0 : index
    %c0_0 = arith.constant 0 : index
    %0 = vector.load %arg1[%c0, %c0_0] : memref<128x32xbf16, #tpu.memory_space<vmem>>, vector<128x32xbf16>
    %c0_1 = arith.constant 0 : index
    %c0_2 = arith.constant 0 : index
    %1 = vector.load %arg2[%c0_1, %c0_2] : memref<32x50xbf16, #tpu.memory_space<vmem>>, vector<32x50xbf16>
    %cst = arith.constant dense<0.000000e+00> : vector<128x50xf32>
    %2 = tpu.matmul %0, %1, %cst {dimension_numbers = #tpu.dot_dimension_numbers<[1], [0], [0], [1], [0, 0, 1, 1], [], []>} : vector<128x32xbf16>, vector<32x50xbf16>, vector<128x50xf32> -> vector<128x50xf32>
    %c0_3 = arith.constant 0 : index
    %c0_4 = arith.constant 0 : index
    %3 = vector.load %arg3[%c0_3, %c0_4] : memref<128x1xf32, #tpu.memory_space<vmem>>, vector<128x1xf32>
    %4 = vector.broadcast %3 : vector<128x1xf32> to vector<128x50xf32>
    %5 = arith.addf %2, %4 : vector<128x50xf32>
    %c0_5 = arith.constant 0 : index
    %c0_6 = arith.constant 0 : index
    %6 = vector.load %arg4[%c0_5, %c0_6] : memref<128x50xf32, #tpu.memory_space<vmem>>, vector<128x50xf32>
    tpu.vector_store %arg4[%c0_5, %c0_6], %5 {strides = array<i32>} : memref<128x50xf32, #tpu.memory_space<vmem>>, vector<128x50xf32>,
    return
  }
  func.func @transform_0(%arg0: i32) -> (i32, i32) {
    %c0_i32 = arith.constant 0 : i32
    %c0_i32_0 = arith.constant 0 : i32
    %c0_i32_1 = arith.constant 0 : i32
    return %c0_i32, %c0_i32_0 : i32, i32
  }
  func.func @transform_1(%arg0: i32) -> (i32, i32) {
    %c0_i32 = arith.constant 0 : i32
    %c0_i32_0 = arith.constant 0 : i32
    return %c0_i32, %arg0 : i32, i32
  }
  func.func @transform_2(%arg0: i32) -> (i32, i32) {
    %c0_i32 = arith.constant 0 : i32
    %c0_i32_0 = arith.constant 0 : i32
    %c0_i32_1 = arith.constant 0 : i32
    return %c0_i32, %c0_i32_0 : i32, i32
  }
  func.func @transform_3(%arg0: i32) -> (i32, i32) {
    %c0_i32 = arith.constant 0 : i32
    %c0_i32_0 = arith.constant 0 : i32
    return %c0_i32, %arg0 : i32, i32
  }
}

module attributes {stable_mosaic.version = 11 : i64} {
  func.func @_fused_matmul_kernel(%arg0: i32, %arg1: memref<32x32xbf16, #tpu.memory_space<vmem>>, %arg2: memref<32x162xbf16, #tpu.memory_space<vmem>>, %arg3: memref<32x1xf32, #tpu.memory_space<vmem>>, %arg4: memref<32x162xf32, #tpu.memory_space<vmem>>) attributes {dimension_semantics = [#tpu.dimension_semantics<parallel>], iteration_bounds = array<i64: 1>, scalar_prefetch = 0 : i64, scratch_operands = 0 : i64, tpu.core_type = #tpu.core_type<tc>, window_params = [{pipeline_mode = #tpu.pipeline_mode<synchronous>, transform_indices = @transform_0, window_bounds = array<i64: 32, 32>}, {transform_indices = @transform_1, window_bounds = array<i64: 32, 162>}, {pipeline_mode = #tpu.pipeline_mode<synchronous>, transform_indices = @transform_2, window_bounds = array<i64: 32, 1>}, {transform_indices = @transform_3, window_bounds = array<i64: 32, 162>}]} {
    %c0 = arith.constant 0 : index
    %c0_0 = arith.constant 0 : index
    %0 = vector.load %arg1[%c0, %c0_0] : memref<32x32xbf16, #tpu.memory_space<vmem>>, vector<32x32xbf16>
    %c0_1 = arith.constant 0 : index
    %c0_2 = arith.constant 0 : index
    %1 = vector.load %arg2[%c0_1, %c0_2] : memref<32x162xbf16, #tpu.memory_space<vmem>>, vector<32x162xbf16>
    %cst = arith.constant dense<0.000000e+00> : vector<32x162xf32>
    %2 = tpu.matmul %0, %1, %cst {dimension_numbers = #tpu.dot_dimension_numbers<[1], [0], [0], [1], [0, 0, 1, 1], [], []>} : vector<32x32xbf16>, vector<32x162xbf16>, vector<32x162xf32> -> vector<32x162xf32>
    %c0_3 = arith.constant 0 : index
    %c0_4 = arith.constant 0 : index
    %3 = vector.load %arg3[%c0_3, %c0_4] : memref<32x1xf32, #tpu.memory_space<vmem>>, vector<32x1xf32>
    %4 = vector.broadcast %3 : vector<32x1xf32> to vector<32x162xf32>
    %5 = arith.addf %2, %4 : vector<32x162xf32>
    %c0_5 = arith.constant 0 : index
    %c0_6 = arith.constant 0 : index
    %6 = vector.load %arg4[%c0_5, %c0_6] : memref<32x162xf32, #tpu.memory_space<vmem>>, vector<32x162xf32>
    tpu.vector_store %arg4[%c0_5, %c0_6], %5 {strides = array<i32>} : memref<32x162xf32, #tpu.memory_space<vmem>>, vector<32x162xf32>,
    return
  }
  func.func @transform_0(%arg0: i32) -> (i32, i32) {
    %c0_i32 = arith.constant 0 : i32
    %c0_i32_0 = arith.constant 0 : i32
    %c0_i32_1 = arith.constant 0 : i32
    return %c0_i32, %c0_i32_0 : i32, i32
  }
  func.func @transform_1(%arg0: i32) -> (i32, i32) {
    %c0_i32 = arith.constant 0 : i32
    %c0_i32_0 = arith.constant 0 : i32
    return %c0_i32, %arg0 : i32, i32
  }
  func.func @transform_2(%arg0: i32) -> (i32, i32) {
    %c0_i32 = arith.constant 0 : i32
    %c0_i32_0 = arith.constant 0 : i32
    %c0_i32_1 = arith.constant 0 : i32
    return %c0_i32, %c0_i32_0 : i32, i32
  }
  func.func @transform_3(%arg0: i32) -> (i32, i32) {
    %c0_i32 = arith.constant 0 : i32
    %c0_i32_0 = arith.constant 0 : i32
    return %c0_i32, %arg0 : i32, i32
  }
}

module attributes {stable_mosaic.version = 11 : i64} {
  func.func @_fused_matmul_kernel(%arg0: i32, %arg1: memref<16x360xbf16, #tpu.memory_space<vmem>>, %arg2: memref<360x512xbf16, #tpu.memory_space<vmem>>, %arg3: memref<16x1xf32, #tpu.memory_space<vmem>>, %arg4: memref<16x512xf32, #tpu.memory_space<vmem>>) attributes {dimension_semantics = [#tpu.dimension_semantics<parallel>], iteration_bounds = array<i64: 1>, scalar_prefetch = 0 : i64, scratch_operands = 0 : i64, tpu.core_type = #tpu.core_type<tc>, window_params = [{pipeline_mode = #tpu.pipeline_mode<synchronous>, transform_indices = @transform_0, window_bounds = array<i64: 16, 360>}, {transform_indices = @transform_1, window_bounds = array<i64: 360, 512>}, {pipeline_mode = #tpu.pipeline_mode<synchronous>, transform_indices = @transform_2, window_bounds = array<i64: 16, 1>}, {transform_indices = @transform_3, window_bounds = array<i64: 16, 512>}]} {
    %c0 = arith.constant 0 : index
    %c0_0 = arith.constant 0 : index
    %0 = vector.load %arg1[%c0, %c0_0] : memref<16x360xbf16, #tpu.memory_space<vmem>>, vector<16x360xbf16>
    %c0_1 = arith.constant 0 : index
    %c0_2 = arith.constant 0 : index
    %1 = vector.load %arg2[%c0_1, %c0_2] : memref<360x512xbf16, #tpu.memory_space<vmem>>, vector<360x512xbf16>
    %cst = arith.constant dense<0.000000e+00> : vector<16x512xf32>
    %2 = tpu.matmul %0, %1, %cst {dimension_numbers = #tpu.dot_dimension_numbers<[1], [0], [0], [1], [0, 0, 1, 1], [], []>} : vector<16x360xbf16>, vector<360x512xbf16>, vector<16x512xf32> -> vector<16x512xf32>
    %c0_3 = arith.constant 0 : index
    %c0_4 = arith.constant 0 : index
    %3 = vector.load %arg3[%c0_3, %c0_4] : memref<16x1xf32, #tpu.memory_space<vmem>>, vector<16x1xf32>
    %4 = vector.broadcast %3 : vector<16x1xf32> to vector<16x512xf32>
    %5 = arith.addf %2, %4 : vector<16x512xf32>
    %cst_5 = arith.constant 0.000000e+00 : f32
    %6 = vector.broadcast %cst_5 : f32 to vector<16x512xf32>
    %7 = arith.maximumf %5, %6 : vector<16x512xf32>
    %c0_6 = arith.constant 0 : index
    %c0_7 = arith.constant 0 : index
    %8 = vector.load %arg4[%c0_6, %c0_7] : memref<16x512xf32, #tpu.memory_space<vmem>>, vector<16x512xf32>
    tpu.vector_store %arg4[%c0_6, %c0_7], %7 {strides = array<i32>} : memref<16x512xf32, #tpu.memory_space<vmem>>, vector<16x512xf32>,
    return
  }
  func.func @transform_0(%arg0: i32) -> (i32, i32) {
    %c0_i32 = arith.constant 0 : i32
    %c0_i32_0 = arith.constant 0 : i32
    %c0_i32_1 = arith.constant 0 : i32
    return %c0_i32, %c0_i32_0 : i32, i32
  }
  func.func @transform_1(%arg0: i32) -> (i32, i32) {
    %c0_i32 = arith.constant 0 : i32
    %c0_i32_0 = arith.constant 0 : i32
    return %c0_i32, %arg0 : i32, i32
  }
  func.func @transform_2(%arg0: i32) -> (i32, i32) {
    %c0_i32 = arith.constant 0 : i32
    %c0_i32_0 = arith.constant 0 : i32
    %c0_i32_1 = arith.constant 0 : i32
    return %c0_i32, %c0_i32_0 : i32, i32
  }
  func.func @transform_3(%arg0: i32) -> (i32, i32) {
    %c0_i32 = arith.constant 0 : i32
    %c0_i32_0 = arith.constant 0 : i32
    return %c0_i32, %arg0 : i32, i32
  }
}

module attributes {stable_mosaic.version = 11 : i64} {
  func.func @_fused_matmul_kernel(%arg0: i32, %arg1: memref<12x16xbf16, #tpu.memory_space<vmem>>, %arg2: memref<16x512xbf16, #tpu.memory_space<vmem>>, %arg3: memref<12x1xf32, #tpu.memory_space<vmem>>, %arg4: memref<12x512xf32, #tpu.memory_space<vmem>>) attributes {dimension_semantics = [#tpu.dimension_semantics<parallel>], iteration_bounds = array<i64: 1>, scalar_prefetch = 0 : i64, scratch_operands = 0 : i64, tpu.core_type = #tpu.core_type<tc>, window_params = [{pipeline_mode = #tpu.pipeline_mode<synchronous>, transform_indices = @transform_0, window_bounds = array<i64: 12, 16>}, {transform_indices = @transform_1, window_bounds = array<i64: 16, 512>}, {pipeline_mode = #tpu.pipeline_mode<synchronous>, transform_indices = @transform_2, window_bounds = array<i64: 12, 1>}, {transform_indices = @transform_3, window_bounds = array<i64: 12, 512>}]} {
    %c0 = arith.constant 0 : index
    %c0_0 = arith.constant 0 : index
    %0 = vector.load %arg1[%c0, %c0_0] : memref<12x16xbf16, #tpu.memory_space<vmem>>, vector<12x16xbf16>
    %c0_1 = arith.constant 0 : index
    %c0_2 = arith.constant 0 : index
    %1 = vector.load %arg2[%c0_1, %c0_2] : memref<16x512xbf16, #tpu.memory_space<vmem>>, vector<16x512xbf16>
    %cst = arith.constant dense<0.000000e+00> : vector<12x512xf32>
    %2 = tpu.matmul %0, %1, %cst {dimension_numbers = #tpu.dot_dimension_numbers<[1], [0], [0], [1], [0, 0, 1, 1], [], []>} : vector<12x16xbf16>, vector<16x512xbf16>, vector<12x512xf32> -> vector<12x512xf32>
    %c0_3 = arith.constant 0 : index
    %c0_4 = arith.constant 0 : index
    %3 = vector.load %arg3[%c0_3, %c0_4] : memref<12x1xf32, #tpu.memory_space<vmem>>, vector<12x1xf32>
    %4 = vector.broadcast %3 : vector<12x1xf32> to vector<12x512xf32>
    %5 = arith.addf %2, %4 : vector<12x512xf32>
    %c0_5 = arith.constant 0 : index
    %c0_6 = arith.constant 0 : index
    %6 = vector.load %arg4[%c0_5, %c0_6] : memref<12x512xf32, #tpu.memory_space<vmem>>, vector<12x512xf32>
    tpu.vector_store %arg4[%c0_5, %c0_6], %5 {strides = array<i32>} : memref<12x512xf32, #tpu.memory_space<vmem>>, vector<12x512xf32>,
    return
  }
  func.func @transform_0(%arg0: i32) -> (i32, i32) {
    %c0_i32 = arith.constant 0 : i32
    %c0_i32_0 = arith.constant 0 : i32
    %c0_i32_1 = arith.constant 0 : i32
    return %c0_i32, %c0_i32_0 : i32, i32
  }
  func.func @transform_1(%arg0: i32) -> (i32, i32) {
    %c0_i32 = arith.constant 0 : i32
    %c0_i32_0 = arith.constant 0 : i32
    return %c0_i32, %arg0 : i32, i32
  }
  func.func @transform_2(%arg0: i32) -> (i32, i32) {
    %c0_i32 = arith.constant 0 : i32
    %c0_i32_0 = arith.constant 0 : i32
    %c0_i32_1 = arith.constant 0 : i32
    return %c0_i32, %c0_i32_0 : i32, i32
  }
  func.func @transform_3(%arg0: i32) -> (i32, i32) {
    %c0_i32 = arith.constant 0 : i32
    %c0_i32_0 = arith.constant 0 : i32
    return %c0_i32, %arg0 : i32, i32
  }
}

</mosaic_0001>

<llo_original>
// kernel: _lambda_.25
$region0: #{_lambda_.25}
  #allocation0 [shape = 'u32[]', space=smem, size = 0x4, offset = 0x4, fixed_abs, tag = 'smem constant byte address 0x4 - core index']
  #allocation1 [shape = 'u32[72,128]{1,0:T(1,128)}', space=vmem, size = 0x9000, scoped, tag = 'internal scratch']
  %s0 = inlined_call_operand.vmem [shape: bf16[8,36], index: 0, kind: input, shape index: {}]
  %s1 = inlined_call_operand.vmem [shape: bf16[36,512], index: 1, kind: input, shape index: {}]
  %s2 = inlined_call_operand.vmem [shape: f32[8,1], index: 2, kind: input, shape index: {}]
  %s3 = inlined_call_operand.vmem [shape: f32[8,512], index: 3, kind: output, shape index: {}]
  %s4 = sld [smem:[#allocation0]]
  $region22: #{_lambda_.25} parent=0
    _
  %s6 = ssub.s32 1, %s4
  %s7 = scalar_select 0, %s6, %s4
  // Predicated region
  $region2: #{_lambda_.25} parent=0 // pred_check
    _
  $region3: #{_lambda_.25} parent=0 // pred_check_branch
    %9 = sbr.rel (0) target = $region5
  $region4: #{_lambda_.25} parent=0 // pred_region
    _
  $region5: #{_lambda_.25} parent=0 // pred_fallthru
    _
  // Predicated region
  $region6: #{_lambda_.25} parent=0 // pred_check
    _
  $region7: #{_lambda_.25} parent=0 // pred_check_branch
    %11 = sbr.rel (0) target = $region9
  $region8: #{_lambda_.25} parent=0 // pred_region
    _
  $region9: #{_lambda_.25} parent=0 // pred_fallthru
    _
  // Predicated region
  $region10: #{_lambda_.25} parent=0 // pred_check
    _
  $region11: #{_lambda_.25} parent=0 // pred_check_branch
    %13 = sbr.rel (0) target = $region13
  $region12: #{_lambda_.25} parent=0 // pred_region
    _
  $region13: #{_lambda_.25} parent=0 // pred_fallthru
    _
  %v15 = vld [vmem:[%s0] sm:$0xf]
  %v16 = vld [vmem:[%s1] sm:$0xff]
  %v17 = vld [vmem:[%s1 + $0x8] sm:$0xff]
  %v18 = vld [vmem:[%s1 + $0x10] sm:$0xff]
  %v19 = vld [vmem:[%s1 + $0x18] sm:$0xff]
  %v20 = vld [vmem:[%s1 + $0x20] sm:$0xff]
  %v21 = vld [vmem:[%s1 + $0x28] sm:$0xff]
  %v22 = vld [vmem:[%s1 + $0x30] sm:$0xff]
  %v23 = vld [vmem:[%s1 + $0x38] sm:$0xff]
  %v24 = vld [vmem:[%s1 + $0x40] sm:$0x33]
  %v25 = vld [vmem:[%s1 + $0x48] sm:$0x33]
  %v26 = vld [vmem:[%s2] sm:$0xff]
  %28 = vset.pattern.permute.xlu0 0
  %29 = vperm.xlu0 %28, %v26
  %v30 = vpop.permute.xlu0 %29
  %v42 = vunpack.c.l.b16 %v16
  %v43 = vunpack.c.h.b16 %v16
  %v44 = vunpack.c.l.b16 %v17
  %v45 = vunpack.c.h.b16 %v17
  %v46 = vunpack.c.l.b16 %v18
  %v47 = vunpack.c.h.b16 %v18
  %v48 = vunpack.c.l.b16 %v19
  %v49 = vunpack.c.h.b16 %v19
  %v50 = vunpack.c.l.b16 %v20
  %v51 = vunpack.c.h.b16 %v20
  %v52 = vunpack.c.l.b16 %v21
  %v53 = vunpack.c.h.b16 %v21
  %v54 = vunpack.c.l.b16 %v22
  %v55 = vunpack.c.h.b16 %v22
  %v56 = vunpack.c.l.b16 %v23
  %v57 = vunpack.c.h.b16 %v23
  %v58 = vunpack.c.l.b16 %v24
  %v59 = vunpack.c.h.b16 %v24
  %v60 = vunpack.c.l.b16 %v25
  %v61 = vunpack.c.h.b16 %v25
  %v62 = vpack.c.b16 %v46, %v42
  %v63 = vpack.c.b16 %v47, %v43
  %v64 = vpack.c.b16 %v48, %v44
  %v65 = vpack.c.b16 %v49, %v45
  %v66 = vpack.c.b16 %v54, %v50
  %v67 = vpack.c.b16 %v55, %v51
  %v68 = vpack.c.b16 %v56, %v52
  %v69 = vpack.c.b16 %v57, %v53
  %v70 = vpack.c.b16 %v58, %v58
  %v71 = vpack.c.b16 %v59, %v59
  %v72 = vpack.c.b16 %v60, %v60
  %v73 = vpack.c.b16 %v61, %v61
  %vm82 = vcmask 293888
  %v84 = vsel %vm82, %v15, 0
  %vm86 = vcmask 1041408
  %v88 = vsel %vm86, %v70, 0
  %v91 = vsel %vm86, %v71, 0
  %v94 = vsel %vm86, %v72, 0
  %v97 = vsel %vm86, %v73, 0
  %99 = vmatpush.bf16.msra.mxu0 0
  %100 = vmatpush.bf16.msra.mxu0 0
  %101 = vmatpush.bf16.msra.mxu0 0
  %102 = vmatpush.bf16.msra.mxu0 0
  %103 = vmatpush.bf16.msra.mxu0 0
  %104 = vmatpush.bf16.msra.mxu0 %v88
  %105 = vmatpush.bf16.msra.mxu0 %v66
  %106 = vmatpush.bf16.msra.mxu0 %v62
  %107 = vmatmul.bf16.gmra.mxu0 %v84
  %v108 = vpop.f32.mrf.mxu0
  %v109 = vadd.f32 %v30, %v108
  %v110 = vpop.f32.mrf.mxu0
  %111 = vdwg.mxu0
  %112 = vmatpush.bf16.msra.mxu0 0
  %113 = vmatpush.bf16.msra.mxu0 0
  %114 = vmatpush.bf16.msra.mxu0 0
  %115 = vmatpush.bf16.msra.mxu0 0
  %116 = vmatpush.bf16.msra.mxu0 0
  %117 = vmatpush.bf16.msra.mxu0 %v91
  %118 = vmatpush.bf16.msra.mxu0 %v67
  %119 = vmatpush.bf16.msra.mxu0 %v63
  %120 = vmatmul.bf16.gmra.mxu0 %v84
  %v121 = vpop.f32.mrf.mxu0
  %v122 = vadd.f32 %v30, %v121
  %v123 = vpop.f32.mrf.mxu0
  %124 = vdwg.mxu0
  %125 = vmatpush.bf16.msra.mxu0 0
  %126 = vmatpush.bf16.msra.mxu0 0
  %127 = vmatpush.bf16.msra.mxu0 0
  %128 = vmatpush.bf16.msra.mxu0 0
  %129 = vmatpush.bf16.msra.mxu0 0
  %130 = vmatpush.bf16.msra.mxu0 %v94
  %131 = vmatpush.bf16.msra.mxu0 %v68
  %132 = vmatpush.bf16.msra.mxu0 %v64
  %133 = vmatmul.bf16.gmra.mxu0 %v84
  %v134 = vpop.f32.mrf.mxu0
  %v135 = vadd.f32 %v30, %v134
  %v136 = vpop.f32.mrf.mxu0
  %137 = vdwg.mxu0
  %138 = vmatpush.bf16.msra.mxu0 0
  %139 = vmatpush.bf16.msra.mxu0 0
  %140 = vmatpush.bf16.msra.mxu0 0
  %141 = vmatpush.bf16.msra.mxu0 0
  %142 = vmatpush.bf16.msra.mxu0 0
  %143 = vmatpush.bf16.msra.mxu0 %v97
  %144 = vmatpush.bf16.msra.mxu0 %v69
  %145 = vmatpush.bf16.msra.mxu0 %v65
  %146 = vmatmul.bf16.gmra.mxu0 %v84
  %v147 = vpop.f32.mrf.mxu0
  %v148 = vadd.f32 %v30, %v147
  %v149 = vpop.f32.mrf.mxu0
  %150 = vdwg.mxu0
  %v151 = vmax.f32 %v109, 0.0
  %v152 = vmax.f32 %v122, 0.0
  %v153 = vmax.f32 %v135, 0.0
  %v154 = vmax.f32 %v148, 0.0
  %155 = vst [vmem:[%s3] sm:$0xff] %v151
  %156 = vst [vmem:[%s3 + $0x8] sm:$0xff] %v152
  %157 = vst [vmem:[%s3 + $0x10] sm:$0xff] %v153
  %158 = vst [vmem:[%s3 + $0x18] sm:$0xff] %v154
  // Predicated region
  $region14: #{_lambda_.25} parent=0 // pred_check
    _
  $region15: #{_lambda_.25} parent=0 // pred_check_branch
    %160 = sbr.rel (0) target = $region17
  $region16: #{_lambda_.25} parent=0 // pred_region
    _
  $region17: #{_lambda_.25} parent=0 // pred_fallthru
    _
  // Predicated region
  $region18: #{_lambda_.25} parent=0 // pred_check
    _
  $region19: #{_lambda_.25} parent=0 // pred_check_branch
    %162 = sbr.rel (0) target = $region21
  $region20: #{_lambda_.25} parent=0 // pred_region
    _
  $region21: #{_lambda_.25} parent=0 // pred_fallthru
    _

// kernel: _lambda_.26
$region0: #{_lambda_.26}
  #allocation0 [shape = 'u32[]', space=smem, size = 0x4, offset = 0x4, fixed_abs, tag = 'smem constant byte address 0x4 - core index']
  #allocation1 [shape = 'u32[72,128]{1,0:T(1,128)}', space=vmem, size = 0x9000, scoped, tag = 'internal scratch']
  %s0 = inlined_call_operand.vmem [shape: bf16[8,72], index: 0, kind: input, shape index: {}]
  %s1 = inlined_call_operand.vmem [shape: bf16[72,512], index: 1, kind: input, shape index: {}]
  %s2 = inlined_call_operand.vmem [shape: f32[8,1], index: 2, kind: input, shape index: {}]
  %s3 = inlined_call_operand.vmem [shape: f32[8,512], index: 3, kind: output, shape index: {}]
  %s4 = sld [smem:[#allocation0]]
  $region22: #{_lambda_.26} parent=0
    _
  %s6 = ssub.s32 1, %s4
  %s7 = scalar_select 0, %s6, %s4
  // Predicated region
  $region2: #{_lambda_.26} parent=0 // pred_check
    _
  $region3: #{_lambda_.26} parent=0 // pred_check_branch
    %9 = sbr.rel (0) target = $region5
  $region4: #{_lambda_.26} parent=0 // pred_region
    _
  $region5: #{_lambda_.26} parent=0 // pred_fallthru
    _
  // Predicated region
  $region6: #{_lambda_.26} parent=0 // pred_check
    _
  $region7: #{_lambda_.26} parent=0 // pred_check_branch
    %11 = sbr.rel (0) target = $region9
  $region8: #{_lambda_.26} parent=0 // pred_region
    _
  $region9: #{_lambda_.26} parent=0 // pred_fallthru
    _
  // Predicated region
  $region10: #{_lambda_.26} parent=0 // pred_check
    _
  $region11: #{_lambda_.26} parent=0 // pred_check_branch
    %13 = sbr.rel (0) target = $region13
  $region12: #{_lambda_.26} parent=0 // pred_region
    _
  $region13: #{_lambda_.26} parent=0 // pred_fallthru
    _
  %v15 = vld [vmem:[%s0] sm:$0xf]
  %v16 = vld [vmem:[%s1] sm:$0xff]
  %v17 = vld [vmem:[%s1 + $0x8] sm:$0xff]
  %v18 = vld [vmem:[%s1 + $0x10] sm:$0xff]
  %v19 = vld [vmem:[%s1 + $0x18] sm:$0xff]
  %v20 = vld [vmem:[%s1 + $0x20] sm:$0xff]
  %v21 = vld [vmem:[%s1 + $0x28] sm:$0xff]
  %v22 = vld [vmem:[%s1 + $0x30] sm:$0xff]
  %v23 = vld [vmem:[%s1 + $0x38] sm:$0xff]
  %v24 = vld [vmem:[%s1 + $0x40] sm:$0xff]
  %v25 = vld [vmem:[%s1 + $0x48] sm:$0xff]
  %v26 = vld [vmem:[%s1 + $0x50] sm:$0xff]
  %v27 = vld [vmem:[%s1 + $0x58] sm:$0xff]
  %v28 = vld [vmem:[%s1 + $0x60] sm:$0xff]
  %v29 = vld [vmem:[%s1 + $0x68] sm:$0xff]
  %v30 = vld [vmem:[%s1 + $0x70] sm:$0xff]
  %v31 = vld [vmem:[%s1 + $0x78] sm:$0xff]
  %v32 = vld [vmem:[%s1 + $0x80] sm:$0xff]
  %v33 = vld [vmem:[%s1 + $0x88] sm:$0xff]
  %v34 = vld [vmem:[%s2] sm:$0xff]
  %36 = vset.pattern.permute.xlu0 0
  %37 = vperm.xlu0 %36, %v34
  %v38 = vpop.permute.xlu0 %37
  %v58 = vunpack.c.l.b16 %v16
  %v59 = vunpack.c.h.b16 %v16
  %v60 = vunpack.c.l.b16 %v17
  %v61 = vunpack.c.h.b16 %v17
  %v62 = vunpack.c.l.b16 %v18
  %v63 = vunpack.c.h.b16 %v18
  %v64 = vunpack.c.l.b16 %v19
  %v65 = vunpack.c.h.b16 %v19
  %v66 = vunpack.c.l.b16 %v20
  %v67 = vunpack.c.h.b16 %v20
  %v68 = vunpack.c.l.b16 %v21
  %v69 = vunpack.c.h.b16 %v21
  %v70 = vunpack.c.l.b16 %v22
  %v71 = vunpack.c.h.b16 %v22
  %v72 = vunpack.c.l.b16 %v23
  %v73 = vunpack.c.h.b16 %v23
  %v74 = vunpack.c.l.b16 %v24
  %v75 = vunpack.c.h.b16 %v24
  %v76 = vunpack.c.l.b16 %v25
  %v77 = vunpack.c.h.b16 %v25
  %v78 = vunpack.c.l.b16 %v26
  %v79 = vunpack.c.h.b16 %v26
  %v80 = vunpack.c.l.b16 %v27
  %v81 = vunpack.c.h.b16 %v27
  %v82 = vunpack.c.l.b16 %v28
  %v83 = vunpack.c.h.b16 %v28
  %v84 = vunpack.c.l.b16 %v29
  %v85 = vunpack.c.h.b16 %v29
  %v86 = vunpack.c.l.b16 %v30
  %v87 = vunpack.c.h.b16 %v30
  %v88 = vunpack.c.l.b16 %v31
  %v89 = vunpack.c.h.b16 %v31
  %v90 = vunpack.c.l.b16 %v32
  %v91 = vunpack.c.h.b16 %v32
  %v92 = vunpack.c.l.b16 %v33
  %v93 = vunpack.c.h.b16 %v33
  %v94 = vpack.c.b16 %v62, %v58
  %v95 = vpack.c.b16 %v63, %v59
  %v96 = vpack.c.b16 %v64, %v60
  %v97 = vpack.c.b16 %v65, %v61
  %v98 = vpack.c.b16 %v70, %v66
  %v99 = vpack.c.b16 %v71, %v67
  %v100 = vpack.c.b16 %v72, %v68
  %v101 = vpack.c.b16 %v73, %v69
  %v102 = vpack.c.b16 %v78, %v74
  %v103 = vpack.c.b16 %v79, %v75
  %v104 = vpack.c.b16 %v80, %v76
  %v105 = vpack.c.b16 %v81, %v77
  %v106 = vpack.c.b16 %v86, %v82
  %v107 = vpack.c.b16 %v87, %v83
  %v108 = vpack.c.b16 %v88, %v84
  %v109 = vpack.c.b16 %v89, %v85
  %v110 = vpack.c.b16 %v90, %v90
  %v111 = vpack.c.b16 %v91, %v91
  %v112 = vpack.c.b16 %v92, %v92
  %v113 = vpack.c.b16 %v93, %v93
  %vm130 = vcmask 588800
  %v132 = vsel %vm130, %v15, 0
  %vm134 = vcmask 1043456
  %v136 = vsel %vm134, %v110, 0
  %v139 = vsel %vm134, %v111, 0
  %v142 = vsel %vm134, %v112, 0
  %v145 = vsel %vm134, %v113, 0
  %147 = vmatpush.bf16.msra.mxu0 0
  %148 = vmatpush.bf16.msra.mxu0 0
  %149 = vmatpush.bf16.msra.mxu0 0
  %150 = vmatpush.bf16.msra.mxu0 %v136
  %151 = vmatpush.bf16.msra.mxu0 %v106
  %152 = vmatpush.bf16.msra.mxu0 %v102
  %153 = vmatpush.bf16.msra.mxu0 %v98
  %154 = vmatpush.bf16.msra.mxu0 %v94
  %155 = vmatmul.bf16.gmra.mxu0 %v132
  %v156 = vpop.f32.mrf.mxu0
  %v157 = vadd.f32 %v38, %v156
  %v158 = vpop.f32.mrf.mxu0
  %159 = vdwg.mxu0
  %160 = vmatpush.bf16.msra.mxu0 0
  %161 = vmatpush.bf16.msra.mxu0 0
  %162 = vmatpush.bf16.msra.mxu0 0
  %163 = vmatpush.bf16.msra.mxu0 %v139
  %164 = vmatpush.bf16.msra.mxu0 %v107
  %165 = vmatpush.bf16.msra.mxu0 %v103
  %166 = vmatpush.bf16.msra.mxu0 %v99
  %167 = vmatpush.bf16.msra.mxu0 %v95
  %168 = vmatmul.bf16.gmra.mxu0 %v132
  %v169 = vpop.f32.mrf.mxu0
  %v170 = vadd.f32 %v38, %v169
  %v171 = vpop.f32.mrf.mxu0
  %172 = vdwg.mxu0
  %173 = vmatpush.bf16.msra.mxu0 0
  %174 = vmatpush.bf16.msra.mxu0 0
  %175 = vmatpush.bf16.msra.mxu0 0
  %176 = vmatpush.bf16.msra.mxu0 %v142
  %177 = vmatpush.bf16.msra.mxu0 %v108
  %178 = vmatpush.bf16.msra.mxu0 %v104
  %179 = vmatpush.bf16.msra.mxu0 %v100
  %180 = vmatpush.bf16.msra.mxu0 %v96
  %181 = vmatmul.bf16.gmra.mxu0 %v132
  %v182 = vpop.f32.mrf.mxu0
  %v183 = vadd.f32 %v38, %v182
  %v184 = vpop.f32.mrf.mxu0
  %185 = vdwg.mxu0
  %186 = vmatpush.bf16.msra.mxu0 0
  %187 = vmatpush.bf16.msra.mxu0 0
  %188 = vmatpush.bf16.msra.mxu0 0
  %189 = vmatpush.bf16.msra.mxu0 %v145
  %190 = vmatpush.bf16.msra.mxu0 %v109
  %191 = vmatpush.bf16.msra.mxu0 %v105
  %192 = vmatpush.bf16.msra.mxu0 %v101
  %193 = vmatpush.bf16.msra.mxu0 %v97
  %194 = vmatmul.bf16.gmra.mxu0 %v132
  %v195 = vpop.f32.mrf.mxu0
  %v196 = vadd.f32 %v38, %v195
  %v197 = vpop.f32.mrf.mxu0
  %198 = vdwg.mxu0
  %v199 = vmax.f32 %v157, 0.0
  %v200 = vmax.f32 %v170, 0.0
  %v201 = vmax.f32 %v183, 0.0
  %v202 = vmax.f32 %v196, 0.0
  %203 = vst [vmem:[%s3] sm:$0xff] %v199
  %204 = vst [vmem:[%s3 + $0x8] sm:$0xff] %v200
  %205 = vst [vmem:[%s3 + $0x10] sm:$0xff] %v201
  %206 = vst [vmem:[%s3 + $0x18] sm:$0xff] %v202
  // Predicated region
  $region14: #{_lambda_.26} parent=0 // pred_check
    _
  $region15: #{_lambda_.26} parent=0 // pred_check_branch
    %208 = sbr.rel (0) target = $region17
  $region16: #{_lambda_.26} parent=0 // pred_region
    _
  $region17: #{_lambda_.26} parent=0 // pred_fallthru
    _
  // Predicated region
  $region18: #{_lambda_.26} parent=0 // pred_check
    _
  $region19: #{_lambda_.26} parent=0 // pred_check_branch
    %210 = sbr.rel (0) target = $region21
  $region20: #{_lambda_.26} parent=0 // pred_region
    _
  $region21: #{_lambda_.26} parent=0 // pred_fallthru
    _

// kernel: _lambda_.29
$region0: #{_lambda_.29}
  #allocation0 [shape = 'u32[]', space=smem, size = 0x4, offset = 0x4, fixed_abs, tag = 'smem constant byte address 0x4 - core index']
  #allocation1 [shape = 'u32[72,128]{1,0:T(1,128)}', space=vmem, size = 0x9000, scoped, tag = 'internal scratch']
  %s0 = inlined_call_operand.vmem [shape: bf16[16,72], index: 0, kind: input, shape index: {}]
  %s1 = inlined_call_operand.vmem [shape: bf16[72,512], index: 1, kind: input, shape index: {}]
  %s2 = inlined_call_operand.vmem [shape: f32[16,1], index: 2, kind: input, shape index: {}]
  %s3 = inlined_call_operand.vmem [shape: f32[16,512], index: 3, kind: output, shape index: {}]
  %s4 = sld [smem:[#allocation0]]
  $region22: #{_lambda_.29} parent=0
    _
  %s6 = ssub.s32 1, %s4
  %s7 = scalar_select 0, %s6, %s4
  // Predicated region
  $region2: #{_lambda_.29} parent=0 // pred_check
    _
  $region3: #{_lambda_.29} parent=0 // pred_check_branch
    %9 = sbr.rel (0) target = $region5
  $region4: #{_lambda_.29} parent=0 // pred_region
    _
  $region5: #{_lambda_.29} parent=0 // pred_fallthru
    _
  // Predicated region
  $region6: #{_lambda_.29} parent=0 // pred_check
    _
  $region7: #{_lambda_.29} parent=0 // pred_check_branch
    %11 = sbr.rel (0) target = $region9
  $region8: #{_lambda_.29} parent=0 // pred_region
    _
  $region9: #{_lambda_.29} parent=0 // pred_fallthru
    _
  // Predicated region
  $region10: #{_lambda_.29} parent=0 // pred_check
    _
  $region11: #{_lambda_.29} parent=0 // pred_check_branch
    %13 = sbr.rel (0) target = $region13
  $region12: #{_lambda_.29} parent=0 // pred_region
    _
  $region13: #{_lambda_.29} parent=0 // pred_fallthru
    _
  %v15 = vld [vmem:[%s0] sm:$0xf]
  %v16 = vld [vmem:[%s0 + $0x4] sm:$0xf]
  %v17 = vld [vmem:[%s1] sm:$0xff]
  %v18 = vld [vmem:[%s1 + $0x8] sm:$0xff]
  %v19 = vld [vmem:[%s1 + $0x10] sm:$0xff]
  %v20 = vld [vmem:[%s1 + $0x18] sm:$0xff]
  %v21 = vld [vmem:[%s1 + $0x20] sm:$0xff]
  %v22 = vld [vmem:[%s1 + $0x28] sm:$0xff]
  %v23 = vld [vmem:[%s1 + $0x30] sm:$0xff]
  %v24 = vld [vmem:[%s1 + $0x38] sm:$0xff]
  %v25 = vld [vmem:[%s1 + $0x40] sm:$0xff]
  %v26 = vld [vmem:[%s1 + $0x48] sm:$0xff]
  %v27 = vld [vmem:[%s1 + $0x50] sm:$0xff]
  %v28 = vld [vmem:[%s1 + $0x58] sm:$0xff]
  %v29 = vld [vmem:[%s1 + $0x60] sm:$0xff]
  %v30 = vld [vmem:[%s1 + $0x68] sm:$0xff]
  %v31 = vld [vmem:[%s1 + $0x70] sm:$0xff]
  %v32 = vld [vmem:[%s1 + $0x78] sm:$0xff]
  %v33 = vld [vmem:[%s1 + $0x80] sm:$0xff]
  %v34 = vld [vmem:[%s1 + $0x88] sm:$0xff]
  %v35 = vld [vmem:[%s2] sm:$0xff]
  %v36 = vld [vmem:[%s2 + $0x8] sm:$0xff]
  %38 = vset.pattern.permute.xlu0 0
  %39 = vperm.xlu0 %38, %v35
  %v40 = vpop.permute.xlu0 %39
  %43 = vset.pattern.permute.xlu0 0
  %44 = vperm.xlu0 %43, %v36
  %v45 = vpop.permute.xlu0 %44
  %v49 = vunpack.c.l.b16 %v15
  %v50 = vunpack.c.l.b16 %v16
  %v51 = vpack.c.b16 %v50, %v49
  %v70 = vunpack.c.l.b16 %v17
  %v71 = vunpack.c.h.b16 %v17
  %v72 = vunpack.c.l.b16 %v18
  %v73 = vunpack.c.h.b16 %v18
  %v74 = vunpack.c.l.b16 %v19
  %v75 = vunpack.c.h.b16 %v19
  %v76 = vunpack.c.l.b16 %v20
  %v77 = vunpack.c.h.b16 %v20
  %v78 = vunpack.c.l.b16 %v21
  %v79 = vunpack.c.h.b16 %v21
  %v80 = vunpack.c.l.b16 %v22
  %v81 = vunpack.c.h.b16 %v22
  %v82 = vunpack.c.l.b16 %v23
  %v83 = vunpack.c.h.b16 %v23
  %v84 = vunpack.c.l.b16 %v24
  %v85 = vunpack.c.h.b16 %v24
  %v86 = vunpack.c.l.b16 %v25
  %v87 = vunpack.c.h.b16 %v25
  %v88 = vunpack.c.l.b16 %v26
  %v89 = vunpack.c.h.b16 %v26
  %v90 = vunpack.c.l.b16 %v27
  %v91 = vunpack.c.h.b16 %v27
  %v92 = vunpack.c.l.b16 %v28
  %v93 = vunpack.c.h.b16 %v28
  %v94 = vunpack.c.l.b16 %v29
  %v95 = vunpack.c.h.b16 %v29
  %v96 = vunpack.c.l.b16 %v30
  %v97 = vunpack.c.h.b16 %v30
  %v98 = vunpack.c.l.b16 %v31
  %v99 = vunpack.c.h.b16 %v31
  %v100 = vunpack.c.l.b16 %v32
  %v101 = vunpack.c.h.b16 %v32
  %v102 = vunpack.c.l.b16 %v33
  %v103 = vunpack.c.h.b16 %v33
  %v104 = vunpack.c.l.b16 %v34
  %v105 = vunpack.c.h.b16 %v34
  %v106 = vpack.c.b16 %v74, %v70
  %v107 = vpack.c.b16 %v75, %v71
  %v108 = vpack.c.b16 %v76, %v72
  %v109 = vpack.c.b16 %v77, %v73
  %v110 = vpack.c.b16 %v82, %v78
  %v111 = vpack.c.b16 %v83, %v79
  %v112 = vpack.c.b16 %v84, %v80
  %v113 = vpack.c.b16 %v85, %v81
  %v114 = vpack.c.b16 %v90, %v86
  %v115 = vpack.c.b16 %v91, %v87
  %v116 = vpack.c.b16 %v92, %v88
  %v117 = vpack.c.b16 %v93, %v89
  %v118 = vpack.c.b16 %v98, %v94
  %v119 = vpack.c.b16 %v99, %v95
  %v120 = vpack.c.b16 %v100, %v96
  %v121 = vpack.c.b16 %v101, %v97
  %v122 = vpack.c.b16 %v102, %v102
  %v123 = vpack.c.b16 %v103, %v103
  %v124 = vpack.c.b16 %v104, %v104
  %v125 = vpack.c.b16 %v105, %v105
  %vm142 = vcmask 588800
  %v144 = vsel %vm142, %v51, 0
  %vm146 = vcmask 1043456
  %v148 = vsel %vm146, %v122, 0
  %v151 = vsel %vm146, %v123, 0
  %v154 = vsel %vm146, %v124, 0
  %v157 = vsel %vm146, %v125, 0
  %159 = vmatpush.bf16.msra.mxu0 0
  %160 = vmatpush.bf16.msra.mxu0 0
  %161 = vmatpush.bf16.msra.mxu0 0
  %162 = vmatpush.bf16.msra.mxu0 %v148
  %163 = vmatpush.bf16.msra.mxu0 %v118
  %164 = vmatpush.bf16.msra.mxu0 %v114
  %165 = vmatpush.bf16.msra.mxu0 %v110
  %166 = vmatpush.bf16.msra.mxu0 %v106
  %167 = vmatmul.bf16.gmra.mxu0 %v144
  %v168 = vpop.f32.mrf.mxu0
  %v169 = vadd.f32 %v40, %v168
  %v170 = vpop.f32.mrf.mxu0
  %v171 = vadd.f32 %v45, %v170
  %172 = vdwg.mxu0
  %173 = vmatpush.bf16.msra.mxu0 0
  %174 = vmatpush.bf16.msra.mxu0 0
  %175 = vmatpush.bf16.msra.mxu0 0
  %176 = vmatpush.bf16.msra.mxu0 %v151
  %177 = vmatpush.bf16.msra.mxu0 %v119
  %178 = vmatpush.bf16.msra.mxu0 %v115
  %179 = vmatpush.bf16.msra.mxu0 %v111
  %180 = vmatpush.bf16.msra.mxu0 %v107
  %181 = vmatmul.bf16.gmra.mxu0 %v144
  %v182 = vpop.f32.mrf.mxu0
  %v183 = vadd.f32 %v40, %v182
  %v184 = vpop.f32.mrf.mxu0
  %v185 = vadd.f32 %v45, %v184
  %186 = vdwg.mxu0
  %187 = vmatpush.bf16.msra.mxu0 0
  %188 = vmatpush.bf16.msra.mxu0 0
  %189 = vmatpush.bf16.msra.mxu0 0
  %190 = vmatpush.bf16.msra.mxu0 %v154
  %191 = vmatpush.bf16.msra.mxu0 %v120
  %192 = vmatpush.bf16.msra.mxu0 %v116
  %193 = vmatpush.bf16.msra.mxu0 %v112
  %194 = vmatpush.bf16.msra.mxu0 %v108
  %195 = vmatmul.bf16.gmra.mxu0 %v144
  %v196 = vpop.f32.mrf.mxu0
  %v197 = vadd.f32 %v40, %v196
  %v198 = vpop.f32.mrf.mxu0
  %v199 = vadd.f32 %v45, %v198
  %200 = vdwg.mxu0
  %201 = vmatpush.bf16.msra.mxu0 0
  %202 = vmatpush.bf16.msra.mxu0 0
  %203 = vmatpush.bf16.msra.mxu0 0
  %204 = vmatpush.bf16.msra.mxu0 %v157
  %205 = vmatpush.bf16.msra.mxu0 %v121
  %206 = vmatpush.bf16.msra.mxu0 %v117
  %207 = vmatpush.bf16.msra.mxu0 %v113
  %208 = vmatpush.bf16.msra.mxu0 %v109
  %209 = vmatmul.bf16.gmra.mxu0 %v144
  %v210 = vpop.f32.mrf.mxu0
  %v211 = vadd.f32 %v40, %v210
  %v212 = vpop.f32.mrf.mxu0
  %v213 = vadd.f32 %v45, %v212
  %214 = vdwg.mxu0
  %v215 = vmax.f32 %v169, 0.0
  %v216 = vmax.f32 %v183, 0.0
  %v217 = vmax.f32 %v197, 0.0
  %v218 = vmax.f32 %v211, 0.0
  %v219 = vmax.f32 %v171, 0.0
  %v220 = vmax.f32 %v185, 0.0
  %v221 = vmax.f32 %v199, 0.0
  %v222 = vmax.f32 %v213, 0.0
  %223 = vst [vmem:[%s3] sm:$0xff] %v215
  %224 = vst [vmem:[%s3 + $0x8] sm:$0xff] %v216
  %225 = vst [vmem:[%s3 + $0x10] sm:$0xff] %v217
  %226 = vst [vmem:[%s3 + $0x18] sm:$0xff] %v218
  %227 = vst [vmem:[%s3 + $0x20] sm:$0xff] %v219
  %228 = vst [vmem:[%s3 + $0x28] sm:$0xff] %v220
  %229 = vst [vmem:[%s3 + $0x30] sm:$0xff] %v221
  %230 = vst [vmem:[%s3 + $0x38] sm:$0xff] %v222
  // Predicated region
  $region14: #{_lambda_.29} parent=0 // pred_check
    _
  $region15: #{_lambda_.29} parent=0 // pred_check_branch
    %232 = sbr.rel (0) target = $region17
  $region16: #{_lambda_.29} parent=0 // pred_region
    _
  $region17: #{_lambda_.29} parent=0 // pred_fallthru
    _
  // Predicated region
  $region18: #{_lambda_.29} parent=0 // pred_check
    _
  $region19: #{_lambda_.29} parent=0 // pred_check_branch
    %234 = sbr.rel (0) target = $region21
  $region20: #{_lambda_.29} parent=0 // pred_region
    _
  $region21: #{_lambda_.29} parent=0 // pred_fallthru
    _

// kernel: _lambda_.30
$region0: #{_lambda_.30}
  #allocation0 [shape = 'u32[]', space=smem, size = 0x4, offset = 0x4, fixed_abs, tag = 'smem constant byte address 0x4 - core index']
  #allocation1 [shape = 'u32[72,128]{1,0:T(1,128)}', space=vmem, size = 0x9000, scoped, tag = 'internal scratch']
  %s0 = inlined_call_operand.vmem [shape: bf16[16,144], index: 0, kind: input, shape index: {}]
  %s1 = inlined_call_operand.vmem [shape: bf16[144,512], index: 1, kind: input, shape index: {}]
  %s2 = inlined_call_operand.vmem [shape: f32[16,1], index: 2, kind: input, shape index: {}]
  %s3 = inlined_call_operand.vmem [shape: f32[16,512], index: 3, kind: output, shape index: {}]
  %s4 = sld [smem:[#allocation0]]
  $region22: #{_lambda_.30} parent=0
    _
  %s6 = ssub.s32 1, %s4
  %s7 = scalar_select 0, %s6, %s4
  // Predicated region
  $region2: #{_lambda_.30} parent=0 // pred_check
    _
  $region3: #{_lambda_.30} parent=0 // pred_check_branch
    %9 = sbr.rel (0) target = $region5
  $region4: #{_lambda_.30} parent=0 // pred_region
    _
  $region5: #{_lambda_.30} parent=0 // pred_fallthru
    _
  // Predicated region
  $region6: #{_lambda_.30} parent=0 // pred_check
    _
  $region7: #{_lambda_.30} parent=0 // pred_check_branch
    %11 = sbr.rel (0) target = $region9
  $region8: #{_lambda_.30} parent=0 // pred_region
    _
  $region9: #{_lambda_.30} parent=0 // pred_fallthru
    _
  // Predicated region
  $region10: #{_lambda_.30} parent=0 // pred_check
    _
  $region11: #{_lambda_.30} parent=0 // pred_check_branch
    %13 = sbr.rel (0) target = $region13
  $region12: #{_lambda_.30} parent=0 // pred_region
    _
  $region13: #{_lambda_.30} parent=0 // pred_fallthru
    _
  %v15 = vld [vmem:[%s0] sm:$0xff]
  %v16 = vld [vmem:[%s0 + $0x8] sm:$0xff]
  %v17 = vld [vmem:[%s1] sm:$0xff]
  %v18 = vld [vmem:[%s1 + $0x8] sm:$0xff]
  %v19 = vld [vmem:[%s1 + $0x10] sm:$0xff]
  %v20 = vld [vmem:[%s1 + $0x18] sm:$0xff]
  %v21 = vld [vmem:[%s1 + $0x20] sm:$0xff]
  %v22 = vld [vmem:[%s1 + $0x28] sm:$0xff]
  %v23 = vld [vmem:[%s1 + $0x30] sm:$0xff]
  %v24 = vld [vmem:[%s1 + $0x38] sm:$0xff]
  %v25 = vld [vmem:[%s1 + $0x40] sm:$0xff]
  %v26 = vld [vmem:[%s1 + $0x48] sm:$0xff]
  %v27 = vld [vmem:[%s1 + $0x50] sm:$0xff]
  %v28 = vld [vmem:[%s1 + $0x58] sm:$0xff]
  %v29 = vld [vmem:[%s1 + $0x60] sm:$0xff]
  %v30 = vld [vmem:[%s1 + $0x68] sm:$0xff]
  %v31 = vld [vmem:[%s1 + $0x70] sm:$0xff]
  %v32 = vld [vmem:[%s1 + $0x78] sm:$0xff]
  %v33 = vld [vmem:[%s1 + $0x80] sm:$0xff]
  %v34 = vld [vmem:[%s1 + $0x88] sm:$0xff]
  %v35 = vld [vmem:[%s1 + $0x90] sm:$0xff]
  %v36 = vld [vmem:[%s1 + $0x98] sm:$0xff]
  %v37 = vld [vmem:[%s1 + $0xa0] sm:$0xff]
  %v38 = vld [vmem:[%s1 + $0xa8] sm:$0xff]
  %v39 = vld [vmem:[%s1 + $0xb0] sm:$0xff]
  %v40 = vld [vmem:[%s1 + $0xb8] sm:$0xff]
  %v41 = vld [vmem:[%s1 + $0xc0] sm:$0xff]
  %v42 = vld [vmem:[%s1 + $0xc8] sm:$0xff]
  %v43 = vld [vmem:[%s1 + $0xd0] sm:$0xff]
  %v44 = vld [vmem:[%s1 + $0xd8] sm:$0xff]
  %v45 = vld [vmem:[%s1 + $0xe0] sm:$0xff]
  %v46 = vld [vmem:[%s1 + $0xe8] sm:$0xff]
  %v47 = vld [vmem:[%s1 + $0xf0] sm:$0xff]
  %v48 = vld [vmem:[%s1 + $0xf8] sm:$0xff]
  %v49 = vld [vmem:[%s1 + $0x100] sm:$0xff]
  %v50 = vld [vmem:[%s1 + $0x108] sm:$0xff]
  %v51 = vld [vmem:[%s1 + $0x110] sm:$0xff]
  %v52 = vld [vmem:[%s1 + $0x118] sm:$0xff]
  %v53 = vld [vmem:[%s2] sm:$0xff]
  %v54 = vld [vmem:[%s2 + $0x8] sm:$0xff]
  %56 = vset.pattern.permute.xlu0 0
  %57 = vperm.xlu0 %56, %v53
  %v58 = vpop.permute.xlu0 %57
  %61 = vset.pattern.permute.xlu0 0
  %62 = vperm.xlu0 %61, %v54
  %v63 = vpop.permute.xlu0 %62
  %v67 = vunpack.c.l.b16 %v15
  %v68 = vunpack.c.h.b16 %v15
  %v69 = vunpack.c.l.b16 %v16
  %v70 = vunpack.c.h.b16 %v16
  %v71 = vpack.c.b16 %v69, %v67
  %v72 = vpack.c.b16 %v70, %v68
  %v110 = vunpack.c.l.b16 %v17
  %v111 = vunpack.c.h.b16 %v17
  %v112 = vunpack.c.l.b16 %v18
  %v113 = vunpack.c.h.b16 %v18
  %v114 = vunpack.c.l.b16 %v19
  %v115 = vunpack.c.h.b16 %v19
  %v116 = vunpack.c.l.b16 %v20
  %v117 = vunpack.c.h.b16 %v20
  %v118 = vunpack.c.l.b16 %v21
  %v119 = vunpack.c.h.b16 %v21
  %v120 = vunpack.c.l.b16 %v22
  %v121 = vunpack.c.h.b16 %v22
  %v122 = vunpack.c.l.b16 %v23
  %v123 = vunpack.c.h.b16 %v23
  %v124 = vunpack.c.l.b16 %v24
  %v125 = vunpack.c.h.b16 %v24
  %v126 = vunpack.c.l.b16 %v25
  %v127 = vunpack.c.h.b16 %v25
  %v128 = vunpack.c.l.b16 %v26
  %v129 = vunpack.c.h.b16 %v26
  %v130 = vunpack.c.l.b16 %v27
  %v131 = vunpack.c.h.b16 %v27
  %v132 = vunpack.c.l.b16 %v28
  %v133 = vunpack.c.h.b16 %v28
  %v134 = vunpack.c.l.b16 %v29
  %v135 = vunpack.c.h.b16 %v29
  %v136 = vunpack.c.l.b16 %v30
  %v137 = vunpack.c.h.b16 %v30
  %v138 = vunpack.c.l.b16 %v31
  %v139 = vunpack.c.h.b16 %v31
  %v140 = vunpack.c.l.b16 %v32
  %v141 = vunpack.c.h.b16 %v32
  %v142 = vunpack.c.l.b16 %v33
  %v143 = vunpack.c.h.b16 %v33
  %v144 = vunpack.c.l.b16 %v34
  %v145 = vunpack.c.h.b16 %v34
  %v146 = vunpack.c.l.b16 %v35
  %v147 = vunpack.c.h.b16 %v35
  %v148 = vunpack.c.l.b16 %v36
  %v149 = vunpack.c.h.b16 %v36
  %v150 = vunpack.c.l.b16 %v37
  %v151 = vunpack.c.h.b16 %v37
  %v152 = vunpack.c.l.b16 %v38
  %v153 = vunpack.c.h.b16 %v38
  %v154 = vunpack.c.l.b16 %v39
  %v155 = vunpack.c.h.b16 %v39
  %v156 = vunpack.c.l.b16 %v40
  %v157 = vunpack.c.h.b16 %v40
  %v158 = vunpack.c.l.b16 %v41
  %v159 = vunpack.c.h.b16 %v41
  %v160 = vunpack.c.l.b16 %v42
  %v161 = vunpack.c.h.b16 %v42
  %v162 = vunpack.c.l.b16 %v43
  %v163 = vunpack.c.h.b16 %v43
  %v164 = vunpack.c.l.b16 %v44
  %v165 = vunpack.c.h.b16 %v44
  %v166 = vunpack.c.l.b16 %v45
  %v167 = vunpack.c.h.b16 %v45
  %v168 = vunpack.c.l.b16 %v46
  %v169 = vunpack.c.h.b16 %v46
  %v170 = vunpack.c.l.b16 %v47
  %v171 = vunpack.c.h.b16 %v47
  %v172 = vunpack.c.l.b16 %v48
  %v173 = vunpack.c.h.b16 %v48
  %v174 = vunpack.c.l.b16 %v49
  %v175 = vunpack.c.h.b16 %v49
  %v176 = vunpack.c.l.b16 %v50
  %v177 = vunpack.c.h.b16 %v50
  %v178 = vunpack.c.l.b16 %v51
  %v179 = vunpack.c.h.b16 %v51
  %v180 = vunpack.c.l.b16 %v52
  %v181 = vunpack.c.h.b16 %v52
  %v182 = vpack.c.b16 %v114, %v110
  %v183 = vpack.c.b16 %v115, %v111
  %v184 = vpack.c.b16 %v116, %v112
  %v185 = vpack.c.b16 %v117, %v113
  %v186 = vpack.c.b16 %v122, %v118
  %v187 = vpack.c.b16 %v123, %v119
  %v188 = vpack.c.b16 %v124, %v120
  %v189 = vpack.c.b16 %v125, %v121
  %v190 = vpack.c.b16 %v130, %v126
  %v191 = vpack.c.b16 %v131, %v127
  %v192 = vpack.c.b16 %v132, %v128
  %v193 = vpack.c.b16 %v133, %v129
  %v194 = vpack.c.b16 %v138, %v134
  %v195 = vpack.c.b16 %v139, %v135
  %v196 = vpack.c.b16 %v140, %v136
  %v197 = vpack.c.b16 %v141, %v137
  %v198 = vpack.c.b16 %v146, %v142
  %v199 = vpack.c.b16 %v147, %v143
  %v200 = vpack.c.b16 %v148, %v144
  %v201 = vpack.c.b16 %v149, %v145
  %v202 = vpack.c.b16 %v154, %v150
  %v203 = vpack.c.b16 %v155, %v151
  %v204 = vpack.c.b16 %v156, %v152
  %v205 = vpack.c.b16 %v157, %v153
  %v206 = vpack.c.b16 %v162, %v158
  %v207 = vpack.c.b16 %v163, %v159
  %v208 = vpack.c.b16 %v164, %v160
  %v209 = vpack.c.b16 %v165, %v161
  %v210 = vpack.c.b16 %v170, %v166
  %v211 = vpack.c.b16 %v171, %v167
  %v212 = vpack.c.b16 %v172, %v168
  %v213 = vpack.c.b16 %v173, %v169
  %v214 = vpack.c.b16 %v178, %v174
  %v215 = vpack.c.b16 %v179, %v175
  %v216 = vpack.c.b16 %v180, %v176
  %v217 = vpack.c.b16 %v181, %v177
  %vm254 = vcmask 130048
  %v256 = vsel %vm254, %v72, 0
  %258 = vmatpush.bf16.msra.mxu0 %v210
  %259 = vmatpush.bf16.msra.mxu0 %v206
  %260 = vmatpush.bf16.msra.mxu0 %v202
  %261 = vmatpush.bf16.msra.mxu0 %v198
  %262 = vmatpush.bf16.msra.mxu0 %v194
  %263 = vmatpush.bf16.msra.mxu0 %v190
  %264 = vmatpush.bf16.msra.mxu0 %v186
  %265 = vmatpush.bf16.msra.mxu0 %v182
  %266 = vmatmul.bf16.gmra.mxu0 %v71
  %v267 = vpop.f32.mrf.mxu0
  %v268 = vadd.f32 %v58, %v267
  %v269 = vpop.f32.mrf.mxu0
  %v270 = vadd.f32 %v63, %v269
  %271 = vdwg.mxu0
  %272 = vmatpush.bf16.msra.mxu0 0
  %273 = vmatpush.bf16.msra.mxu0 0
  %274 = vmatpush.bf16.msra.mxu0 0
  %275 = vmatpush.bf16.msra.mxu0 0
  %276 = vmatpush.bf16.msra.mxu0 0
  %277 = vmatpush.bf16.msra.mxu0 0
  %278 = vmatpush.bf16.msra.mxu0 0
  %279 = vmatpush.bf16.msra.mxu0 %v214
  %280 = vmatmul.bf16.gmra.mxu0 %v256
  %v281 = vpop.f32.mrf.mxu0
  %v282 = vadd.f32 %v268, %v281
  %v283 = vpop.f32.mrf.mxu0
  %v284 = vadd.f32 %v270, %v283
  %285 = vdwg.mxu0
  %286 = vmatpush.bf16.msra.mxu0 %v211
  %287 = vmatpush.bf16.msra.mxu0 %v207
  %288 = vmatpush.bf16.msra.mxu0 %v203
  %289 = vmatpush.bf16.msra.mxu0 %v199
  %290 = vmatpush.bf16.msra.mxu0 %v195
  %291 = vmatpush.bf16.msra.mxu0 %v191
  %292 = vmatpush.bf16.msra.mxu0 %v187
  %293 = vmatpush.bf16.msra.mxu0 %v183
  %294 = vmatmul.bf16.gmra.mxu0 %v71
  %v295 = vpop.f32.mrf.mxu0
  %v296 = vadd.f32 %v58, %v295
  %v297 = vpop.f32.mrf.mxu0
  %v298 = vadd.f32 %v63, %v297
  %299 = vdwg.mxu0
  %300 = vmatpush.bf16.msra.mxu0 0
  %301 = vmatpush.bf16.msra.mxu0 0
  %302 = vmatpush.bf16.msra.mxu0 0
  %303 = vmatpush.bf16.msra.mxu0 0
  %304 = vmatpush.bf16.msra.mxu0 0
  %305 = vmatpush.bf16.msra.mxu0 0
  %306 = vmatpush.bf16.msra.mxu0 0
  %307 = vmatpush.bf16.msra.mxu0 %v215
  %308 = vmatmul.bf16.gmra.mxu0 %v256
  %v309 = vpop.f32.mrf.mxu0
  %v310 = vadd.f32 %v296, %v309
  %v311 = vpop.f32.mrf.mxu0
  %v312 = vadd.f32 %v298, %v311
  %313 = vdwg.mxu0
  %314 = vmatpush.bf16.msra.mxu0 %v212
  %315 = vmatpush.bf16.msra.mxu0 %v208
  %316 = vmatpush.bf16.msra.mxu0 %v204
  %317 = vmatpush.bf16.msra.mxu0 %v200
  %318 = vmatpush.bf16.msra.mxu0 %v196
  %319 = vmatpush.bf16.msra.mxu0 %v192
  %320 = vmatpush.bf16.msra.mxu0 %v188
  %321 = vmatpush.bf16.msra.mxu0 %v184
  %322 = vmatmul.bf16.gmra.mxu0 %v71
  %v323 = vpop.f32.mrf.mxu0
  %v324 = vadd.f32 %v58, %v323
  %v325 = vpop.f32.mrf.mxu0
  %v326 = vadd.f32 %v63, %v325
  %327 = vdwg.mxu0
  %328 = vmatpush.bf16.msra.mxu0 0
  %329 = vmatpush.bf16.msra.mxu0 0
  %330 = vmatpush.bf16.msra.mxu0 0
  %331 = vmatpush.bf16.msra.mxu0 0
  %332 = vmatpush.bf16.msra.mxu0 0
  %333 = vmatpush.bf16.msra.mxu0 0
  %334 = vmatpush.bf16.msra.mxu0 0
  %335 = vmatpush.bf16.msra.mxu0 %v216
  %336 = vmatmul.bf16.gmra.mxu0 %v256
  %v337 = vpop.f32.mrf.mxu0
  %v338 = vadd.f32 %v324, %v337
  %v339 = vpop.f32.mrf.mxu0
  %v340 = vadd.f32 %v326, %v339
  %341 = vdwg.mxu0
  %342 = vmatpush.bf16.msra.mxu0 %v213
  %343 = vmatpush.bf16.msra.mxu0 %v209
  %344 = vmatpush.bf16.msra.mxu0 %v205
  %345 = vmatpush.bf16.msra.mxu0 %v201
  %346 = vmatpush.bf16.msra.mxu0 %v197
  %347 = vmatpush.bf16.msra.mxu0 %v193
  %348 = vmatpush.bf16.msra.mxu0 %v189
  %349 = vmatpush.bf16.msra.mxu0 %v185
  %350 = vmatmul.bf16.gmra.mxu0 %v71
  %v351 = vpop.f32.mrf.mxu0
  %v352 = vadd.f32 %v58, %v351
  %v353 = vpop.f32.mrf.mxu0
  %v354 = vadd.f32 %v63, %v353
  %355 = vdwg.mxu0
  %356 = vmatpush.bf16.msra.mxu0 0
  %357 = vmatpush.bf16.msra.mxu0 0
  %358 = vmatpush.bf16.msra.mxu0 0
  %359 = vmatpush.bf16.msra.mxu0 0
  %360 = vmatpush.bf16.msra.mxu0 0
  %361 = vmatpush.bf16.msra.mxu0 0
  %362 = vmatpush.bf16.msra.mxu0 0
  %363 = vmatpush.bf16.msra.mxu0 %v217
  %364 = vmatmul.bf16.gmra.mxu0 %v256
  %v365 = vpop.f32.mrf.mxu0
  %v366 = vadd.f32 %v352, %v365
  %v367 = vpop.f32.mrf.mxu0
  %v368 = vadd.f32 %v354, %v367
  %369 = vdwg.mxu0
  %v370 = vmax.f32 %v282, 0.0
  %v371 = vmax.f32 %v310, 0.0
  %v372 = vmax.f32 %v338, 0.0
  %v373 = vmax.f32 %v366, 0.0
  %v374 = vmax.f32 %v284, 0.0
  %v375 = vmax.f32 %v312, 0.0
  %v376 = vmax.f32 %v340, 0.0
  %v377 = vmax.f32 %v368, 0.0
  %378 = vst [vmem:[%s3] sm:$0xff] %v370
  %379 = vst [vmem:[%s3 + $0x8] sm:$0xff] %v371
  %380 = vst [vmem:[%s3 + $0x10] sm:$0xff] %v372
  %381 = vst [vmem:[%s3 + $0x18] sm:$0xff] %v373
  %382 = vst [vmem:[%s3 + $0x20] sm:$0xff] %v374
  %383 = vst [vmem:[%s3 + $0x28] sm:$0xff] %v375
  %384 = vst [vmem:[%s3 + $0x30] sm:$0xff] %v376
  %385 = vst [vmem:[%s3 + $0x38] sm:$0xff] %v377
  // Predicated region
  $region14: #{_lambda_.30} parent=0 // pred_check
    _
  $region15: #{_lambda_.30} parent=0 // pred_check_branch
    %387 = sbr.rel (0) target = $region17
  $region16: #{_lambda_.30} parent=0 // pred_region
    _
  $region17: #{_lambda_.30} parent=0 // pred_fallthru
    _
  // Predicated region
  $region18: #{_lambda_.30} parent=0 // pred_check
    _
  $region19: #{_lambda_.30} parent=0 // pred_check_branch
    %389 = sbr.rel (0) target = $region21
  $region20: #{_lambda_.30} parent=0 // pred_region
    _
  $region21: #{_lambda_.30} parent=0 // pred_fallthru
    _

// kernel: _lambda_.45
$region0: #{_lambda_.45}
  #allocation0 [shape = 'u32[]', space=smem, size = 0x4, offset = 0x4, fixed_abs, tag = 'smem constant byte address 0x4 - core index']
  #allocation1 [shape = 'u32[72,128]{1,0:T(1,128)}', space=vmem, size = 0x9000, scoped, tag = 'internal scratch']
  %s0 = inlined_call_operand.vmem [shape: bf16[8,144], index: 0, kind: input, shape index: {}]
  %s1 = inlined_call_operand.vmem [shape: bf16[144,512], index: 1, kind: input, shape index: {}]
  %s2 = inlined_call_operand.vmem [shape: f32[8,1], index: 2, kind: input, shape index: {}]
  %s3 = inlined_call_operand.vmem [shape: f32[8,512], index: 3, kind: output, shape index: {}]
  %s4 = sld [smem:[#allocation0]]
  $region22: #{_lambda_.45} parent=0
    _
  %s6 = ssub.s32 1, %s4
  %s7 = scalar_select 0, %s6, %s4
  // Predicated region
  $region2: #{_lambda_.45} parent=0 // pred_check
    _
  $region3: #{_lambda_.45} parent=0 // pred_check_branch
    %9 = sbr.rel (0) target = $region5
  $region4: #{_lambda_.45} parent=0 // pred_region
    _
  $region5: #{_lambda_.45} parent=0 // pred_fallthru
    _
  // Predicated region
  $region6: #{_lambda_.45} parent=0 // pred_check
    _
  $region7: #{_lambda_.45} parent=0 // pred_check_branch
    %11 = sbr.rel (0) target = $region9
  $region8: #{_lambda_.45} parent=0 // pred_region
    _
  $region9: #{_lambda_.45} parent=0 // pred_fallthru
    _
  // Predicated region
  $region10: #{_lambda_.45} parent=0 // pred_check
    _
  $region11: #{_lambda_.45} parent=0 // pred_check_branch
    %13 = sbr.rel (0) target = $region13
  $region12: #{_lambda_.45} parent=0 // pred_region
    _
  $region13: #{_lambda_.45} parent=0 // pred_fallthru
    _
  %v15 = vld [vmem:[%s0] sm:$0xff]
  %v16 = vld [vmem:[%s1] sm:$0xff]
  %v17 = vld [vmem:[%s1 + $0x8] sm:$0xff]
  %v18 = vld [vmem:[%s1 + $0x10] sm:$0xff]
  %v19 = vld [vmem:[%s1 + $0x18] sm:$0xff]
  %v20 = vld [vmem:[%s1 + $0x20] sm:$0xff]
  %v21 = vld [vmem:[%s1 + $0x28] sm:$0xff]
  %v22 = vld [vmem:[%s1 + $0x30] sm:$0xff]
  %v23 = vld [vmem:[%s1 + $0x38] sm:$0xff]
  %v24 = vld [vmem:[%s1 + $0x40] sm:$0xff]
  %v25 = vld [vmem:[%s1 + $0x48] sm:$0xff]
  %v26 = vld [vmem:[%s1 + $0x50] sm:$0xff]
  %v27 = vld [vmem:[%s1 + $0x58] sm:$0xff]
  %v28 = vld [vmem:[%s1 + $0x60] sm:$0xff]
  %v29 = vld [vmem:[%s1 + $0x68] sm:$0xff]
  %v30 = vld [vmem:[%s1 + $0x70] sm:$0xff]
  %v31 = vld [vmem:[%s1 + $0x78] sm:$0xff]
  %v32 = vld [vmem:[%s1 + $0x80] sm:$0xff]
  %v33 = vld [vmem:[%s1 + $0x88] sm:$0xff]
  %v34 = vld [vmem:[%s1 + $0x90] sm:$0xff]
  %v35 = vld [vmem:[%s1 + $0x98] sm:$0xff]
  %v36 = vld [vmem:[%s1 + $0xa0] sm:$0xff]
  %v37 = vld [vmem:[%s1 + $0xa8] sm:$0xff]
  %v38 = vld [vmem:[%s1 + $0xb0] sm:$0xff]
  %v39 = vld [vmem:[%s1 + $0xb8] sm:$0xff]
  %v40 = vld [vmem:[%s1 + $0xc0] sm:$0xff]
  %v41 = vld [vmem:[%s1 + $0xc8] sm:$0xff]
  %v42 = vld [vmem:[%s1 + $0xd0] sm:$0xff]
  %v43 = vld [vmem:[%s1 + $0xd8] sm:$0xff]
  %v44 = vld [vmem:[%s1 + $0xe0] sm:$0xff]
  %v45 = vld [vmem:[%s1 + $0xe8] sm:$0xff]
  %v46 = vld [vmem:[%s1 + $0xf0] sm:$0xff]
  %v47 = vld [vmem:[%s1 + $0xf8] sm:$0xff]
  %v48 = vld [vmem:[%s1 + $0x100] sm:$0xff]
  %v49 = vld [vmem:[%s1 + $0x108] sm:$0xff]
  %v50 = vld [vmem:[%s1 + $0x110] sm:$0xff]
  %v51 = vld [vmem:[%s1 + $0x118] sm:$0xff]
  %v52 = vld [vmem:[%s2] sm:$0xff]
  %54 = vset.pattern.permute.xlu0 0
  %55 = vperm.xlu0 %54, %v52
  %v56 = vpop.permute.xlu0 %55
  %v59 = vunpack.c.l.b16 %v15
  %v60 = vunpack.c.h.b16 %v15
  %v61 = vpack.c.b16 %v59, %v59
  %v62 = vpack.c.b16 %v60, %v60
  %v100 = vunpack.c.l.b16 %v16
  %v101 = vunpack.c.h.b16 %v16
  %v102 = vunpack.c.l.b16 %v17
  %v103 = vunpack.c.h.b16 %v17
  %v104 = vunpack.c.l.b16 %v18
  %v105 = vunpack.c.h.b16 %v18
  %v106 = vunpack.c.l.b16 %v19
  %v107 = vunpack.c.h.b16 %v19
  %v108 = vunpack.c.l.b16 %v20
  %v109 = vunpack.c.h.b16 %v20
  %v110 = vunpack.c.l.b16 %v21
  %v111 = vunpack.c.h.b16 %v21
  %v112 = vunpack.c.l.b16 %v22
  %v113 = vunpack.c.h.b16 %v22
  %v114 = vunpack.c.l.b16 %v23
  %v115 = vunpack.c.h.b16 %v23
  %v116 = vunpack.c.l.b16 %v24
  %v117 = vunpack.c.h.b16 %v24
  %v118 = vunpack.c.l.b16 %v25
  %v119 = vunpack.c.h.b16 %v25
  %v120 = vunpack.c.l.b16 %v26
  %v121 = vunpack.c.h.b16 %v26
  %v122 = vunpack.c.l.b16 %v27
  %v123 = vunpack.c.h.b16 %v27
  %v124 = vunpack.c.l.b16 %v28
  %v125 = vunpack.c.h.b16 %v28
  %v126 = vunpack.c.l.b16 %v29
  %v127 = vunpack.c.h.b16 %v29
  %v128 = vunpack.c.l.b16 %v30
  %v129 = vunpack.c.h.b16 %v30
  %v130 = vunpack.c.l.b16 %v31
  %v131 = vunpack.c.h.b16 %v31
  %v132 = vunpack.c.l.b16 %v32
  %v133 = vunpack.c.h.b16 %v32
  %v134 = vunpack.c.l.b16 %v33
  %v135 = vunpack.c.h.b16 %v33
  %v136 = vunpack.c.l.b16 %v34
  %v137 = vunpack.c.h.b16 %v34
  %v138 = vunpack.c.l.b16 %v35
  %v139 = vunpack.c.h.b16 %v35
  %v140 = vunpack.c.l.b16 %v36
  %v141 = vunpack.c.h.b16 %v36
  %v142 = vunpack.c.l.b16 %v37
  %v143 = vunpack.c.h.b16 %v37
  %v144 = vunpack.c.l.b16 %v38
  %v145 = vunpack.c.h.b16 %v38
  %v146 = vunpack.c.l.b16 %v39
  %v147 = vunpack.c.h.b16 %v39
  %v148 = vunpack.c.l.b16 %v40
  %v149 = vunpack.c.h.b16 %v40
  %v150 = vunpack.c.l.b16 %v41
  %v151 = vunpack.c.h.b16 %v41
  %v152 = vunpack.c.l.b16 %v42
  %v153 = vunpack.c.h.b16 %v42
  %v154 = vunpack.c.l.b16 %v43
  %v155 = vunpack.c.h.b16 %v43
  %v156 = vunpack.c.l.b16 %v44
  %v157 = vunpack.c.h.b16 %v44
  %v158 = vunpack.c.l.b16 %v45
  %v159 = vunpack.c.h.b16 %v45
  %v160 = vunpack.c.l.b16 %v46
  %v161 = vunpack.c.h.b16 %v46
  %v162 = vunpack.c.l.b16 %v47
  %v163 = vunpack.c.h.b16 %v47
  %v164 = vunpack.c.l.b16 %v48
  %v165 = vunpack.c.h.b16 %v48
  %v166 = vunpack.c.l.b16 %v49
  %v167 = vunpack.c.h.b16 %v49
  %v168 = vunpack.c.l.b16 %v50
  %v169 = vunpack.c.h.b16 %v50
  %v170 = vunpack.c.l.b16 %v51
  %v171 = vunpack.c.h.b16 %v51
  %v172 = vpack.c.b16 %v104, %v100
  %v173 = vpack.c.b16 %v105, %v101
  %v174 = vpack.c.b16 %v106, %v102
  %v175 = vpack.c.b16 %v107, %v103
  %v176 = vpack.c.b16 %v112, %v108
  %v177 = vpack.c.b16 %v113, %v109
  %v178 = vpack.c.b16 %v114, %v110
  %v179 = vpack.c.b16 %v115, %v111
  %v180 = vpack.c.b16 %v120, %v116
  %v181 = vpack.c.b16 %v121, %v117
  %v182 = vpack.c.b16 %v122, %v118
  %v183 = vpack.c.b16 %v123, %v119
  %v184 = vpack.c.b16 %v128, %v124
  %v185 = vpack.c.b16 %v129, %v125
  %v186 = vpack.c.b16 %v130, %v126
  %v187 = vpack.c.b16 %v131, %v127
  %v188 = vpack.c.b16 %v136, %v132
  %v189 = vpack.c.b16 %v137, %v133
  %v190 = vpack.c.b16 %v138, %v134
  %v191 = vpack.c.b16 %v139, %v135
  %v192 = vpack.c.b16 %v144, %v140
  %v193 = vpack.c.b16 %v145, %v141
  %v194 = vpack.c.b16 %v146, %v142
  %v195 = vpack.c.b16 %v147, %v143
  %v196 = vpack.c.b16 %v152, %v148
  %v197 = vpack.c.b16 %v153, %v149
  %v198 = vpack.c.b16 %v154, %v150
  %v199 = vpack.c.b16 %v155, %v151
  %v200 = vpack.c.b16 %v160, %v156
  %v201 = vpack.c.b16 %v161, %v157
  %v202 = vpack.c.b16 %v162, %v158
  %v203 = vpack.c.b16 %v163, %v159
  %v204 = vpack.c.b16 %v168, %v164
  %v205 = vpack.c.b16 %v169, %v165
  %v206 = vpack.c.b16 %v170, %v166
  %v207 = vpack.c.b16 %v171, %v167
  %vm244 = vcmask 130048
  %v246 = vsel %vm244, %v62, 0
  %248 = vmatpush.bf16.msra.mxu0 %v200
  %249 = vmatpush.bf16.msra.mxu0 %v196
  %250 = vmatpush.bf16.msra.mxu0 %v192
  %251 = vmatpush.bf16.msra.mxu0 %v188
  %252 = vmatpush.bf16.msra.mxu0 %v184
  %253 = vmatpush.bf16.msra.mxu0 %v180
  %254 = vmatpush.bf16.msra.mxu0 %v176
  %255 = vmatpush.bf16.msra.mxu0 %v172
  %256 = vmatmul.bf16.gmra.mxu0 %v61
  %v257 = vpop.f32.mrf.mxu0
  %v258 = vadd.f32 %v56, %v257
  %v259 = vpop.f32.mrf.mxu0
  %260 = vdwg.mxu0
  %261 = vmatpush.bf16.msra.mxu0 0
  %262 = vmatpush.bf16.msra.mxu0 0
  %263 = vmatpush.bf16.msra.mxu0 0
  %264 = vmatpush.bf16.msra.mxu0 0
  %265 = vmatpush.bf16.msra.mxu0 0
  %266 = vmatpush.bf16.msra.mxu0 0
  %267 = vmatpush.bf16.msra.mxu0 0
  %268 = vmatpush.bf16.msra.mxu0 %v204
  %269 = vmatmul.bf16.gmra.mxu0 %v246
  %v270 = vpop.f32.mrf.mxu0
  %v271 = vadd.f32 %v258, %v270
  %v272 = vpop.f32.mrf.mxu0
  %273 = vdwg.mxu0
  %274 = vmatpush.bf16.msra.mxu0 %v201
  %275 = vmatpush.bf16.msra.mxu0 %v197
  %276 = vmatpush.bf16.msra.mxu0 %v193
  %277 = vmatpush.bf16.msra.mxu0 %v189
  %278 = vmatpush.bf16.msra.mxu0 %v185
  %279 = vmatpush.bf16.msra.mxu0 %v181
  %280 = vmatpush.bf16.msra.mxu0 %v177
  %281 = vmatpush.bf16.msra.mxu0 %v173
  %282 = vmatmul.bf16.gmra.mxu0 %v61
  %v283 = vpop.f32.mrf.mxu0
  %v284 = vadd.f32 %v56, %v283
  %v285 = vpop.f32.mrf.mxu0
  %286 = vdwg.mxu0
  %287 = vmatpush.bf16.msra.mxu0 0
  %288 = vmatpush.bf16.msra.mxu0 0
  %289 = vmatpush.bf16.msra.mxu0 0
  %290 = vmatpush.bf16.msra.mxu0 0
  %291 = vmatpush.bf16.msra.mxu0 0
  %292 = vmatpush.bf16.msra.mxu0 0
  %293 = vmatpush.bf16.msra.mxu0 0
  %294 = vmatpush.bf16.msra.mxu0 %v205
  %295 = vmatmul.bf16.gmra.mxu0 %v246
  %v296 = vpop.f32.mrf.mxu0
  %v297 = vadd.f32 %v284, %v296
  %v298 = vpop.f32.mrf.mxu0
  %299 = vdwg.mxu0
  %300 = vmatpush.bf16.msra.mxu0 %v202
  %301 = vmatpush.bf16.msra.mxu0 %v198
  %302 = vmatpush.bf16.msra.mxu0 %v194
  %303 = vmatpush.bf16.msra.mxu0 %v190
  %304 = vmatpush.bf16.msra.mxu0 %v186
  %305 = vmatpush.bf16.msra.mxu0 %v182
  %306 = vmatpush.bf16.msra.mxu0 %v178
  %307 = vmatpush.bf16.msra.mxu0 %v174
  %308 = vmatmul.bf16.gmra.mxu0 %v61
  %v309 = vpop.f32.mrf.mxu0
  %v310 = vadd.f32 %v56, %v309
  %v311 = vpop.f32.mrf.mxu0
  %312 = vdwg.mxu0
  %313 = vmatpush.bf16.msra.mxu0 0
  %314 = vmatpush.bf16.msra.mxu0 0
  %315 = vmatpush.bf16.msra.mxu0 0
  %316 = vmatpush.bf16.msra.mxu0 0
  %317 = vmatpush.bf16.msra.mxu0 0
  %318 = vmatpush.bf16.msra.mxu0 0
  %319 = vmatpush.bf16.msra.mxu0 0
  %320 = vmatpush.bf16.msra.mxu0 %v206
  %321 = vmatmul.bf16.gmra.mxu0 %v246
  %v322 = vpop.f32.mrf.mxu0
  %v323 = vadd.f32 %v310, %v322
  %v324 = vpop.f32.mrf.mxu0
  %325 = vdwg.mxu0
  %326 = vmatpush.bf16.msra.mxu0 %v203
  %327 = vmatpush.bf16.msra.mxu0 %v199
  %328 = vmatpush.bf16.msra.mxu0 %v195
  %329 = vmatpush.bf16.msra.mxu0 %v191
  %330 = vmatpush.bf16.msra.mxu0 %v187
  %331 = vmatpush.bf16.msra.mxu0 %v183
  %332 = vmatpush.bf16.msra.mxu0 %v179
  %333 = vmatpush.bf16.msra.mxu0 %v175
  %334 = vmatmul.bf16.gmra.mxu0 %v61
  %v335 = vpop.f32.mrf.mxu0
  %v336 = vadd.f32 %v56, %v335
  %v337 = vpop.f32.mrf.mxu0
  %338 = vdwg.mxu0
  %339 = vmatpush.bf16.msra.mxu0 0
  %340 = vmatpush.bf16.msra.mxu0 0
  %341 = vmatpush.bf16.msra.mxu0 0
  %342 = vmatpush.bf16.msra.mxu0 0
  %343 = vmatpush.bf16.msra.mxu0 0
  %344 = vmatpush.bf16.msra.mxu0 0
  %345 = vmatpush.bf16.msra.mxu0 0
  %346 = vmatpush.bf16.msra.mxu0 %v207
  %347 = vmatmul.bf16.gmra.mxu0 %v246
  %v348 = vpop.f32.mrf.mxu0
  %v349 = vadd.f32 %v336, %v348
  %v350 = vpop.f32.mrf.mxu0
  %351 = vdwg.mxu0
  %v352 = vmax.f32 %v271, 0.0
  %v353 = vmax.f32 %v297, 0.0
  %v354 = vmax.f32 %v323, 0.0
  %v355 = vmax.f32 %v349, 0.0
  %356 = vst [vmem:[%s3] sm:$0xff] %v352
  %357 = vst [vmem:[%s3 + $0x8] sm:$0xff] %v353
  %358 = vst [vmem:[%s3 + $0x10] sm:$0xff] %v354
  %359 = vst [vmem:[%s3 + $0x18] sm:$0xff] %v355
  // Predicated region
  $region14: #{_lambda_.45} parent=0 // pred_check
    _
  $region15: #{_lambda_.45} parent=0 // pred_check_branch
    %361 = sbr.rel (0) target = $region17
  $region16: #{_lambda_.45} parent=0 // pred_region
    _
  $region17: #{_lambda_.45} parent=0 // pred_fallthru
    _
  // Predicated region
  $region18: #{_lambda_.45} parent=0 // pred_check
    _
  $region19: #{_lambda_.45} parent=0 // pred_check_branch
    %363 = sbr.rel (0) target = $region21
  $region20: #{_lambda_.45} parent=0 // pred_region
    _
  $region21: #{_lambda_.45} parent=0 // pred_fallthru
    _

// kernel: tile.38
$region0: #{tile.38}
  #allocation0 [shape = 's32[1]{0}', space=sflag, size = 0x4, scoped, tag = 'scoped memory for tile.38']
  %s0 = inlined_call_operand.vmem [shape: f32[8], index: 0, kind: input, shape index: {}]
  %s1 = inlined_call_operand.vmem [shape: f32[225,8], index: 1, kind: output, shape index: {}]
  // Predicated region
  $region2: #{tile.38} parent=0 // pred_check
    _
  $region3: #{tile.38} parent=0 // pred_check_branch
    %3 = sbr.rel (0) target = $region5
  $region4: #{tile.38} parent=0 // pred_region
    _
  $region5: #{tile.38} parent=0 // pred_fallthru
    _
  %v4 = vld [vmem:[%s0] ss:$0 sm:$0xff]
  %5 = vst [vmem:[%s1] sm:$0xff] %v4
  %s6 = scalar_lea.vmem %s1, 8
  %7 = vst [vmem:[%s6] sm:$0xff] %v4
  %s8 = scalar_lea.vmem %s1, 16
  %9 = vst [vmem:[%s8] sm:$0xff] %v4
  %s10 = scalar_lea.vmem %s1, 24
  %11 = vst [vmem:[%s10] sm:$0xff] %v4
  %s12 = scalar_lea.vmem %s1, 32
  %13 = vst [vmem:[%s12] sm:$0xff] %v4
  %s14 = scalar_lea.vmem %s1, 40
  %15 = vst [vmem:[%s14] sm:$0xff] %v4
  %s16 = scalar_lea.vmem %s1, 48
  %17 = vst [vmem:[%s16] sm:$0xff] %v4
  %s18 = scalar_lea.vmem %s1, 56
  %19 = vst [vmem:[%s18] sm:$0xff] %v4
  %s20 = scalar_lea.vmem %s1, 64
  %21 = vst [vmem:[%s20] sm:$0xff] %v4
  %s22 = scalar_lea.vmem %s1, 72
  %23 = vst [vmem:[%s22] sm:$0xff] %v4
  %s24 = scalar_lea.vmem %s1, 80
  %25 = vst [vmem:[%s24] sm:$0xff] %v4
  %s26 = scalar_lea.vmem %s1, 88
  %27 = vst [vmem:[%s26] sm:$0xff] %v4
  %s28 = scalar_lea.vmem %s1, 96
  %29 = vst [vmem:[%s28] sm:$0xff] %v4
  %s30 = scalar_lea.vmem %s1, 104
  %31 = vst [vmem:[%s30] sm:$0xff] %v4
  %s32 = scalar_lea.vmem %s1, 112
  %33 = vst [vmem:[%s32] sm:$0xff] %v4
  %s34 = scalar_lea.vmem %s1, 120
  %35 = vst [vmem:[%s34] sm:$0xff] %v4
  %s36 = scalar_lea.vmem %s1, 128
  %37 = vst [vmem:[%s36] sm:$0xff] %v4
  %s38 = scalar_lea.vmem %s1, 136
  %39 = vst [vmem:[%s38] sm:$0xff] %v4
  %s40 = scalar_lea.vmem %s1, 144
  %41 = vst [vmem:[%s40] sm:$0xff] %v4
  %s42 = scalar_lea.vmem %s1, 152
  %43 = vst [vmem:[%s42] sm:$0xff] %v4
  %s44 = scalar_lea.vmem %s1, 160
  %45 = vst [vmem:[%s44] sm:$0xff] %v4
  %s46 = scalar_lea.vmem %s1, 168
  %47 = vst [vmem:[%s46] sm:$0xff] %v4
  %s48 = scalar_lea.vmem %s1, 176
  %49 = vst [vmem:[%s48] sm:$0xff] %v4
  %s50 = scalar_lea.vmem %s1, 184
  %51 = vst [vmem:[%s50] sm:$0xff] %v4
  %s52 = scalar_lea.vmem %s1, 192
  %53 = vst [vmem:[%s52] sm:$0xff] %v4
  %s54 = scalar_lea.vmem %s1, 200
  %55 = vst [vmem:[%s54] sm:$0xff] %v4
  %s56 = scalar_lea.vmem %s1, 208
  %57 = vst [vmem:[%s56] sm:$0xff] %v4
  %s58 = scalar_lea.vmem %s1, 216
  %59 = vst [vmem:[%s58] sm:$0xff] %v4
  %s60 = scalar_lea.vmem %s1, 224
  %61 = vst [vmem:[%s60] sm:$0xff] %v4

// kernel: tile.3
$region0: #{tile.3}
  %s0 = inlined_call_operand.vmem [shape: f32[225,8], index: 0, kind: input, shape index: {}]
  %s1 = inlined_call_operand.vmem [shape: f32[1800,1], index: 1, kind: output, shape index: {}]
  %v2 = vld [vmem:[%s0] sm:$0xff]
  %vm3 = vcmask 7168
  %4 = vst.msk [vmem:[%s1] ss:$8 sm:$0xf] %vm3, %v2
  %5 = vst.msk [vmem:[%s1] ss:$8 sm:$0xf0] %vm3, %v2
  %s6 = scalar_lea.vmem %s0, 8
  %v7 = vld [vmem:[%s6] sm:$0xff]
  %vm8 = vcmask 7168
  %s9 = scalar_lea.vmem %s1, 64
  %10 = vst.msk [vmem:[%s9] ss:$8 sm:$0xf] %vm8, %v7
  %s11 = scalar_lea.vmem %s1, 64
  %12 = vst.msk [vmem:[%s11] ss:$8 sm:$0xf0] %vm8, %v7
  %s13 = scalar_lea.vmem %s0, 16
  %v14 = vld [vmem:[%s13] sm:$0xff]
  %vm15 = vcmask 7168
  %s16 = scalar_lea.vmem %s1, 128
  %17 = vst.msk [vmem:[%s16] ss:$8 sm:$0xf] %vm15, %v14
  %s18 = scalar_lea.vmem %s1, 128
  %19 = vst.msk [vmem:[%s18] ss:$8 sm:$0xf0] %vm15, %v14
  %s20 = scalar_lea.vmem %s0, 24
  %v21 = vld [vmem:[%s20] sm:$0xff]
  %vm22 = vcmask 7168
  %s23 = scalar_lea.vmem %s1, 192
  %24 = vst.msk [vmem:[%s23] ss:$8 sm:$0xf] %vm22, %v21
  %s25 = scalar_lea.vmem %s1, 192
  %26 = vst.msk [vmem:[%s25] ss:$8 sm:$0xf0] %vm22, %v21
  %s27 = scalar_lea.vmem %s0, 32
  %v28 = vld [vmem:[%s27] sm:$0xff]
  %vm29 = vcmask 7168
  %s30 = scalar_lea.vmem %s1, 256
  %31 = vst.msk [vmem:[%s30] ss:$8 sm:$0xf] %vm29, %v28
  %s32 = scalar_lea.vmem %s1, 256
  %33 = vst.msk [vmem:[%s32] ss:$8 sm:$0xf0] %vm29, %v28
  %s34 = scalar_lea.vmem %s0, 40
  %v35 = vld [vmem:[%s34] sm:$0xff]
  %vm36 = vcmask 7168
  %s37 = scalar_lea.vmem %s1, 320
  %38 = vst.msk [vmem:[%s37] ss:$8 sm:$0xf] %vm36, %v35
  %s39 = scalar_lea.vmem %s1, 320
  %40 = vst.msk [vmem:[%s39] ss:$8 sm:$0xf0] %vm36, %v35
  %s41 = scalar_lea.vmem %s0, 48
  %v42 = vld [vmem:[%s41] sm:$0xff]
  %vm43 = vcmask 7168
  %s44 = scalar_lea.vmem %s1, 384
  %45 = vst.msk [vmem:[%s44] ss:$8 sm:$0xf] %vm43, %v42
  %s46 = scalar_lea.vmem %s1, 384
  %47 = vst.msk [vmem:[%s46] ss:$8 sm:$0xf0] %vm43, %v42
  %s48 = scalar_lea.vmem %s0, 56
  %v49 = vld [vmem:[%s48] sm:$0xff]
  %vm50 = vcmask 7168
  %s51 = scalar_lea.vmem %s1, 448
  %52 = vst.msk [vmem:[%s51] ss:$8 sm:$0xf] %vm50, %v49
  %s53 = scalar_lea.vmem %s1, 448
  %54 = vst.msk [vmem:[%s53] ss:$8 sm:$0xf0] %vm50, %v49
  %s55 = scalar_lea.vmem %s0, 64
  %v56 = vld [vmem:[%s55] sm:$0xff]
  %vm57 = vcmask 7168
  %s58 = scalar_lea.vmem %s1, 512
  %59 = vst.msk [vmem:[%s58] ss:$8 sm:$0xf] %vm57, %v56
  %s60 = scalar_lea.vmem %s1, 512
  %61 = vst.msk [vmem:[%s60] ss:$8 sm:$0xf0] %vm57, %v56
  %s62 = scalar_lea.vmem %s0, 72
  %v63 = vld [vmem:[%s62] sm:$0xff]
  %vm64 = vcmask 7168
  %s65 = scalar_lea.vmem %s1, 576
  %66 = vst.msk [vmem:[%s65] ss:$8 sm:$0xf] %vm64, %v63
  %s67 = scalar_lea.vmem %s1, 576
  %68 = vst.msk [vmem:[%s67] ss:$8 sm:$0xf0] %vm64, %v63
  %s69 = scalar_lea.vmem %s0, 80
  %v70 = vld [vmem:[%s69] sm:$0xff]
  %vm71 = vcmask 7168
  %s72 = scalar_lea.vmem %s1, 640
  %73 = vst.msk [vmem:[%s72] ss:$8 sm:$0xf] %vm71, %v70
  %s74 = scalar_lea.vmem %s1, 640
  %75 = vst.msk [vmem:[%s74] ss:$8 sm:$0xf0] %vm71, %v70
  %s76 = scalar_lea.vmem %s0, 88
  %v77 = vld [vmem:[%s76] sm:$0xff]
  %vm78 = vcmask 7168
  %s79 = scalar_lea.vmem %s1, 704
  %80 = vst.msk [vmem:[%s79] ss:$8 sm:$0xf] %vm78, %v77
  %s81 = scalar_lea.vmem %s1, 704
  %82 = vst.msk [vmem:[%s81] ss:$8 sm:$0xf0] %vm78, %v77
  %s83 = scalar_lea.vmem %s0, 96
  %v84 = vld [vmem:[%s83] sm:$0xff]
  %vm85 = vcmask 7168
  %s86 = scalar_lea.vmem %s1, 768
  %87 = vst.msk [vmem:[%s86] ss:$8 sm:$0xf] %vm85, %v84
  %s88 = scalar_lea.vmem %s1, 768
  %89 = vst.msk [vmem:[%s88] ss:$8 sm:$0xf0] %vm85, %v84
  %s90 = scalar_lea.vmem %s0, 104
  %v91 = vld [vmem:[%s90] sm:$0xff]
  %vm92 = vcmask 7168
  %s93 = scalar_lea.vmem %s1, 832
  %94 = vst.msk [vmem:[%s93] ss:$8 sm:$0xf] %vm92, %v91
  %s95 = scalar_lea.vmem %s1, 832
  %96 = vst.msk [vmem:[%s95] ss:$8 sm:$0xf0] %vm92, %v91
  %s97 = scalar_lea.vmem %s0, 112
  %v98 = vld [vmem:[%s97] sm:$0xff]
  %vm99 = vcmask 7168
  %s100 = scalar_lea.vmem %s1, 896
  %101 = vst.msk [vmem:[%s100] ss:$8 sm:$0xf] %vm99, %v98
  %s102 = scalar_lea.vmem %s1, 896
  %103 = vst.msk [vmem:[%s102] ss:$8 sm:$0xf0] %vm99, %v98
  %s104 = scalar_lea.vmem %s0, 120
  %v105 = vld [vmem:[%s104] sm:$0xff]
  %vm106 = vcmask 7168
  %s107 = scalar_lea.vmem %s1, 960
  %108 = vst.msk [vmem:[%s107] ss:$8 sm:$0xf] %vm106, %v105
  %s109 = scalar_lea.vmem %s1, 960
  %110 = vst.msk [vmem:[%s109] ss:$8 sm:$0xf0] %vm106, %v105
  %s111 = scalar_lea.vmem %s0, 128
  %v112 = vld [vmem:[%s111] sm:$0xff]
  %vm113 = vcmask 7168
  %s114 = scalar_lea.vmem %s1, 1024
  %115 = vst.msk [vmem:[%s114] ss:$8 sm:$0xf] %vm113, %v112
  %s116 = scalar_lea.vmem %s1, 1024
  %117 = vst.msk [vmem:[%s116] ss:$8 sm:$0xf0] %vm113, %v112
  %s118 = scalar_lea.vmem %s0, 136
  %v119 = vld [vmem:[%s118] sm:$0xff]
  %vm120 = vcmask 7168
  %s121 = scalar_lea.vmem %s1, 1088
  %122 = vst.msk [vmem:[%s121] ss:$8 sm:$0xf] %vm120, %v119
  %s123 = scalar_lea.vmem %s1, 1088
  %124 = vst.msk [vmem:[%s123] ss:$8 sm:$0xf0] %vm120, %v119
  %s125 = scalar_lea.vmem %s0, 144
  %v126 = vld [vmem:[%s125] sm:$0xff]
  %vm127 = vcmask 7168
  %s128 = scalar_lea.vmem %s1, 1152
  %129 = vst.msk [vmem:[%s128] ss:$8 sm:$0xf] %vm127, %v126
  %s130 = scalar_lea.vmem %s1, 1152
  %131 = vst.msk [vmem:[%s130] ss:$8 sm:$0xf0] %vm127, %v126
  %s132 = scalar_lea.vmem %s0, 152
  %v133 = vld [vmem:[%s132] sm:$0xff]
  %vm134 = vcmask 7168
  %s135 = scalar_lea.vmem %s1, 1216
  %136 = vst.msk [vmem:[%s135] ss:$8 sm:$0xf] %vm134, %v133
  %s137 = scalar_lea.vmem %s1, 1216
  %138 = vst.msk [vmem:[%s137] ss:$8 sm:$0xf0] %vm134, %v133
  %s139 = scalar_lea.vmem %s0, 160
  %v140 = vld [vmem:[%s139] sm:$0xff]
  %vm141 = vcmask 7168
  %s142 = scalar_lea.vmem %s1, 1280
  %143 = vst.msk [vmem:[%s142] ss:$8 sm:$0xf] %vm141, %v140
  %s144 = scalar_lea.vmem %s1, 1280
  %145 = vst.msk [vmem:[%s144] ss:$8 sm:$0xf0] %vm141, %v140
  %s146 = scalar_lea.vmem %s0, 168
  %v147 = vld [vmem:[%s146] sm:$0xff]
  %vm148 = vcmask 7168
  %s149 = scalar_lea.vmem %s1, 1344
  %150 = vst.msk [vmem:[%s149] ss:$8 sm:$0xf] %vm148, %v147
  %s151 = scalar_lea.vmem %s1, 1344
  %152 = vst.msk [vmem:[%s151] ss:$8 sm:$0xf0] %vm148, %v147
  %s153 = scalar_lea.vmem %s0, 176
  %v154 = vld [vmem:[%s153] sm:$0xff]
  %vm155 = vcmask 7168
  %s156 = scalar_lea.vmem %s1, 1408
  %157 = vst.msk [vmem:[%s156] ss:$8 sm:$0xf] %vm155, %v154
  %s158 = scalar_lea.vmem %s1, 1408
  %159 = vst.msk [vmem:[%s158] ss:$8 sm:$0xf0] %vm155, %v154
  %s160 = scalar_lea.vmem %s0, 184
  %v161 = vld [vmem:[%s160] sm:$0xff]
  %vm162 = vcmask 7168
  %s163 = scalar_lea.vmem %s1, 1472
  %164 = vst.msk [vmem:[%s163] ss:$8 sm:$0xf] %vm162, %v161
  %s165 = scalar_lea.vmem %s1, 1472
  %166 = vst.msk [vmem:[%s165] ss:$8 sm:$0xf0] %vm162, %v161
  %s167 = scalar_lea.vmem %s0, 192
  %v168 = vld [vmem:[%s167] sm:$0xff]
  %vm169 = vcmask 7168
  %s170 = scalar_lea.vmem %s1, 1536
  %171 = vst.msk [vmem:[%s170] ss:$8 sm:$0xf] %vm169, %v168
  %s172 = scalar_lea.vmem %s1, 1536
  %173 = vst.msk [vmem:[%s172] ss:$8 sm:$0xf0] %vm169, %v168
  %s174 = scalar_lea.vmem %s0, 200
  %v175 = vld [vmem:[%s174] sm:$0xff]
  %vm176 = vcmask 7168
  %s177 = scalar_lea.vmem %s1, 1600
  %178 = vst.msk [vmem:[%s177] ss:$8 sm:$0xf] %vm176, %v175
  %s179 = scalar_lea.vmem %s1, 1600
  %180 = vst.msk [vmem:[%s179] ss:$8 sm:$0xf0] %vm176, %v175
  %s181 = scalar_lea.vmem %s0, 208
  %v182 = vld [vmem:[%s181] sm:$0xff]
  %vm183 = vcmask 7168
  %s184 = scalar_lea.vmem %s1, 1664
  %185 = vst.msk [vmem:[%s184] ss:$8 sm:$0xf] %vm183, %v182
  %s186 = scalar_lea.vmem %s1, 1664
  %187 = vst.msk [vmem:[%s186] ss:$8 sm:$0xf0] %vm183, %v182
  %s188 = scalar_lea.vmem %s0, 216
  %v189 = vld [vmem:[%s188] sm:$0xff]
  %vm190 = vcmask 7168
  %s191 = scalar_lea.vmem %s1, 1728
  %192 = vst.msk [vmem:[%s191] ss:$8 sm:$0xf] %vm190, %v189
  %s193 = scalar_lea.vmem %s1, 1728
  %194 = vst.msk [vmem:[%s193] ss:$8 sm:$0xf0] %vm190, %v189
  %s195 = scalar_lea.vmem %s0, 224
  %v196 = vld [vmem:[%s195] sm:$0x1]
  %vm197 = vcmask 7168
  %s198 = scalar_lea.vmem %s1, 1792
  %199 = vst.msk [vmem:[%s198] sm:$0x1] %vm197, %v196
  %v200 = vld [vmem:[%s0] sm:$0xff]
  %201 = vrot.lane.b32.xlu0 %v200, 127
  %v202 = vpop.permute.xlu0 %201
  %vm203 = vcmask 7168
  %s204 = scalar_lea.vmem %s1, 1
  %205 = vst.msk [vmem:[%s204] ss:$8 sm:$0xf] %vm203, %v202
  %s206 = scalar_lea.vmem %s1, 1
  %207 = vst.msk [vmem:[%s206] ss:$8 sm:$0xf0] %vm203, %v202
  %s208 = scalar_lea.vmem %s0, 8
  %v209 = vld [vmem:[%s208] sm:$0xff]
  %210 = vrot.lane.b32.xlu0 %v209, 127
  %v211 = vpop.permute.xlu0 %210
  %vm212 = vcmask 7168
  %s213 = scalar_lea.vmem %s1, 65
  %214 = vst.msk [vmem:[%s213] ss:$8 sm:$0xf] %vm212, %v211
  %s215 = scalar_lea.vmem %s1, 65
  %216 = vst.msk [vmem:[%s215] ss:$8 sm:$0xf0] %vm212, %v211
  %s217 = scalar_lea.vmem %s0, 16
  %v218 = vld [vmem:[%s217] sm:$0xff]
  %219 = vrot.lane.b32.xlu0 %v218, 127
  %v220 = vpop.permute.xlu0 %219
  %vm221 = vcmask 7168
  %s222 = scalar_lea.vmem %s1, 129
  %223 = vst.msk [vmem:[%s222] ss:$8 sm:$0xf] %vm221, %v220
  %s224 = scalar_lea.vmem %s1, 129
  %225 = vst.msk [vmem:[%s224] ss:$8 sm:$0xf0] %vm221, %v220
  %s226 = scalar_lea.vmem %s0, 24
  %v227 = vld [vmem:[%s226] sm:$0xff]
  %228 = vrot.lane.b32.xlu0 %v227, 127
  %v229 = vpop.permute.xlu0 %228
  %vm230 = vcmask 7168
  %s231 = scalar_lea.vmem %s1, 193
  %232 = vst.msk [vmem:[%s231] ss:$8 sm:$0xf] %vm230, %v229
  %s233 = scalar_lea.vmem %s1, 193
  %234 = vst.msk [vmem:[%s233] ss:$8 sm:$0xf0] %vm230, %v229
  %s235 = scalar_lea.vmem %s0, 32
  %v236 = vld [vmem:[%s235] sm:$0xff]
  %237 = vrot.lane.b32.xlu0 %v236, 127
  %v238 = vpop.permute.xlu0 %237
  %vm239 = vcmask 7168
  %s240 = scalar_lea.vmem %s1, 257
  %241 = vst.msk [vmem:[%s240] ss:$8 sm:$0xf] %vm239, %v238
  %s242 = scalar_lea.vmem %s1, 257
  %243 = vst.msk [vmem:[%s242] ss:$8 sm:$0xf0] %vm239, %v238
  %s244 = scalar_lea.vmem %s0, 40
  %v245 = vld [vmem:[%s244] sm:$0xff]
  %246 = vrot.lane.b32.xlu0 %v245, 127
  %v247 = vpop.permute.xlu0 %246
  %vm248 = vcmask 7168
  %s249 = scalar_lea.vmem %s1, 321
  %250 = vst.msk [vmem:[%s249] ss:$8 sm:$0xf] %vm248, %v247
  %s251 = scalar_lea.vmem %s1, 321
  %252 = vst.msk [vmem:[%s251] ss:$8 sm:$0xf0] %vm248, %v247
  %s253 = scalar_lea.vmem %s0, 48
  %v254 = vld [vmem:[%s253] sm:$0xff]
  %255 = vrot.lane.b32.xlu0 %v254, 127
  %v256 = vpop.permute.xlu0 %255
  %vm257 = vcmask 7168
  %s258 = scalar_lea.vmem %s1, 385
  %259 = vst.msk [vmem:[%s258] ss:$8 sm:$0xf] %vm257, %v256
  %s260 = scalar_lea.vmem %s1, 385
  %261 = vst.msk [vmem:[%s260] ss:$8 sm:$0xf0] %vm257, %v256
  %s262 = scalar_lea.vmem %s0, 56
  %v263 = vld [vmem:[%s262] sm:$0xff]
  %264 = vrot.lane.b32.xlu0 %v263, 127
  %v265 = vpop.permute.xlu0 %264
  %vm266 = vcmask 7168
  %s267 = scalar_lea.vmem %s1, 449
  %268 = vst.msk [vmem:[%s267] ss:$8 sm:$0xf] %vm266, %v265
  %s269 = scalar_lea.vmem %s1, 449
  %270 = vst.msk [vmem:[%s269] ss:$8 sm:$0xf0] %vm266, %v265
  %s271 = scalar_lea.vmem %s0, 64
  %v272 = vld [vmem:[%s271] sm:$0xff]
  %273 = vrot.lane.b32.xlu0 %v272, 127
  %v274 = vpop.permute.xlu0 %273
  %vm275 = vcmask 7168
  %s276 = scalar_lea.vmem %s1, 513
  %277 = vst.msk [vmem:[%s276] ss:$8 sm:$0xf] %vm275, %v274
  %s278 = scalar_lea.vmem %s1, 513
  %279 = vst.msk [vmem:[%s278] ss:$8 sm:$0xf0] %vm275, %v274
  %s280 = scalar_lea.vmem %s0, 72
  %v281 = vld [vmem:[%s280] sm:$0xff]
  %282 = vrot.lane.b32.xlu0 %v281, 127
  %v283 = vpop.permute.xlu0 %282
  %vm284 = vcmask 7168
  %s285 = scalar_lea.vmem %s1, 577
  %286 = vst.msk [vmem:[%s285] ss:$8 sm:$0xf] %vm284, %v283
  %s287 = scalar_lea.vmem %s1, 577
  %288 = vst.msk [vmem:[%s287] ss:$8 sm:$0xf0] %vm284, %v283
  %s289 = scalar_lea.vmem %s0, 80
  %v290 = vld [vmem:[%s289] sm:$0xff]
  %291 = vrot.lane.b32.xlu0 %v290, 127
  %v292 = vpop.permute.xlu0 %291
  %vm293 = vcmask 7168
  %s294 = scalar_lea.vmem %s1, 641
  %295 = vst.msk [vmem:[%s294] ss:$8 sm:$0xf] %vm293, %v292
  %s296 = scalar_lea.vmem %s1, 641
  %297 = vst.msk [vmem:[%s296] ss:$8 sm:$0xf0] %vm293, %v292
  %s298 = scalar_lea.vmem %s0, 88
  %v299 = vld [vmem:[%s298] sm:$0xff]
  %300 = vrot.lane.b32.xlu0 %v299, 127
  %v301 = vpop.permute.xlu0 %300
  %vm302 = vcmask 7168
  %s303 = scalar_lea.vmem %s1, 705
  %304 = vst.msk [vmem:[%s303] ss:$8 sm:$0xf] %vm302, %v301
  %s305 = scalar_lea.vmem %s1, 705
  %306 = vst.msk [vmem:[%s305] ss:$8 sm:$0xf0] %vm302, %v301
  %s307 = scalar_lea.vmem %s0, 96
  %v308 = vld [vmem:[%s307] sm:$0xff]
  %309 = vrot.lane.b32.xlu0 %v308, 127
  %v310 = vpop.permute.xlu0 %309
  %vm311 = vcmask 7168
  %s312 = scalar_lea.vmem %s1, 769
  %313 = vst.msk [vmem:[%s312] ss:$8 sm:$0xf] %vm311, %v310
  %s314 = scalar_lea.vmem %s1, 769
  %315 = vst.msk [vmem:[%s314] ss:$8 sm:$0xf0] %vm311, %v310
  %s316 = scalar_lea.vmem %s0, 104
  %v317 = vld [vmem:[%s316] sm:$0xff]
  %318 = vrot.lane.b32.xlu0 %v317, 127
  %v319 = vpop.permute.xlu0 %318
  %vm320 = vcmask 7168
  %s321 = scalar_lea.vmem %s1, 833
  %322 = vst.msk [vmem:[%s321] ss:$8 sm:$0xf] %vm320, %v319
  %s323 = scalar_lea.vmem %s1, 833
  %324 = vst.msk [vmem:[%s323] ss:$8 sm:$0xf0] %vm320, %v319
  %s325 = scalar_lea.vmem %s0, 112
  %v326 = vld [vmem:[%s325] sm:$0xff]
  %327 = vrot.lane.b32.xlu0 %v326, 127
  %v328 = vpop.permute.xlu0 %327
  %vm329 = vcmask 7168
  %s330 = scalar_lea.vmem %s1, 897
  %331 = vst.msk [vmem:[%s330] ss:$8 sm:$0xf] %vm329, %v328
  %s332 = scalar_lea.vmem %s1, 897
  %333 = vst.msk [vmem:[%s332] ss:$8 sm:$0xf0] %vm329, %v328
  %s334 = scalar_lea.vmem %s0, 120
  %v335 = vld [vmem:[%s334] sm:$0xff]
  %336 = vrot.lane.b32.xlu0 %v335, 127
  %v337 = vpop.permute.xlu0 %336
  %vm338 = vcmask 7168
  %s339 = scalar_lea.vmem %s1, 961
  %340 = vst.msk [vmem:[%s339] ss:$8 sm:$0xf] %vm338, %v337
  %s341 = scalar_lea.vmem %s1, 961
  %342 = vst.msk [vmem:[%s341] ss:$8 sm:$0xf0] %vm338, %v337
  %s343 = scalar_lea.vmem %s0, 128
  %v344 = vld [vmem:[%s343] sm:$0xff]
  %345 = vrot.lane.b32.xlu0 %v344, 127
  %v346 = vpop.permute.xlu0 %345
  %vm347 = vcmask 7168
  %s348 = scalar_lea.vmem %s1, 1025
  %349 = vst.msk [vmem:[%s348] ss:$8 sm:$0xf] %vm347, %v346
  %s350 = scalar_lea.vmem %s1, 1025
  %351 = vst.msk [vmem:[%s350] ss:$8 sm:$0xf0] %vm347, %v346
  %s352 = scalar_lea.vmem %s0, 136
  %v353 = vld [vmem:[%s352] sm:$0xff]
  %354 = vrot.lane.b32.xlu0 %v353, 127
  %v355 = vpop.permute.xlu0 %354
  %vm356 = vcmask 7168
  %s357 = scalar_lea.vmem %s1, 1089
  %358 = vst.msk [vmem:[%s357] ss:$8 sm:$0xf] %vm356, %v355
  %s359 = scalar_lea.vmem %s1, 1089
  %360 = vst.msk [vmem:[%s359] ss:$8 sm:$0xf0] %vm356, %v355
  %s361 = scalar_lea.vmem %s0, 144
  %v362 = vld [vmem:[%s361] sm:$0xff]
  %363 = vrot.lane.b32.xlu0 %v362, 127
  %v364 = vpop.permute.xlu0 %363
  %vm365 = vcmask 7168
  %s366 = scalar_lea.vmem %s1, 1153
  %367 = vst.msk [vmem:[%s366] ss:$8 sm:$0xf] %vm365, %v364
  %s368 = scalar_lea.vmem %s1, 1153
  %369 = vst.msk [vmem:[%s368] ss:$8 sm:$0xf0] %vm365, %v364
  %s370 = scalar_lea.vmem %s0, 152
  %v371 = vld [vmem:[%s370] sm:$0xff]
  %372 = vrot.lane.b32.xlu0 %v371, 127
  %v373 = vpop.permute.xlu0 %372
  %vm374 = vcmask 7168
  %s375 = scalar_lea.vmem %s1, 1217
  %376 = vst.msk [vmem:[%s375] ss:$8 sm:$0xf] %vm374, %v373
  %s377 = scalar_lea.vmem %s1, 1217
  %378 = vst.msk [vmem:[%s377] ss:$8 sm:$0xf0] %vm374, %v373
  %s379 = scalar_lea.vmem %s0, 160
  %v380 = vld [vmem:[%s379] sm:$0xff]
  %381 = vrot.lane.b32.xlu0 %v380, 127
  %v382 = vpop.permute.xlu0 %381
  %vm383 = vcmask 7168
  %s384 = scalar_lea.vmem %s1, 1281
  %385 = vst.msk [vmem:[%s384] ss:$8 sm:$0xf] %vm383, %v382
  %s386 = scalar_lea.vmem %s1, 1281
  %387 = vst.msk [vmem:[%s386] ss:$8 sm:$0xf0] %vm383, %v382
  %s388 = scalar_lea.vmem %s0, 168
  %v389 = vld [vmem:[%s388] sm:$0xff]
  %390 = vrot.lane.b32.xlu0 %v389, 127
  %v391 = vpop.permute.xlu0 %390
  %vm392 = vcmask 7168
  %s393 = scalar_lea.vmem %s1, 1345
  %394 = vst.msk [vmem:[%s393] ss:$8 sm:$0xf] %vm392, %v391
  %s395 = scalar_lea.vmem %s1, 1345
  %396 = vst.msk [vmem:[%s395] ss:$8 sm:$0xf0] %vm392, %v391
  %s397 = scalar_lea.vmem %s0, 176
  %v398 = vld [vmem:[%s397] sm:$0xff]
  %399 = vrot.lane.b32.xlu0 %v398, 127
  %v400 = vpop.permute.xlu0 %399
  %vm401 = vcmask 7168
  %s402 = scalar_lea.vmem %s1, 1409
  %403 = vst.msk [vmem:[%s402] ss:$8 sm:$0xf] %vm401, %v400
  %s404 = scalar_lea.vmem %s1, 1409
  %405 = vst.msk [vmem:[%s404] ss:$8 sm:$0xf0] %vm401, %v400
  %s406 = scalar_lea.vmem %s0, 184
  %v407 = vld [vmem:[%s406] sm:$0xff]
  %408 = vrot.lane.b32.xlu0 %v407, 127
  %v409 = vpop.permute.xlu0 %408
  %vm410 = vcmask 7168
  %s411 = scalar_lea.vmem %s1, 1473
  %412 = vst.msk [vmem:[%s411] ss:$8 sm:$0xf] %vm410, %v409
  %s413 = scalar_lea.vmem %s1, 1473
  %414 = vst.msk [vmem:[%s413] ss:$8 sm:$0xf0] %vm410, %v409
  %s415 = scalar_lea.vmem %s0, 192
  %v416 = vld [vmem:[%s415] sm:$0xff]
  %417 = vrot.lane.b32.xlu0 %v416, 127
  %v418 = vpop.permute.xlu0 %417
  %vm419 = vcmask 7168
  %s420 = scalar_lea.vmem %s1, 1537
  %421 = vst.msk [vmem:[%s420] ss:$8 sm:$0xf] %vm419, %v418
  %s422 = scalar_lea.vmem %s1, 1537
  %423 = vst.msk [vmem:[%s422] ss:$8 sm:$0xf0] %vm419, %v418
  %s424 = scalar_lea.vmem %s0, 200
  %v425 = vld [vmem:[%s424] sm:$0xff]
  %426 = vrot.lane.b32.xlu0 %v425, 127
  %v427 = vpop.permute.xlu0 %426
  %vm428 = vcmask 7168
  %s429 = scalar_lea.vmem %s1, 1601
  %430 = vst.msk [vmem:[%s429] ss:$8 sm:$0xf] %vm428, %v427
  %s431 = scalar_lea.vmem %s1, 1601
  %432 = vst.msk [vmem:[%s431] ss:$8 sm:$0xf0] %vm428, %v427
  %s433 = scalar_lea.vmem %s0, 208
  %v434 = vld [vmem:[%s433] sm:$0xff]
  %435 = vrot.lane.b32.xlu0 %v434, 127
  %v436 = vpop.permute.xlu0 %435
  %vm437 = vcmask 7168
  %s438 = scalar_lea.vmem %s1, 1665
  %439 = vst.msk [vmem:[%s438] ss:$8 sm:$0xf] %vm437, %v436
  %s440 = scalar_lea.vmem %s1, 1665
  %441 = vst.msk [vmem:[%s440] ss:$8 sm:$0xf0] %vm437, %v436
  %s442 = scalar_lea.vmem %s0, 216
  %v443 = vld [vmem:[%s442] sm:$0xff]
  %444 = vrot.lane.b32.xlu0 %v443, 127
  %v445 = vpop.permute.xlu0 %444
  %vm446 = vcmask 7168
  %s447 = scalar_lea.vmem %s1, 1729
  %448 = vst.msk [vmem:[%s447] ss:$8 sm:$0xf] %vm446, %v445
  %s449 = scalar_lea.vmem %s1, 1729
  %450 = vst.msk [vmem:[%s449] ss:$8 sm:$0xf0] %vm446, %v445
  %s451 = scalar_lea.vmem %s0, 224
  %v452 = vld [vmem:[%s451] sm:$0x1]
  %453 = vrot.lane.b32.xlu0 %v452, 127
  %v454 = vpop.permute.xlu0 %453
  %vm455 = vcmask 7168
  %s456 = scalar_lea.vmem %s1, 1793
  %457 = vst.msk [vmem:[%s456] sm:$0x1] %vm455, %v454
  %v458 = vld [vmem:[%s0] sm:$0xff]
  %459 = vrot.lane.b32.xlu0 %v458, 126
  %v460 = vpop.permute.xlu0 %459
  %vm461 = vcmask 7168
  %s462 = scalar_lea.vmem %s1, 2
  %463 = vst.msk [vmem:[%s462] ss:$8 sm:$0xf] %vm461, %v460
  %s464 = scalar_lea.vmem %s1, 2
  %465 = vst.msk [vmem:[%s464] ss:$8 sm:$0xf0] %vm461, %v460
  %s466 = scalar_lea.vmem %s0, 8
  %v467 = vld [vmem:[%s466] sm:$0xff]
  %468 = vrot.lane.b32.xlu0 %v467, 126
  %v469 = vpop.permute.xlu0 %468
  %vm470 = vcmask 7168
  %s471 = scalar_lea.vmem %s1, 66
  %472 = vst.msk [vmem:[%s471] ss:$8 sm:$0xf] %vm470, %v469
  %s473 = scalar_lea.vmem %s1, 66
  %474 = vst.msk [vmem:[%s473] ss:$8 sm:$0xf0] %vm470, %v469
  %s475 = scalar_lea.vmem %s0, 16
  %v476 = vld [vmem:[%s475] sm:$0xff]
  %477 = vrot.lane.b32.xlu0 %v476, 126
  %v478 = vpop.permute.xlu0 %477
  %vm479 = vcmask 7168
  %s480 = scalar_lea.vmem %s1, 130
  %481 = vst.msk [vmem:[%s480] ss:$8 sm:$0xf] %vm479, %v478
  %s482 = scalar_lea.vmem %s1, 130
  %483 = vst.msk [vmem:[%s482] ss:$8 sm:$0xf0] %vm479, %v478
  %s484 = scalar_lea.vmem %s0, 24
  %v485 = vld [vmem:[%s484] sm:$0xff]
  %486 = vrot.lane.b32.xlu0 %v485, 126
  %v487 = vpop.permute.xlu0 %486
  %vm488 = vcmask 7168
  %s489 = scalar_lea.vmem %s1, 194
  %490 = vst.msk [vmem:[%s489] ss:$8 sm:$0xf] %vm488, %v487
  %s491 = scalar_lea.vmem %s1, 194
  %492 = vst.msk [vmem:[%s491] ss:$8 sm:$0xf0] %vm488, %v487
  %s493 = scalar_lea.vmem %s0, 32
  %v494 = vld [vmem:[%s493] sm:$0xff]
  %495 = vrot.lane.b32.xlu0 %v494, 126
  %v496 = vpop.permute.xlu0 %495
  %vm497 = vcmask 7168
  %s498 = scalar_lea.vmem %s1, 258
  %499 = vst.msk [vmem:[%s498] ss:$8 sm:$0xf] %vm497, %v496
  %s500 = scalar_lea.vmem %s1, 258
  %501 = vst.msk [vmem:[%s500] ss:$8 sm:$0xf0] %vm497, %v496
  %s502 = scalar_lea.vmem %s0, 40
  %v503 = vld [vmem:[%s502] sm:$0xff]
  %504 = vrot.lane.b32.xlu0 %v503, 126
  %v505 = vpop.permute.xlu0 %504
  %vm506 = vcmask 7168
  %s507 = scalar_lea.vmem %s1, 322
  %508 = vst.msk [vmem:[%s507] ss:$8 sm:$0xf] %vm506, %v505
  %s509 = scalar_lea.vmem %s1, 322
  %510 = vst.msk [vmem:[%s509] ss:$8 sm:$0xf0] %vm506, %v505
  %s511 = scalar_lea.vmem %s0, 48
  %v512 = vld [vmem:[%s511] sm:$0xff]
  %513 = vrot.lane.b32.xlu0 %v512, 126
  %v514 = vpop.permute.xlu0 %513
  %vm515 = vcmask 7168
  %s516 = scalar_lea.vmem %s1, 386
  %517 = vst.msk [vmem:[%s516] ss:$8 sm:$0xf] %vm515, %v514
  %s518 = scalar_lea.vmem %s1, 386
  %519 = vst.msk [vmem:[%s518] ss:$8 sm:$0xf0] %vm515, %v514
  %s520 = scalar_lea.vmem %s0, 56
  %v521 = vld [vmem:[%s520] sm:$0xff]
  %522 = vrot.lane.b32.xlu0 %v521, 126
  %v523 = vpop.permute.xlu0 %522
  %vm524 = vcmask 7168
  %s525 = scalar_lea.vmem %s1, 450
  %526 = vst.msk [vmem:[%s525] ss:$8 sm:$0xf] %vm524, %v523
  %s527 = scalar_lea.vmem %s1, 450
  %528 = vst.msk [vmem:[%s527] ss:$8 sm:$0xf0] %vm524, %v523
  %s529 = scalar_lea.vmem %s0, 64
  %v530 = vld [vmem:[%s529] sm:$0xff]
  %531 = vrot.lane.b32.xlu0 %v530, 126
  %v532 = vpop.permute.xlu0 %531
  %vm533 = vcmask 7168
  %s534 = scalar_lea.vmem %s1, 514
  %535 = vst.msk [vmem:[%s534] ss:$8 sm:$0xf] %vm533, %v532
  %s536 = scalar_lea.vmem %s1, 514
  %537 = vst.msk [vmem:[%s536] ss:$8 sm:$0xf0] %vm533, %v532
  %s538 = scalar_lea.vmem %s0, 72
  %v539 = vld [vmem:[%s538] sm:$0xff]
  %540 = vrot.lane.b32.xlu0 %v539, 126
  %v541 = vpop.permute.xlu0 %540
  %vm542 = vcmask 7168
  %s543 = scalar_lea.vmem %s1, 578
  %544 = vst.msk [vmem:[%s543] ss:$8 sm:$0xf] %vm542, %v541
  %s545 = scalar_lea.vmem %s1, 578
  %546 = vst.msk [vmem:[%s545] ss:$8 sm:$0xf0] %vm542, %v541
  %s547 = scalar_lea.vmem %s0, 80
  %v548 = vld [vmem:[%s547] sm:$0xff]
  %549 = vrot.lane.b32.xlu0 %v548, 126
  %v550 = vpop.permute.xlu0 %549
  %vm551 = vcmask 7168
  %s552 = scalar_lea.vmem %s1, 642
  %553 = vst.msk [vmem:[%s552] ss:$8 sm:$0xf] %vm551, %v550
  %s554 = scalar_lea.vmem %s1, 642
  %555 = vst.msk [vmem:[%s554] ss:$8 sm:$0xf0] %vm551, %v550
  %s556 = scalar_lea.vmem %s0, 88
  %v557 = vld [vmem:[%s556] sm:$0xff]
  %558 = vrot.lane.b32.xlu0 %v557, 126
  %v559 = vpop.permute.xlu0 %558
  %vm560 = vcmask 7168
  %s561 = scalar_lea.vmem %s1, 706
  %562 = vst.msk [vmem:[%s561] ss:$8 sm:$0xf] %vm560, %v559
  %s563 = scalar_lea.vmem %s1, 706
  %564 = vst.msk [vmem:[%s563] ss:$8 sm:$0xf0] %vm560, %v559
  %s565 = scalar_lea.vmem %s0, 96
  %v566 = vld [vmem:[%s565] sm:$0xff]
  %567 = vrot.lane.b32.xlu0 %v566, 126
  %v568 = vpop.permute.xlu0 %567
  %vm569 = vcmask 7168
  %s570 = scalar_lea.vmem %s1, 770
  %571 = vst.msk [vmem:[%s570] ss:$8 sm:$0xf] %vm569, %v568
  %s572 = scalar_lea.vmem %s1, 770
  %573 = vst.msk [vmem:[%s572] ss:$8 sm:$0xf0] %vm569, %v568
  %s574 = scalar_lea.vmem %s0, 104
  %v575 = vld [vmem:[%s574] sm:$0xff]
  %576 = vrot.lane.b32.xlu0 %v575, 126
  %v577 = vpop.permute.xlu0 %576
  %vm578 = vcmask 7168
  %s579 = scalar_lea.vmem %s1, 834
  %580 = vst.msk [vmem:[%s579] ss:$8 sm:$0xf] %vm578, %v577
  %s581 = scalar_lea.vmem %s1, 834
  %582 = vst.msk [vmem:[%s581] ss:$8 sm:$0xf0] %vm578, %v577
  %s583 = scalar_lea.vmem %s0, 112
  %v584 = vld [vmem:[%s583] sm:$0xff]
  %585 = vrot.lane.b32.xlu0 %v584, 126
  %v586 = vpop.permute.xlu0 %585
  %vm587 = vcmask 7168
  %s588 = scalar_lea.vmem %s1, 898
  %589 = vst.msk [vmem:[%s588] ss:$8 sm:$0xf] %vm587, %v586
  %s590 = scalar_lea.vmem %s1, 898
  %591 = vst.msk [vmem:[%s590] ss:$8 sm:$0xf0] %vm587, %v586
  %s592 = scalar_lea.vmem %s0, 120
  %v593 = vld [vmem:[%s592] sm:$0xff]
  %594 = vrot.lane.b32.xlu0 %v593, 126
  %v595 = vpop.permute.xlu0 %594
  %vm596 = vcmask 7168
  %s597 = scalar_lea.vmem %s1, 962
  %598 = vst.msk [vmem:[%s597] ss:$8 sm:$0xf] %vm596, %v595
  %s599 = scalar_lea.vmem %s1, 962
  %600 = vst.msk [vmem:[%s599] ss:$8 sm:$0xf0] %vm596, %v595
  %s601 = scalar_lea.vmem %s0, 128
  %v602 = vld [vmem:[%s601] sm:$0xff]
  %603 = vrot.lane.b32.xlu0 %v602, 126
  %v604 = vpop.permute.xlu0 %603
  %vm605 = vcmask 7168
  %s606 = scalar_lea.vmem %s1, 1026
  %607 = vst.msk [vmem:[%s606] ss:$8 sm:$0xf] %vm605, %v604
  %s608 = scalar_lea.vmem %s1, 1026
  %609 = vst.msk [vmem:[%s608] ss:$8 sm:$0xf0] %vm605, %v604
  %s610 = scalar_lea.vmem %s0, 136
  %v611 = vld [vmem:[%s610] sm:$0xff]
  %612 = vrot.lane.b32.xlu0 %v611, 126
  %v613 = vpop.permute.xlu0 %612
  %vm614 = vcmask 7168
  %s615 = scalar_lea.vmem %s1, 1090
  %616 = vst.msk [vmem:[%s615] ss:$8 sm:$0xf] %vm614, %v613
  %s617 = scalar_lea.vmem %s1, 1090
  %618 = vst.msk [vmem:[%s617] ss:$8 sm:$0xf0] %vm614, %v613
  %s619 = scalar_lea.vmem %s0, 144
  %v620 = vld [vmem:[%s619] sm:$0xff]
  %621 = vrot.lane.b32.xlu0 %v620, 126
  %v622 = vpop.permute.xlu0 %621
  %vm623 = vcmask 7168
  %s624 = scalar_lea.vmem %s1, 1154
  %625 = vst.msk [vmem:[%s624] ss:$8 sm:$0xf] %vm623, %v622
  %s626 = scalar_lea.vmem %s1, 1154
  %627 = vst.msk [vmem:[%s626] ss:$8 sm:$0xf0] %vm623, %v622
  %s628 = scalar_lea.vmem %s0, 152
  %v629 = vld [vmem:[%s628] sm:$0xff]
  %630 = vrot.lane.b32.xlu0 %v629, 126
  %v631 = vpop.permute.xlu0 %630
  %vm632 = vcmask 7168
  %s633 = scalar_lea.vmem %s1, 1218
  %634 = vst.msk [vmem:[%s633] ss:$8 sm:$0xf] %vm632, %v631
  %s635 = scalar_lea.vmem %s1, 1218
  %636 = vst.msk [vmem:[%s635] ss:$8 sm:$0xf0] %vm632, %v631
  %s637 = scalar_lea.vmem %s0, 160
  %v638 = vld [vmem:[%s637] sm:$0xff]
  %639 = vrot.lane.b32.xlu0 %v638, 126
  %v640 = vpop.permute.xlu0 %639
  %vm641 = vcmask 7168
  %s642 = scalar_lea.vmem %s1, 1282
  %643 = vst.msk [vmem:[%s642] ss:$8 sm:$0xf] %vm641, %v640
  %s644 = scalar_lea.vmem %s1, 1282
  %645 = vst.msk [vmem:[%s644] ss:$8 sm:$0xf0] %vm641, %v640
  %s646 = scalar_lea.vmem %s0, 168
  %v647 = vld [vmem:[%s646] sm:$0xff]
  %648 = vrot.lane.b32.xlu0 %v647, 126
  %v649 = vpop.permute.xlu0 %648
  %vm650 = vcmask 7168
  %s651 = scalar_lea.vmem %s1, 1346
  %652 = vst.msk [vmem:[%s651] ss:$8 sm:$0xf] %vm650, %v649
  %s653 = scalar_lea.vmem %s1, 1346
  %654 = vst.msk [vmem:[%s653] ss:$8 sm:$0xf0] %vm650, %v649
  %s655 = scalar_lea.vmem %s0, 176
  %v656 = vld [vmem:[%s655] sm:$0xff]
  %657 = vrot.lane.b32.xlu0 %v656, 126
  %v658 = vpop.permute.xlu0 %657
  %vm659 = vcmask 7168
  %s660 = scalar_lea.vmem %s1, 1410
  %661 = vst.msk [vmem:[%s660] ss:$8 sm:$0xf] %vm659, %v658
  %s662 = scalar_lea.vmem %s1, 1410
  %663 = vst.msk [vmem:[%s662] ss:$8 sm:$0xf0] %vm659, %v658
  %s664 = scalar_lea.vmem %s0, 184
  %v665 = vld [vmem:[%s664] sm:$0xff]
  %666 = vrot.lane.b32.xlu0 %v665, 126
  %v667 = vpop.permute.xlu0 %666
  %vm668 = vcmask 7168
  %s669 = scalar_lea.vmem %s1, 1474
  %670 = vst.msk [vmem:[%s669] ss:$8 sm:$0xf] %vm668, %v667
  %s671 = scalar_lea.vmem %s1, 1474
  %672 = vst.msk [vmem:[%s671] ss:$8 sm:$0xf0] %vm668, %v667
  %s673 = scalar_lea.vmem %s0, 192
  %v674 = vld [vmem:[%s673] sm:$0xff]
  %675 = vrot.lane.b32.xlu0 %v674, 126
  %v676 = vpop.permute.xlu0 %675
  %vm677 = vcmask 7168
  %s678 = scalar_lea.vmem %s1, 1538
  %679 = vst.msk [vmem:[%s678] ss:$8 sm:$0xf] %vm677, %v676
  %s680 = scalar_lea.vmem %s1, 1538
  %681 = vst.msk [vmem:[%s680] ss:$8 sm:$0xf0] %vm677, %v676
  %s682 = scalar_lea.vmem %s0, 200
  %v683 = vld [vmem:[%s682] sm:$0xff]
  %684 = vrot.lane.b32.xlu0 %v683, 126
  %v685 = vpop.permute.xlu0 %684
  %vm686 = vcmask 7168
  %s687 = scalar_lea.vmem %s1, 1602
  %688 = vst.msk [vmem:[%s687] ss:$8 sm:$0xf] %vm686, %v685
  %s689 = scalar_lea.vmem %s1, 1602
  %690 = vst.msk [vmem:[%s689] ss:$8 sm:$0xf0] %vm686, %v685
  %s691 = scalar_lea.vmem %s0, 208
  %v692 = vld [vmem:[%s691] sm:$0xff]
  %693 = vrot.lane.b32.xlu0 %v692, 126
  %v694 = vpop.permute.xlu0 %693
  %vm695 = vcmask 7168
  %s696 = scalar_lea.vmem %s1, 1666
  %697 = vst.msk [vmem:[%s696] ss:$8 sm:$0xf] %vm695, %v694
  %s698 = scalar_lea.vmem %s1, 1666
  %699 = vst.msk [vmem:[%s698] ss:$8 sm:$0xf0] %vm695, %v694
  %s700 = scalar_lea.vmem %s0, 216
  %v701 = vld [vmem:[%s700] sm:$0xff]
  %702 = vrot.lane.b32.xlu0 %v701, 126
  %v703 = vpop.permute.xlu0 %702
  %vm704 = vcmask 7168
  %s705 = scalar_lea.vmem %s1, 1730
  %706 = vst.msk [vmem:[%s705] ss:$8 sm:$0xf] %vm704, %v703
  %s707 = scalar_lea.vmem %s1, 1730
  %708 = vst.msk [vmem:[%s707] ss:$8 sm:$0xf0] %vm704, %v703
  %s709 = scalar_lea.vmem %s0, 224
  %v710 = vld [vmem:[%s709] sm:$0x1]
  %711 = vrot.lane.b32.xlu0 %v710, 126
  %v712 = vpop.permute.xlu0 %711
  %vm713 = vcmask 7168
  %s714 = scalar_lea.vmem %s1, 1794
  %715 = vst.msk [vmem:[%s714] sm:$0x1] %vm713, %v712
  %v716 = vld [vmem:[%s0] sm:$0xff]
  %717 = vrot.lane.b32.xlu0 %v716, 125
  %v718 = vpop.permute.xlu0 %717
  %vm719 = vcmask 7168
  %s720 = scalar_lea.vmem %s1, 3
  %721 = vst.msk [vmem:[%s720] ss:$8 sm:$0xf] %vm719, %v718
  %s722 = scalar_lea.vmem %s1, 3
  %723 = vst.msk [vmem:[%s722] ss:$8 sm:$0xf0] %vm719, %v718
  %s724 = scalar_lea.vmem %s0, 8
  %v725 = vld [vmem:[%s724] sm:$0xff]
  %726 = vrot.lane.b32.xlu0 %v725, 125
  %v727 = vpop.permute.xlu0 %726
  %vm728 = vcmask 7168
  %s729 = scalar_lea.vmem %s1, 67
  %730 = vst.msk [vmem:[%s729] ss:$8 sm:$0xf] %vm728, %v727
  %s731 = scalar_lea.vmem %s1, 67
  %732 = vst.msk [vmem:[%s731] ss:$8 sm:$0xf0] %vm728, %v727
  %s733 = scalar_lea.vmem %s0, 16
  %v734 = vld [vmem:[%s733] sm:$0xff]
  %735 = vrot.lane.b32.xlu0 %v734, 125
  %v736 = vpop.permute.xlu0 %735
  %vm737 = vcmask 7168
  %s738 = scalar_lea.vmem %s1, 131
  %739 = vst.msk [vmem:[%s738] ss:$8 sm:$0xf] %vm737, %v736
  %s740 = scalar_lea.vmem %s1, 131
  %741 = vst.msk [vmem:[%s740] ss:$8 sm:$0xf0] %vm737, %v736
  %s742 = scalar_lea.vmem %s0, 24
  %v743 = vld [vmem:[%s742] sm:$0xff]
  %744 = vrot.lane.b32.xlu0 %v743, 125
  %v745 = vpop.permute.xlu0 %744
  %vm746 = vcmask 7168
  %s747 = scalar_lea.vmem %s1, 195
  %748 = vst.msk [vmem:[%s747] ss:$8 sm:$0xf] %vm746, %v745
  %s749 = scalar_lea.vmem %s1, 195
  %750 = vst.msk [vmem:[%s749] ss:$8 sm:$0xf0] %vm746, %v745
  %s751 = scalar_lea.vmem %s0, 32
  %v752 = vld [vmem:[%s751] sm:$0xff]
  %753 = vrot.lane.b32.xlu0 %v752, 125
  %v754 = vpop.permute.xlu0 %753
  %vm755 = vcmask 7168
  %s756 = scalar_lea.vmem %s1, 259
  %757 = vst.msk [vmem:[%s756] ss:$8 sm:$0xf] %vm755, %v754
  %s758 = scalar_lea.vmem %s1, 259
  %759 = vst.msk [vmem:[%s758] ss:$8 sm:$0xf0] %vm755, %v754
  %s760 = scalar_lea.vmem %s0, 40
  %v761 = vld [vmem:[%s760] sm:$0xff]
  %762 = vrot.lane.b32.xlu0 %v761, 125
  %v763 = vpop.permute.xlu0 %762
  %vm764 = vcmask 7168
  %s765 = scalar_lea.vmem %s1, 323
  %766 = vst.msk [vmem:[%s765] ss:$8 sm:$0xf] %vm764, %v763
  %s767 = scalar_lea.vmem %s1, 323
  %768 = vst.msk [vmem:[%s767] ss:$8 sm:$0xf0] %vm764, %v763
  %s769 = scalar_lea.vmem %s0, 48
  %v770 = vld [vmem:[%s769] sm:$0xff]
  %771 = vrot.lane.b32.xlu0 %v770, 125
  %v772 = vpop.permute.xlu0 %771
  %vm773 = vcmask 7168
  %s774 = scalar_lea.vmem %s1, 387
  %775 = vst.msk [vmem:[%s774] ss:$8 sm:$0xf] %vm773, %v772
  %s776 = scalar_lea.vmem %s1, 387
  %777 = vst.msk [vmem:[%s776] ss:$8 sm:$0xf0] %vm773, %v772
  %s778 = scalar_lea.vmem %s0, 56
  %v779 = vld [vmem:[%s778] sm:$0xff]
  %780 = vrot.lane.b32.xlu0 %v779, 125
  %v781 = vpop.permute.xlu0 %780
  %vm782 = vcmask 7168
  %s783 = scalar_lea.vmem %s1, 451
  %784 = vst.msk [vmem:[%s783] ss:$8 sm:$0xf] %vm782, %v781
  %s785 = scalar_lea.vmem %s1, 451
  %786 = vst.msk [vmem:[%s785] ss:$8 sm:$0xf0] %vm782, %v781
  %s787 = scalar_lea.vmem %s0, 64
  %v788 = vld [vmem:[%s787] sm:$0xff]
  %789 = vrot.lane.b32.xlu0 %v788, 125
  %v790 = vpop.permute.xlu0 %789
  %vm791 = vcmask 7168
  %s792 = scalar_lea.vmem %s1, 515
  %793 = vst.msk [vmem:[%s792] ss:$8 sm:$0xf] %vm791, %v790
  %s794 = scalar_lea.vmem %s1, 515
  %795 = vst.msk [vmem:[%s794] ss:$8 sm:$0xf0] %vm791, %v790
  %s796 = scalar_lea.vmem %s0, 72
  %v797 = vld [vmem:[%s796] sm:$0xff]
  %798 = vrot.lane.b32.xlu0 %v797, 125
  %v799 = vpop.permute.xlu0 %798
  %vm800 = vcmask 7168
  %s801 = scalar_lea.vmem %s1, 579
  %802 = vst.msk [vmem:[%s801] ss:$8 sm:$0xf] %vm800, %v799
  %s803 = scalar_lea.vmem %s1, 579
  %804 = vst.msk [vmem:[%s803] ss:$8 sm:$0xf0] %vm800, %v799
  %s805 = scalar_lea.vmem %s0, 80
  %v806 = vld [vmem:[%s805] sm:$0xff]
  %807 = vrot.lane.b32.xlu0 %v806, 125
  %v808 = vpop.permute.xlu0 %807
  %vm809 = vcmask 7168
  %s810 = scalar_lea.vmem %s1, 643
  %811 = vst.msk [vmem:[%s810] ss:$8 sm:$0xf] %vm809, %v808
  %s812 = scalar_lea.vmem %s1, 643
  %813 = vst.msk [vmem:[%s812] ss:$8 sm:$0xf0] %vm809, %v808
  %s814 = scalar_lea.vmem %s0, 88
  %v815 = vld [vmem:[%s814] sm:$0xff]
  %816 = vrot.lane.b32.xlu0 %v815, 125
  %v817 = vpop.permute.xlu0 %816
  %vm818 = vcmask 7168
  %s819 = scalar_lea.vmem %s1, 707
  %820 = vst.msk [vmem:[%s819] ss:$8 sm:$0xf] %vm818, %v817
  %s821 = scalar_lea.vmem %s1, 707
  %822 = vst.msk [vmem:[%s821] ss:$8 sm:$0xf0] %vm818, %v817
  %s823 = scalar_lea.vmem %s0, 96
  %v824 = vld [vmem:[%s823] sm:$0xff]
  %825 = vrot.lane.b32.xlu0 %v824, 125
  %v826 = vpop.permute.xlu0 %825
  %vm827 = vcmask 7168
  %s828 = scalar_lea.vmem %s1, 771
  %829 = vst.msk [vmem:[%s828] ss:$8 sm:$0xf] %vm827, %v826
  %s830 = scalar_lea.vmem %s1, 771
  %831 = vst.msk [vmem:[%s830] ss:$8 sm:$0xf0] %vm827, %v826
  %s832 = scalar_lea.vmem %s0, 104
  %v833 = vld [vmem:[%s832] sm:$0xff]
  %834 = vrot.lane.b32.xlu0 %v833, 125
  %v835 = vpop.permute.xlu0 %834
  %vm836 = vcmask 7168
  %s837 = scalar_lea.vmem %s1, 835
  %838 = vst.msk [vmem:[%s837] ss:$8 sm:$0xf] %vm836, %v835
  %s839 = scalar_lea.vmem %s1, 835
  %840 = vst.msk [vmem:[%s839] ss:$8 sm:$0xf0] %vm836, %v835
  %s841 = scalar_lea.vmem %s0, 112
  %v842 = vld [vmem:[%s841] sm:$0xff]
  %843 = vrot.lane.b32.xlu0 %v842, 125
  %v844 = vpop.permute.xlu0 %843
  %vm845 = vcmask 7168
  %s846 = scalar_lea.vmem %s1, 899
  %847 = vst.msk [vmem:[%s846] ss:$8 sm:$0xf] %vm845, %v844
  %s848 = scalar_lea.vmem %s1, 899
  %849 = vst.msk [vmem:[%s848] ss:$8 sm:$0xf0] %vm845, %v844
  %s850 = scalar_lea.vmem %s0, 120
  %v851 = vld [vmem:[%s850] sm:$0xff]
  %852 = vrot.lane.b32.xlu0 %v851, 125
  %v853 = vpop.permute.xlu0 %852
  %vm854 = vcmask 7168
  %s855 = scalar_lea.vmem %s1, 963
  %856 = vst.msk [vmem:[%s855] ss:$8 sm:$0xf] %vm854, %v853
  %s857 = scalar_lea.vmem %s1, 963
  %858 = vst.msk [vmem:[%s857] ss:$8 sm:$0xf0] %vm854, %v853
  %s859 = scalar_lea.vmem %s0, 128
  %v860 = vld [vmem:[%s859] sm:$0xff]
  %861 = vrot.lane.b32.xlu0 %v860, 125
  %v862 = vpop.permute.xlu0 %861
  %vm863 = vcmask 7168
  %s864 = scalar_lea.vmem %s1, 1027
  %865 = vst.msk [vmem:[%s864] ss:$8 sm:$0xf] %vm863, %v862
  %s866 = scalar_lea.vmem %s1, 1027
  %867 = vst.msk [vmem:[%s866] ss:$8 sm:$0xf0] %vm863, %v862
  %s868 = scalar_lea.vmem %s0, 136
  %v869 = vld [vmem:[%s868] sm:$0xff]
  %870 = vrot.lane.b32.xlu0 %v869, 125
  %v871 = vpop.permute.xlu0 %870
  %vm872 = vcmask 7168
  %s873 = scalar_lea.vmem %s1, 1091
  %874 = vst.msk [vmem:[%s873] ss:$8 sm:$0xf] %vm872, %v871
  %s875 = scalar_lea.vmem %s1, 1091
  %876 = vst.msk [vmem:[%s875] ss:$8 sm:$0xf0] %vm872, %v871
  %s877 = scalar_lea.vmem %s0, 144
  %v878 = vld [vmem:[%s877] sm:$0xff]
  %879 = vrot.lane.b32.xlu0 %v878, 125
  %v880 = vpop.permute.xlu0 %879
  %vm881 = vcmask 7168
  %s882 = scalar_lea.vmem %s1, 1155
  %883 = vst.msk [vmem:[%s882] ss:$8 sm:$0xf] %vm881, %v880
  %s884 = scalar_lea.vmem %s1, 1155
  %885 = vst.msk [vmem:[%s884] ss:$8 sm:$0xf0] %vm881, %v880
  %s886 = scalar_lea.vmem %s0, 152
  %v887 = vld [vmem:[%s886] sm:$0xff]
  %888 = vrot.lane.b32.xlu0 %v887, 125
  %v889 = vpop.permute.xlu0 %888
  %vm890 = vcmask 7168
  %s891 = scalar_lea.vmem %s1, 1219
  %892 = vst.msk [vmem:[%s891] ss:$8 sm:$0xf] %vm890, %v889
  %s893 = scalar_lea.vmem %s1, 1219
  %894 = vst.msk [vmem:[%s893] ss:$8 sm:$0xf0] %vm890, %v889
  %s895 = scalar_lea.vmem %s0, 160
  %v896 = vld [vmem:[%s895] sm:$0xff]
  %897 = vrot.lane.b32.xlu0 %v896, 125
  %v898 = vpop.permute.xlu0 %897
  %vm899 = vcmask 7168
  %s900 = scalar_lea.vmem %s1, 1283
  %901 = vst.msk [vmem:[%s900] ss:$8 sm:$0xf] %vm899, %v898
  %s902 = scalar_lea.vmem %s1, 1283
  %903 = vst.msk [vmem:[%s902] ss:$8 sm:$0xf0] %vm899, %v898
  %s904 = scalar_lea.vmem %s0, 168
  %v905 = vld [vmem:[%s904] sm:$0xff]
  %906 = vrot.lane.b32.xlu0 %v905, 125
  %v907 = vpop.permute.xlu0 %906
  %vm908 = vcmask 7168
  %s909 = scalar_lea.vmem %s1, 1347
  %910 = vst.msk [vmem:[%s909] ss:$8 sm:$0xf] %vm908, %v907
  %s911 = scalar_lea.vmem %s1, 1347
  %912 = vst.msk [vmem:[%s911] ss:$8 sm:$0xf0] %vm908, %v907
  %s913 = scalar_lea.vmem %s0, 176
  %v914 = vld [vmem:[%s913] sm:$0xff]
  %915 = vrot.lane.b32.xlu0 %v914, 125
  %v916 = vpop.permute.xlu0 %915
  %vm917 = vcmask 7168
  %s918 = scalar_lea.vmem %s1, 1411
  %919 = vst.msk [vmem:[%s918] ss:$8 sm:$0xf] %vm917, %v916
  %s920 = scalar_lea.vmem %s1, 1411
  %921 = vst.msk [vmem:[%s920] ss:$8 sm:$0xf0] %vm917, %v916
  %s922 = scalar_lea.vmem %s0, 184
  %v923 = vld [vmem:[%s922] sm:$0xff]
  %924 = vrot.lane.b32.xlu0 %v923, 125
  %v925 = vpop.permute.xlu0 %924
  %vm926 = vcmask 7168
  %s927 = scalar_lea.vmem %s1, 1475
  %928 = vst.msk [vmem:[%s927] ss:$8 sm:$0xf] %vm926, %v925
  %s929 = scalar_lea.vmem %s1, 1475
  %930 = vst.msk [vmem:[%s929] ss:$8 sm:$0xf0] %vm926, %v925
  %s931 = scalar_lea.vmem %s0, 192
  %v932 = vld [vmem:[%s931] sm:$0xff]
  %933 = vrot.lane.b32.xlu0 %v932, 125
  %v934 = vpop.permute.xlu0 %933
  %vm935 = vcmask 7168
  %s936 = scalar_lea.vmem %s1, 1539
  %937 = vst.msk [vmem:[%s936] ss:$8 sm:$0xf] %vm935, %v934
  %s938 = scalar_lea.vmem %s1, 1539
  %939 = vst.msk [vmem:[%s938] ss:$8 sm:$0xf0] %vm935, %v934
  %s940 = scalar_lea.vmem %s0, 200
  %v941 = vld [vmem:[%s940] sm:$0xff]
  %942 = vrot.lane.b32.xlu0 %v941, 125
  %v943 = vpop.permute.xlu0 %942
  %vm944 = vcmask 7168
  %s945 = scalar_lea.vmem %s1, 1603
  %946 = vst.msk [vmem:[%s945] ss:$8 sm:$0xf] %vm944, %v943
  %s947 = scalar_lea.vmem %s1, 1603
  %948 = vst.msk [vmem:[%s947] ss:$8 sm:$0xf0] %vm944, %v943
  %s949 = scalar_lea.vmem %s0, 208
  %v950 = vld [vmem:[%s949] sm:$0xff]
  %951 = vrot.lane.b32.xlu0 %v950, 125
  %v952 = vpop.permute.xlu0 %951
  %vm953 = vcmask 7168
  %s954 = scalar_lea.vmem %s1, 1667
  %955 = vst.msk [vmem:[%s954] ss:$8 sm:$0xf] %vm953, %v952
  %s956 = scalar_lea.vmem %s1, 1667
  %957 = vst.msk [vmem:[%s956] ss:$8 sm:$0xf0] %vm953, %v952
  %s958 = scalar_lea.vmem %s0, 216
  %v959 = vld [vmem:[%s958] sm:$0xff]
  %960 = vrot.lane.b32.xlu0 %v959, 125
  %v961 = vpop.permute.xlu0 %960
  %vm962 = vcmask 7168
  %s963 = scalar_lea.vmem %s1, 1731
  %964 = vst.msk [vmem:[%s963] ss:$8 sm:$0xf] %vm962, %v961
  %s965 = scalar_lea.vmem %s1, 1731
  %966 = vst.msk [vmem:[%s965] ss:$8 sm:$0xf0] %vm962, %v961
  %s967 = scalar_lea.vmem %s0, 224
  %v968 = vld [vmem:[%s967] sm:$0x1]
  %969 = vrot.lane.b32.xlu0 %v968, 125
  %v970 = vpop.permute.xlu0 %969
  %vm971 = vcmask 7168
  %s972 = scalar_lea.vmem %s1, 1795
  %973 = vst.msk [vmem:[%s972] sm:$0x1] %vm971, %v970
  %v974 = vld [vmem:[%s0] sm:$0xff]
  %975 = vrot.lane.b32.xlu0 %v974, 124
  %v976 = vpop.permute.xlu0 %975
  %vm977 = vcmask 7168
  %s978 = scalar_lea.vmem %s1, 4
  %979 = vst.msk [vmem:[%s978] ss:$8 sm:$0xf] %vm977, %v976
  %s980 = scalar_lea.vmem %s1, 4
  %981 = vst.msk [vmem:[%s980] ss:$8 sm:$0xf0] %vm977, %v976
  %s982 = scalar_lea.vmem %s0, 8
  %v983 = vld [vmem:[%s982] sm:$0xff]
  %984 = vrot.lane.b32.xlu0 %v983, 124
  %v985 = vpop.permute.xlu0 %984
  %vm986 = vcmask 7168
  %s987 = scalar_lea.vmem %s1, 68
  %988 = vst.msk [vmem:[%s987] ss:$8 sm:$0xf] %vm986, %v985
  %s989 = scalar_lea.vmem %s1, 68
  %990 = vst.msk [vmem:[%s989] ss:$8 sm:$0xf0] %vm986, %v985
  %s991 = scalar_lea.vmem %s0, 16
  %v992 = vld [vmem:[%s991] sm:$0xff]
  %993 = vrot.lane.b32.xlu0 %v992, 124
  %v994 = vpop.permute.xlu0 %993
  %vm995 = vcmask 7168
  %s996 = scalar_lea.vmem %s1, 132
  %997 = vst.msk [vmem:[%s996] ss:$8 sm:$0xf] %vm995, %v994
  %s998 = scalar_lea.vmem %s1, 132
  %999 = vst.msk [vmem:[%s998] ss:$8 sm:$0xf0] %vm995, %v994
  %s1000 = scalar_lea.vmem %s0, 24
  %v1001 = vld [vmem:[%s1000] sm:$0xff]
  %1002 = vrot.lane.b32.xlu0 %v1001, 124
  %v1003 = vpop.permute.xlu0 %1002
  %vm1004 = vcmask 7168
  %s1005 = scalar_lea.vmem %s1, 196
  %1006 = vst.msk [vmem:[%s1005] ss:$8 sm:$0xf] %vm1004, %v1003
  %s1007 = scalar_lea.vmem %s1, 196
  %1008 = vst.msk [vmem:[%s1007] ss:$8 sm:$0xf0] %vm1004, %v1003
  %s1009 = scalar_lea.vmem %s0, 32
  %v1010 = vld [vmem:[%s1009] sm:$0xff]
  %1011 = vrot.lane.b32.xlu0 %v1010, 124
  %v1012 = vpop.permute.xlu0 %1011
  %vm1013 = vcmask 7168
  %s1014 = scalar_lea.vmem %s1, 260
  %1015 = vst.msk [vmem:[%s1014] ss:$8 sm:$0xf] %vm1013, %v1012
  %s1016 = scalar_lea.vmem %s1, 260
  %1017 = vst.msk [vmem:[%s1016] ss:$8 sm:$0xf0] %vm1013, %v1012
  %s1018 = scalar_lea.vmem %s0, 40
  %v1019 = vld [vmem:[%s1018] sm:$0xff]
  %1020 = vrot.lane.b32.xlu0 %v1019, 124
  %v1021 = vpop.permute.xlu0 %1020
  %vm1022 = vcmask 7168
  %s1023 = scalar_lea.vmem %s1, 324
  %1024 = vst.msk [vmem:[%s1023] ss:$8 sm:$0xf] %vm1022, %v1021
  %s1025 = scalar_lea.vmem %s1, 324
  %1026 = vst.msk [vmem:[%s1025] ss:$8 sm:$0xf0] %vm1022, %v1021
  %s1027 = scalar_lea.vmem %s0, 48
  %v1028 = vld [vmem:[%s1027] sm:$0xff]
  %1029 = vrot.lane.b32.xlu0 %v1028, 124
  %v1030 = vpop.permute.xlu0 %1029
  %vm1031 = vcmask 7168
  %s1032 = scalar_lea.vmem %s1, 388
  %1033 = vst.msk [vmem:[%s1032] ss:$8 sm:$0xf] %vm1031, %v1030
  %s1034 = scalar_lea.vmem %s1, 388
  %1035 = vst.msk [vmem:[%s1034] ss:$8 sm:$0xf0] %vm1031, %v1030
  %s1036 = scalar_lea.vmem %s0, 56
  %v1037 = vld [vmem:[%s1036] sm:$0xff]
  %1038 = vrot.lane.b32.xlu0 %v1037, 124
  %v1039 = vpop.permute.xlu0 %1038
  %vm1040 = vcmask 7168
  %s1041 = scalar_lea.vmem %s1, 452
  %1042 = vst.msk [vmem:[%s1041] ss:$8 sm:$0xf] %vm1040, %v1039
  %s1043 = scalar_lea.vmem %s1, 452
  %1044 = vst.msk [vmem:[%s1043] ss:$8 sm:$0xf0] %vm1040, %v1039
  %s1045 = scalar_lea.vmem %s0, 64
  %v1046 = vld [vmem:[%s1045] sm:$0xff]
  %1047 = vrot.lane.b32.xlu0 %v1046, 124
  %v1048 = vpop.permute.xlu0 %1047
  %vm1049 = vcmask 7168
  %s1050 = scalar_lea.vmem %s1, 516
  %1051 = vst.msk [vmem:[%s1050] ss:$8 sm:$0xf] %vm1049, %v1048
  %s1052 = scalar_lea.vmem %s1, 516
  %1053 = vst.msk [vmem:[%s1052] ss:$8 sm:$0xf0] %vm1049, %v1048
  %s1054 = scalar_lea.vmem %s0, 72
  %v1055 = vld [vmem:[%s1054] sm:$0xff]
  %1056 = vrot.lane.b32.xlu0 %v1055, 124
  %v1057 = vpop.permute.xlu0 %1056
  %vm1058 = vcmask 7168
  %s1059 = scalar_lea.vmem %s1, 580
  %1060 = vst.msk [vmem:[%s1059] ss:$8 sm:$0xf] %vm1058, %v1057
  %s1061 = scalar_lea.vmem %s1, 580
  %1062 = vst.msk [vmem:[%s1061] ss:$8 sm:$0xf0] %vm1058, %v1057
  %s1063 = scalar_lea.vmem %s0, 80
  %v1064 = vld [vmem:[%s1063] sm:$0xff]
  %1065 = vrot.lane.b32.xlu0 %v1064, 124
  %v1066 = vpop.permute.xlu0 %1065
  %vm1067 = vcmask 7168
  %s1068 = scalar_lea.vmem %s1, 644
  %1069 = vst.msk [vmem:[%s1068] ss:$8 sm:$0xf] %vm1067, %v1066
  %s1070 = scalar_lea.vmem %s1, 644
  %1071 = vst.msk [vmem:[%s1070] ss:$8 sm:$0xf0] %vm1067, %v1066
  %s1072 = scalar_lea.vmem %s0, 88
  %v1073 = vld [vmem:[%s1072] sm:$0xff]
  %1074 = vrot.lane.b32.xlu0 %v1073, 124
  %v1075 = vpop.permute.xlu0 %1074
  %vm1076 = vcmask 7168
  %s1077 = scalar_lea.vmem %s1, 708
  %1078 = vst.msk [vmem:[%s1077] ss:$8 sm:$0xf] %vm1076, %v1075
  %s1079 = scalar_lea.vmem %s1, 708
  %1080 = vst.msk [vmem:[%s1079] ss:$8 sm:$0xf0] %vm1076, %v1075
  %s1081 = scalar_lea.vmem %s0, 96
  %v1082 = vld [vmem:[%s1081] sm:$0xff]
  %1083 = vrot.lane.b32.xlu0 %v1082, 124
  %v1084 = vpop.permute.xlu0 %1083
  %vm1085 = vcmask 7168
  %s1086 = scalar_lea.vmem %s1, 772
  %1087 = vst.msk [vmem:[%s1086] ss:$8 sm:$0xf] %vm1085, %v1084
  %s1088 = scalar_lea.vmem %s1, 772
  %1089 = vst.msk [vmem:[%s1088] ss:$8 sm:$0xf0] %vm1085, %v1084
  %s1090 = scalar_lea.vmem %s0, 104
  %v1091 = vld [vmem:[%s1090] sm:$0xff]
  %1092 = vrot.lane.b32.xlu0 %v1091, 124
  %v1093 = vpop.permute.xlu0 %1092
  %vm1094 = vcmask 7168
  %s1095 = scalar_lea.vmem %s1, 836
  %1096 = vst.msk [vmem:[%s1095] ss:$8 sm:$0xf] %vm1094, %v1093
  %s1097 = scalar_lea.vmem %s1, 836
  %1098 = vst.msk [vmem:[%s1097] ss:$8 sm:$0xf0] %vm1094, %v1093
  %s1099 = scalar_lea.vmem %s0, 112
  %v1100 = vld [vmem:[%s1099] sm:$0xff]
  %1101 = vrot.lane.b32.xlu0 %v1100, 124
  %v1102 = vpop.permute.xlu0 %1101
  %vm1103 = vcmask 7168
  %s1104 = scalar_lea.vmem %s1, 900
  %1105 = vst.msk [vmem:[%s1104] ss:$8 sm:$0xf] %vm1103, %v1102
  %s1106 = scalar_lea.vmem %s1, 900
  %1107 = vst.msk [vmem:[%s1106] ss:$8 sm:$0xf0] %vm1103, %v1102
  %s1108 = scalar_lea.vmem %s0, 120
  %v1109 = vld [vmem:[%s1108] sm:$0xff]
  %1110 = vrot.lane.b32.xlu0 %v1109, 124
  %v1111 = vpop.permute.xlu0 %1110
  %vm1112 = vcmask 7168
  %s1113 = scalar_lea.vmem %s1, 964
  %1114 = vst.msk [vmem:[%s1113] ss:$8 sm:$0xf] %vm1112, %v1111
  %s1115 = scalar_lea.vmem %s1, 964
  %1116 = vst.msk [vmem:[%s1115] ss:$8 sm:$0xf0] %vm1112, %v1111
  %s1117 = scalar_lea.vmem %s0, 128
  %v1118 = vld [vmem:[%s1117] sm:$0xff]
  %1119 = vrot.lane.b32.xlu0 %v1118, 124
  %v1120 = vpop.permute.xlu0 %1119
  %vm1121 = vcmask 7168
  %s1122 = scalar_lea.vmem %s1, 1028
  %1123 = vst.msk [vmem:[%s1122] ss:$8 sm:$0xf] %vm1121, %v1120
  %s1124 = scalar_lea.vmem %s1, 1028
  %1125 = vst.msk [vmem:[%s1124] ss:$8 sm:$0xf0] %vm1121, %v1120
  %s1126 = scalar_lea.vmem %s0, 136
  %v1127 = vld [vmem:[%s1126] sm:$0xff]
  %1128 = vrot.lane.b32.xlu0 %v1127, 124
  %v1129 = vpop.permute.xlu0 %1128
  %vm1130 = vcmask 7168
  %s1131 = scalar_lea.vmem %s1, 1092
  %1132 = vst.msk [vmem:[%s1131] ss:$8 sm:$0xf] %vm1130, %v1129
  %s1133 = scalar_lea.vmem %s1, 1092
  %1134 = vst.msk [vmem:[%s1133] ss:$8 sm:$0xf0] %vm1130, %v1129
  %s1135 = scalar_lea.vmem %s0, 144
  %v1136 = vld [vmem:[%s1135] sm:$0xff]
  %1137 = vrot.lane.b32.xlu0 %v1136, 124
  %v1138 = vpop.permute.xlu0 %1137
  %vm1139 = vcmask 7168
  %s1140 = scalar_lea.vmem %s1, 1156
  %1141 = vst.msk [vmem:[%s1140] ss:$8 sm:$0xf] %vm1139, %v1138
  %s1142 = scalar_lea.vmem %s1, 1156
  %1143 = vst.msk [vmem:[%s1142] ss:$8 sm:$0xf0] %vm1139, %v1138
  %s1144 = scalar_lea.vmem %s0, 152
  %v1145 = vld [vmem:[%s1144] sm:$0xff]
  %1146 = vrot.lane.b32.xlu0 %v1145, 124
  %v1147 = vpop.permute.xlu0 %1146
  %vm1148 = vcmask 7168
  %s1149 = scalar_lea.vmem %s1, 1220
  %1150 = vst.msk [vmem:[%s1149] ss:$8 sm:$0xf] %vm1148, %v1147
  %s1151 = scalar_lea.vmem %s1, 1220
  %1152 = vst.msk [vmem:[%s1151] ss:$8 sm:$0xf0] %vm1148, %v1147
  %s1153 = scalar_lea.vmem %s0, 160
  %v1154 = vld [vmem:[%s1153] sm:$0xff]
  %1155 = vrot.lane.b32.xlu0 %v1154, 124
  %v1156 = vpop.permute.xlu0 %1155
  %vm1157 = vcmask 7168
  %s1158 = scalar_lea.vmem %s1, 1284
  %1159 = vst.msk [vmem:[%s1158] ss:$8 sm:$0xf] %vm1157, %v1156
  %s1160 = scalar_lea.vmem %s1, 1284
  %1161 = vst.msk [vmem:[%s1160] ss:$8 sm:$0xf0] %vm1157, %v1156
  %s1162 = scalar_lea.vmem %s0, 168
  %v1163 = vld [vmem:[%s1162] sm:$0xff]
  %1164 = vrot.lane.b32.xlu0 %v1163, 124
  %v1165 = vpop.permute.xlu0 %1164
  %vm1166 = vcmask 7168
  %s1167 = scalar_lea.vmem %s1, 1348
  %1168 = vst.msk [vmem:[%s1167] ss:$8 sm:$0xf] %vm1166, %v1165
  %s1169 = scalar_lea.vmem %s1, 1348
  %1170 = vst.msk [vmem:[%s1169] ss:$8 sm:$0xf0] %vm1166, %v1165
  %s1171 = scalar_lea.vmem %s0, 176
  %v1172 = vld [vmem:[%s1171] sm:$0xff]
  %1173 = vrot.lane.b32.xlu0 %v1172, 124
  %v1174 = vpop.permute.xlu0 %1173
  %vm1175 = vcmask 7168
  %s1176 = scalar_lea.vmem %s1, 1412
  %1177 = vst.msk [vmem:[%s1176] ss:$8 sm:$0xf] %vm1175, %v1174
  %s1178 = scalar_lea.vmem %s1, 1412
  %1179 = vst.msk [vmem:[%s1178] ss:$8 sm:$0xf0] %vm1175, %v1174
  %s1180 = scalar_lea.vmem %s0, 184
  %v1181 = vld [vmem:[%s1180] sm:$0xff]
  %1182 = vrot.lane.b32.xlu0 %v1181, 124
  %v1183 = vpop.permute.xlu0 %1182
  %vm1184 = vcmask 7168
  %s1185 = scalar_lea.vmem %s1, 1476
  %1186 = vst.msk [vmem:[%s1185] ss:$8 sm:$0xf] %vm1184, %v1183
  %s1187 = scalar_lea.vmem %s1, 1476
  %1188 = vst.msk [vmem:[%s1187] ss:$8 sm:$0xf0] %vm1184, %v1183
  %s1189 = scalar_lea.vmem %s0, 192
  %v1190 = vld [vmem:[%s1189] sm:$0xff]
  %1191 = vrot.lane.b32.xlu0 %v1190, 124
  %v1192 = vpop.permute.xlu0 %1191
  %vm1193 = vcmask 7168
  %s1194 = scalar_lea.vmem %s1, 1540
  %1195 = vst.msk [vmem:[%s1194] ss:$8 sm:$0xf] %vm1193, %v1192
  %s1196 = scalar_lea.vmem %s1, 1540
  %1197 = vst.msk [vmem:[%s1196] ss:$8 sm:$0xf0] %vm1193, %v1192
  %s1198 = scalar_lea.vmem %s0, 200
  %v1199 = vld [vmem:[%s1198] sm:$0xff]
  %1200 = vrot.lane.b32.xlu0 %v1199, 124
  %v1201 = vpop.permute.xlu0 %1200
  %vm1202 = vcmask 7168
  %s1203 = scalar_lea.vmem %s1, 1604
  %1204 = vst.msk [vmem:[%s1203] ss:$8 sm:$0xf] %vm1202, %v1201
  %s1205 = scalar_lea.vmem %s1, 1604
  %1206 = vst.msk [vmem:[%s1205] ss:$8 sm:$0xf0] %vm1202, %v1201
  %s1207 = scalar_lea.vmem %s0, 208
  %v1208 = vld [vmem:[%s1207] sm:$0xff]
  %1209 = vrot.lane.b32.xlu0 %v1208, 124
  %v1210 = vpop.permute.xlu0 %1209
  %vm1211 = vcmask 7168
  %s1212 = scalar_lea.vmem %s1, 1668
  %1213 = vst.msk [vmem:[%s1212] ss:$8 sm:$0xf] %vm1211, %v1210
  %s1214 = scalar_lea.vmem %s1, 1668
  %1215 = vst.msk [vmem:[%s1214] ss:$8 sm:$0xf0] %vm1211, %v1210
  %s1216 = scalar_lea.vmem %s0, 216
  %v1217 = vld [vmem:[%s1216] sm:$0xff]
  %1218 = vrot.lane.b32.xlu0 %v1217, 124
  %v1219 = vpop.permute.xlu0 %1218
  %vm1220 = vcmask 7168
  %s1221 = scalar_lea.vmem %s1, 1732
  %1222 = vst.msk [vmem:[%s1221] ss:$8 sm:$0xf] %vm1220, %v1219
  %s1223 = scalar_lea.vmem %s1, 1732
  %1224 = vst.msk [vmem:[%s1223] ss:$8 sm:$0xf0] %vm1220, %v1219
  %s1225 = scalar_lea.vmem %s0, 224
  %v1226 = vld [vmem:[%s1225] sm:$0x1]
  %1227 = vrot.lane.b32.xlu0 %v1226, 124
  %v1228 = vpop.permute.xlu0 %1227
  %vm1229 = vcmask 7168
  %s1230 = scalar_lea.vmem %s1, 1796
  %1231 = vst.msk [vmem:[%s1230] sm:$0x1] %vm1229, %v1228
  %v1232 = vld [vmem:[%s0] sm:$0xff]
  %1233 = vrot.lane.b32.xlu0 %v1232, 123
  %v1234 = vpop.permute.xlu0 %1233
  %vm1235 = vcmask 7168
  %s1236 = scalar_lea.vmem %s1, 5
  %1237 = vst.msk [vmem:[%s1236] ss:$8 sm:$0xf] %vm1235, %v1234
  %s1238 = scalar_lea.vmem %s1, 5
  %1239 = vst.msk [vmem:[%s1238] ss:$8 sm:$0xf0] %vm1235, %v1234
  %s1240 = scalar_lea.vmem %s0, 8
  %v1241 = vld [vmem:[%s1240] sm:$0xff]
  %1242 = vrot.lane.b32.xlu0 %v1241, 123
  %v1243 = vpop.permute.xlu0 %1242
  %vm1244 = vcmask 7168
  %s1245 = scalar_lea.vmem %s1, 69
  %1246 = vst.msk [vmem:[%s1245] ss:$8 sm:$0xf] %vm1244, %v1243
  %s1247 = scalar_lea.vmem %s1, 69
  %1248 = vst.msk [vmem:[%s1247] ss:$8 sm:$0xf0] %vm1244, %v1243
  %s1249 = scalar_lea.vmem %s0, 16
  %v1250 = vld [vmem:[%s1249] sm:$0xff]
  %1251 = vrot.lane.b32.xlu0 %v1250, 123
  %v1252 = vpop.permute.xlu0 %1251
  %vm1253 = vcmask 7168
  %s1254 = scalar_lea.vmem %s1, 133
  %1255 = vst.msk [vmem:[%s1254] ss:$8 sm:$0xf] %vm1253, %v1252
  %s1256 = scalar_lea.vmem %s1, 133
  %1257 = vst.msk [vmem:[%s1256] ss:$8 sm:$0xf0] %vm1253, %v1252
  %s1258 = scalar_lea.vmem %s0, 24
  %v1259 = vld [vmem:[%s1258] sm:$0xff]
  %1260 = vrot.lane.b32.xlu0 %v1259, 123
  %v1261 = vpop.permute.xlu0 %1260
  %vm1262 = vcmask 7168
  %s1263 = scalar_lea.vmem %s1, 197
  %1264 = vst.msk [vmem:[%s1263] ss:$8 sm:$0xf] %vm1262, %v1261
  %s1265 = scalar_lea.vmem %s1, 197
  %1266 = vst.msk [vmem:[%s1265] ss:$8 sm:$0xf0] %vm1262, %v1261
  %s1267 = scalar_lea.vmem %s0, 32
  %v1268 = vld [vmem:[%s1267] sm:$0xff]
  %1269 = vrot.lane.b32.xlu0 %v1268, 123
  %v1270 = vpop.permute.xlu0 %1269
  %vm1271 = vcmask 7168
  %s1272 = scalar_lea.vmem %s1, 261
  %1273 = vst.msk [vmem:[%s1272] ss:$8 sm:$0xf] %vm1271, %v1270
  %s1274 = scalar_lea.vmem %s1, 261
  %1275 = vst.msk [vmem:[%s1274] ss:$8 sm:$0xf0] %vm1271, %v1270
  %s1276 = scalar_lea.vmem %s0, 40
  %v1277 = vld [vmem:[%s1276] sm:$0xff]
  %1278 = vrot.lane.b32.xlu0 %v1277, 123
  %v1279 = vpop.permute.xlu0 %1278
  %vm1280 = vcmask 7168
  %s1281 = scalar_lea.vmem %s1, 325
  %1282 = vst.msk [vmem:[%s1281] ss:$8 sm:$0xf] %vm1280, %v1279
  %s1283 = scalar_lea.vmem %s1, 325
  %1284 = vst.msk [vmem:[%s1283] ss:$8 sm:$0xf0] %vm1280, %v1279
  %s1285 = scalar_lea.vmem %s0, 48
  %v1286 = vld [vmem:[%s1285] sm:$0xff]
  %1287 = vrot.lane.b32.xlu0 %v1286, 123
  %v1288 = vpop.permute.xlu0 %1287
  %vm1289 = vcmask 7168
  %s1290 = scalar_lea.vmem %s1, 389
  %1291 = vst.msk [vmem:[%s1290] ss:$8 sm:$0xf] %vm1289, %v1288
  %s1292 = scalar_lea.vmem %s1, 389
  %1293 = vst.msk [vmem:[%s1292] ss:$8 sm:$0xf0] %vm1289, %v1288
  %s1294 = scalar_lea.vmem %s0, 56
  %v1295 = vld [vmem:[%s1294] sm:$0xff]
  %1296 = vrot.lane.b32.xlu0 %v1295, 123
  %v1297 = vpop.permute.xlu0 %1296
  %vm1298 = vcmask 7168
  %s1299 = scalar_lea.vmem %s1, 453
  %1300 = vst.msk [vmem:[%s1299] ss:$8 sm:$0xf] %vm1298, %v1297
  %s1301 = scalar_lea.vmem %s1, 453
  %1302 = vst.msk [vmem:[%s1301] ss:$8 sm:$0xf0] %vm1298, %v1297
  %s1303 = scalar_lea.vmem %s0, 64
  %v1304 = vld [vmem:[%s1303] sm:$0xff]
  %1305 = vrot.lane.b32.xlu0 %v1304, 123
  %v1306 = vpop.permute.xlu0 %1305
  %vm1307 = vcmask 7168
  %s1308 = scalar_lea.vmem %s1, 517
  %1309 = vst.msk [vmem:[%s1308] ss:$8 sm:$0xf] %vm1307, %v1306
  %s1310 = scalar_lea.vmem %s1, 517
  %1311 = vst.msk [vmem:[%s1310] ss:$8 sm:$0xf0] %vm1307, %v1306
  %s1312 = scalar_lea.vmem %s0, 72
  %v1313 = vld [vmem:[%s1312] sm:$0xff]
  %1314 = vrot.lane.b32.xlu0 %v1313, 123
  %v1315 = vpop.permute.xlu0 %1314
  %vm1316 = vcmask 7168
  %s1317 = scalar_lea.vmem %s1, 581
  %1318 = vst.msk [vmem:[%s1317] ss:$8 sm:$0xf] %vm1316, %v1315
  %s1319 = scalar_lea.vmem %s1, 581
  %1320 = vst.msk [vmem:[%s1319] ss:$8 sm:$0xf0] %vm1316, %v1315
  %s1321 = scalar_lea.vmem %s0, 80
  %v1322 = vld [vmem:[%s1321] sm:$0xff]
  %1323 = vrot.lane.b32.xlu0 %v1322, 123
  %v1324 = vpop.permute.xlu0 %1323
  %vm1325 = vcmask 7168
  %s1326 = scalar_lea.vmem %s1, 645
  %1327 = vst.msk [vmem:[%s1326] ss:$8 sm:$0xf] %vm1325, %v1324
  %s1328 = scalar_lea.vmem %s1, 645
  %1329 = vst.msk [vmem:[%s1328] ss:$8 sm:$0xf0] %vm1325, %v1324
  %s1330 = scalar_lea.vmem %s0, 88
  %v1331 = vld [vmem:[%s1330] sm:$0xff]
  %1332 = vrot.lane.b32.xlu0 %v1331, 123
  %v1333 = vpop.permute.xlu0 %1332
  %vm1334 = vcmask 7168
  %s1335 = scalar_lea.vmem %s1, 709
  %1336 = vst.msk [vmem:[%s1335] ss:$8 sm:$0xf] %vm1334, %v1333
  %s1337 = scalar_lea.vmem %s1, 709
  %1338 = vst.msk [vmem:[%s1337] ss:$8 sm:$0xf0] %vm1334, %v1333
  %s1339 = scalar_lea.vmem %s0, 96
  %v1340 = vld [vmem:[%s1339] sm:$0xff]
  %1341 = vrot.lane.b32.xlu0 %v1340, 123
  %v1342 = vpop.permute.xlu0 %1341
  %vm1343 = vcmask 7168
  %s1344 = scalar_lea.vmem %s1, 773
  %1345 = vst.msk [vmem:[%s1344] ss:$8 sm:$0xf] %vm1343, %v1342
  %s1346 = scalar_lea.vmem %s1, 773
  %1347 = vst.msk [vmem:[%s1346] ss:$8 sm:$0xf0] %vm1343, %v1342
  %s1348 = scalar_lea.vmem %s0, 104
  %v1349 = vld [vmem:[%s1348] sm:$0xff]
  %1350 = vrot.lane.b32.xlu0 %v1349, 123
  %v1351 = vpop.permute.xlu0 %1350
  %vm1352 = vcmask 7168
  %s1353 = scalar_lea.vmem %s1, 837
  %1354 = vst.msk [vmem:[%s1353] ss:$8 sm:$0xf] %vm1352, %v1351
  %s1355 = scalar_lea.vmem %s1, 837
  %1356 = vst.msk [vmem:[%s1355] ss:$8 sm:$0xf0] %vm1352, %v1351
  %s1357 = scalar_lea.vmem %s0, 112
  %v1358 = vld [vmem:[%s1357] sm:$0xff]
  %1359 = vrot.lane.b32.xlu0 %v1358, 123
  %v1360 = vpop.permute.xlu0 %1359
  %vm1361 = vcmask 7168
  %s1362 = scalar_lea.vmem %s1, 901
  %1363 = vst.msk [vmem:[%s1362] ss:$8 sm:$0xf] %vm1361, %v1360
  %s1364 = scalar_lea.vmem %s1, 901
  %1365 = vst.msk [vmem:[%s1364] ss:$8 sm:$0xf0] %vm1361, %v1360
  %s1366 = scalar_lea.vmem %s0, 120
  %v1367 = vld [vmem:[%s1366] sm:$0xff]
  %1368 = vrot.lane.b32.xlu0 %v1367, 123
  %v1369 = vpop.permute.xlu0 %1368
  %vm1370 = vcmask 7168
  %s1371 = scalar_lea.vmem %s1, 965
  %1372 = vst.msk [vmem:[%s1371] ss:$8 sm:$0xf] %vm1370, %v1369
  %s1373 = scalar_lea.vmem %s1, 965
  %1374 = vst.msk [vmem:[%s1373] ss:$8 sm:$0xf0] %vm1370, %v1369
  %s1375 = scalar_lea.vmem %s0, 128
  %v1376 = vld [vmem:[%s1375] sm:$0xff]
  %1377 = vrot.lane.b32.xlu0 %v1376, 123
  %v1378 = vpop.permute.xlu0 %1377
  %vm1379 = vcmask 7168
  %s1380 = scalar_lea.vmem %s1, 1029
  %1381 = vst.msk [vmem:[%s1380] ss:$8 sm:$0xf] %vm1379, %v1378
  %s1382 = scalar_lea.vmem %s1, 1029
  %1383 = vst.msk [vmem:[%s1382] ss:$8 sm:$0xf0] %vm1379, %v1378
  %s1384 = scalar_lea.vmem %s0, 136
  %v1385 = vld [vmem:[%s1384] sm:$0xff]
  %1386 = vrot.lane.b32.xlu0 %v1385, 123
  %v1387 = vpop.permute.xlu0 %1386
  %vm1388 = vcmask 7168
  %s1389 = scalar_lea.vmem %s1, 1093
  %1390 = vst.msk [vmem:[%s1389] ss:$8 sm:$0xf] %vm1388, %v1387
  %s1391 = scalar_lea.vmem %s1, 1093
  %1392 = vst.msk [vmem:[%s1391] ss:$8 sm:$0xf0] %vm1388, %v1387
  %s1393 = scalar_lea.vmem %s0, 144
  %v1394 = vld [vmem:[%s1393] sm:$0xff]
  %1395 = vrot.lane.b32.xlu0 %v1394, 123
  %v1396 = vpop.permute.xlu0 %1395
  %vm1397 = vcmask 7168
  %s1398 = scalar_lea.vmem %s1, 1157
  %1399 = vst.msk [vmem:[%s1398] ss:$8 sm:$0xf] %vm1397, %v1396
  %s1400 = scalar_lea.vmem %s1, 1157
  %1401 = vst.msk [vmem:[%s1400] ss:$8 sm:$0xf0] %vm1397, %v1396
  %s1402 = scalar_lea.vmem %s0, 152
  %v1403 = vld [vmem:[%s1402] sm:$0xff]
  %1404 = vrot.lane.b32.xlu0 %v1403, 123
  %v1405 = vpop.permute.xlu0 %1404
  %vm1406 = vcmask 7168
  %s1407 = scalar_lea.vmem %s1, 1221
  %1408 = vst.msk [vmem:[%s1407] ss:$8 sm:$0xf] %vm1406, %v1405
  %s1409 = scalar_lea.vmem %s1, 1221
  %1410 = vst.msk [vmem:[%s1409] ss:$8 sm:$0xf0] %vm1406, %v1405
  %s1411 = scalar_lea.vmem %s0, 160
  %v1412 = vld [vmem:[%s1411] sm:$0xff]
  %1413 = vrot.lane.b32.xlu0 %v1412, 123
  %v1414 = vpop.permute.xlu0 %1413
  %vm1415 = vcmask 7168
  %s1416 = scalar_lea.vmem %s1, 1285
  %1417 = vst.msk [vmem:[%s1416] ss:$8 sm:$0xf] %vm1415, %v1414
  %s1418 = scalar_lea.vmem %s1, 1285
  %1419 = vst.msk [vmem:[%s1418] ss:$8 sm:$0xf0] %vm1415, %v1414
  %s1420 = scalar_lea.vmem %s0, 168
  %v1421 = vld [vmem:[%s1420] sm:$0xff]
  %1422 = vrot.lane.b32.xlu0 %v1421, 123
  %v1423 = vpop.permute.xlu0 %1422
  %vm1424 = vcmask 7168
  %s1425 = scalar_lea.vmem %s1, 1349
  %1426 = vst.msk [vmem:[%s1425] ss:$8 sm:$0xf] %vm1424, %v1423
  %s1427 = scalar_lea.vmem %s1, 1349
  %1428 = vst.msk [vmem:[%s1427] ss:$8 sm:$0xf0] %vm1424, %v1423
  %s1429 = scalar_lea.vmem %s0, 176
  %v1430 = vld [vmem:[%s1429] sm:$0xff]
  %1431 = vrot.lane.b32.xlu0 %v1430, 123
  %v1432 = vpop.permute.xlu0 %1431
  %vm1433 = vcmask 7168
  %s1434 = scalar_lea.vmem %s1, 1413
  %1435 = vst.msk [vmem:[%s1434] ss:$8 sm:$0xf] %vm1433, %v1432
  %s1436 = scalar_lea.vmem %s1, 1413
  %1437 = vst.msk [vmem:[%s1436] ss:$8 sm:$0xf0] %vm1433, %v1432
  %s1438 = scalar_lea.vmem %s0, 184
  %v1439 = vld [vmem:[%s1438] sm:$0xff]
  %1440 = vrot.lane.b32.xlu0 %v1439, 123
  %v1441 = vpop.permute.xlu0 %1440
  %vm1442 = vcmask 7168
  %s1443 = scalar_lea.vmem %s1, 1477
  %1444 = vst.msk [vmem:[%s1443] ss:$8 sm:$0xf] %vm1442, %v1441
  %s1445 = scalar_lea.vmem %s1, 1477
  %1446 = vst.msk [vmem:[%s1445] ss:$8 sm:$0xf0] %vm1442, %v1441
  %s1447 = scalar_lea.vmem %s0, 192
  %v1448 = vld [vmem:[%s1447] sm:$0xff]
  %1449 = vrot.lane.b32.xlu0 %v1448, 123
  %v1450 = vpop.permute.xlu0 %1449
  %vm1451 = vcmask 7168
  %s1452 = scalar_lea.vmem %s1, 1541
  %1453 = vst.msk [vmem:[%s1452] ss:$8 sm:$0xf] %vm1451, %v1450
  %s1454 = scalar_lea.vmem %s1, 1541
  %1455 = vst.msk [vmem:[%s1454] ss:$8 sm:$0xf0] %vm1451, %v1450
  %s1456 = scalar_lea.vmem %s0, 200
  %v1457 = vld [vmem:[%s1456] sm:$0xff]
  %1458 = vrot.lane.b32.xlu0 %v1457, 123
  %v1459 = vpop.permute.xlu0 %1458
  %vm1460 = vcmask 7168
  %s1461 = scalar_lea.vmem %s1, 1605
  %1462 = vst.msk [vmem:[%s1461] ss:$8 sm:$0xf] %vm1460, %v1459
  %s1463 = scalar_lea.vmem %s1, 1605
  %1464 = vst.msk [vmem:[%s1463] ss:$8 sm:$0xf0] %vm1460, %v1459
  %s1465 = scalar_lea.vmem %s0, 208
  %v1466 = vld [vmem:[%s1465] sm:$0xff]
  %1467 = vrot.lane.b32.xlu0 %v1466, 123
  %v1468 = vpop.permute.xlu0 %1467
  %vm1469 = vcmask 7168
  %s1470 = scalar_lea.vmem %s1, 1669
  %1471 = vst.msk [vmem:[%s1470] ss:$8 sm:$0xf] %vm1469, %v1468
  %s1472 = scalar_lea.vmem %s1, 1669
  %1473 = vst.msk [vmem:[%s1472] ss:$8 sm:$0xf0] %vm1469, %v1468
  %s1474 = scalar_lea.vmem %s0, 216
  %v1475 = vld [vmem:[%s1474] sm:$0xff]
  %1476 = vrot.lane.b32.xlu0 %v1475, 123
  %v1477 = vpop.permute.xlu0 %1476
  %vm1478 = vcmask 7168
  %s1479 = scalar_lea.vmem %s1, 1733
  %1480 = vst.msk [vmem:[%s1479] ss:$8 sm:$0xf] %vm1478, %v1477
  %s1481 = scalar_lea.vmem %s1, 1733
  %1482 = vst.msk [vmem:[%s1481] ss:$8 sm:$0xf0] %vm1478, %v1477
  %s1483 = scalar_lea.vmem %s0, 224
  %v1484 = vld [vmem:[%s1483] sm:$0x1]
  %1485 = vrot.lane.b32.xlu0 %v1484, 123
  %v1486 = vpop.permute.xlu0 %1485
  %vm1487 = vcmask 7168
  %s1488 = scalar_lea.vmem %s1, 1797
  %1489 = vst.msk [vmem:[%s1488] sm:$0x1] %vm1487, %v1486
  %v1490 = vld [vmem:[%s0] sm:$0xff]
  %1491 = vrot.lane.b32.xlu0 %v1490, 122
  %v1492 = vpop.permute.xlu0 %1491
  %vm1493 = vcmask 7168
  %s1494 = scalar_lea.vmem %s1, 6
  %1495 = vst.msk [vmem:[%s1494] ss:$8 sm:$0xf] %vm1493, %v1492
  %s1496 = scalar_lea.vmem %s1, 6
  %1497 = vst.msk [vmem:[%s1496] ss:$8 sm:$0xf0] %vm1493, %v1492
  %s1498 = scalar_lea.vmem %s0, 8
  %v1499 = vld [vmem:[%s1498] sm:$0xff]
  %1500 = vrot.lane.b32.xlu0 %v1499, 122
  %v1501 = vpop.permute.xlu0 %1500
  %vm1502 = vcmask 7168
  %s1503 = scalar_lea.vmem %s1, 70
  %1504 = vst.msk [vmem:[%s1503] ss:$8 sm:$0xf] %vm1502, %v1501
  %s1505 = scalar_lea.vmem %s1, 70
  %1506 = vst.msk [vmem:[%s1505] ss:$8 sm:$0xf0] %vm1502, %v1501
  %s1507 = scalar_lea.vmem %s0, 16
  %v1508 = vld [vmem:[%s1507] sm:$0xff]
  %1509 = vrot.lane.b32.xlu0 %v1508, 122
  %v1510 = vpop.permute.xlu0 %1509
  %vm1511 = vcmask 7168
  %s1512 = scalar_lea.vmem %s1, 134
  %1513 = vst.msk [vmem:[%s1512] ss:$8 sm:$0xf] %vm1511, %v1510
  %s1514 = scalar_lea.vmem %s1, 134
  %1515 = vst.msk [vmem:[%s1514] ss:$8 sm:$0xf0] %vm1511, %v1510
  %s1516 = scalar_lea.vmem %s0, 24
  %v1517 = vld [vmem:[%s1516] sm:$0xff]
  %1518 = vrot.lane.b32.xlu0 %v1517, 122
  %v1519 = vpop.permute.xlu0 %1518
  %vm1520 = vcmask 7168
  %s1521 = scalar_lea.vmem %s1, 198
  %1522 = vst.msk [vmem:[%s1521] ss:$8 sm:$0xf] %vm1520, %v1519
  %s1523 = scalar_lea.vmem %s1, 198
  %1524 = vst.msk [vmem:[%s1523] ss:$8 sm:$0xf0] %vm1520, %v1519
  %s1525 = scalar_lea.vmem %s0, 32
  %v1526 = vld [vmem:[%s1525] sm:$0xff]
  %1527 = vrot.lane.b32.xlu0 %v1526, 122
  %v1528 = vpop.permute.xlu0 %1527
  %vm1529 = vcmask 7168
  %s1530 = scalar_lea.vmem %s1, 262
  %1531 = vst.msk [vmem:[%s1530] ss:$8 sm:$0xf] %vm1529, %v1528
  %s1532 = scalar_lea.vmem %s1, 262
  %1533 = vst.msk [vmem:[%s1532] ss:$8 sm:$0xf0] %vm1529, %v1528
  %s1534 = scalar_lea.vmem %s0, 40
  %v1535 = vld [vmem:[%s1534] sm:$0xff]
  %1536 = vrot.lane.b32.xlu0 %v1535, 122
  %v1537 = vpop.permute.xlu0 %1536
  %vm1538 = vcmask 7168
  %s1539 = scalar_lea.vmem %s1, 326
  %1540 = vst.msk [vmem:[%s1539] ss:$8 sm:$0xf] %vm1538, %v1537
  %s1541 = scalar_lea.vmem %s1, 326
  %1542 = vst.msk [vmem:[%s1541] ss:$8 sm:$0xf0] %vm1538, %v1537
  %s1543 = scalar_lea.vmem %s0, 48
  %v1544 = vld [vmem:[%s1543] sm:$0xff]
  %1545 = vrot.lane.b32.xlu0 %v1544, 122
  %v1546 = vpop.permute.xlu0 %1545
  %vm1547 = vcmask 7168
  %s1548 = scalar_lea.vmem %s1, 390
  %1549 = vst.msk [vmem:[%s1548] ss:$8 sm:$0xf] %vm1547, %v1546
  %s1550 = scalar_lea.vmem %s1, 390
  %1551 = vst.msk [vmem:[%s1550] ss:$8 sm:$0xf0] %vm1547, %v1546
  %s1552 = scalar_lea.vmem %s0, 56
  %v1553 = vld [vmem:[%s1552] sm:$0xff]
  %1554 = vrot.lane.b32.xlu0 %v1553, 122
  %v1555 = vpop.permute.xlu0 %1554
  %vm1556 = vcmask 7168
  %s1557 = scalar_lea.vmem %s1, 454
  %1558 = vst.msk [vmem:[%s1557] ss:$8 sm:$0xf] %vm1556, %v1555
  %s1559 = scalar_lea.vmem %s1, 454
  %1560 = vst.msk [vmem:[%s1559] ss:$8 sm:$0xf0] %vm1556, %v1555
  %s1561 = scalar_lea.vmem %s0, 64
  %v1562 = vld [vmem:[%s1561] sm:$0xff]
  %1563 = vrot.lane.b32.xlu0 %v1562, 122
  %v1564 = vpop.permute.xlu0 %1563
  %vm1565 = vcmask 7168
  %s1566 = scalar_lea.vmem %s1, 518
  %1567 = vst.msk [vmem:[%s1566] ss:$8 sm:$0xf] %vm1565, %v1564
  %s1568 = scalar_lea.vmem %s1, 518
  %1569 = vst.msk [vmem:[%s1568] ss:$8 sm:$0xf0] %vm1565, %v1564
  %s1570 = scalar_lea.vmem %s0, 72
  %v1571 = vld [vmem:[%s1570] sm:$0xff]
  %1572 = vrot.lane.b32.xlu0 %v1571, 122
  %v1573 = vpop.permute.xlu0 %1572
  %vm1574 = vcmask 7168
  %s1575 = scalar_lea.vmem %s1, 582
  %1576 = vst.msk [vmem:[%s1575] ss:$8 sm:$0xf] %vm1574, %v1573
  %s1577 = scalar_lea.vmem %s1, 582
  %1578 = vst.msk [vmem:[%s1577] ss:$8 sm:$0xf0] %vm1574, %v1573
  %s1579 = scalar_lea.vmem %s0, 80
  %v1580 = vld [vmem:[%s1579] sm:$0xff]
  %1581 = vrot.lane.b32.xlu0 %v1580, 122
  %v1582 = vpop.permute.xlu0 %1581
  %vm1583 = vcmask 7168
  %s1584 = scalar_lea.vmem %s1, 646
  %1585 = vst.msk [vmem:[%s1584] ss:$8 sm:$0xf] %vm1583, %v1582
  %s1586 = scalar_lea.vmem %s1, 646
  %1587 = vst.msk [vmem:[%s1586] ss:$8 sm:$0xf0] %vm1583, %v1582
  %s1588 = scalar_lea.vmem %s0, 88
  %v1589 = vld [vmem:[%s1588] sm:$0xff]
  %1590 = vrot.lane.b32.xlu0 %v1589, 122
  %v1591 = vpop.permute.xlu0 %1590
  %vm1592 = vcmask 7168
  %s1593 = scalar_lea.vmem %s1, 710
  %1594 = vst.msk [vmem:[%s1593] ss:$8 sm:$0xf] %vm1592, %v1591
  %s1595 = scalar_lea.vmem %s1, 710
  %1596 = vst.msk [vmem:[%s1595] ss:$8 sm:$0xf0] %vm1592, %v1591
  %s1597 = scalar_lea.vmem %s0, 96
  %v1598 = vld [vmem:[%s1597] sm:$0xff]
  %1599 = vrot.lane.b32.xlu0 %v1598, 122
  %v1600 = vpop.permute.xlu0 %1599
  %vm1601 = vcmask 7168
  %s1602 = scalar_lea.vmem %s1, 774
  %1603 = vst.msk [vmem:[%s1602] ss:$8 sm:$0xf] %vm1601, %v1600
  %s1604 = scalar_lea.vmem %s1, 774
  %1605 = vst.msk [vmem:[%s1604] ss:$8 sm:$0xf0] %vm1601, %v1600
  %s1606 = scalar_lea.vmem %s0, 104
  %v1607 = vld [vmem:[%s1606] sm:$0xff]
  %1608 = vrot.lane.b32.xlu0 %v1607, 122
  %v1609 = vpop.permute.xlu0 %1608
  %vm1610 = vcmask 7168
  %s1611 = scalar_lea.vmem %s1, 838
  %1612 = vst.msk [vmem:[%s1611] ss:$8 sm:$0xf] %vm1610, %v1609
  %s1613 = scalar_lea.vmem %s1, 838
  %1614 = vst.msk [vmem:[%s1613] ss:$8 sm:$0xf0] %vm1610, %v1609
  %s1615 = scalar_lea.vmem %s0, 112
  %v1616 = vld [vmem:[%s1615] sm:$0xff]
  %1617 = vrot.lane.b32.xlu0 %v1616, 122
  %v1618 = vpop.permute.xlu0 %1617
  %vm1619 = vcmask 7168
  %s1620 = scalar_lea.vmem %s1, 902
  %1621 = vst.msk [vmem:[%s1620] ss:$8 sm:$0xf] %vm1619, %v1618
  %s1622 = scalar_lea.vmem %s1, 902
  %1623 = vst.msk [vmem:[%s1622] ss:$8 sm:$0xf0] %vm1619, %v1618
  %s1624 = scalar_lea.vmem %s0, 120
  %v1625 = vld [vmem:[%s1624] sm:$0xff]
  %1626 = vrot.lane.b32.xlu0 %v1625, 122
  %v1627 = vpop.permute.xlu0 %1626
  %vm1628 = vcmask 7168
  %s1629 = scalar_lea.vmem %s1, 966
  %1630 = vst.msk [vmem:[%s1629] ss:$8 sm:$0xf] %vm1628, %v1627
  %s1631 = scalar_lea.vmem %s1, 966
  %1632 = vst.msk [vmem:[%s1631] ss:$8 sm:$0xf0] %vm1628, %v1627
  %s1633 = scalar_lea.vmem %s0, 128
  %v1634 = vld [vmem:[%s1633] sm:$0xff]
  %1635 = vrot.lane.b32.xlu0 %v1634, 122
  %v1636 = vpop.permute.xlu0 %1635
  %vm1637 = vcmask 7168
  %s1638 = scalar_lea.vmem %s1, 1030
  %1639 = vst.msk [vmem:[%s1638] ss:$8 sm:$0xf] %vm1637, %v1636
  %s1640 = scalar_lea.vmem %s1, 1030
  %1641 = vst.msk [vmem:[%s1640] ss:$8 sm:$0xf0] %vm1637, %v1636
  %s1642 = scalar_lea.vmem %s0, 136
  %v1643 = vld [vmem:[%s1642] sm:$0xff]
  %1644 = vrot.lane.b32.xlu0 %v1643, 122
  %v1645 = vpop.permute.xlu0 %1644
  %vm1646 = vcmask 7168
  %s1647 = scalar_lea.vmem %s1, 1094
  %1648 = vst.msk [vmem:[%s1647] ss:$8 sm:$0xf] %vm1646, %v1645
  %s1649 = scalar_lea.vmem %s1, 1094
  %1650 = vst.msk [vmem:[%s1649] ss:$8 sm:$0xf0] %vm1646, %v1645
  %s1651 = scalar_lea.vmem %s0, 144
  %v1652 = vld [vmem:[%s1651] sm:$0xff]
  %1653 = vrot.lane.b32.xlu0 %v1652, 122
  %v1654 = vpop.permute.xlu0 %1653
  %vm1655 = vcmask 7168
  %s1656 = scalar_lea.vmem %s1, 1158
  %1657 = vst.msk [vmem:[%s1656] ss:$8 sm:$0xf] %vm1655, %v1654
  %s1658 = scalar_lea.vmem %s1, 1158
  %1659 = vst.msk [vmem:[%s1658] ss:$8 sm:$0xf0] %vm1655, %v1654
  %s1660 = scalar_lea.vmem %s0, 152
  %v1661 = vld [vmem:[%s1660] sm:$0xff]
  %1662 = vrot.lane.b32.xlu0 %v1661, 122
  %v1663 = vpop.permute.xlu0 %1662
  %vm1664 = vcmask 7168
  %s1665 = scalar_lea.vmem %s1, 1222
  %1666 = vst.msk [vmem:[%s1665] ss:$8 sm:$0xf] %vm1664, %v1663
  %s1667 = scalar_lea.vmem %s1, 1222
  %1668 = vst.msk [vmem:[%s1667] ss:$8 sm:$0xf0] %vm1664, %v1663
  %s1669 = scalar_lea.vmem %s0, 160
  %v1670 = vld [vmem:[%s1669] sm:$0xff]
  %1671 = vrot.lane.b32.xlu0 %v1670, 122
  %v1672 = vpop.permute.xlu0 %1671
  %vm1673 = vcmask 7168
  %s1674 = scalar_lea.vmem %s1, 1286
  %1675 = vst.msk [vmem:[%s1674] ss:$8 sm:$0xf] %vm1673, %v1672
  %s1676 = scalar_lea.vmem %s1, 1286
  %1677 = vst.msk [vmem:[%s1676] ss:$8 sm:$0xf0] %vm1673, %v1672
  %s1678 = scalar_lea.vmem %s0, 168
  %v1679 = vld [vmem:[%s1678] sm:$0xff]
  %1680 = vrot.lane.b32.xlu0 %v1679, 122
  %v1681 = vpop.permute.xlu0 %1680
  %vm1682 = vcmask 7168
  %s1683 = scalar_lea.vmem %s1, 1350
  %1684 = vst.msk [vmem:[%s1683] ss:$8 sm:$0xf] %vm1682, %v1681
  %s1685 = scalar_lea.vmem %s1, 1350
  %1686 = vst.msk [vmem:[%s1685] ss:$8 sm:$0xf0] %vm1682, %v1681
  %s1687 = scalar_lea.vmem %s0, 176
  %v1688 = vld [vmem:[%s1687] sm:$0xff]
  %1689 = vrot.lane.b32.xlu0 %v1688, 122
  %v1690 = vpop.permute.xlu0 %1689
  %vm1691 = vcmask 7168
  %s1692 = scalar_lea.vmem %s1, 1414
  %1693 = vst.msk [vmem:[%s1692] ss:$8 sm:$0xf] %vm1691, %v1690
  %s1694 = scalar_lea.vmem %s1, 1414
  %1695 = vst.msk [vmem:[%s1694] ss:$8 sm:$0xf0] %vm1691, %v1690
  %s1696 = scalar_lea.vmem %s0, 184
  %v1697 = vld [vmem:[%s1696] sm:$0xff]
  %1698 = vrot.lane.b32.xlu0 %v1697, 122
  %v1699 = vpop.permute.xlu0 %1698
  %vm1700 = vcmask 7168
  %s1701 = scalar_lea.vmem %s1, 1478
  %1702 = vst.msk [vmem:[%s1701] ss:$8 sm:$0xf] %vm1700, %v1699
  %s1703 = scalar_lea.vmem %s1, 1478
  %1704 = vst.msk [vmem:[%s1703] ss:$8 sm:$0xf0] %vm1700, %v1699
  %s1705 = scalar_lea.vmem %s0, 192
  %v1706 = vld [vmem:[%s1705] sm:$0xff]
  %1707 = vrot.lane.b32.xlu0 %v1706, 122
  %v1708 = vpop.permute.xlu0 %1707
  %vm1709 = vcmask 7168
  %s1710 = scalar_lea.vmem %s1, 1542
  %1711 = vst.msk [vmem:[%s1710] ss:$8 sm:$0xf] %vm1709, %v1708
  %s1712 = scalar_lea.vmem %s1, 1542
  %1713 = vst.msk [vmem:[%s1712] ss:$8 sm:$0xf0] %vm1709, %v1708
  %s1714 = scalar_lea.vmem %s0, 200
  %v1715 = vld [vmem:[%s1714] sm:$0xff]
  %1716 = vrot.lane.b32.xlu0 %v1715, 122
  %v1717 = vpop.permute.xlu0 %1716
  %vm1718 = vcmask 7168
  %s1719 = scalar_lea.vmem %s1, 1606
  %1720 = vst.msk [vmem:[%s1719] ss:$8 sm:$0xf] %vm1718, %v1717
  %s1721 = scalar_lea.vmem %s1, 1606
  %1722 = vst.msk [vmem:[%s1721] ss:$8 sm:$0xf0] %vm1718, %v1717
  %s1723 = scalar_lea.vmem %s0, 208
  %v1724 = vld [vmem:[%s1723] sm:$0xff]
  %1725 = vrot.lane.b32.xlu0 %v1724, 122
  %v1726 = vpop.permute.xlu0 %1725
  %vm1727 = vcmask 7168
  %s1728 = scalar_lea.vmem %s1, 1670
  %1729 = vst.msk [vmem:[%s1728] ss:$8 sm:$0xf] %vm1727, %v1726
  %s1730 = scalar_lea.vmem %s1, 1670
  %1731 = vst.msk [vmem:[%s1730] ss:$8 sm:$0xf0] %vm1727, %v1726
  %s1732 = scalar_lea.vmem %s0, 216
  %v1733 = vld [vmem:[%s1732] sm:$0xff]
  %1734 = vrot.lane.b32.xlu0 %v1733, 122
  %v1735 = vpop.permute.xlu0 %1734
  %vm1736 = vcmask 7168
  %s1737 = scalar_lea.vmem %s1, 1734
  %1738 = vst.msk [vmem:[%s1737] ss:$8 sm:$0xf] %vm1736, %v1735
  %s1739 = scalar_lea.vmem %s1, 1734
  %1740 = vst.msk [vmem:[%s1739] ss:$8 sm:$0xf0] %vm1736, %v1735
  %s1741 = scalar_lea.vmem %s0, 224
  %v1742 = vld [vmem:[%s1741] sm:$0x1]
  %1743 = vrot.lane.b32.xlu0 %v1742, 122
  %v1744 = vpop.permute.xlu0 %1743
  %vm1745 = vcmask 7168
  %s1746 = scalar_lea.vmem %s1, 1798
  %1747 = vst.msk [vmem:[%s1746] sm:$0x1] %vm1745, %v1744
  %v1748 = vld [vmem:[%s0] sm:$0xff]
  %1749 = vrot.lane.b32.xlu0 %v1748, 121
  %v1750 = vpop.permute.xlu0 %1749
  %vm1751 = vcmask 7168
  %s1752 = scalar_lea.vmem %s1, 7
  %1753 = vst.msk [vmem:[%s1752] ss:$8 sm:$0xf] %vm1751, %v1750
  %s1754 = scalar_lea.vmem %s1, 7
  %1755 = vst.msk [vmem:[%s1754] ss:$8 sm:$0xf0] %vm1751, %v1750
  %s1756 = scalar_lea.vmem %s0, 8
  %v1757 = vld [vmem:[%s1756] sm:$0xff]
  %1758 = vrot.lane.b32.xlu0 %v1757, 121
  %v1759 = vpop.permute.xlu0 %1758
  %vm1760 = vcmask 7168
  %s1761 = scalar_lea.vmem %s1, 71
  %1762 = vst.msk [vmem:[%s1761] ss:$8 sm:$0xf] %vm1760, %v1759
  %s1763 = scalar_lea.vmem %s1, 71
  %1764 = vst.msk [vmem:[%s1763] ss:$8 sm:$0xf0] %vm1760, %v1759
  %s1765 = scalar_lea.vmem %s0, 16
  %v1766 = vld [vmem:[%s1765] sm:$0xff]
  %1767 = vrot.lane.b32.xlu0 %v1766, 121
  %v1768 = vpop.permute.xlu0 %1767
  %vm1769 = vcmask 7168
  %s1770 = scalar_lea.vmem %s1, 135
  %1771 = vst.msk [vmem:[%s1770] ss:$8 sm:$0xf] %vm1769, %v1768
  %s1772 = scalar_lea.vmem %s1, 135
  %1773 = vst.msk [vmem:[%s1772] ss:$8 sm:$0xf0] %vm1769, %v1768
  %s1774 = scalar_lea.vmem %s0, 24
  %v1775 = vld [vmem:[%s1774] sm:$0xff]
  %1776 = vrot.lane.b32.xlu0 %v1775, 121
  %v1777 = vpop.permute.xlu0 %1776
  %vm1778 = vcmask 7168
  %s1779 = scalar_lea.vmem %s1, 199
  %1780 = vst.msk [vmem:[%s1779] ss:$8 sm:$0xf] %vm1778, %v1777
  %s1781 = scalar_lea.vmem %s1, 199
  %1782 = vst.msk [vmem:[%s1781] ss:$8 sm:$0xf0] %vm1778, %v1777
  %s1783 = scalar_lea.vmem %s0, 32
  %v1784 = vld [vmem:[%s1783] sm:$0xff]
  %1785 = vrot.lane.b32.xlu0 %v1784, 121
  %v1786 = vpop.permute.xlu0 %1785
  %vm1787 = vcmask 7168
  %s1788 = scalar_lea.vmem %s1, 263
  %1789 = vst.msk [vmem:[%s1788] ss:$8 sm:$0xf] %vm1787, %v1786
  %s1790 = scalar_lea.vmem %s1, 263
  %1791 = vst.msk [vmem:[%s1790] ss:$8 sm:$0xf0] %vm1787, %v1786
  %s1792 = scalar_lea.vmem %s0, 40
  %v1793 = vld [vmem:[%s1792] sm:$0xff]
  %1794 = vrot.lane.b32.xlu0 %v1793, 121
  %v1795 = vpop.permute.xlu0 %1794
  %vm1796 = vcmask 7168
  %s1797 = scalar_lea.vmem %s1, 327
  %1798 = vst.msk [vmem:[%s1797] ss:$8 sm:$0xf] %vm1796, %v1795
  %s1799 = scalar_lea.vmem %s1, 327
  %1800 = vst.msk [vmem:[%s1799] ss:$8 sm:$0xf0] %vm1796, %v1795
  %s1801 = scalar_lea.vmem %s0, 48
  %v1802 = vld [vmem:[%s1801] sm:$0xff]
  %1803 = vrot.lane.b32.xlu0 %v1802, 121
  %v1804 = vpop.permute.xlu0 %1803
  %vm1805 = vcmask 7168
  %s1806 = scalar_lea.vmem %s1, 391
  %1807 = vst.msk [vmem:[%s1806] ss:$8 sm:$0xf] %vm1805, %v1804
  %s1808 = scalar_lea.vmem %s1, 391
  %1809 = vst.msk [vmem:[%s1808] ss:$8 sm:$0xf0] %vm1805, %v1804
  %s1810 = scalar_lea.vmem %s0, 56
  %v1811 = vld [vmem:[%s1810] sm:$0xff]
  %1812 = vrot.lane.b32.xlu0 %v1811, 121
  %v1813 = vpop.permute.xlu0 %1812
  %vm1814 = vcmask 7168
  %s1815 = scalar_lea.vmem %s1, 455
  %1816 = vst.msk [vmem:[%s1815] ss:$8 sm:$0xf] %vm1814, %v1813
  %s1817 = scalar_lea.vmem %s1, 455
  %1818 = vst.msk [vmem:[%s1817] ss:$8 sm:$0xf0] %vm1814, %v1813
  %s1819 = scalar_lea.vmem %s0, 64
  %v1820 = vld [vmem:[%s1819] sm:$0xff]
  %1821 = vrot.lane.b32.xlu0 %v1820, 121
  %v1822 = vpop.permute.xlu0 %1821
  %vm1823 = vcmask 7168
  %s1824 = scalar_lea.vmem %s1, 519
  %1825 = vst.msk [vmem:[%s1824] ss:$8 sm:$0xf] %vm1823, %v1822
  %s1826 = scalar_lea.vmem %s1, 519
  %1827 = vst.msk [vmem:[%s1826] ss:$8 sm:$0xf0] %vm1823, %v1822
  %s1828 = scalar_lea.vmem %s0, 72
  %v1829 = vld [vmem:[%s1828] sm:$0xff]
  %1830 = vrot.lane.b32.xlu0 %v1829, 121
  %v1831 = vpop.permute.xlu0 %1830
  %vm1832 = vcmask 7168
  %s1833 = scalar_lea.vmem %s1, 583
  %1834 = vst.msk [vmem:[%s1833] ss:$8 sm:$0xf] %vm1832, %v1831
  %s1835 = scalar_lea.vmem %s1, 583
  %1836 = vst.msk [vmem:[%s1835] ss:$8 sm:$0xf0] %vm1832, %v1831
  %s1837 = scalar_lea.vmem %s0, 80
  %v1838 = vld [vmem:[%s1837] sm:$0xff]
  %1839 = vrot.lane.b32.xlu0 %v1838, 121
  %v1840 = vpop.permute.xlu0 %1839
  %vm1841 = vcmask 7168
  %s1842 = scalar_lea.vmem %s1, 647
  %1843 = vst.msk [vmem:[%s1842] ss:$8 sm:$0xf] %vm1841, %v1840
  %s1844 = scalar_lea.vmem %s1, 647
  %1845 = vst.msk [vmem:[%s1844] ss:$8 sm:$0xf0] %vm1841, %v1840
  %s1846 = scalar_lea.vmem %s0, 88
  %v1847 = vld [vmem:[%s1846] sm:$0xff]
  %1848 = vrot.lane.b32.xlu0 %v1847, 121
  %v1849 = vpop.permute.xlu0 %1848
  %vm1850 = vcmask 7168
  %s1851 = scalar_lea.vmem %s1, 711
  %1852 = vst.msk [vmem:[%s1851] ss:$8 sm:$0xf] %vm1850, %v1849
  %s1853 = scalar_lea.vmem %s1, 711
  %1854 = vst.msk [vmem:[%s1853] ss:$8 sm:$0xf0] %vm1850, %v1849
  %s1855 = scalar_lea.vmem %s0, 96
  %v1856 = vld [vmem:[%s1855] sm:$0xff]
  %1857 = vrot.lane.b32.xlu0 %v1856, 121
  %v1858 = vpop.permute.xlu0 %1857
  %vm1859 = vcmask 7168
  %s1860 = scalar_lea.vmem %s1, 775
  %1861 = vst.msk [vmem:[%s1860] ss:$8 sm:$0xf] %vm1859, %v1858
  %s1862 = scalar_lea.vmem %s1, 775
  %1863 = vst.msk [vmem:[%s1862] ss:$8 sm:$0xf0] %vm1859, %v1858
  %s1864 = scalar_lea.vmem %s0, 104
  %v1865 = vld [vmem:[%s1864] sm:$0xff]
  %1866 = vrot.lane.b32.xlu0 %v1865, 121
  %v1867 = vpop.permute.xlu0 %1866
  %vm1868 = vcmask 7168
  %s1869 = scalar_lea.vmem %s1, 839
  %1870 = vst.msk [vmem:[%s1869] ss:$8 sm:$0xf] %vm1868, %v1867
  %s1871 = scalar_lea.vmem %s1, 839
  %1872 = vst.msk [vmem:[%s1871] ss:$8 sm:$0xf0] %vm1868, %v1867
  %s1873 = scalar_lea.vmem %s0, 112
  %v1874 = vld [vmem:[%s1873] sm:$0xff]
  %1875 = vrot.lane.b32.xlu0 %v1874, 121
  %v1876 = vpop.permute.xlu0 %1875
  %vm1877 = vcmask 7168
  %s1878 = scalar_lea.vmem %s1, 903
  %1879 = vst.msk [vmem:[%s1878] ss:$8 sm:$0xf] %vm1877, %v1876
  %s1880 = scalar_lea.vmem %s1, 903
  %1881 = vst.msk [vmem:[%s1880] ss:$8 sm:$0xf0] %vm1877, %v1876
  %s1882 = scalar_lea.vmem %s0, 120
  %v1883 = vld [vmem:[%s1882] sm:$0xff]
  %1884 = vrot.lane.b32.xlu0 %v1883, 121
  %v1885 = vpop.permute.xlu0 %1884
  %vm1886 = vcmask 7168
  %s1887 = scalar_lea.vmem %s1, 967
  %1888 = vst.msk [vmem:[%s1887] ss:$8 sm:$0xf] %vm1886, %v1885
  %s1889 = scalar_lea.vmem %s1, 967
  %1890 = vst.msk [vmem:[%s1889] ss:$8 sm:$0xf0] %vm1886, %v1885
  %s1891 = scalar_lea.vmem %s0, 128
  %v1892 = vld [vmem:[%s1891] sm:$0xff]
  %1893 = vrot.lane.b32.xlu0 %v1892, 121
  %v1894 = vpop.permute.xlu0 %1893
  %vm1895 = vcmask 7168
  %s1896 = scalar_lea.vmem %s1, 1031
  %1897 = vst.msk [vmem:[%s1896] ss:$8 sm:$0xf] %vm1895, %v1894
  %s1898 = scalar_lea.vmem %s1, 1031
  %1899 = vst.msk [vmem:[%s1898] ss:$8 sm:$0xf0] %vm1895, %v1894
  %s1900 = scalar_lea.vmem %s0, 136
  %v1901 = vld [vmem:[%s1900] sm:$0xff]
  %1902 = vrot.lane.b32.xlu0 %v1901, 121
  %v1903 = vpop.permute.xlu0 %1902
  %vm1904 = vcmask 7168
  %s1905 = scalar_lea.vmem %s1, 1095
  %1906 = vst.msk [vmem:[%s1905] ss:$8 sm:$0xf] %vm1904, %v1903
  %s1907 = scalar_lea.vmem %s1, 1095
  %1908 = vst.msk [vmem:[%s1907] ss:$8 sm:$0xf0] %vm1904, %v1903
  %s1909 = scalar_lea.vmem %s0, 144
  %v1910 = vld [vmem:[%s1909] sm:$0xff]
  %1911 = vrot.lane.b32.xlu0 %v1910, 121
  %v1912 = vpop.permute.xlu0 %1911
  %vm1913 = vcmask 7168
  %s1914 = scalar_lea.vmem %s1, 1159
  %1915 = vst.msk [vmem:[%s1914] ss:$8 sm:$0xf] %vm1913, %v1912
  %s1916 = scalar_lea.vmem %s1, 1159
  %1917 = vst.msk [vmem:[%s1916] ss:$8 sm:$0xf0] %vm1913, %v1912
  %s1918 = scalar_lea.vmem %s0, 152
  %v1919 = vld [vmem:[%s1918] sm:$0xff]
  %1920 = vrot.lane.b32.xlu0 %v1919, 121
  %v1921 = vpop.permute.xlu0 %1920
  %vm1922 = vcmask 7168
  %s1923 = scalar_lea.vmem %s1, 1223
  %1924 = vst.msk [vmem:[%s1923] ss:$8 sm:$0xf] %vm1922, %v1921
  %s1925 = scalar_lea.vmem %s1, 1223
  %1926 = vst.msk [vmem:[%s1925] ss:$8 sm:$0xf0] %vm1922, %v1921
  %s1927 = scalar_lea.vmem %s0, 160
  %v1928 = vld [vmem:[%s1927] sm:$0xff]
  %1929 = vrot.lane.b32.xlu0 %v1928, 121
  %v1930 = vpop.permute.xlu0 %1929
  %vm1931 = vcmask 7168
  %s1932 = scalar_lea.vmem %s1, 1287
  %1933 = vst.msk [vmem:[%s1932] ss:$8 sm:$0xf] %vm1931, %v1930
  %s1934 = scalar_lea.vmem %s1, 1287
  %1935 = vst.msk [vmem:[%s1934] ss:$8 sm:$0xf0] %vm1931, %v1930
  %s1936 = scalar_lea.vmem %s0, 168
  %v1937 = vld [vmem:[%s1936] sm:$0xff]
  %1938 = vrot.lane.b32.xlu0 %v1937, 121
  %v1939 = vpop.permute.xlu0 %1938
  %vm1940 = vcmask 7168
  %s1941 = scalar_lea.vmem %s1, 1351
  %1942 = vst.msk [vmem:[%s1941] ss:$8 sm:$0xf] %vm1940, %v1939
  %s1943 = scalar_lea.vmem %s1, 1351
  %1944 = vst.msk [vmem:[%s1943] ss:$8 sm:$0xf0] %vm1940, %v1939
  %s1945 = scalar_lea.vmem %s0, 176
  %v1946 = vld [vmem:[%s1945] sm:$0xff]
  %1947 = vrot.lane.b32.xlu0 %v1946, 121
  %v1948 = vpop.permute.xlu0 %1947
  %vm1949 = vcmask 7168
  %s1950 = scalar_lea.vmem %s1, 1415
  %1951 = vst.msk [vmem:[%s1950] ss:$8 sm:$0xf] %vm1949, %v1948
  %s1952 = scalar_lea.vmem %s1, 1415
  %1953 = vst.msk [vmem:[%s1952] ss:$8 sm:$0xf0] %vm1949, %v1948
  %s1954 = scalar_lea.vmem %s0, 184
  %v1955 = vld [vmem:[%s1954] sm:$0xff]
  %1956 = vrot.lane.b32.xlu0 %v1955, 121
  %v1957 = vpop.permute.xlu0 %1956
  %vm1958 = vcmask 7168
  %s1959 = scalar_lea.vmem %s1, 1479
  %1960 = vst.msk [vmem:[%s1959] ss:$8 sm:$0xf] %vm1958, %v1957
  %s1961 = scalar_lea.vmem %s1, 1479
  %1962 = vst.msk [vmem:[%s1961] ss:$8 sm:$0xf0] %vm1958, %v1957
  %s1963 = scalar_lea.vmem %s0, 192
  %v1964 = vld [vmem:[%s1963] sm:$0xff]
  %1965 = vrot.lane.b32.xlu0 %v1964, 121
  %v1966 = vpop.permute.xlu0 %1965
  %vm1967 = vcmask 7168
  %s1968 = scalar_lea.vmem %s1, 1543
  %1969 = vst.msk [vmem:[%s1968] ss:$8 sm:$0xf] %vm1967, %v1966
  %s1970 = scalar_lea.vmem %s1, 1543
  %1971 = vst.msk [vmem:[%s1970] ss:$8 sm:$0xf0] %vm1967, %v1966
  %s1972 = scalar_lea.vmem %s0, 200
  %v1973 = vld [vmem:[%s1972] sm:$0xff]
  %1974 = vrot.lane.b32.xlu0 %v1973, 121
  %v1975 = vpop.permute.xlu0 %1974
  %vm1976 = vcmask 7168
  %s1977 = scalar_lea.vmem %s1, 1607
  %1978 = vst.msk [vmem:[%s1977] ss:$8 sm:$0xf] %vm1976, %v1975
  %s1979 = scalar_lea.vmem %s1, 1607
  %1980 = vst.msk [vmem:[%s1979] ss:$8 sm:$0xf0] %vm1976, %v1975
  %s1981 = scalar_lea.vmem %s0, 208
  %v1982 = vld [vmem:[%s1981] sm:$0xff]
  %1983 = vrot.lane.b32.xlu0 %v1982, 121
  %v1984 = vpop.permute.xlu0 %1983
  %vm1985 = vcmask 7168
  %s1986 = scalar_lea.vmem %s1, 1671
  %1987 = vst.msk [vmem:[%s1986] ss:$8 sm:$0xf] %vm1985, %v1984
  %s1988 = scalar_lea.vmem %s1, 1671
  %1989 = vst.msk [vmem:[%s1988] ss:$8 sm:$0xf0] %vm1985, %v1984
  %s1990 = scalar_lea.vmem %s0, 216
  %v1991 = vld [vmem:[%s1990] sm:$0xff]
  %1992 = vrot.lane.b32.xlu0 %v1991, 121
  %v1993 = vpop.permute.xlu0 %1992
  %vm1994 = vcmask 7168
  %s1995 = scalar_lea.vmem %s1, 1735
  %1996 = vst.msk [vmem:[%s1995] ss:$8 sm:$0xf] %vm1994, %v1993
  %s1997 = scalar_lea.vmem %s1, 1735
  %1998 = vst.msk [vmem:[%s1997] ss:$8 sm:$0xf0] %vm1994, %v1993
  %s1999 = scalar_lea.vmem %s0, 224
  %v2000 = vld [vmem:[%s1999] sm:$0x1]
  %2001 = vrot.lane.b32.xlu0 %v2000, 121
  %v2002 = vpop.permute.xlu0 %2001
  %vm2003 = vcmask 7168
  %s2004 = scalar_lea.vmem %s1, 1799
  %2005 = vst.msk [vmem:[%s2004] sm:$0x1] %vm2003, %v2002

// kernel: _lambda_.46
$region0: #{_lambda_.46}
  #allocation0 [shape = 'u32[]', space=smem, size = 0x4, offset = 0x4, fixed_abs, tag = 'smem constant byte address 0x4 - core index']
  #allocation1 [shape = 'u32[72,128]{1,0:T(1,128)}', space=vmem, size = 0x9000, scoped, tag = 'internal scratch']
  %s0 = inlined_call_operand.vmem [shape: bf16[1800,72], index: 0, kind: input, shape index: {}]
  %s1 = inlined_call_operand.vmem [shape: bf16[72,8], index: 1, kind: input, shape index: {}]
  %s2 = inlined_call_operand.vmem [shape: f32[1800,1], index: 2, kind: input, shape index: {}]
  %s3 = inlined_call_operand.vmem [shape: f32[1800,8], index: 3, kind: output, shape index: {}]
  %s4 = sld [smem:[#allocation0]]
  $region22: #{_lambda_.46} parent=0
    _
  %s6 = ssub.s32 1, %s4
  %s7 = scalar_select 0, %s6, %s4
  // Predicated region
  $region2: #{_lambda_.46} parent=0 // pred_check
    _
  $region3: #{_lambda_.46} parent=0 // pred_check_branch
    %9 = sbr.rel (0) target = $region5
  $region4: #{_lambda_.46} parent=0 // pred_region
    _
  $region5: #{_lambda_.46} parent=0 // pred_fallthru
    _
  // Predicated region
  $region6: #{_lambda_.46} parent=0 // pred_check
    _
  $region7: #{_lambda_.46} parent=0 // pred_check_branch
    %11 = sbr.rel (0) target = $region9
  $region8: #{_lambda_.46} parent=0 // pred_region
    _
  $region9: #{_lambda_.46} parent=0 // pred_fallthru
    _
  // Predicated region
  $region10: #{_lambda_.46} parent=0 // pred_check
    _
  $region11: #{_lambda_.46} parent=0 // pred_check_branch
    %13 = sbr.rel (0) target = $region13
  $region12: #{_lambda_.46} parent=0 // pred_region
    _
  $region13: #{_lambda_.46} parent=0 // pred_fallthru
    _
  %v15 = vld [vmem:[%s0] sm:$0xf]
  %v16 = vld [vmem:[%s0 + $0x4] sm:$0xf]
  %v17 = vld [vmem:[%s0 + $0x8] sm:$0xf]
  %v18 = vld [vmem:[%s0 + $0xc] sm:$0xf]
  %v19 = vld [vmem:[%s0 + $0x10] sm:$0xf]
  %v20 = vld [vmem:[%s0 + $0x14] sm:$0xf]
  %v21 = vld [vmem:[%s0 + $0x18] sm:$0xf]
  %v22 = vld [vmem:[%s0 + $0x1c] sm:$0xf]
  %v23 = vld [vmem:[%s0 + $0x20] sm:$0xf]
  %v24 = vld [vmem:[%s0 + $0x24] sm:$0xf]
  %v25 = vld [vmem:[%s0 + $0x28] sm:$0xf]
  %v26 = vld [vmem:[%s0 + $0x2c] sm:$0xf]
  %v27 = vld [vmem:[%s0 + $0x30] sm:$0xf]
  %v28 = vld [vmem:[%s0 + $0x34] sm:$0xf]
  %v29 = vld [vmem:[%s0 + $0x38] sm:$0xf]
  %v30 = vld [vmem:[%s0 + $0x3c] sm:$0xf]
  %v31 = vld [vmem:[%s0 + $0x40] sm:$0xf]
  %v32 = vld [vmem:[%s0 + $0x44] sm:$0xf]
  %v33 = vld [vmem:[%s0 + $0x48] sm:$0xf]
  %v34 = vld [vmem:[%s0 + $0x4c] sm:$0xf]
  %v35 = vld [vmem:[%s0 + $0x50] sm:$0xf]
  %v36 = vld [vmem:[%s0 + $0x54] sm:$0xf]
  %v37 = vld [vmem:[%s0 + $0x58] sm:$0xf]
  %v38 = vld [vmem:[%s0 + $0x5c] sm:$0xf]
  %v39 = vld [vmem:[%s0 + $0x60] sm:$0xf]
  %v40 = vld [vmem:[%s0 + $0x64] sm:$0xf]
  %v41 = vld [vmem:[%s0 + $0x68] sm:$0xf]
  %v42 = vld [vmem:[%s0 + $0x6c] sm:$0xf]
  %v43 = vld [vmem:[%s0 + $0x70] sm:$0xf]
  %v44 = vld [vmem:[%s0 + $0x74] sm:$0xf]
  %v45 = vld [vmem:[%s0 + $0x78] sm:$0xf]
  %v46 = vld [vmem:[%s0 + $0x7c] sm:$0xf]
  %v47 = vld [vmem:[%s0 + $0x80] sm:$0xf]
  %v48 = vld [vmem:[%s0 + $0x84] sm:$0xf]
  %v49 = vld [vmem:[%s0 + $0x88] sm:$0xf]
  %v50 = vld [vmem:[%s0 + $0x8c] sm:$0xf]
  %v51 = vld [vmem:[%s0 + $0x90] sm:$0xf]
  %v52 = vld [vmem:[%s0 + $0x94] sm:$0xf]
  %v53 = vld [vmem:[%s0 + $0x98] sm:$0xf]
  %v54 = vld [vmem:[%s0 + $0x9c] sm:$0xf]
  %v55 = vld [vmem:[%s0 + $0xa0] sm:$0xf]
  %v56 = vld [vmem:[%s0 + $0xa4] sm:$0xf]
  %v57 = vld [vmem:[%s0 + $0xa8] sm:$0xf]
  %v58 = vld [vmem:[%s0 + $0xac] sm:$0xf]
  %v59 = vld [vmem:[%s0 + $0xb0] sm:$0xf]
  %v60 = vld [vmem:[%s0 + $0xb4] sm:$0xf]
  %v61 = vld [vmem:[%s0 + $0xb8] sm:$0xf]
  %v62 = vld [vmem:[%s0 + $0xbc] sm:$0xf]
  %v63 = vld [vmem:[%s0 + $0xc0] sm:$0xf]
  %v64 = vld [vmem:[%s0 + $0xc4] sm:$0xf]
  %v65 = vld [vmem:[%s0 + $0xc8] sm:$0xf]
  %v66 = vld [vmem:[%s0 + $0xcc] sm:$0xf]
  %v67 = vld [vmem:[%s0 + $0xd0] sm:$0xf]
  %v68 = vld [vmem:[%s0 + $0xd4] sm:$0xf]
  %v69 = vld [vmem:[%s0 + $0xd8] sm:$0xf]
  %v70 = vld [vmem:[%s0 + $0xdc] sm:$0xf]
  %v71 = vld [vmem:[%s0 + $0xe0] sm:$0xf]
  %v72 = vld [vmem:[%s0 + $0xe4] sm:$0xf]
  %v73 = vld [vmem:[%s0 + $0xe8] sm:$0xf]
  %v74 = vld [vmem:[%s0 + $0xec] sm:$0xf]
  %v75 = vld [vmem:[%s0 + $0xf0] sm:$0xf]
  %v76 = vld [vmem:[%s0 + $0xf4] sm:$0xf]
  %v77 = vld [vmem:[%s0 + $0xf8] sm:$0xf]
  %v78 = vld [vmem:[%s0 + $0xfc] sm:$0xf]
  %v79 = vld [vmem:[%s0 + $0x100] sm:$0xf]
  %v80 = vld [vmem:[%s0 + $0x104] sm:$0xf]
  %v81 = vld [vmem:[%s0 + $0x108] sm:$0xf]
  %v82 = vld [vmem:[%s0 + $0x10c] sm:$0xf]
  %v83 = vld [vmem:[%s0 + $0x110] sm:$0xf]
  %v84 = vld [vmem:[%s0 + $0x114] sm:$0xf]
  %v85 = vld [vmem:[%s0 + $0x118] sm:$0xf]
  %v86 = vld [vmem:[%s0 + $0x11c] sm:$0xf]
  %v87 = vld [vmem:[%s0 + $0x120] sm:$0xf]
  %v88 = vld [vmem:[%s0 + $0x124] sm:$0xf]
  %v89 = vld [vmem:[%s0 + $0x128] sm:$0xf]
  %v90 = vld [vmem:[%s0 + $0x12c] sm:$0xf]
  %v91 = vld [vmem:[%s0 + $0x130] sm:$0xf]
  %v92 = vld [vmem:[%s0 + $0x134] sm:$0xf]
  %v93 = vld [vmem:[%s0 + $0x138] sm:$0xf]
  %v94 = vld [vmem:[%s0 + $0x13c] sm:$0xf]
  %v95 = vld [vmem:[%s0 + $0x140] sm:$0xf]
  %v96 = vld [vmem:[%s0 + $0x144] sm:$0xf]
  %v97 = vld [vmem:[%s0 + $0x148] sm:$0xf]
  %v98 = vld [vmem:[%s0 + $0x14c] sm:$0xf]
  %v99 = vld [vmem:[%s0 + $0x150] sm:$0xf]
  %v100 = vld [vmem:[%s0 + $0x154] sm:$0xf]
  %v101 = vld [vmem:[%s0 + $0x158] sm:$0xf]
  %v102 = vld [vmem:[%s0 + $0x15c] sm:$0xf]
  %v103 = vld [vmem:[%s0 + $0x160] sm:$0xf]
  %v104 = vld [vmem:[%s0 + $0x164] sm:$0xf]
  %v105 = vld [vmem:[%s0 + $0x168] sm:$0xf]
  %v106 = vld [vmem:[%s0 + $0x16c] sm:$0xf]
  %v107 = vld [vmem:[%s0 + $0x170] sm:$0xf]
  %v108 = vld [vmem:[%s0 + $0x174] sm:$0xf]
  %v109 = vld [vmem:[%s0 + $0x178] sm:$0xf]
  %v110 = vld [vmem:[%s0 + $0x17c] sm:$0xf]
  %v111 = vld [vmem:[%s0 + $0x180] sm:$0xf]
  %v112 = vld [vmem:[%s0 + $0x184] sm:$0xf]
  %v113 = vld [vmem:[%s0 + $0x188] sm:$0xf]
  %v114 = vld [vmem:[%s0 + $0x18c] sm:$0xf]
  %v115 = vld [vmem:[%s0 + $0x190] sm:$0xf]
  %v116 = vld [vmem:[%s0 + $0x194] sm:$0xf]
  %v117 = vld [vmem:[%s0 + $0x198] sm:$0xf]
  %v118 = vld [vmem:[%s0 + $0x19c] sm:$0xf]
  %v119 = vld [vmem:[%s0 + $0x1a0] sm:$0xf]
  %v120 = vld [vmem:[%s0 + $0x1a4] sm:$0xf]
  %v121 = vld [vmem:[%s0 + $0x1a8] sm:$0xf]
  %v122 = vld [vmem:[%s0 + $0x1ac] sm:$0xf]
  %v123 = vld [vmem:[%s0 + $0x1b0] sm:$0xf]
  %v124 = vld [vmem:[%s0 + $0x1b4] sm:$0xf]
  %v125 = vld [vmem:[%s0 + $0x1b8] sm:$0xf]
  %v126 = vld [vmem:[%s0 + $0x1bc] sm:$0xf]
  %v127 = vld [vmem:[%s0 + $0x1c0] sm:$0xf]
  %v128 = vld [vmem:[%s0 + $0x1c4] sm:$0xf]
  %v129 = vld [vmem:[%s0 + $0x1c8] sm:$0xf]
  %v130 = vld [vmem:[%s0 + $0x1cc] sm:$0xf]
  %v131 = vld [vmem:[%s0 + $0x1d0] sm:$0xf]
  %v132 = vld [vmem:[%s0 + $0x1d4] sm:$0xf]
  %v133 = vld [vmem:[%s0 + $0x1d8] sm:$0xf]
  %v134 = vld [vmem:[%s0 + $0x1dc] sm:$0xf]
  %v135 = vld [vmem:[%s0 + $0x1e0] sm:$0xf]
  %v136 = vld [vmem:[%s0 + $0x1e4] sm:$0xf]
  %v137 = vld [vmem:[%s0 + $0x1e8] sm:$0xf]
  %v138 = vld [vmem:[%s0 + $0x1ec] sm:$0xf]
  %v139 = vld [vmem:[%s0 + $0x1f0] sm:$0xf]
  %v140 = vld [vmem:[%s0 + $0x1f4] sm:$0xf]
  %v141 = vld [vmem:[%s0 + $0x1f8] sm:$0xf]
  %v142 = vld [vmem:[%s0 + $0x1fc] sm:$0xf]
  %v143 = vld [vmem:[%s0 + $0x200] sm:$0xf]
  %v144 = vld [vmem:[%s0 + $0x204] sm:$0xf]
  %v145 = vld [vmem:[%s0 + $0x208] sm:$0xf]
  %v146 = vld [vmem:[%s0 + $0x20c] sm:$0xf]
  %v147 = vld [vmem:[%s0 + $0x210] sm:$0xf]
  %v148 = vld [vmem:[%s0 + $0x214] sm:$0xf]
  %v149 = vld [vmem:[%s0 + $0x218] sm:$0xf]
  %v150 = vld [vmem:[%s0 + $0x21c] sm:$0xf]
  %v151 = vld [vmem:[%s0 + $0x220] sm:$0xf]
  %v152 = vld [vmem:[%s0 + $0x224] sm:$0xf]
  %v153 = vld [vmem:[%s0 + $0x228] sm:$0xf]
  %v154 = vld [vmem:[%s0 + $0x22c] sm:$0xf]
  %v155 = vld [vmem:[%s0 + $0x230] sm:$0xf]
  %v156 = vld [vmem:[%s0 + $0x234] sm:$0xf]
  %v157 = vld [vmem:[%s0 + $0x238] sm:$0xf]
  %v158 = vld [vmem:[%s0 + $0x23c] sm:$0xf]
  %v159 = vld [vmem:[%s0 + $0x240] sm:$0xf]
  %v160 = vld [vmem:[%s0 + $0x244] sm:$0xf]
  %v161 = vld [vmem:[%s0 + $0x248] sm:$0xf]
  %v162 = vld [vmem:[%s0 + $0x24c] sm:$0xf]
  %v163 = vld [vmem:[%s0 + $0x250] sm:$0xf]
  %v164 = vld [vmem:[%s0 + $0x254] sm:$0xf]
  %v165 = vld [vmem:[%s0 + $0x258] sm:$0xf]
  %v166 = vld [vmem:[%s0 + $0x25c] sm:$0xf]
  %v167 = vld [vmem:[%s0 + $0x260] sm:$0xf]
  %v168 = vld [vmem:[%s0 + $0x264] sm:$0xf]
  %v169 = vld [vmem:[%s0 + $0x268] sm:$0xf]
  %v170 = vld [vmem:[%s0 + $0x26c] sm:$0xf]
  %v171 = vld [vmem:[%s0 + $0x270] sm:$0xf]
  %v172 = vld [vmem:[%s0 + $0x274] sm:$0xf]
  %v173 = vld [vmem:[%s0 + $0x278] sm:$0xf]
  %v174 = vld [vmem:[%s0 + $0x27c] sm:$0xf]
  %v175 = vld [vmem:[%s0 + $0x280] sm:$0xf]
  %v176 = vld [vmem:[%s0 + $0x284] sm:$0xf]
  %v177 = vld [vmem:[%s0 + $0x288] sm:$0xf]
  %v178 = vld [vmem:[%s0 + $0x28c] sm:$0xf]
  %v179 = vld [vmem:[%s0 + $0x290] sm:$0xf]
  %v180 = vld [vmem:[%s0 + $0x294] sm:$0xf]
  %v181 = vld [vmem:[%s0 + $0x298] sm:$0xf]
  %v182 = vld [vmem:[%s0 + $0x29c] sm:$0xf]
  %v183 = vld [vmem:[%s0 + $0x2a0] sm:$0xf]
  %v184 = vld [vmem:[%s0 + $0x2a4] sm:$0xf]
  %v185 = vld [vmem:[%s0 + $0x2a8] sm:$0xf]
  %v186 = vld [vmem:[%s0 + $0x2ac] sm:$0xf]
  %v187 = vld [vmem:[%s0 + $0x2b0] sm:$0xf]
  %v188 = vld [vmem:[%s0 + $0x2b4] sm:$0xf]
  %v189 = vld [vmem:[%s0 + $0x2b8] sm:$0xf]
  %v190 = vld [vmem:[%s0 + $0x2bc] sm:$0xf]
  %v191 = vld [vmem:[%s0 + $0x2c0] sm:$0xf]
  %v192 = vld [vmem:[%s0 + $0x2c4] sm:$0xf]
  %v193 = vld [vmem:[%s0 + $0x2c8] sm:$0xf]
  %v194 = vld [vmem:[%s0 + $0x2cc] sm:$0xf]
  %v195 = vld [vmem:[%s0 + $0x2d0] sm:$0xf]
  %v196 = vld [vmem:[%s0 + $0x2d4] sm:$0xf]
  %v197 = vld [vmem:[%s0 + $0x2d8] sm:$0xf]
  %v198 = vld [vmem:[%s0 + $0x2dc] sm:$0xf]
  %v199 = vld [vmem:[%s0 + $0x2e0] sm:$0xf]
  %v200 = vld [vmem:[%s0 + $0x2e4] sm:$0xf]
  %v201 = vld [vmem:[%s0 + $0x2e8] sm:$0xf]
  %v202 = vld [vmem:[%s0 + $0x2ec] sm:$0xf]
  %v203 = vld [vmem:[%s0 + $0x2f0] sm:$0xf]
  %v204 = vld [vmem:[%s0 + $0x2f4] sm:$0xf]
  %v205 = vld [vmem:[%s0 + $0x2f8] sm:$0xf]
  %v206 = vld [vmem:[%s0 + $0x2fc] sm:$0xf]
  %v207 = vld [vmem:[%s0 + $0x300] sm:$0xf]
  %v208 = vld [vmem:[%s0 + $0x304] sm:$0xf]
  %v209 = vld [vmem:[%s0 + $0x308] sm:$0xf]
  %v210 = vld [vmem:[%s0 + $0x30c] sm:$0xf]
  %v211 = vld [vmem:[%s0 + $0x310] sm:$0xf]
  %v212 = vld [vmem:[%s0 + $0x314] sm:$0xf]
  %v213 = vld [vmem:[%s0 + $0x318] sm:$0xf]
  %v214 = vld [vmem:[%s0 + $0x31c] sm:$0xf]
  %v215 = vld [vmem:[%s0 + $0x320] sm:$0xf]
  %v216 = vld [vmem:[%s0 + $0x324] sm:$0xf]
  %v217 = vld [vmem:[%s0 + $0x328] sm:$0xf]
  %v218 = vld [vmem:[%s0 + $0x32c] sm:$0xf]
  %v219 = vld [vmem:[%s0 + $0x330] sm:$0xf]
  %v220 = vld [vmem:[%s0 + $0x334] sm:$0xf]
  %v221 = vld [vmem:[%s0 + $0x338] sm:$0xf]
  %v222 = vld [vmem:[%s0 + $0x33c] sm:$0xf]
  %v223 = vld [vmem:[%s0 + $0x340] sm:$0xf]
  %v224 = vld [vmem:[%s0 + $0x344] sm:$0xf]
  %v225 = vld [vmem:[%s0 + $0x348] sm:$0xf]
  %v226 = vld [vmem:[%s0 + $0x34c] sm:$0xf]
  %v227 = vld [vmem:[%s0 + $0x350] sm:$0xf]
  %v228 = vld [vmem:[%s0 + $0x354] sm:$0xf]
  %v229 = vld [vmem:[%s0 + $0x358] sm:$0xf]
  %v230 = vld [vmem:[%s0 + $0x35c] sm:$0xf]
  %v231 = vld [vmem:[%s0 + $0x360] sm:$0xf]
  %v232 = vld [vmem:[%s0 + $0x364] sm:$0xf]
  %v233 = vld [vmem:[%s0 + $0x368] sm:$0xf]
  %v234 = vld [vmem:[%s0 + $0x36c] sm:$0xf]
  %v235 = vld [vmem:[%s0 + $0x370] sm:$0xf]
  %v236 = vld [vmem:[%s0 + $0x374] sm:$0xf]
  %v237 = vld [vmem:[%s0 + $0x378] sm:$0xf]
  %v238 = vld [vmem:[%s0 + $0x37c] sm:$0xf]
  %v239 = vld [vmem:[%s0 + $0x380] sm:$0xf]
  %v240 = vld [vmem:[%s1] sm:$0xf]
  %v241 = vld [vmem:[%s1 + $0x4] sm:$0xf]
  %v242 = vld [vmem:[%s1 + $0x8] sm:$0xf]
  %v243 = vld [vmem:[%s1 + $0xc] sm:$0xf]
  %v244 = vld [vmem:[%s1 + $0x10] sm:$0xf]
  %v245 = vld [vmem:[%s1 + $0x14] sm:$0xf]
  %v246 = vld [vmem:[%s1 + $0x18] sm:$0xf]
  %v247 = vld [vmem:[%s1 + $0x1c] sm:$0xf]
  %v248 = vld [vmem:[%s1 + $0x20] sm:$0xf]
  %v249 = vld [vmem:[%s2] sm:$0xff]
  %v250 = vld [vmem:[%s2 + $0x8] sm:$0xff]
  %v251 = vld [vmem:[%s2 + $0x10] sm:$0xff]
  %v252 = vld [vmem:[%s2 + $0x18] sm:$0xff]
  %v253 = vld [vmem:[%s2 + $0x20] sm:$0xff]
  %v254 = vld [vmem:[%s2 + $0x28] sm:$0xff]
  %v255 = vld [vmem:[%s2 + $0x30] sm:$0xff]
  %v256 = vld [vmem:[%s2 + $0x38] sm:$0xff]
  %v257 = vld [vmem:[%s2 + $0x40] sm:$0xff]
  %v258 = vld [vmem:[%s2 + $0x48] sm:$0xff]
  %v259 = vld [vmem:[%s2 + $0x50] sm:$0xff]
  %v260 = vld [vmem:[%s2 + $0x58] sm:$0xff]
  %v261 = vld [vmem:[%s2 + $0x60] sm:$0xff]
  %v262 = vld [vmem:[%s2 + $0x68] sm:$0xff]
  %v263 = vld [vmem:[%s2 + $0x70] sm:$0xff]
  %v264 = vld [vmem:[%s2 + $0x78] sm:$0xff]
  %v265 = vld [vmem:[%s2 + $0x80] sm:$0xff]
  %v266 = vld [vmem:[%s2 + $0x88] sm:$0xff]
  %v267 = vld [vmem:[%s2 + $0x90] sm:$0xff]
  %v268 = vld [vmem:[%s2 + $0x98] sm:$0xff]
  %v269 = vld [vmem:[%s2 + $0xa0] sm:$0xff]
  %v270 = vld [vmem:[%s2 + $0xa8] sm:$0xff]
  %v271 = vld [vmem:[%s2 + $0xb0] sm:$0xff]
  %v272 = vld [vmem:[%s2 + $0xb8] sm:$0xff]
  %v273 = vld [vmem:[%s2 + $0xc0] sm:$0xff]
  %v274 = vld [vmem:[%s2 + $0xc8] sm:$0xff]
  %v275 = vld [vmem:[%s2 + $0xd0] sm:$0xff]
  %v276 = vld [vmem:[%s2 + $0xd8] sm:$0xff]
  %v277 = vld [vmem:[%s2 + $0xe0] sm:$0xff]
  %v278 = vld [vmem:[%s2 + $0xe8] sm:$0xff]
  %v279 = vld [vmem:[%s2 + $0xf0] sm:$0xff]
  %v280 = vld [vmem:[%s2 + $0xf8] sm:$0xff]
  %v281 = vld [vmem:[%s2 + $0x100] sm:$0xff]
  %v282 = vld [vmem:[%s2 + $0x108] sm:$0xff]
  %v283 = vld [vmem:[%s2 + $0x110] sm:$0xff]
  %v284 = vld [vmem:[%s2 + $0x118] sm:$0xff]
  %v285 = vld [vmem:[%s2 + $0x120] sm:$0xff]
  %v286 = vld [vmem:[%s2 + $0x128] sm:$0xff]
  %v287 = vld [vmem:[%s2 + $0x130] sm:$0xff]
  %v288 = vld [vmem:[%s2 + $0x138] sm:$0xff]
  %v289 = vld [vmem:[%s2 + $0x140] sm:$0xff]
  %v290 = vld [vmem:[%s2 + $0x148] sm:$0xff]
  %v291 = vld [vmem:[%s2 + $0x150] sm:$0xff]
  %v292 = vld [vmem:[%s2 + $0x158] sm:$0xff]
  %v293 = vld [vmem:[%s2 + $0x160] sm:$0xff]
  %v294 = vld [vmem:[%s2 + $0x168] sm:$0xff]
  %v295 = vld [vmem:[%s2 + $0x170] sm:$0xff]
  %v296 = vld [vmem:[%s2 + $0x178] sm:$0xff]
  %v297 = vld [vmem:[%s2 + $0x180] sm:$0xff]
  %v298 = vld [vmem:[%s2 + $0x188] sm:$0xff]
  %v299 = vld [vmem:[%s2 + $0x190] sm:$0xff]
  %v300 = vld [vmem:[%s2 + $0x198] sm:$0xff]
  %v301 = vld [vmem:[%s2 + $0x1a0] sm:$0xff]
  %v302 = vld [vmem:[%s2 + $0x1a8] sm:$0xff]
  %v303 = vld [vmem:[%s2 + $0x1b0] sm:$0xff]
  %v304 = vld [vmem:[%s2 + $0x1b8] sm:$0xff]
  %v305 = vld [vmem:[%s2 + $0x1c0] sm:$0xff]
  %v306 = vld [vmem:[%s2 + $0x1c8] sm:$0xff]
  %v307 = vld [vmem:[%s2 + $0x1d0] sm:$0xff]
  %v308 = vld [vmem:[%s2 + $0x1d8] sm:$0xff]
  %v309 = vld [vmem:[%s2 + $0x1e0] sm:$0xff]
  %v310 = vld [vmem:[%s2 + $0x1e8] sm:$0xff]
  %v311 = vld [vmem:[%s2 + $0x1f0] sm:$0xff]
  %v312 = vld [vmem:[%s2 + $0x1f8] sm:$0xff]
  %v313 = vld [vmem:[%s2 + $0x200] sm:$0xff]
  %v314 = vld [vmem:[%s2 + $0x208] sm:$0xff]
  %v315 = vld [vmem:[%s2 + $0x210] sm:$0xff]
  %v316 = vld [vmem:[%s2 + $0x218] sm:$0xff]
  %v317 = vld [vmem:[%s2 + $0x220] sm:$0xff]
  %v318 = vld [vmem:[%s2 + $0x228] sm:$0xff]
  %v319 = vld [vmem:[%s2 + $0x230] sm:$0xff]
  %v320 = vld [vmem:[%s2 + $0x238] sm:$0xff]
  %v321 = vld [vmem:[%s2 + $0x240] sm:$0xff]
  %v322 = vld [vmem:[%s2 + $0x248] sm:$0xff]
  %v323 = vld [vmem:[%s2 + $0x250] sm:$0xff]
  %v324 = vld [vmem:[%s2 + $0x258] sm:$0xff]
  %v325 = vld [vmem:[%s2 + $0x260] sm:$0xff]
  %v326 = vld [vmem:[%s2 + $0x268] sm:$0xff]
  %v327 = vld [vmem:[%s2 + $0x270] sm:$0xff]
  %v328 = vld [vmem:[%s2 + $0x278] sm:$0xff]
  %v329 = vld [vmem:[%s2 + $0x280] sm:$0xff]
  %v330 = vld [vmem:[%s2 + $0x288] sm:$0xff]
  %v331 = vld [vmem:[%s2 + $0x290] sm:$0xff]
  %v332 = vld [vmem:[%s2 + $0x298] sm:$0xff]
  %v333 = vld [vmem:[%s2 + $0x2a0] sm:$0xff]
  %v334 = vld [vmem:[%s2 + $0x2a8] sm:$0xff]
  %v335 = vld [vmem:[%s2 + $0x2b0] sm:$0xff]
  %v336 = vld [vmem:[%s2 + $0x2b8] sm:$0xff]
  %v337 = vld [vmem:[%s2 + $0x2c0] sm:$0xff]
  %v338 = vld [vmem:[%s2 + $0x2c8] sm:$0xff]
  %v339 = vld [vmem:[%s2 + $0x2d0] sm:$0xff]
  %v340 = vld [vmem:[%s2 + $0x2d8] sm:$0xff]
  %v341 = vld [vmem:[%s2 + $0x2e0] sm:$0xff]
  %v342 = vld [vmem:[%s2 + $0x2e8] sm:$0xff]
  %v343 = vld [vmem:[%s2 + $0x2f0] sm:$0xff]
  %v344 = vld [vmem:[%s2 + $0x2f8] sm:$0xff]
  %v345 = vld [vmem:[%s2 + $0x300] sm:$0xff]
  %v346 = vld [vmem:[%s2 + $0x308] sm:$0xff]
  %v347 = vld [vmem:[%s2 + $0x310] sm:$0xff]
  %v348 = vld [vmem:[%s2 + $0x318] sm:$0xff]
  %v349 = vld [vmem:[%s2 + $0x320] sm:$0xff]
  %v350 = vld [vmem:[%s2 + $0x328] sm:$0xff]
  %v351 = vld [vmem:[%s2 + $0x330] sm:$0xff]
  %v352 = vld [vmem:[%s2 + $0x338] sm:$0xff]
  %v353 = vld [vmem:[%s2 + $0x340] sm:$0xff]
  %v354 = vld [vmem:[%s2 + $0x348] sm:$0xff]
  %v355 = vld [vmem:[%s2 + $0x350] sm:$0xff]
  %v356 = vld [vmem:[%s2 + $0x358] sm:$0xff]
  %v357 = vld [vmem:[%s2 + $0x360] sm:$0xff]
  %v358 = vld [vmem:[%s2 + $0x368] sm:$0xff]
  %v359 = vld [vmem:[%s2 + $0x370] sm:$0xff]
  %v360 = vld [vmem:[%s2 + $0x378] sm:$0xff]
  %v361 = vld [vmem:[%s2 + $0x380] sm:$0xff]
  %v362 = vld [vmem:[%s2 + $0x388] sm:$0xff]
  %v363 = vld [vmem:[%s2 + $0x390] sm:$0xff]
  %v364 = vld [vmem:[%s2 + $0x398] sm:$0xff]
  %v365 = vld [vmem:[%s2 + $0x3a0] sm:$0xff]
  %v366 = vld [vmem:[%s2 + $0x3a8] sm:$0xff]
  %v367 = vld [vmem:[%s2 + $0x3b0] sm:$0xff]
  %v368 = vld [vmem:[%s2 + $0x3b8] sm:$0xff]
  %v369 = vld [vmem:[%s2 + $0x3c0] sm:$0xff]
  %v370 = vld [vmem:[%s2 + $0x3c8] sm:$0xff]
  %v371 = vld [vmem:[%s2 + $0x3d0] sm:$0xff]
  %v372 = vld [vmem:[%s2 + $0x3d8] sm:$0xff]
  %v373 = vld [vmem:[%s2 + $0x3e0] sm:$0xff]
  %v374 = vld [vmem:[%s2 + $0x3e8] sm:$0xff]
  %v375 = vld [vmem:[%s2 + $0x3f0] sm:$0xff]
  %v376 = vld [vmem:[%s2 + $0x3f8] sm:$0xff]
  %v377 = vld [vmem:[%s2 + $0x400] sm:$0xff]
  %v378 = vld [vmem:[%s2 + $0x408] sm:$0xff]
  %v379 = vld [vmem:[%s2 + $0x410] sm:$0xff]
  %v380 = vld [vmem:[%s2 + $0x418] sm:$0xff]
  %v381 = vld [vmem:[%s2 + $0x420] sm:$0xff]
  %v382 = vld [vmem:[%s2 + $0x428] sm:$0xff]
  %v383 = vld [vmem:[%s2 + $0x430] sm:$0xff]
  %v384 = vld [vmem:[%s2 + $0x438] sm:$0xff]
  %v385 = vld [vmem:[%s2 + $0x440] sm:$0xff]
  %v386 = vld [vmem:[%s2 + $0x448] sm:$0xff]
  %v387 = vld [vmem:[%s2 + $0x450] sm:$0xff]
  %v388 = vld [vmem:[%s2 + $0x458] sm:$0xff]
  %v389 = vld [vmem:[%s2 + $0x460] sm:$0xff]
  %v390 = vld [vmem:[%s2 + $0x468] sm:$0xff]
  %v391 = vld [vmem:[%s2 + $0x470] sm:$0xff]
  %v392 = vld [vmem:[%s2 + $0x478] sm:$0xff]
  %v393 = vld [vmem:[%s2 + $0x480] sm:$0xff]
  %v394 = vld [vmem:[%s2 + $0x488] sm:$0xff]
  %v395 = vld [vmem:[%s2 + $0x490] sm:$0xff]
  %v396 = vld [vmem:[%s2 + $0x498] sm:$0xff]
  %v397 = vld [vmem:[%s2 + $0x4a0] sm:$0xff]
  %v398 = vld [vmem:[%s2 + $0x4a8] sm:$0xff]
  %v399 = vld [vmem:[%s2 + $0x4b0] sm:$0xff]
  %v400 = vld [vmem:[%s2 + $0x4b8] sm:$0xff]
  %v401 = vld [vmem:[%s2 + $0x4c0] sm:$0xff]
  %v402 = vld [vmem:[%s2 + $0x4c8] sm:$0xff]
  %v403 = vld [vmem:[%s2 + $0x4d0] sm:$0xff]
  %v404 = vld [vmem:[%s2 + $0x4d8] sm:$0xff]
  %v405 = vld [vmem:[%s2 + $0x4e0] sm:$0xff]
  %v406 = vld [vmem:[%s2 + $0x4e8] sm:$0xff]
  %v407 = vld [vmem:[%s2 + $0x4f0] sm:$0xff]
  %v408 = vld [vmem:[%s2 + $0x4f8] sm:$0xff]
  %v409 = vld [vmem:[%s2 + $0x500] sm:$0xff]
  %v410 = vld [vmem:[%s2 + $0x508] sm:$0xff]
  %v411 = vld [vmem:[%s2 + $0x510] sm:$0xff]
  %v412 = vld [vmem:[%s2 + $0x518] sm:$0xff]
  %v413 = vld [vmem:[%s2 + $0x520] sm:$0xff]
  %v414 = vld [vmem:[%s2 + $0x528] sm:$0xff]
  %v415 = vld [vmem:[%s2 + $0x530] sm:$0xff]
  %v416 = vld [vmem:[%s2 + $0x538] sm:$0xff]
  %v417 = vld [vmem:[%s2 + $0x540] sm:$0xff]
  %v418 = vld [vmem:[%s2 + $0x548] sm:$0xff]
  %v419 = vld [vmem:[%s2 + $0x550] sm:$0xff]
  %v420 = vld [vmem:[%s2 + $0x558] sm:$0xff]
  %v421 = vld [vmem:[%s2 + $0x560] sm:$0xff]
  %v422 = vld [vmem:[%s2 + $0x568] sm:$0xff]
  %v423 = vld [vmem:[%s2 + $0x570] sm:$0xff]
  %v424 = vld [vmem:[%s2 + $0x578] sm:$0xff]
  %v425 = vld [vmem:[%s2 + $0x580] sm:$0xff]
  %v426 = vld [vmem:[%s2 + $0x588] sm:$0xff]
  %v427 = vld [vmem:[%s2 + $0x590] sm:$0xff]
  %v428 = vld [vmem:[%s2 + $0x598] sm:$0xff]
  %v429 = vld [vmem:[%s2 + $0x5a0] sm:$0xff]
  %v430 = vld [vmem:[%s2 + $0x5a8] sm:$0xff]
  %v431 = vld [vmem:[%s2 + $0x5b0] sm:$0xff]
  %v432 = vld [vmem:[%s2 + $0x5b8] sm:$0xff]
  %v433 = vld [vmem:[%s2 + $0x5c0] sm:$0xff]
  %v434 = vld [vmem:[%s2 + $0x5c8] sm:$0xff]
  %v435 = vld [vmem:[%s2 + $0x5d0] sm:$0xff]
  %v436 = vld [vmem:[%s2 + $0x5d8] sm:$0xff]
  %v437 = vld [vmem:[%s2 + $0x5e0] sm:$0xff]
  %v438 = vld [vmem:[%s2 + $0x5e8] sm:$0xff]
  %v439 = vld [vmem:[%s2 + $0x5f0] sm:$0xff]
  %v440 = vld [vmem:[%s2 + $0x5f8] sm:$0xff]
  %v441 = vld [vmem:[%s2 + $0x600] sm:$0xff]
  %v442 = vld [vmem:[%s2 + $0x608] sm:$0xff]
  %v443 = vld [vmem:[%s2 + $0x610] sm:$0xff]
  %v444 = vld [vmem:[%s2 + $0x618] sm:$0xff]
  %v445 = vld [vmem:[%s2 + $0x620] sm:$0xff]
  %v446 = vld [vmem:[%s2 + $0x628] sm:$0xff]
  %v447 = vld [vmem:[%s2 + $0x630] sm:$0xff]
  %v448 = vld [vmem:[%s2 + $0x638] sm:$0xff]
  %v449 = vld [vmem:[%s2 + $0x640] sm:$0xff]
  %v450 = vld [vmem:[%s2 + $0x648] sm:$0xff]
  %v451 = vld [vmem:[%s2 + $0x650] sm:$0xff]
  %v452 = vld [vmem:[%s2 + $0x658] sm:$0xff]
  %v453 = vld [vmem:[%s2 + $0x660] sm:$0xff]
  %v454 = vld [vmem:[%s2 + $0x668] sm:$0xff]
  %v455 = vld [vmem:[%s2 + $0x670] sm:$0xff]
  %v456 = vld [vmem:[%s2 + $0x678] sm:$0xff]
  %v457 = vld [vmem:[%s2 + $0x680] sm:$0xff]
  %v458 = vld [vmem:[%s2 + $0x688] sm:$0xff]
  %v459 = vld [vmem:[%s2 + $0x690] sm:$0xff]
  %v460 = vld [vmem:[%s2 + $0x698] sm:$0xff]
  %v461 = vld [vmem:[%s2 + $0x6a0] sm:$0xff]
  %v462 = vld [vmem:[%s2 + $0x6a8] sm:$0xff]
  %v463 = vld [vmem:[%s2 + $0x6b0] sm:$0xff]
  %v464 = vld [vmem:[%s2 + $0x6b8] sm:$0xff]
  %v465 = vld [vmem:[%s2 + $0x6c0] sm:$0xff]
  %v466 = vld [vmem:[%s2 + $0x6c8] sm:$0xff]
  %v467 = vld [vmem:[%s2 + $0x6d0] sm:$0xff]
  %v468 = vld [vmem:[%s2 + $0x6d8] sm:$0xff]
  %v469 = vld [vmem:[%s2 + $0x6e0] sm:$0xff]
  %v470 = vld [vmem:[%s2 + $0x6e8] sm:$0xff]
  %v471 = vld [vmem:[%s2 + $0x6f0] sm:$0xff]
  %v472 = vld [vmem:[%s2 + $0x6f8] sm:$0xff]
  %v473 = vld [vmem:[%s2 + $0x700] sm:$0xff]
  %475 = vset.pattern.permute.xlu0 0
  %476 = vperm.xlu0 %475, %v249
  %v477 = vpop.permute.xlu0 %476
  %480 = vset.pattern.permute.xlu0 0
  %481 = vperm.xlu0 %480, %v250
  %v482 = vpop.permute.xlu0 %481
  %485 = vset.pattern.permute.xlu0 0
  %486 = vperm.xlu0 %485, %v251
  %v487 = vpop.permute.xlu0 %486
  %490 = vset.pattern.permute.xlu0 0
  %491 = vperm.xlu0 %490, %v252
  %v492 = vpop.permute.xlu0 %491
  %495 = vset.pattern.permute.xlu0 0
  %496 = vperm.xlu0 %495, %v253
  %v497 = vpop.permute.xlu0 %496
  %500 = vset.pattern.permute.xlu0 0
  %501 = vperm.xlu0 %500, %v254
  %v502 = vpop.permute.xlu0 %501
  %505 = vset.pattern.permute.xlu0 0
  %506 = vperm.xlu0 %505, %v255
  %v507 = vpop.permute.xlu0 %506
  %510 = vset.pattern.permute.xlu0 0
  %511 = vperm.xlu0 %510, %v256
  %v512 = vpop.permute.xlu0 %511
  %515 = vset.pattern.permute.xlu0 0
  %516 = vperm.xlu0 %515, %v257
  %v517 = vpop.permute.xlu0 %516
  %520 = vset.pattern.permute.xlu0 0
  %521 = vperm.xlu0 %520, %v258
  %v522 = vpop.permute.xlu0 %521
  %525 = vset.pattern.permute.xlu0 0
  %526 = vperm.xlu0 %525, %v259
  %v527 = vpop.permute.xlu0 %526
  %530 = vset.pattern.permute.xlu0 0
  %531 = vperm.xlu0 %530, %v260
  %v532 = vpop.permute.xlu0 %531
  %535 = vset.pattern.permute.xlu0 0
  %536 = vperm.xlu0 %535, %v261
  %v537 = vpop.permute.xlu0 %536
  %540 = vset.pattern.permute.xlu0 0
  %541 = vperm.xlu0 %540, %v262
  %v542 = vpop.permute.xlu0 %541
  %545 = vset.pattern.permute.xlu0 0
  %546 = vperm.xlu0 %545, %v263
  %v547 = vpop.permute.xlu0 %546
  %550 = vset.pattern.permute.xlu0 0
  %551 = vperm.xlu0 %550, %v264
  %v552 = vpop.permute.xlu0 %551
  %555 = vset.pattern.permute.xlu0 0
  %556 = vperm.xlu0 %555, %v265
  %v557 = vpop.permute.xlu0 %556
  %560 = vset.pattern.permute.xlu0 0
  %561 = vperm.xlu0 %560, %v266
  %v562 = vpop.permute.xlu0 %561
  %565 = vset.pattern.permute.xlu0 0
  %566 = vperm.xlu0 %565, %v267
  %v567 = vpop.permute.xlu0 %566
  %570 = vset.pattern.permute.xlu0 0
  %571 = vperm.xlu0 %570, %v268
  %v572 = vpop.permute.xlu0 %571
  %575 = vset.pattern.permute.xlu0 0
  %576 = vperm.xlu0 %575, %v269
  %v577 = vpop.permute.xlu0 %576
  %580 = vset.pattern.permute.xlu0 0
  %581 = vperm.xlu0 %580, %v270
  %v582 = vpop.permute.xlu0 %581
  %585 = vset.pattern.permute.xlu0 0
  %586 = vperm.xlu0 %585, %v271
  %v587 = vpop.permute.xlu0 %586
  %590 = vset.pattern.permute.xlu0 0
  %591 = vperm.xlu0 %590, %v272
  %v592 = vpop.permute.xlu0 %591
  %595 = vset.pattern.permute.xlu0 0
  %596 = vperm.xlu0 %595, %v273
  %v597 = vpop.permute.xlu0 %596
  %600 = vset.pattern.permute.xlu0 0
  %601 = vperm.xlu0 %600, %v274
  %v602 = vpop.permute.xlu0 %601
  %605 = vset.pattern.permute.xlu0 0
  %606 = vperm.xlu0 %605, %v275
  %v607 = vpop.permute.xlu0 %606
  %610 = vset.pattern.permute.xlu0 0
  %611 = vperm.xlu0 %610, %v276
  %v612 = vpop.permute.xlu0 %611
  %615 = vset.pattern.permute.xlu0 0
  %616 = vperm.xlu0 %615, %v277
  %v617 = vpop.permute.xlu0 %616
  %620 = vset.pattern.permute.xlu0 0
  %621 = vperm.xlu0 %620, %v278
  %v622 = vpop.permute.xlu0 %621
  %625 = vset.pattern.permute.xlu0 0
  %626 = vperm.xlu0 %625, %v279
  %v627 = vpop.permute.xlu0 %626
  %630 = vset.pattern.permute.xlu0 0
  %631 = vperm.xlu0 %630, %v280
  %v632 = vpop.permute.xlu0 %631
  %635 = vset.pattern.permute.xlu0 0
  %636 = vperm.xlu0 %635, %v281
  %v637 = vpop.permute.xlu0 %636
  %640 = vset.pattern.permute.xlu0 0
  %641 = vperm.xlu0 %640, %v282
  %v642 = vpop.permute.xlu0 %641
  %645 = vset.pattern.permute.xlu0 0
  %646 = vperm.xlu0 %645, %v283
  %v647 = vpop.permute.xlu0 %646
  %650 = vset.pattern.permute.xlu0 0
  %651 = vperm.xlu0 %650, %v284
  %v652 = vpop.permute.xlu0 %651
  %655 = vset.pattern.permute.xlu0 0
  %656 = vperm.xlu0 %655, %v285
  %v657 = vpop.permute.xlu0 %656
  %660 = vset.pattern.permute.xlu0 0
  %661 = vperm.xlu0 %660, %v286
  %v662 = vpop.permute.xlu0 %661
  %665 = vset.pattern.permute.xlu0 0
  %666 = vperm.xlu0 %665, %v287
  %v667 = vpop.permute.xlu0 %666
  %670 = vset.pattern.permute.xlu0 0
  %671 = vperm.xlu0 %670, %v288
  %v672 = vpop.permute.xlu0 %671
  %675 = vset.pattern.permute.xlu0 0
  %676 = vperm.xlu0 %675, %v289
  %v677 = vpop.permute.xlu0 %676
  %680 = vset.pattern.permute.xlu0 0
  %681 = vperm.xlu0 %680, %v290
  %v682 = vpop.permute.xlu0 %681
  %685 = vset.pattern.permute.xlu0 0
  %686 = vperm.xlu0 %685, %v291
  %v687 = vpop.permute.xlu0 %686
  %690 = vset.pattern.permute.xlu0 0
  %691 = vperm.xlu0 %690, %v292
  %v692 = vpop.permute.xlu0 %691
  %695 = vset.pattern.permute.xlu0 0
  %696 = vperm.xlu0 %695, %v293
  %v697 = vpop.permute.xlu0 %696
  %700 = vset.pattern.permute.xlu0 0
  %701 = vperm.xlu0 %700, %v294
  %v702 = vpop.permute.xlu0 %701
  %705 = vset.pattern.permute.xlu0 0
  %706 = vperm.xlu0 %705, %v295
  %v707 = vpop.permute.xlu0 %706
  %710 = vset.pattern.permute.xlu0 0
  %711 = vperm.xlu0 %710, %v296
  %v712 = vpop.permute.xlu0 %711
  %715 = vset.pattern.permute.xlu0 0
  %716 = vperm.xlu0 %715, %v297
  %v717 = vpop.permute.xlu0 %716
  %720 = vset.pattern.permute.xlu0 0
  %721 = vperm.xlu0 %720, %v298
  %v722 = vpop.permute.xlu0 %721
  %725 = vset.pattern.permute.xlu0 0
  %726 = vperm.xlu0 %725, %v299
  %v727 = vpop.permute.xlu0 %726
  %730 = vset.pattern.permute.xlu0 0
  %731 = vperm.xlu0 %730, %v300
  %v732 = vpop.permute.xlu0 %731
  %735 = vset.pattern.permute.xlu0 0
  %736 = vperm.xlu0 %735, %v301
  %v737 = vpop.permute.xlu0 %736
  %740 = vset.pattern.permute.xlu0 0
  %741 = vperm.xlu0 %740, %v302
  %v742 = vpop.permute.xlu0 %741
  %745 = vset.pattern.permute.xlu0 0
  %746 = vperm.xlu0 %745, %v303
  %v747 = vpop.permute.xlu0 %746
  %750 = vset.pattern.permute.xlu0 0
  %751 = vperm.xlu0 %750, %v304
  %v752 = vpop.permute.xlu0 %751
  %755 = vset.pattern.permute.xlu0 0
  %756 = vperm.xlu0 %755, %v305
  %v757 = vpop.permute.xlu0 %756
  %760 = vset.pattern.permute.xlu0 0
  %761 = vperm.xlu0 %760, %v306
  %v762 = vpop.permute.xlu0 %761
  %765 = vset.pattern.permute.xlu0 0
  %766 = vperm.xlu0 %765, %v307
  %v767 = vpop.permute.xlu0 %766
  %770 = vset.pattern.permute.xlu0 0
  %771 = vperm.xlu0 %770, %v308
  %v772 = vpop.permute.xlu0 %771
  %775 = vset.pattern.permute.xlu0 0
  %776 = vperm.xlu0 %775, %v309
  %v777 = vpop.permute.xlu0 %776
  %780 = vset.pattern.permute.xlu0 0
  %781 = vperm.xlu0 %780, %v310
  %v782 = vpop.permute.xlu0 %781
  %785 = vset.pattern.permute.xlu0 0
  %786 = vperm.xlu0 %785, %v311
  %v787 = vpop.permute.xlu0 %786
  %790 = vset.pattern.permute.xlu0 0
  %791 = vperm.xlu0 %790, %v312
  %v792 = vpop.permute.xlu0 %791
  %795 = vset.pattern.permute.xlu0 0
  %796 = vperm.xlu0 %795, %v313
  %v797 = vpop.permute.xlu0 %796
  %800 = vset.pattern.permute.xlu0 0
  %801 = vperm.xlu0 %800, %v314
  %v802 = vpop.permute.xlu0 %801
  %805 = vset.pattern.permute.xlu0 0
  %806 = vperm.xlu0 %805, %v315
  %v807 = vpop.permute.xlu0 %806
  %810 = vset.pattern.permute.xlu0 0
  %811 = vperm.xlu0 %810, %v316
  %v812 = vpop.permute.xlu0 %811
  %815 = vset.pattern.permute.xlu0 0
  %816 = vperm.xlu0 %815, %v317
  %v817 = vpop.permute.xlu0 %816
  %820 = vset.pattern.permute.xlu0 0
  %821 = vperm.xlu0 %820, %v318
  %v822 = vpop.permute.xlu0 %821
  %825 = vset.pattern.permute.xlu0 0
  %826 = vperm.xlu0 %825, %v319
  %v827 = vpop.permute.xlu0 %826
  %830 = vset.pattern.permute.xlu0 0
  %831 = vperm.xlu0 %830, %v320
  %v832 = vpop.permute.xlu0 %831
  %835 = vset.pattern.permute.xlu0 0
  %836 = vperm.xlu0 %835, %v321
  %v837 = vpop.permute.xlu0 %836
  %840 = vset.pattern.permute.xlu0 0
  %841 = vperm.xlu0 %840, %v322
  %v842 = vpop.permute.xlu0 %841
  %845 = vset.pattern.permute.xlu0 0
  %846 = vperm.xlu0 %845, %v323
  %v847 = vpop.permute.xlu0 %846
  %850 = vset.pattern.permute.xlu0 0
  %851 = vperm.xlu0 %850, %v324
  %v852 = vpop.permute.xlu0 %851
  %855 = vset.pattern.permute.xlu0 0
  %856 = vperm.xlu0 %855, %v325
  %v857 = vpop.permute.xlu0 %856
  %860 = vset.pattern.permute.xlu0 0
  %861 = vperm.xlu0 %860, %v326
  %v862 = vpop.permute.xlu0 %861
  %865 = vset.pattern.permute.xlu0 0
  %866 = vperm.xlu0 %865, %v327
  %v867 = vpop.permute.xlu0 %866
  %870 = vset.pattern.permute.xlu0 0
  %871 = vperm.xlu0 %870, %v328
  %v872 = vpop.permute.xlu0 %871
  %875 = vset.pattern.permute.xlu0 0
  %876 = vperm.xlu0 %875, %v329
  %v877 = vpop.permute.xlu0 %876
  %880 = vset.pattern.permute.xlu0 0
  %881 = vperm.xlu0 %880, %v330
  %v882 = vpop.permute.xlu0 %881
  %885 = vset.pattern.permute.xlu0 0
  %886 = vperm.xlu0 %885, %v331
  %v887 = vpop.permute.xlu0 %886
  %890 = vset.pattern.permute.xlu0 0
  %891 = vperm.xlu0 %890, %v332
  %v892 = vpop.permute.xlu0 %891
  %895 = vset.pattern.permute.xlu0 0
  %896 = vperm.xlu0 %895, %v333
  %v897 = vpop.permute.xlu0 %896
  %900 = vset.pattern.permute.xlu0 0
  %901 = vperm.xlu0 %900, %v334
  %v902 = vpop.permute.xlu0 %901
  %905 = vset.pattern.permute.xlu0 0
  %906 = vperm.xlu0 %905, %v335
  %v907 = vpop.permute.xlu0 %906
  %910 = vset.pattern.permute.xlu0 0
  %911 = vperm.xlu0 %910, %v336
  %v912 = vpop.permute.xlu0 %911
  %915 = vset.pattern.permute.xlu0 0
  %916 = vperm.xlu0 %915, %v337
  %v917 = vpop.permute.xlu0 %916
  %920 = vset.pattern.permute.xlu0 0
  %921 = vperm.xlu0 %920, %v338
  %v922 = vpop.permute.xlu0 %921
  %925 = vset.pattern.permute.xlu0 0
  %926 = vperm.xlu0 %925, %v339
  %v927 = vpop.permute.xlu0 %926
  %930 = vset.pattern.permute.xlu0 0
  %931 = vperm.xlu0 %930, %v340
  %v932 = vpop.permute.xlu0 %931
  %935 = vset.pattern.permute.xlu0 0
  %936 = vperm.xlu0 %935, %v341
  %v937 = vpop.permute.xlu0 %936
  %940 = vset.pattern.permute.xlu0 0
  %941 = vperm.xlu0 %940, %v342
  %v942 = vpop.permute.xlu0 %941
  %945 = vset.pattern.permute.xlu0 0
  %946 = vperm.xlu0 %945, %v343
  %v947 = vpop.permute.xlu0 %946
  %950 = vset.pattern.permute.xlu0 0
  %951 = vperm.xlu0 %950, %v344
  %v952 = vpop.permute.xlu0 %951
  %955 = vset.pattern.permute.xlu0 0
  %956 = vperm.xlu0 %955, %v345
  %v957 = vpop.permute.xlu0 %956
  %960 = vset.pattern.permute.xlu0 0
  %961 = vperm.xlu0 %960, %v346
  %v962 = vpop.permute.xlu0 %961
  %965 = vset.pattern.permute.xlu0 0
  %966 = vperm.xlu0 %965, %v347
  %v967 = vpop.permute.xlu0 %966
  %970 = vset.pattern.permute.xlu0 0
  %971 = vperm.xlu0 %970, %v348
  %v972 = vpop.permute.xlu0 %971
  %975 = vset.pattern.permute.xlu0 0
  %976 = vperm.xlu0 %975, %v349
  %v977 = vpop.permute.xlu0 %976
  %980 = vset.pattern.permute.xlu0 0
  %981 = vperm.xlu0 %980, %v350
  %v982 = vpop.permute.xlu0 %981
  %985 = vset.pattern.permute.xlu0 0
  %986 = vperm.xlu0 %985, %v351
  %v987 = vpop.permute.xlu0 %986
  %990 = vset.pattern.permute.xlu0 0
  %991 = vperm.xlu0 %990, %v352
  %v992 = vpop.permute.xlu0 %991
  %995 = vset.pattern.permute.xlu0 0
  %996 = vperm.xlu0 %995, %v353
  %v997 = vpop.permute.xlu0 %996
  %1000 = vset.pattern.permute.xlu0 0
  %1001 = vperm.xlu0 %1000, %v354
  %v1002 = vpop.permute.xlu0 %1001
  %1005 = vset.pattern.permute.xlu0 0
  %1006 = vperm.xlu0 %1005, %v355
  %v1007 = vpop.permute.xlu0 %1006
  %1010 = vset.pattern.permute.xlu0 0
  %1011 = vperm.xlu0 %1010, %v356
  %v1012 = vpop.permute.xlu0 %1011
  %1015 = vset.pattern.permute.xlu0 0
  %1016 = vperm.xlu0 %1015, %v357
  %v1017 = vpop.permute.xlu0 %1016
  %1020 = vset.pattern.permute.xlu0 0
  %1021 = vperm.xlu0 %1020, %v358
  %v1022 = vpop.permute.xlu0 %1021
  %1025 = vset.pattern.permute.xlu0 0
  %1026 = vperm.xlu0 %1025, %v359
  %v1027 = vpop.permute.xlu0 %1026
  %1030 = vset.pattern.permute.xlu0 0
  %1031 = vperm.xlu0 %1030, %v360
  %v1032 = vpop.permute.xlu0 %1031
  %1035 = vset.pattern.permute.xlu0 0
  %1036 = vperm.xlu0 %1035, %v361
  %v1037 = vpop.permute.xlu0 %1036
  %1040 = vset.pattern.permute.xlu0 0
  %1041 = vperm.xlu0 %1040, %v362
  %v1042 = vpop.permute.xlu0 %1041
  %1045 = vset.pattern.permute.xlu0 0
  %1046 = vperm.xlu0 %1045, %v363
  %v1047 = vpop.permute.xlu0 %1046
  %1050 = vset.pattern.permute.xlu0 0
  %1051 = vperm.xlu0 %1050, %v364
  %v1052 = vpop.permute.xlu0 %1051
  %1055 = vset.pattern.permute.xlu0 0
  %1056 = vperm.xlu0 %1055, %v365
  %v1057 = vpop.permute.xlu0 %1056
  %1060 = vset.pattern.permute.xlu0 0
  %1061 = vperm.xlu0 %1060, %v366
  %v1062 = vpop.permute.xlu0 %1061
  %1065 = vset.pattern.permute.xlu0 0
  %1066 = vperm.xlu0 %1065, %v367
  %v1067 = vpop.permute.xlu0 %1066
  %1070 = vset.pattern.permute.xlu0 0
  %1071 = vperm.xlu0 %1070, %v368
  %v1072 = vpop.permute.xlu0 %1071
  %1075 = vset.pattern.permute.xlu0 0
  %1076 = vperm.xlu0 %1075, %v369
  %v1077 = vpop.permute.xlu0 %1076
  %1080 = vset.pattern.permute.xlu0 0
  %1081 = vperm.xlu0 %1080, %v370
  %v1082 = vpop.permute.xlu0 %1081
  %1085 = vset.pattern.permute.xlu0 0
  %1086 = vperm.xlu0 %1085, %v371
  %v1087 = vpop.permute.xlu0 %1086
  %1090 = vset.pattern.permute.xlu0 0
  %1091 = vperm.xlu0 %1090, %v372
  %v1092 = vpop.permute.xlu0 %1091
  %1095 = vset.pattern.permute.xlu0 0
  %1096 = vperm.xlu0 %1095, %v373
  %v1097 = vpop.permute.xlu0 %1096
  %1100 = vset.pattern.permute.xlu0 0
  %1101 = vperm.xlu0 %1100, %v374
  %v1102 = vpop.permute.xlu0 %1101
  %1105 = vset.pattern.permute.xlu0 0
  %1106 = vperm.xlu0 %1105, %v375
  %v1107 = vpop.permute.xlu0 %1106
  %1110 = vset.pattern.permute.xlu0 0
  %1111 = vperm.xlu0 %1110, %v376
  %v1112 = vpop.permute.xlu0 %1111
  %1115 = vset.pattern.permute.xlu0 0
  %1116 = vperm.xlu0 %1115, %v377
  %v1117 = vpop.permute.xlu0 %1116
  %1120 = vset.pattern.permute.xlu0 0
  %1121 = vperm.xlu0 %1120, %v378
  %v1122 = vpop.permute.xlu0 %1121
  %1125 = vset.pattern.permute.xlu0 0
  %1126 = vperm.xlu0 %1125, %v379
  %v1127 = vpop.permute.xlu0 %1126
  %1130 = vset.pattern.permute.xlu0 0
  %1131 = vperm.xlu0 %1130, %v380
  %v1132 = vpop.permute.xlu0 %1131
  %1135 = vset.pattern.permute.xlu0 0
  %1136 = vperm.xlu0 %1135, %v381
  %v1137 = vpop.permute.xlu0 %1136
  %1140 = vset.pattern.permute.xlu0 0
  %1141 = vperm.xlu0 %1140, %v382
  %v1142 = vpop.permute.xlu0 %1141
  %1145 = vset.pattern.permute.xlu0 0
  %1146 = vperm.xlu0 %1145, %v383
  %v1147 = vpop.permute.xlu0 %1146
  %1150 = vset.pattern.permute.xlu0 0
  %1151 = vperm.xlu0 %1150, %v384
  %v1152 = vpop.permute.xlu0 %1151
  %1155 = vset.pattern.permute.xlu0 0
  %1156 = vperm.xlu0 %1155, %v385
  %v1157 = vpop.permute.xlu0 %1156
  %1160 = vset.pattern.permute.xlu0 0
  %1161 = vperm.xlu0 %1160, %v386
  %v1162 = vpop.permute.xlu0 %1161
  %1165 = vset.pattern.permute.xlu0 0
  %1166 = vperm.xlu0 %1165, %v387
  %v1167 = vpop.permute.xlu0 %1166
  %1170 = vset.pattern.permute.xlu0 0
  %1171 = vperm.xlu0 %1170, %v388
  %v1172 = vpop.permute.xlu0 %1171
  %1175 = vset.pattern.permute.xlu0 0
  %1176 = vperm.xlu0 %1175, %v389
  %v1177 = vpop.permute.xlu0 %1176
  %1180 = vset.pattern.permute.xlu0 0
  %1181 = vperm.xlu0 %1180, %v390
  %v1182 = vpop.permute.xlu0 %1181
  %1185 = vset.pattern.permute.xlu0 0
  %1186 = vperm.xlu0 %1185, %v391
  %v1187 = vpop.permute.xlu0 %1186
  %1190 = vset.pattern.permute.xlu0 0
  %1191 = vperm.xlu0 %1190, %v392
  %v1192 = vpop.permute.xlu0 %1191
  %1195 = vset.pattern.permute.xlu0 0
  %1196 = vperm.xlu0 %1195, %v393
  %v1197 = vpop.permute.xlu0 %1196
  %1200 = vset.pattern.permute.xlu0 0
  %1201 = vperm.xlu0 %1200, %v394
  %v1202 = vpop.permute.xlu0 %1201
  %1205 = vset.pattern.permute.xlu0 0
  %1206 = vperm.xlu0 %1205, %v395
  %v1207 = vpop.permute.xlu0 %1206
  %1210 = vset.pattern.permute.xlu0 0
  %1211 = vperm.xlu0 %1210, %v396
  %v1212 = vpop.permute.xlu0 %1211
  %1215 = vset.pattern.permute.xlu0 0
  %1216 = vperm.xlu0 %1215, %v397
  %v1217 = vpop.permute.xlu0 %1216
  %1220 = vset.pattern.permute.xlu0 0
  %1221 = vperm.xlu0 %1220, %v398
  %v1222 = vpop.permute.xlu0 %1221
  %1225 = vset.pattern.permute.xlu0 0
  %1226 = vperm.xlu0 %1225, %v399
  %v1227 = vpop.permute.xlu0 %1226
  %1230 = vset.pattern.permute.xlu0 0
  %1231 = vperm.xlu0 %1230, %v400
  %v1232 = vpop.permute.xlu0 %1231
  %1235 = vset.pattern.permute.xlu0 0
  %1236 = vperm.xlu0 %1235, %v401
  %v1237 = vpop.permute.xlu0 %1236
  %1240 = vset.pattern.permute.xlu0 0
  %1241 = vperm.xlu0 %1240, %v402
  %v1242 = vpop.permute.xlu0 %1241
  %1245 = vset.pattern.permute.xlu0 0
  %1246 = vperm.xlu0 %1245, %v403
  %v1247 = vpop.permute.xlu0 %1246
  %1250 = vset.pattern.permute.xlu0 0
  %1251 = vperm.xlu0 %1250, %v404
  %v1252 = vpop.permute.xlu0 %1251
  %1255 = vset.pattern.permute.xlu0 0
  %1256 = vperm.xlu0 %1255, %v405
  %v1257 = vpop.permute.xlu0 %1256
  %1260 = vset.pattern.permute.xlu0 0
  %1261 = vperm.xlu0 %1260, %v406
  %v1262 = vpop.permute.xlu0 %1261
  %1265 = vset.pattern.permute.xlu0 0
  %1266 = vperm.xlu0 %1265, %v407
  %v1267 = vpop.permute.xlu0 %1266
  %1270 = vset.pattern.permute.xlu0 0
  %1271 = vperm.xlu0 %1270, %v408
  %v1272 = vpop.permute.xlu0 %1271
  %1275 = vset.pattern.permute.xlu0 0
  %1276 = vperm.xlu0 %1275, %v409
  %v1277 = vpop.permute.xlu0 %1276
  %1280 = vset.pattern.permute.xlu0 0
  %1281 = vperm.xlu0 %1280, %v410
  %v1282 = vpop.permute.xlu0 %1281
  %1285 = vset.pattern.permute.xlu0 0
  %1286 = vperm.xlu0 %1285, %v411
  %v1287 = vpop.permute.xlu0 %1286
  %1290 = vset.pattern.permute.xlu0 0
  %1291 = vperm.xlu0 %1290, %v412
  %v1292 = vpop.permute.xlu0 %1291
  %1295 = vset.pattern.permute.xlu0 0
  %1296 = vperm.xlu0 %1295, %v413
  %v1297 = vpop.permute.xlu0 %1296
  %1300 = vset.pattern.permute.xlu0 0
  %1301 = vperm.xlu0 %1300, %v414
  %v1302 = vpop.permute.xlu0 %1301
  %1305 = vset.pattern.permute.xlu0 0
  %1306 = vperm.xlu0 %1305, %v415
  %v1307 = vpop.permute.xlu0 %1306
  %1310 = vset.pattern.permute.xlu0 0
  %1311 = vperm.xlu0 %1310, %v416
  %v1312 = vpop.permute.xlu0 %1311
  %1315 = vset.pattern.permute.xlu0 0
  %1316 = vperm.xlu0 %1315, %v417
  %v1317 = vpop.permute.xlu0 %1316
  %1320 = vset.pattern.permute.xlu0 0
  %1321 = vperm.xlu0 %1320, %v418
  %v1322 = vpop.permute.xlu0 %1321
  %1325 = vset.pattern.permute.xlu0 0
  %1326 = vperm.xlu0 %1325, %v419
  %v1327 = vpop.permute.xlu0 %1326
  %1330 = vset.pattern.permute.xlu0 0
  %1331 = vperm.xlu0 %1330, %v420
  %v1332 = vpop.permute.xlu0 %1331
  %1335 = vset.pattern.permute.xlu0 0
  %1336 = vperm.xlu0 %1335, %v421
  %v1337 = vpop.permute.xlu0 %1336
  %1340 = vset.pattern.permute.xlu0 0
  %1341 = vperm.xlu0 %1340, %v422
  %v1342 = vpop.permute.xlu0 %1341
  %1345 = vset.pattern.permute.xlu0 0
  %1346 = vperm.xlu0 %1345, %v423
  %v1347 = vpop.permute.xlu0 %1346
  %1350 = vset.pattern.permute.xlu0 0
  %1351 = vperm.xlu0 %1350, %v424
  %v1352 = vpop.permute.xlu0 %1351
  %1355 = vset.pattern.permute.xlu0 0
  %1356 = vperm.xlu0 %1355, %v425
  %v1357 = vpop.permute.xlu0 %1356
  %1360 = vset.pattern.permute.xlu0 0
  %1361 = vperm.xlu0 %1360, %v426
  %v1362 = vpop.permute.xlu0 %1361
  %1365 = vset.pattern.permute.xlu0 0
  %1366 = vperm.xlu0 %1365, %v427
  %v1367 = vpop.permute.xlu0 %1366
  %1370 = vset.pattern.permute.xlu0 0
  %1371 = vperm.xlu0 %1370, %v428
  %v1372 = vpop.permute.xlu0 %1371
  %1375 = vset.pattern.permute.xlu0 0
  %1376 = vperm.xlu0 %1375, %v429
  %v1377 = vpop.permute.xlu0 %1376
  %1380 = vset.pattern.permute.xlu0 0
  %1381 = vperm.xlu0 %1380, %v430
  %v1382 = vpop.permute.xlu0 %1381
  %1385 = vset.pattern.permute.xlu0 0
  %1386 = vperm.xlu0 %1385, %v431
  %v1387 = vpop.permute.xlu0 %1386
  %1390 = vset.pattern.permute.xlu0 0
  %1391 = vperm.xlu0 %1390, %v432
  %v1392 = vpop.permute.xlu0 %1391
  %1395 = vset.pattern.permute.xlu0 0
  %1396 = vperm.xlu0 %1395, %v433
  %v1397 = vpop.permute.xlu0 %1396
  %1400 = vset.pattern.permute.xlu0 0
  %1401 = vperm.xlu0 %1400, %v434
  %v1402 = vpop.permute.xlu0 %1401
  %1405 = vset.pattern.permute.xlu0 0
  %1406 = vperm.xlu0 %1405, %v435
  %v1407 = vpop.permute.xlu0 %1406
  %1410 = vset.pattern.permute.xlu0 0
  %1411 = vperm.xlu0 %1410, %v436
  %v1412 = vpop.permute.xlu0 %1411
  %1415 = vset.pattern.permute.xlu0 0
  %1416 = vperm.xlu0 %1415, %v437
  %v1417 = vpop.permute.xlu0 %1416
  %1420 = vset.pattern.permute.xlu0 0
  %1421 = vperm.xlu0 %1420, %v438
  %v1422 = vpop.permute.xlu0 %1421
  %1425 = vset.pattern.permute.xlu0 0
  %1426 = vperm.xlu0 %1425, %v439
  %v1427 = vpop.permute.xlu0 %1426
  %1430 = vset.pattern.permute.xlu0 0
  %1431 = vperm.xlu0 %1430, %v440
  %v1432 = vpop.permute.xlu0 %1431
  %1435 = vset.pattern.permute.xlu0 0
  %1436 = vperm.xlu0 %1435, %v441
  %v1437 = vpop.permute.xlu0 %1436
  %1440 = vset.pattern.permute.xlu0 0
  %1441 = vperm.xlu0 %1440, %v442
  %v1442 = vpop.permute.xlu0 %1441
  %1445 = vset.pattern.permute.xlu0 0
  %1446 = vperm.xlu0 %1445, %v443
  %v1447 = vpop.permute.xlu0 %1446
  %1450 = vset.pattern.permute.xlu0 0
  %1451 = vperm.xlu0 %1450, %v444
  %v1452 = vpop.permute.xlu0 %1451
  %1455 = vset.pattern.permute.xlu0 0
  %1456 = vperm.xlu0 %1455, %v445
  %v1457 = vpop.permute.xlu0 %1456
  %1460 = vset.pattern.permute.xlu0 0
  %1461 = vperm.xlu0 %1460, %v446
  %v1462 = vpop.permute.xlu0 %1461
  %1465 = vset.pattern.permute.xlu0 0
  %1466 = vperm.xlu0 %1465, %v447
  %v1467 = vpop.permute.xlu0 %1466
  %1470 = vset.pattern.permute.xlu0 0
  %1471 = vperm.xlu0 %1470, %v448
  %v1472 = vpop.permute.xlu0 %1471
  %1475 = vset.pattern.permute.xlu0 0
  %1476 = vperm.xlu0 %1475, %v449
  %v1477 = vpop.permute.xlu0 %1476
  %1480 = vset.pattern.permute.xlu0 0
  %1481 = vperm.xlu0 %1480, %v450
  %v1482 = vpop.permute.xlu0 %1481
  %1485 = vset.pattern.permute.xlu0 0
  %1486 = vperm.xlu0 %1485, %v451
  %v1487 = vpop.permute.xlu0 %1486
  %1490 = vset.pattern.permute.xlu0 0
  %1491 = vperm.xlu0 %1490, %v452
  %v1492 = vpop.permute.xlu0 %1491
  %1495 = vset.pattern.permute.xlu0 0
  %1496 = vperm.xlu0 %1495, %v453
  %v1497 = vpop.permute.xlu0 %1496
  %1500 = vset.pattern.permute.xlu0 0
  %1501 = vperm.xlu0 %1500, %v454
  %v1502 = vpop.permute.xlu0 %1501
  %1505 = vset.pattern.permute.xlu0 0
  %1506 = vperm.xlu0 %1505, %v455
  %v1507 = vpop.permute.xlu0 %1506
  %1510 = vset.pattern.permute.xlu0 0
  %1511 = vperm.xlu0 %1510, %v456
  %v1512 = vpop.permute.xlu0 %1511
  %1515 = vset.pattern.permute.xlu0 0
  %1516 = vperm.xlu0 %1515, %v457
  %v1517 = vpop.permute.xlu0 %1516
  %1520 = vset.pattern.permute.xlu0 0
  %1521 = vperm.xlu0 %1520, %v458
  %v1522 = vpop.permute.xlu0 %1521
  %1525 = vset.pattern.permute.xlu0 0
  %1526 = vperm.xlu0 %1525, %v459
  %v1527 = vpop.permute.xlu0 %1526
  %1530 = vset.pattern.permute.xlu0 0
  %1531 = vperm.xlu0 %1530, %v460
  %v1532 = vpop.permute.xlu0 %1531
  %1535 = vset.pattern.permute.xlu0 0
  %1536 = vperm.xlu0 %1535, %v461
  %v1537 = vpop.permute.xlu0 %1536
  %1540 = vset.pattern.permute.xlu0 0
  %1541 = vperm.xlu0 %1540, %v462
  %v1542 = vpop.permute.xlu0 %1541
  %1545 = vset.pattern.permute.xlu0 0
  %1546 = vperm.xlu0 %1545, %v463
  %v1547 = vpop.permute.xlu0 %1546
  %1550 = vset.pattern.permute.xlu0 0
  %1551 = vperm.xlu0 %1550, %v464
  %v1552 = vpop.permute.xlu0 %1551
  %1555 = vset.pattern.permute.xlu0 0
  %1556 = vperm.xlu0 %1555, %v465
  %v1557 = vpop.permute.xlu0 %1556
  %1560 = vset.pattern.permute.xlu0 0
  %1561 = vperm.xlu0 %1560, %v466
  %v1562 = vpop.permute.xlu0 %1561
  %1565 = vset.pattern.permute.xlu0 0
  %1566 = vperm.xlu0 %1565, %v467
  %v1567 = vpop.permute.xlu0 %1566
  %1570 = vset.pattern.permute.xlu0 0
  %1571 = vperm.xlu0 %1570, %v468
  %v1572 = vpop.permute.xlu0 %1571
  %1575 = vset.pattern.permute.xlu0 0
  %1576 = vperm.xlu0 %1575, %v469
  %v1577 = vpop.permute.xlu0 %1576
  %1580 = vset.pattern.permute.xlu0 0
  %1581 = vperm.xlu0 %1580, %v470
  %v1582 = vpop.permute.xlu0 %1581
  %1585 = vset.pattern.permute.xlu0 0
  %1586 = vperm.xlu0 %1585, %v471
  %v1587 = vpop.permute.xlu0 %1586
  %1590 = vset.pattern.permute.xlu0 0
  %1591 = vperm.xlu0 %1590, %v472
  %v1592 = vpop.permute.xlu0 %1591
  %1595 = vset.pattern.permute.xlu0 0
  %1596 = vperm.xlu0 %1595, %v473
  %v1597 = vpop.permute.xlu0 %1596
  %v1824 = vunpack.c.l.b16 %v15
  %v1825 = vunpack.c.l.b16 %v16
  %v1826 = vunpack.c.l.b16 %v17
  %v1827 = vunpack.c.l.b16 %v18
  %v1828 = vunpack.c.l.b16 %v19
  %v1829 = vunpack.c.l.b16 %v20
  %v1830 = vunpack.c.l.b16 %v21
  %v1831 = vunpack.c.l.b16 %v22
  %v1832 = vunpack.c.l.b16 %v23
  %v1833 = vunpack.c.l.b16 %v24
  %v1834 = vunpack.c.l.b16 %v25
  %v1835 = vunpack.c.l.b16 %v26
  %v1836 = vunpack.c.l.b16 %v27
  %v1837 = vunpack.c.l.b16 %v28
  %v1838 = vunpack.c.l.b16 %v29
  %v1839 = vunpack.c.l.b16 %v30
  %v1840 = vunpack.c.l.b16 %v31
  %v1841 = vunpack.c.l.b16 %v32
  %v1842 = vunpack.c.l.b16 %v33
  %v1843 = vunpack.c.l.b16 %v34
  %v1844 = vunpack.c.l.b16 %v35
  %v1845 = vunpack.c.l.b16 %v36
  %v1846 = vunpack.c.l.b16 %v37
  %v1847 = vunpack.c.l.b16 %v38
  %v1848 = vunpack.c.l.b16 %v39
  %v1849 = vunpack.c.l.b16 %v40
  %v1850 = vunpack.c.l.b16 %v41
  %v1851 = vunpack.c.l.b16 %v42
  %v1852 = vunpack.c.l.b16 %v43
  %v1853 = vunpack.c.l.b16 %v44
  %v1854 = vunpack.c.l.b16 %v45
  %v1855 = vunpack.c.l.b16 %v46
  %v1856 = vunpack.c.l.b16 %v47
  %v1857 = vunpack.c.l.b16 %v48
  %v1858 = vunpack.c.l.b16 %v49
  %v1859 = vunpack.c.l.b16 %v50
  %v1860 = vunpack.c.l.b16 %v51
  %v1861 = vunpack.c.l.b16 %v52
  %v1862 = vunpack.c.l.b16 %v53
  %v1863 = vunpack.c.l.b16 %v54
  %v1864 = vunpack.c.l.b16 %v55
  %v1865 = vunpack.c.l.b16 %v56
  %v1866 = vunpack.c.l.b16 %v57
  %v1867 = vunpack.c.l.b16 %v58
  %v1868 = vunpack.c.l.b16 %v59
  %v1869 = vunpack.c.l.b16 %v60
  %v1870 = vunpack.c.l.b16 %v61
  %v1871 = vunpack.c.l.b16 %v62
  %v1872 = vunpack.c.l.b16 %v63
  %v1873 = vunpack.c.l.b16 %v64
  %v1874 = vunpack.c.l.b16 %v65
  %v1875 = vunpack.c.l.b16 %v66
  %v1876 = vunpack.c.l.b16 %v67
  %v1877 = vunpack.c.l.b16 %v68
  %v1878 = vunpack.c.l.b16 %v69
  %v1879 = vunpack.c.l.b16 %v70
  %v1880 = vunpack.c.l.b16 %v71
  %v1881 = vunpack.c.l.b16 %v72
  %v1882 = vunpack.c.l.b16 %v73
  %v1883 = vunpack.c.l.b16 %v74
  %v1884 = vunpack.c.l.b16 %v75
  %v1885 = vunpack.c.l.b16 %v76
  %v1886 = vunpack.c.l.b16 %v77
  %v1887 = vunpack.c.l.b16 %v78
  %v1888 = vunpack.c.l.b16 %v79
  %v1889 = vunpack.c.l.b16 %v80
  %v1890 = vunpack.c.l.b16 %v81
  %v1891 = vunpack.c.l.b16 %v82
  %v1892 = vunpack.c.l.b16 %v83
  %v1893 = vunpack.c.l.b16 %v84
  %v1894 = vunpack.c.l.b16 %v85
  %v1895 = vunpack.c.l.b16 %v86
  %v1896 = vunpack.c.l.b16 %v87
  %v1897 = vunpack.c.l.b16 %v88
  %v1898 = vunpack.c.l.b16 %v89
  %v1899 = vunpack.c.l.b16 %v90
  %v1900 = vunpack.c.l.b16 %v91
  %v1901 = vunpack.c.l.b16 %v92
  %v1902 = vunpack.c.l.b16 %v93
  %v1903 = vunpack.c.l.b16 %v94
  %v1904 = vunpack.c.l.b16 %v95
  %v1905 = vunpack.c.l.b16 %v96
  %v1906 = vunpack.c.l.b16 %v97
  %v1907 = vunpack.c.l.b16 %v98
  %v1908 = vunpack.c.l.b16 %v99
  %v1909 = vunpack.c.l.b16 %v100
  %v1910 = vunpack.c.l.b16 %v101
  %v1911 = vunpack.c.l.b16 %v102
  %v1912 = vunpack.c.l.b16 %v103
  %v1913 = vunpack.c.l.b16 %v104
  %v1914 = vunpack.c.l.b16 %v105
  %v1915 = vunpack.c.l.b16 %v106
  %v1916 = vunpack.c.l.b16 %v107
  %v1917 = vunpack.c.l.b16 %v108
  %v1918 = vunpack.c.l.b16 %v109
  %v1919 = vunpack.c.l.b16 %v110
  %v1920 = vunpack.c.l.b16 %v111
  %v1921 = vunpack.c.l.b16 %v112
  %v1922 = vunpack.c.l.b16 %v113
  %v1923 = vunpack.c.l.b16 %v114
  %v1924 = vunpack.c.l.b16 %v115
  %v1925 = vunpack.c.l.b16 %v116
  %v1926 = vunpack.c.l.b16 %v117
  %v1927 = vunpack.c.l.b16 %v118
  %v1928 = vunpack.c.l.b16 %v119
  %v1929 = vunpack.c.l.b16 %v120
  %v1930 = vunpack.c.l.b16 %v121
  %v1931 = vunpack.c.l.b16 %v122
  %v1932 = vunpack.c.l.b16 %v123
  %v1933 = vunpack.c.l.b16 %v124
  %v1934 = vunpack.c.l.b16 %v125
  %v1935 = vunpack.c.l.b16 %v126
  %v1936 = vunpack.c.l.b16 %v127
  %v1937 = vunpack.c.l.b16 %v128
  %v1938 = vunpack.c.l.b16 %v129
  %v1939 = vunpack.c.l.b16 %v130
  %v1940 = vunpack.c.l.b16 %v131
  %v1941 = vunpack.c.l.b16 %v132
  %v1942 = vunpack.c.l.b16 %v133
  %v1943 = vunpack.c.l.b16 %v134
  %v1944 = vunpack.c.l.b16 %v135
  %v1945 = vunpack.c.l.b16 %v136
  %v1946 = vunpack.c.l.b16 %v137
  %v1947 = vunpack.c.l.b16 %v138
  %v1948 = vunpack.c.l.b16 %v139
  %v1949 = vunpack.c.l.b16 %v140
  %v1950 = vunpack.c.l.b16 %v141
  %v1951 = vunpack.c.l.b16 %v142
  %v1952 = vunpack.c.l.b16 %v143
  %v1953 = vunpack.c.l.b16 %v144
  %v1954 = vunpack.c.l.b16 %v145
  %v1955 = vunpack.c.l.b16 %v146
  %v1956 = vunpack.c.l.b16 %v147
  %v1957 = vunpack.c.l.b16 %v148
  %v1958 = vunpack.c.l.b16 %v149
  %v1959 = vunpack.c.l.b16 %v150
  %v1960 = vunpack.c.l.b16 %v151
  %v1961 = vunpack.c.l.b16 %v152
  %v1962 = vunpack.c.l.b16 %v153
  %v1963 = vunpack.c.l.b16 %v154
  %v1964 = vunpack.c.l.b16 %v155
  %v1965 = vunpack.c.l.b16 %v156
  %v1966 = vunpack.c.l.b16 %v157
  %v1967 = vunpack.c.l.b16 %v158
  %v1968 = vunpack.c.l.b16 %v159
  %v1969 = vunpack.c.l.b16 %v160
  %v1970 = vunpack.c.l.b16 %v161
  %v1971 = vunpack.c.l.b16 %v162
  %v1972 = vunpack.c.l.b16 %v163
  %v1973 = vunpack.c.l.b16 %v164
  %v1974 = vunpack.c.l.b16 %v165
  %v1975 = vunpack.c.l.b16 %v166
  %v1976 = vunpack.c.l.b16 %v167
  %v1977 = vunpack.c.l.b16 %v168
  %v1978 = vunpack.c.l.b16 %v169
  %v1979 = vunpack.c.l.b16 %v170
  %v1980 = vunpack.c.l.b16 %v171
  %v1981 = vunpack.c.l.b16 %v172
  %v1982 = vunpack.c.l.b16 %v173
  %v1983 = vunpack.c.l.b16 %v174
  %v1984 = vunpack.c.l.b16 %v175
  %v1985 = vunpack.c.l.b16 %v176
  %v1986 = vunpack.c.l.b16 %v177
  %v1987 = vunpack.c.l.b16 %v178
  %v1988 = vunpack.c.l.b16 %v179
  %v1989 = vunpack.c.l.b16 %v180
  %v1990 = vunpack.c.l.b16 %v181
  %v1991 = vunpack.c.l.b16 %v182
  %v1992 = vunpack.c.l.b16 %v183
  %v1993 = vunpack.c.l.b16 %v184
  %v1994 = vunpack.c.l.b16 %v185
  %v1995 = vunpack.c.l.b16 %v186
  %v1996 = vunpack.c.l.b16 %v187
  %v1997 = vunpack.c.l.b16 %v188
  %v1998 = vunpack.c.l.b16 %v189
  %v1999 = vunpack.c.l.b16 %v190
  %v2000 = vunpack.c.l.b16 %v191
  %v2001 = vunpack.c.l.b16 %v192
  %v2002 = vunpack.c.l.b16 %v193
  %v2003 = vunpack.c.l.b16 %v194
  %v2004 = vunpack.c.l.b16 %v195
  %v2005 = vunpack.c.l.b16 %v196
  %v2006 = vunpack.c.l.b16 %v197
  %v2007 = vunpack.c.l.b16 %v198
  %v2008 = vunpack.c.l.b16 %v199
  %v2009 = vunpack.c.l.b16 %v200
  %v2010 = vunpack.c.l.b16 %v201
  %v2011 = vunpack.c.l.b16 %v202
  %v2012 = vunpack.c.l.b16 %v203
  %v2013 = vunpack.c.l.b16 %v204
  %v2014 = vunpack.c.l.b16 %v205
  %v2015 = vunpack.c.l.b16 %v206
  %v2016 = vunpack.c.l.b16 %v207
  %v2017 = vunpack.c.l.b16 %v208
  %v2018 = vunpack.c.l.b16 %v209
  %v2019 = vunpack.c.l.b16 %v210
  %v2020 = vunpack.c.l.b16 %v211
  %v2021 = vunpack.c.l.b16 %v212
  %v2022 = vunpack.c.l.b16 %v213
  %v2023 = vunpack.c.l.b16 %v214
  %v2024 = vunpack.c.l.b16 %v215
  %v2025 = vunpack.c.l.b16 %v216
  %v2026 = vunpack.c.l.b16 %v217
  %v2027 = vunpack.c.l.b16 %v218
  %v2028 = vunpack.c.l.b16 %v219
  %v2029 = vunpack.c.l.b16 %v220
  %v2030 = vunpack.c.l.b16 %v221
  %v2031 = vunpack.c.l.b16 %v222
  %v2032 = vunpack.c.l.b16 %v223
  %v2033 = vunpack.c.l.b16 %v224
  %v2034 = vunpack.c.l.b16 %v225
  %v2035 = vunpack.c.l.b16 %v226
  %v2036 = vunpack.c.l.b16 %v227
  %v2037 = vunpack.c.l.b16 %v228
  %v2038 = vunpack.c.l.b16 %v229
  %v2039 = vunpack.c.l.b16 %v230
  %v2040 = vunpack.c.l.b16 %v231
  %v2041 = vunpack.c.l.b16 %v232
  %v2042 = vunpack.c.l.b16 %v233
  %v2043 = vunpack.c.l.b16 %v234
  %v2044 = vunpack.c.l.b16 %v235
  %v2045 = vunpack.c.l.b16 %v236
  %v2046 = vunpack.c.l.b16 %v237
  %v2047 = vunpack.c.l.b16 %v238
  %v2048 = vunpack.c.l.b16 %v239
  %v2049 = vpack.c.b16 %v1825, %v1824
  %v2050 = vpack.c.b16 %v1827, %v1826
  %v2051 = vpack.c.b16 %v1829, %v1828
  %v2052 = vpack.c.b16 %v1831, %v1830
  %v2053 = vpack.c.b16 %v1833, %v1832
  %v2054 = vpack.c.b16 %v1835, %v1834
  %v2055 = vpack.c.b16 %v1837, %v1836
  %v2056 = vpack.c.b16 %v1839, %v1838
  %v2057 = vpack.c.b16 %v1841, %v1840
  %v2058 = vpack.c.b16 %v1843, %v1842
  %v2059 = vpack.c.b16 %v1845, %v1844
  %v2060 = vpack.c.b16 %v1847, %v1846
  %v2061 = vpack.c.b16 %v1849, %v1848
  %v2062 = vpack.c.b16 %v1851, %v1850
  %v2063 = vpack.c.b16 %v1853, %v1852
  %v2064 = vpack.c.b16 %v1855, %v1854
  %v2065 = vpack.c.b16 %v1857, %v1856
  %v2066 = vpack.c.b16 %v1859, %v1858
  %v2067 = vpack.c.b16 %v1861, %v1860
  %v2068 = vpack.c.b16 %v1863, %v1862
  %v2069 = vpack.c.b16 %v1865, %v1864
  %v2070 = vpack.c.b16 %v1867, %v1866
  %v2071 = vpack.c.b16 %v1869, %v1868
  %v2072 = vpack.c.b16 %v1871, %v1870
  %v2073 = vpack.c.b16 %v1873, %v1872
  %v2074 = vpack.c.b16 %v1875, %v1874
  %v2075 = vpack.c.b16 %v1877, %v1876
  %v2076 = vpack.c.b16 %v1879, %v1878
  %v2077 = vpack.c.b16 %v1881, %v1880
  %v2078 = vpack.c.b16 %v1883, %v1882
  %v2079 = vpack.c.b16 %v1885, %v1884
  %v2080 = vpack.c.b16 %v1887, %v1886
  %v2081 = vpack.c.b16 %v1889, %v1888
  %v2082 = vpack.c.b16 %v1891, %v1890
  %v2083 = vpack.c.b16 %v1893, %v1892
  %v2084 = vpack.c.b16 %v1895, %v1894
  %v2085 = vpack.c.b16 %v1897, %v1896
  %v2086 = vpack.c.b16 %v1899, %v1898
  %v2087 = vpack.c.b16 %v1901, %v1900
  %v2088 = vpack.c.b16 %v1903, %v1902
  %v2089 = vpack.c.b16 %v1905, %v1904
  %v2090 = vpack.c.b16 %v1907, %v1906
  %v2091 = vpack.c.b16 %v1909, %v1908
  %v2092 = vpack.c.b16 %v1911, %v1910
  %v2093 = vpack.c.b16 %v1913, %v1912
  %v2094 = vpack.c.b16 %v1915, %v1914
  %v2095 = vpack.c.b16 %v1917, %v1916
  %v2096 = vpack.c.b16 %v1919, %v1918
  %v2097 = vpack.c.b16 %v1921, %v1920
  %v2098 = vpack.c.b16 %v1923, %v1922
  %v2099 = vpack.c.b16 %v1925, %v1924
  %v2100 = vpack.c.b16 %v1927, %v1926
  %v2101 = vpack.c.b16 %v1929, %v1928
  %v2102 = vpack.c.b16 %v1931, %v1930
  %v2103 = vpack.c.b16 %v1933, %v1932
  %v2104 = vpack.c.b16 %v1935, %v1934
  %v2105 = vpack.c.b16 %v1937, %v1936
  %v2106 = vpack.c.b16 %v1939, %v1938
  %v2107 = vpack.c.b16 %v1941, %v1940
  %v2108 = vpack.c.b16 %v1943, %v1942
  %v2109 = vpack.c.b16 %v1945, %v1944
  %v2110 = vpack.c.b16 %v1947, %v1946
  %v2111 = vpack.c.b16 %v1949, %v1948
  %v2112 = vpack.c.b16 %v1951, %v1950
  %v2113 = vpack.c.b16 %v1953, %v1952
  %v2114 = vpack.c.b16 %v1955, %v1954
  %v2115 = vpack.c.b16 %v1957, %v1956
  %v2116 = vpack.c.b16 %v1959, %v1958
  %v2117 = vpack.c.b16 %v1961, %v1960
  %v2118 = vpack.c.b16 %v1963, %v1962
  %v2119 = vpack.c.b16 %v1965, %v1964
  %v2120 = vpack.c.b16 %v1967, %v1966
  %v2121 = vpack.c.b16 %v1969, %v1968
  %v2122 = vpack.c.b16 %v1971, %v1970
  %v2123 = vpack.c.b16 %v1973, %v1972
  %v2124 = vpack.c.b16 %v1975, %v1974
  %v2125 = vpack.c.b16 %v1977, %v1976
  %v2126 = vpack.c.b16 %v1979, %v1978
  %v2127 = vpack.c.b16 %v1981, %v1980
  %v2128 = vpack.c.b16 %v1983, %v1982
  %v2129 = vpack.c.b16 %v1985, %v1984
  %v2130 = vpack.c.b16 %v1987, %v1986
  %v2131 = vpack.c.b16 %v1989, %v1988
  %v2132 = vpack.c.b16 %v1991, %v1990
  %v2133 = vpack.c.b16 %v1993, %v1992
  %v2134 = vpack.c.b16 %v1995, %v1994
  %v2135 = vpack.c.b16 %v1997, %v1996
  %v2136 = vpack.c.b16 %v1999, %v1998
  %v2137 = vpack.c.b16 %v2001, %v2000
  %v2138 = vpack.c.b16 %v2003, %v2002
  %v2139 = vpack.c.b16 %v2005, %v2004
  %v2140 = vpack.c.b16 %v2007, %v2006
  %v2141 = vpack.c.b16 %v2009, %v2008
  %v2142 = vpack.c.b16 %v2011, %v2010
  %v2143 = vpack.c.b16 %v2013, %v2012
  %v2144 = vpack.c.b16 %v2015, %v2014
  %v2145 = vpack.c.b16 %v2017, %v2016
  %v2146 = vpack.c.b16 %v2019, %v2018
  %v2147 = vpack.c.b16 %v2021, %v2020
  %v2148 = vpack.c.b16 %v2023, %v2022
  %v2149 = vpack.c.b16 %v2025, %v2024
  %v2150 = vpack.c.b16 %v2027, %v2026
  %v2151 = vpack.c.b16 %v2029, %v2028
  %v2152 = vpack.c.b16 %v2031, %v2030
  %v2153 = vpack.c.b16 %v2033, %v2032
  %v2154 = vpack.c.b16 %v2035, %v2034
  %v2155 = vpack.c.b16 %v2037, %v2036
  %v2156 = vpack.c.b16 %v2039, %v2038
  %v2157 = vpack.c.b16 %v2041, %v2040
  %v2158 = vpack.c.b16 %v2043, %v2042
  %v2159 = vpack.c.b16 %v2045, %v2044
  %v2160 = vpack.c.b16 %v2047, %v2046
  %v2161 = vpack.c.b16 %v2048, %v2048
  %v2171 = vunpack.c.l.b16 %v240
  %v2172 = vunpack.c.l.b16 %v241
  %v2173 = vunpack.c.l.b16 %v242
  %v2174 = vunpack.c.l.b16 %v243
  %v2175 = vunpack.c.l.b16 %v244
  %v2176 = vunpack.c.l.b16 %v245
  %v2177 = vunpack.c.l.b16 %v246
  %v2178 = vunpack.c.l.b16 %v247
  %v2179 = vunpack.c.l.b16 %v248
  %v2180 = vpack.c.b16 %v2172, %v2171
  %v2181 = vpack.c.b16 %v2174, %v2173
  %v2182 = vpack.c.b16 %v2176, %v2175
  %v2183 = vpack.c.b16 %v2178, %v2177
  %v2184 = vpack.c.b16 %v2179, %v2179
  %vm2189 = vcmask 588800
  %v2191 = vsel %vm2189, %v2049, 0
  %v2194 = vsel %vm2189, %v2050, 0
  %v2197 = vsel %vm2189, %v2051, 0
  %v2200 = vsel %vm2189, %v2052, 0
  %v2203 = vsel %vm2189, %v2053, 0
  %v2206 = vsel %vm2189, %v2054, 0
  %v2209 = vsel %vm2189, %v2055, 0
  %v2212 = vsel %vm2189, %v2056, 0
  %v2215 = vsel %vm2189, %v2057, 0
  %v2218 = vsel %vm2189, %v2058, 0
  %v2221 = vsel %vm2189, %v2059, 0
  %v2224 = vsel %vm2189, %v2060, 0
  %v2227 = vsel %vm2189, %v2061, 0
  %v2230 = vsel %vm2189, %v2062, 0
  %v2233 = vsel %vm2189, %v2063, 0
  %v2236 = vsel %vm2189, %v2064, 0
  %v2239 = vsel %vm2189, %v2065, 0
  %v2242 = vsel %vm2189, %v2066, 0
  %v2245 = vsel %vm2189, %v2067, 0
  %v2248 = vsel %vm2189, %v2068, 0
  %v2251 = vsel %vm2189, %v2069, 0
  %v2254 = vsel %vm2189, %v2070, 0
  %v2257 = vsel %vm2189, %v2071, 0
  %v2260 = vsel %vm2189, %v2072, 0
  %v2263 = vsel %vm2189, %v2073, 0
  %v2266 = vsel %vm2189, %v2074, 0
  %v2269 = vsel %vm2189, %v2075, 0
  %v2272 = vsel %vm2189, %v2076, 0
  %v2275 = vsel %vm2189, %v2077, 0
  %v2278 = vsel %vm2189, %v2078, 0
  %v2281 = vsel %vm2189, %v2079, 0
  %v2284 = vsel %vm2189, %v2080, 0
  %v2287 = vsel %vm2189, %v2081, 0
  %v2290 = vsel %vm2189, %v2082, 0
  %v2293 = vsel %vm2189, %v2083, 0
  %v2296 = vsel %vm2189, %v2084, 0
  %v2299 = vsel %vm2189, %v2085, 0
  %v2302 = vsel %vm2189, %v2086, 0
  %v2305 = vsel %vm2189, %v2087, 0
  %v2308 = vsel %vm2189, %v2088, 0
  %v2311 = vsel %vm2189, %v2089, 0
  %v2314 = vsel %vm2189, %v2090, 0
  %v2317 = vsel %vm2189, %v2091, 0
  %v2320 = vsel %vm2189, %v2092, 0
  %v2323 = vsel %vm2189, %v2093, 0
  %v2326 = vsel %vm2189, %v2094, 0
  %v2329 = vsel %vm2189, %v2095, 0
  %v2332 = vsel %vm2189, %v2096, 0
  %v2335 = vsel %vm2189, %v2097, 0
  %v2338 = vsel %vm2189, %v2098, 0
  %v2341 = vsel %vm2189, %v2099, 0
  %v2344 = vsel %vm2189, %v2100, 0
  %v2347 = vsel %vm2189, %v2101, 0
  %v2350 = vsel %vm2189, %v2102, 0
  %v2353 = vsel %vm2189, %v2103, 0
  %v2356 = vsel %vm2189, %v2104, 0
  %v2359 = vsel %vm2189, %v2105, 0
  %v2362 = vsel %vm2189, %v2106, 0
  %v2365 = vsel %vm2189, %v2107, 0
  %v2368 = vsel %vm2189, %v2108, 0
  %v2371 = vsel %vm2189, %v2109, 0
  %v2374 = vsel %vm2189, %v2110, 0
  %v2377 = vsel %vm2189, %v2111, 0
  %v2380 = vsel %vm2189, %v2112, 0
  %v2383 = vsel %vm2189, %v2113, 0
  %v2386 = vsel %vm2189, %v2114, 0
  %v2389 = vsel %vm2189, %v2115, 0
  %v2392 = vsel %vm2189, %v2116, 0
  %v2395 = vsel %vm2189, %v2117, 0
  %v2398 = vsel %vm2189, %v2118, 0
  %v2401 = vsel %vm2189, %v2119, 0
  %v2404 = vsel %vm2189, %v2120, 0
  %v2407 = vsel %vm2189, %v2121, 0
  %v2410 = vsel %vm2189, %v2122, 0
  %v2413 = vsel %vm2189, %v2123, 0
  %v2416 = vsel %vm2189, %v2124, 0
  %v2419 = vsel %vm2189, %v2125, 0
  %v2422 = vsel %vm2189, %v2126, 0
  %v2425 = vsel %vm2189, %v2127, 0
  %v2428 = vsel %vm2189, %v2128, 0
  %v2431 = vsel %vm2189, %v2129, 0
  %v2434 = vsel %vm2189, %v2130, 0
  %v2437 = vsel %vm2189, %v2131, 0
  %v2440 = vsel %vm2189, %v2132, 0
  %v2443 = vsel %vm2189, %v2133, 0
  %v2446 = vsel %vm2189, %v2134, 0
  %v2449 = vsel %vm2189, %v2135, 0
  %v2452 = vsel %vm2189, %v2136, 0
  %v2455 = vsel %vm2189, %v2137, 0
  %v2458 = vsel %vm2189, %v2138, 0
  %v2461 = vsel %vm2189, %v2139, 0
  %v2464 = vsel %vm2189, %v2140, 0
  %v2467 = vsel %vm2189, %v2141, 0
  %v2470 = vsel %vm2189, %v2142, 0
  %v2473 = vsel %vm2189, %v2143, 0
  %v2476 = vsel %vm2189, %v2144, 0
  %v2479 = vsel %vm2189, %v2145, 0
  %v2482 = vsel %vm2189, %v2146, 0
  %v2485 = vsel %vm2189, %v2147, 0
  %v2488 = vsel %vm2189, %v2148, 0
  %v2491 = vsel %vm2189, %v2149, 0
  %v2494 = vsel %vm2189, %v2150, 0
  %v2497 = vsel %vm2189, %v2151, 0
  %v2500 = vsel %vm2189, %v2152, 0
  %v2503 = vsel %vm2189, %v2153, 0
  %v2506 = vsel %vm2189, %v2154, 0
  %v2509 = vsel %vm2189, %v2155, 0
  %v2512 = vsel %vm2189, %v2156, 0
  %v2515 = vsel %vm2189, %v2157, 0
  %v2518 = vsel %vm2189, %v2158, 0
  %v2521 = vsel %vm2189, %v2159, 0
  %v2524 = vsel %vm2189, %v2160, 0
  %v2527 = vsel %vm2189, %v2161, 0
  %vm2529 = vcmask 1043456
  %v2531 = vsel %vm2529, %v2184, 0
  %2533 = vmatpush.bf16.msra.mxu0 0
  %2534 = vmatpush.bf16.msra.mxu0 0
  %2535 = vmatpush.bf16.msra.mxu0 0
  %2536 = vmatpush.bf16.msra.mxu0 %v2531
  %2537 = vmatpush.bf16.msra.mxu0 %v2183
  %2538 = vmatpush.bf16.msra.mxu0 %v2182
  %2539 = vmatpush.bf16.msra.mxu0 %v2181
  %2540 = vmatpush.bf16.msra.mxu0 %v2180
  %2541 = vmatmul.bf16.gmra.mxu0 %v2191
  %v2542 = vpop.f32.mrf.mxu0
  %v2543 = vadd.f32 %v477, %v2542
  %v2544 = vpop.f32.mrf.mxu0
  %v2545 = vadd.f32 %v482, %v2544
  %2546 = vmatmul.bf16.gmra.mxu0 %v2194
  %v2547 = vpop.f32.mrf.mxu0
  %v2548 = vadd.f32 %v487, %v2547
  %v2549 = vpop.f32.mrf.mxu0
  %v2550 = vadd.f32 %v492, %v2549
  %2551 = vmatmul.bf16.gmra.mxu0 %v2197
  %v2552 = vpop.f32.mrf.mxu0
  %v2553 = vadd.f32 %v497, %v2552
  %v2554 = vpop.f32.mrf.mxu0
  %v2555 = vadd.f32 %v502, %v2554
  %2556 = vmatmul.bf16.gmra.mxu0 %v2200
  %v2557 = vpop.f32.mrf.mxu0
  %v2558 = vadd.f32 %v507, %v2557
  %v2559 = vpop.f32.mrf.mxu0
  %v2560 = vadd.f32 %v512, %v2559
  %2561 = vmatmul.bf16.gmra.mxu0 %v2203
  %v2562 = vpop.f32.mrf.mxu0
  %v2563 = vadd.f32 %v517, %v2562
  %v2564 = vpop.f32.mrf.mxu0
  %v2565 = vadd.f32 %v522, %v2564
  %2566 = vmatmul.bf16.gmra.mxu0 %v2206
  %v2567 = vpop.f32.mrf.mxu0
  %v2568 = vadd.f32 %v527, %v2567
  %v2569 = vpop.f32.mrf.mxu0
  %v2570 = vadd.f32 %v532, %v2569
  %2571 = vmatmul.bf16.gmra.mxu0 %v2209
  %v2572 = vpop.f32.mrf.mxu0
  %v2573 = vadd.f32 %v537, %v2572
  %v2574 = vpop.f32.mrf.mxu0
  %v2575 = vadd.f32 %v542, %v2574
  %2576 = vmatmul.bf16.gmra.mxu0 %v2212
  %v2577 = vpop.f32.mrf.mxu0
  %v2578 = vadd.f32 %v547, %v2577
  %v2579 = vpop.f32.mrf.mxu0
  %v2580 = vadd.f32 %v552, %v2579
  %2581 = vmatmul.bf16.gmra.mxu0 %v2215
  %v2582 = vpop.f32.mrf.mxu0
  %v2583 = vadd.f32 %v557, %v2582
  %v2584 = vpop.f32.mrf.mxu0
  %v2585 = vadd.f32 %v562, %v2584
  %2586 = vmatmul.bf16.gmra.mxu0 %v2218
  %v2587 = vpop.f32.mrf.mxu0
  %v2588 = vadd.f32 %v567, %v2587
  %v2589 = vpop.f32.mrf.mxu0
  %v2590 = vadd.f32 %v572, %v2589
  %2591 = vmatmul.bf16.gmra.mxu0 %v2221
  %v2592 = vpop.f32.mrf.mxu0
  %v2593 = vadd.f32 %v577, %v2592
  %v2594 = vpop.f32.mrf.mxu0
  %v2595 = vadd.f32 %v582, %v2594
  %2596 = vmatmul.bf16.gmra.mxu0 %v2224
  %v2597 = vpop.f32.mrf.mxu0
  %v2598 = vadd.f32 %v587, %v2597
  %v2599 = vpop.f32.mrf.mxu0
  %v2600 = vadd.f32 %v592, %v2599
  %2601 = vmatmul.bf16.gmra.mxu0 %v2227
  %v2602 = vpop.f32.mrf.mxu0
  %v2603 = vadd.f32 %v597, %v2602
  %v2604 = vpop.f32.mrf.mxu0
  %v2605 = vadd.f32 %v602, %v2604
  %2606 = vmatmul.bf16.gmra.mxu0 %v2230
  %v2607 = vpop.f32.mrf.mxu0
  %v2608 = vadd.f32 %v607, %v2607
  %v2609 = vpop.f32.mrf.mxu0
  %v2610 = vadd.f32 %v612, %v2609
  %2611 = vmatmul.bf16.gmra.mxu0 %v2233
  %v2612 = vpop.f32.mrf.mxu0
  %v2613 = vadd.f32 %v617, %v2612
  %v2614 = vpop.f32.mrf.mxu0
  %v2615 = vadd.f32 %v622, %v2614
  %2616 = vmatmul.bf16.gmra.mxu0 %v2236
  %v2617 = vpop.f32.mrf.mxu0
  %v2618 = vadd.f32 %v627, %v2617
  %v2619 = vpop.f32.mrf.mxu0
  %v2620 = vadd.f32 %v632, %v2619
  %2621 = vmatmul.bf16.gmra.mxu0 %v2239
  %v2622 = vpop.f32.mrf.mxu0
  %v2623 = vadd.f32 %v637, %v2622
  %v2624 = vpop.f32.mrf.mxu0
  %v2625 = vadd.f32 %v642, %v2624
  %2626 = vmatmul.bf16.gmra.mxu0 %v2242
  %v2627 = vpop.f32.mrf.mxu0
  %v2628 = vadd.f32 %v647, %v2627
  %v2629 = vpop.f32.mrf.mxu0
  %v2630 = vadd.f32 %v652, %v2629
  %2631 = vmatmul.bf16.gmra.mxu0 %v2245
  %v2632 = vpop.f32.mrf.mxu0
  %v2633 = vadd.f32 %v657, %v2632
  %v2634 = vpop.f32.mrf.mxu0
  %v2635 = vadd.f32 %v662, %v2634
  %2636 = vmatmul.bf16.gmra.mxu0 %v2248
  %v2637 = vpop.f32.mrf.mxu0
  %v2638 = vadd.f32 %v667, %v2637
  %v2639 = vpop.f32.mrf.mxu0
  %v2640 = vadd.f32 %v672, %v2639
  %2641 = vmatmul.bf16.gmra.mxu0 %v2251
  %v2642 = vpop.f32.mrf.mxu0
  %v2643 = vadd.f32 %v677, %v2642
  %v2644 = vpop.f32.mrf.mxu0
  %v2645 = vadd.f32 %v682, %v2644
  %2646 = vmatmul.bf16.gmra.mxu0 %v2254
  %v2647 = vpop.f32.mrf.mxu0
  %v2648 = vadd.f32 %v687, %v2647
  %v2649 = vpop.f32.mrf.mxu0
  %v2650 = vadd.f32 %v692, %v2649
  %2651 = vmatmul.bf16.gmra.mxu0 %v2257
  %v2652 = vpop.f32.mrf.mxu0
  %v2653 = vadd.f32 %v697, %v2652
  %v2654 = vpop.f32.mrf.mxu0
  %v2655 = vadd.f32 %v702, %v2654
  %2656 = vmatmul.bf16.gmra.mxu0 %v2260
  %v2657 = vpop.f32.mrf.mxu0
  %v2658 = vadd.f32 %v707, %v2657
  %v2659 = vpop.f32.mrf.mxu0
  %v2660 = vadd.f32 %v712, %v2659
  %2661 = vmatmul.bf16.gmra.mxu0 %v2263
  %v2662 = vpop.f32.mrf.mxu0
  %v2663 = vadd.f32 %v717, %v2662
  %v2664 = vpop.f32.mrf.mxu0
  %v2665 = vadd.f32 %v722, %v2664
  %2666 = vmatmul.bf16.gmra.mxu0 %v2266
  %v2667 = vpop.f32.mrf.mxu0
  %v2668 = vadd.f32 %v727, %v2667
  %v2669 = vpop.f32.mrf.mxu0
  %v2670 = vadd.f32 %v732, %v2669
  %2671 = vmatmul.bf16.gmra.mxu0 %v2269
  %v2672 = vpop.f32.mrf.mxu0
  %v2673 = vadd.f32 %v737, %v2672
  %v2674 = vpop.f32.mrf.mxu0
  %v2675 = vadd.f32 %v742, %v2674
  %2676 = vmatmul.bf16.gmra.mxu0 %v2272
  %v2677 = vpop.f32.mrf.mxu0
  %v2678 = vadd.f32 %v747, %v2677
  %v2679 = vpop.f32.mrf.mxu0
  %v2680 = vadd.f32 %v752, %v2679
  %2681 = vmatmul.bf16.gmra.mxu0 %v2275
  %v2682 = vpop.f32.mrf.mxu0
  %v2683 = vadd.f32 %v757, %v2682
  %v2684 = vpop.f32.mrf.mxu0
  %v2685 = vadd.f32 %v762, %v2684
  %2686 = vmatmul.bf16.gmra.mxu0 %v2278
  %v2687 = vpop.f32.mrf.mxu0
  %v2688 = vadd.f32 %v767, %v2687
  %v2689 = vpop.f32.mrf.mxu0
  %v2690 = vadd.f32 %v772, %v2689
  %2691 = vmatmul.bf16.gmra.mxu0 %v2281
  %v2692 = vpop.f32.mrf.mxu0
  %v2693 = vadd.f32 %v777, %v2692
  %v2694 = vpop.f32.mrf.mxu0
  %v2695 = vadd.f32 %v782, %v2694
  %2696 = vmatmul.bf16.gmra.mxu0 %v2284
  %v2697 = vpop.f32.mrf.mxu0
  %v2698 = vadd.f32 %v787, %v2697
  %v2699 = vpop.f32.mrf.mxu0
  %v2700 = vadd.f32 %v792, %v2699
  %2701 = vmatmul.bf16.gmra.mxu0 %v2287
  %v2702 = vpop.f32.mrf.mxu0
  %v2703 = vadd.f32 %v797, %v2702
  %v2704 = vpop.f32.mrf.mxu0
  %v2705 = vadd.f32 %v802, %v2704
  %2706 = vmatmul.bf16.gmra.mxu0 %v2290
  %v2707 = vpop.f32.mrf.mxu0
  %v2708 = vadd.f32 %v807, %v2707
  %v2709 = vpop.f32.mrf.mxu0
  %v2710 = vadd.f32 %v812, %v2709
  %2711 = vmatmul.bf16.gmra.mxu0 %v2293
  %v2712 = vpop.f32.mrf.mxu0
  %v2713 = vadd.f32 %v817, %v2712
  %v2714 = vpop.f32.mrf.mxu0
  %v2715 = vadd.f32 %v822, %v2714
  %2716 = vmatmul.bf16.gmra.mxu0 %v2296
  %v2717 = vpop.f32.mrf.mxu0
  %v2718 = vadd.f32 %v827, %v2717
  %v2719 = vpop.f32.mrf.mxu0
  %v2720 = vadd.f32 %v832, %v2719
  %2721 = vmatmul.bf16.gmra.mxu0 %v2299
  %v2722 = vpop.f32.mrf.mxu0
  %v2723 = vadd.f32 %v837, %v2722
  %v2724 = vpop.f32.mrf.mxu0
  %v2725 = vadd.f32 %v842, %v2724
  %2726 = vmatmul.bf16.gmra.mxu0 %v2302
  %v2727 = vpop.f32.mrf.mxu0
  %v2728 = vadd.f32 %v847, %v2727
  %v2729 = vpop.f32.mrf.mxu0
  %v2730 = vadd.f32 %v852, %v2729
  %2731 = vmatmul.bf16.gmra.mxu0 %v2305
  %v2732 = vpop.f32.mrf.mxu0
  %v2733 = vadd.f32 %v857, %v2732
  %v2734 = vpop.f32.mrf.mxu0
  %v2735 = vadd.f32 %v862, %v2734
  %2736 = vmatmul.bf16.gmra.mxu0 %v2308
  %v2737 = vpop.f32.mrf.mxu0
  %v2738 = vadd.f32 %v867, %v2737
  %v2739 = vpop.f32.mrf.mxu0
  %v2740 = vadd.f32 %v872, %v2739
  %2741 = vmatmul.bf16.gmra.mxu0 %v2311
  %v2742 = vpop.f32.mrf.mxu0
  %v2743 = vadd.f32 %v877, %v2742
  %v2744 = vpop.f32.mrf.mxu0
  %v2745 = vadd.f32 %v882, %v2744
  %2746 = vmatmul.bf16.gmra.mxu0 %v2314
  %v2747 = vpop.f32.mrf.mxu0
  %v2748 = vadd.f32 %v887, %v2747
  %v2749 = vpop.f32.mrf.mxu0
  %v2750 = vadd.f32 %v892, %v2749
  %2751 = vmatmul.bf16.gmra.mxu0 %v2317
  %v2752 = vpop.f32.mrf.mxu0
  %v2753 = vadd.f32 %v897, %v2752
  %v2754 = vpop.f32.mrf.mxu0
  %v2755 = vadd.f32 %v902, %v2754
  %2756 = vmatmul.bf16.gmra.mxu0 %v2320
  %v2757 = vpop.f32.mrf.mxu0
  %v2758 = vadd.f32 %v907, %v2757
  %v2759 = vpop.f32.mrf.mxu0
  %v2760 = vadd.f32 %v912, %v2759
  %2761 = vmatmul.bf16.gmra.mxu0 %v2323
  %v2762 = vpop.f32.mrf.mxu0
  %v2763 = vadd.f32 %v917, %v2762
  %v2764 = vpop.f32.mrf.mxu0
  %v2765 = vadd.f32 %v922, %v2764
  %2766 = vmatmul.bf16.gmra.mxu0 %v2326
  %v2767 = vpop.f32.mrf.mxu0
  %v2768 = vadd.f32 %v927, %v2767
  %v2769 = vpop.f32.mrf.mxu0
  %v2770 = vadd.f32 %v932, %v2769
  %2771 = vmatmul.bf16.gmra.mxu0 %v2329
  %v2772 = vpop.f32.mrf.mxu0
  %v2773 = vadd.f32 %v937, %v2772
  %v2774 = vpop.f32.mrf.mxu0
  %v2775 = vadd.f32 %v942, %v2774
  %2776 = vmatmul.bf16.gmra.mxu0 %v2332
  %v2777 = vpop.f32.mrf.mxu0
  %v2778 = vadd.f32 %v947, %v2777
  %v2779 = vpop.f32.mrf.mxu0
  %v2780 = vadd.f32 %v952, %v2779
  %2781 = vmatmul.bf16.gmra.mxu0 %v2335
  %v2782 = vpop.f32.mrf.mxu0
  %v2783 = vadd.f32 %v957, %v2782
  %v2784 = vpop.f32.mrf.mxu0
  %v2785 = vadd.f32 %v962, %v2784
  %2786 = vmatmul.bf16.gmra.mxu0 %v2338
  %v2787 = vpop.f32.mrf.mxu0
  %v2788 = vadd.f32 %v967, %v2787
  %v2789 = vpop.f32.mrf.mxu0
  %v2790 = vadd.f32 %v972, %v2789
  %2791 = vmatmul.bf16.gmra.mxu0 %v2341
  %v2792 = vpop.f32.mrf.mxu0
  %v2793 = vadd.f32 %v977, %v2792
  %v2794 = vpop.f32.mrf.mxu0
  %v2795 = vadd.f32 %v982, %v2794
  %2796 = vmatmul.bf16.gmra.mxu0 %v2344
  %v2797 = vpop.f32.mrf.mxu0
  %v2798 = vadd.f32 %v987, %v2797
  %v2799 = vpop.f32.mrf.mxu0
  %v2800 = vadd.f32 %v992, %v2799
  %2801 = vmatmul.bf16.gmra.mxu0 %v2347
  %v2802 = vpop.f32.mrf.mxu0
  %v2803 = vadd.f32 %v997, %v2802
  %v2804 = vpop.f32.mrf.mxu0
  %v2805 = vadd.f32 %v1002, %v2804
  %2806 = vmatmul.bf16.gmra.mxu0 %v2350
  %v2807 = vpop.f32.mrf.mxu0
  %v2808 = vadd.f32 %v1007, %v2807
  %v2809 = vpop.f32.mrf.mxu0
  %v2810 = vadd.f32 %v1012, %v2809
  %2811 = vmatmul.bf16.gmra.mxu0 %v2353
  %v2812 = vpop.f32.mrf.mxu0
  %v2813 = vadd.f32 %v1017, %v2812
  %v2814 = vpop.f32.mrf.mxu0
  %v2815 = vadd.f32 %v1022, %v2814
  %2816 = vmatmul.bf16.gmra.mxu0 %v2356
  %v2817 = vpop.f32.mrf.mxu0
  %v2818 = vadd.f32 %v1027, %v2817
  %v2819 = vpop.f32.mrf.mxu0
  %v2820 = vadd.f32 %v1032, %v2819
  %2821 = vmatmul.bf16.gmra.mxu0 %v2359
  %v2822 = vpop.f32.mrf.mxu0
  %v2823 = vadd.f32 %v1037, %v2822
  %v2824 = vpop.f32.mrf.mxu0
  %v2825 = vadd.f32 %v1042, %v2824
  %2826 = vmatmul.bf16.gmra.mxu0 %v2362
  %v2827 = vpop.f32.mrf.mxu0
  %v2828 = vadd.f32 %v1047, %v2827
  %v2829 = vpop.f32.mrf.mxu0
  %v2830 = vadd.f32 %v1052, %v2829
  %2831 = vmatmul.bf16.gmra.mxu0 %v2365
  %v2832 = vpop.f32.mrf.mxu0
  %v2833 = vadd.f32 %v1057, %v2832
  %v2834 = vpop.f32.mrf.mxu0
  %v2835 = vadd.f32 %v1062, %v2834
  %2836 = vmatmul.bf16.gmra.mxu0 %v2368
  %v2837 = vpop.f32.mrf.mxu0
  %v2838 = vadd.f32 %v1067, %v2837
  %v2839 = vpop.f32.mrf.mxu0
  %v2840 = vadd.f32 %v1072, %v2839
  %2841 = vmatmul.bf16.gmra.mxu0 %v2371
  %v2842 = vpop.f32.mrf.mxu0
  %v2843 = vadd.f32 %v1077, %v2842
  %v2844 = vpop.f32.mrf.mxu0
  %v2845 = vadd.f32 %v1082, %v2844
  %2846 = vmatmul.bf16.gmra.mxu0 %v2374
  %v2847 = vpop.f32.mrf.mxu0
  %v2848 = vadd.f32 %v1087, %v2847
  %v2849 = vpop.f32.mrf.mxu0
  %v2850 = vadd.f32 %v1092, %v2849
  %2851 = vmatmul.bf16.gmra.mxu0 %v2377
  %v2852 = vpop.f32.mrf.mxu0
  %v2853 = vadd.f32 %v1097, %v2852
  %v2854 = vpop.f32.mrf.mxu0
  %v2855 = vadd.f32 %v1102, %v2854
  %2856 = vmatmul.bf16.gmra.mxu0 %v2380
  %v2857 = vpop.f32.mrf.mxu0
  %v2858 = vadd.f32 %v1107, %v2857
  %v2859 = vpop.f32.mrf.mxu0
  %v2860 = vadd.f32 %v1112, %v2859
  %2861 = vmatmul.bf16.gmra.mxu0 %v2383
  %v2862 = vpop.f32.mrf.mxu0
  %v2863 = vadd.f32 %v1117, %v2862
  %v2864 = vpop.f32.mrf.mxu0
  %v2865 = vadd.f32 %v1122, %v2864
  %2866 = vmatmul.bf16.gmra.mxu0 %v2386
  %v2867 = vpop.f32.mrf.mxu0
  %v2868 = vadd.f32 %v1127, %v2867
  %v2869 = vpop.f32.mrf.mxu0
  %v2870 = vadd.f32 %v1132, %v2869
  %2871 = vmatmul.bf16.gmra.mxu0 %v2389
  %v2872 = vpop.f32.mrf.mxu0
  %v2873 = vadd.f32 %v1137, %v2872
  %v2874 = vpop.f32.mrf.mxu0
  %v2875 = vadd.f32 %v1142, %v2874
  %2876 = vmatmul.bf16.gmra.mxu0 %v2392
  %v2877 = vpop.f32.mrf.mxu0
  %v2878 = vadd.f32 %v1147, %v2877
  %v2879 = vpop.f32.mrf.mxu0
  %v2880 = vadd.f32 %v1152, %v2879
  %2881 = vmatmul.bf16.gmra.mxu0 %v2395
  %v2882 = vpop.f32.mrf.mxu0
  %v2883 = vadd.f32 %v1157, %v2882
  %v2884 = vpop.f32.mrf.mxu0
  %v2885 = vadd.f32 %v1162, %v2884
  %2886 = vmatmul.bf16.gmra.mxu0 %v2398
  %v2887 = vpop.f32.mrf.mxu0
  %v2888 = vadd.f32 %v1167, %v2887
  %v2889 = vpop.f32.mrf.mxu0
  %v2890 = vadd.f32 %v1172, %v2889
  %2891 = vmatmul.bf16.gmra.mxu0 %v2401
  %v2892 = vpop.f32.mrf.mxu0
  %v2893 = vadd.f32 %v1177, %v2892
  %v2894 = vpop.f32.mrf.mxu0
  %v2895 = vadd.f32 %v1182, %v2894
  %2896 = vmatmul.bf16.gmra.mxu0 %v2404
  %v2897 = vpop.f32.mrf.mxu0
  %v2898 = vadd.f32 %v1187, %v2897
  %v2899 = vpop.f32.mrf.mxu0
  %v2900 = vadd.f32 %v1192, %v2899
  %2901 = vmatmul.bf16.gmra.mxu0 %v2407
  %v2902 = vpop.f32.mrf.mxu0
  %v2903 = vadd.f32 %v1197, %v2902
  %v2904 = vpop.f32.mrf.mxu0
  %v2905 = vadd.f32 %v1202, %v2904
  %2906 = vmatmul.bf16.gmra.mxu0 %v2410
  %v2907 = vpop.f32.mrf.mxu0
  %v2908 = vadd.f32 %v1207, %v2907
  %v2909 = vpop.f32.mrf.mxu0
  %v2910 = vadd.f32 %v1212, %v2909
  %2911 = vmatmul.bf16.gmra.mxu0 %v2413
  %v2912 = vpop.f32.mrf.mxu0
  %v2913 = vadd.f32 %v1217, %v2912
  %v2914 = vpop.f32.mrf.mxu0
  %v2915 = vadd.f32 %v1222, %v2914
  %2916 = vmatmul.bf16.gmra.mxu0 %v2416
  %v2917 = vpop.f32.mrf.mxu0
  %v2918 = vadd.f32 %v1227, %v2917
  %v2919 = vpop.f32.mrf.mxu0
  %v2920 = vadd.f32 %v1232, %v2919
  %2921 = vmatmul.bf16.gmra.mxu0 %v2419
  %v2922 = vpop.f32.mrf.mxu0
  %v2923 = vadd.f32 %v1237, %v2922
  %v2924 = vpop.f32.mrf.mxu0
  %v2925 = vadd.f32 %v1242, %v2924
  %2926 = vmatmul.bf16.gmra.mxu0 %v2422
  %v2927 = vpop.f32.mrf.mxu0
  %v2928 = vadd.f32 %v1247, %v2927
  %v2929 = vpop.f32.mrf.mxu0
  %v2930 = vadd.f32 %v1252, %v2929
  %2931 = vmatmul.bf16.gmra.mxu0 %v2425
  %v2932 = vpop.f32.mrf.mxu0
  %v2933 = vadd.f32 %v1257, %v2932
  %v2934 = vpop.f32.mrf.mxu0
  %v2935 = vadd.f32 %v1262, %v2934
  %2936 = vmatmul.bf16.gmra.mxu0 %v2428
  %v2937 = vpop.f32.mrf.mxu0
  %v2938 = vadd.f32 %v1267, %v2937
  %v2939 = vpop.f32.mrf.mxu0
  %v2940 = vadd.f32 %v1272, %v2939
  %2941 = vmatmul.bf16.gmra.mxu0 %v2431
  %v2942 = vpop.f32.mrf.mxu0
  %v2943 = vadd.f32 %v1277, %v2942
  %v2944 = vpop.f32.mrf.mxu0
  %v2945 = vadd.f32 %v1282, %v2944
  %2946 = vmatmul.bf16.gmra.mxu0 %v2434
  %v2947 = vpop.f32.mrf.mxu0
  %v2948 = vadd.f32 %v1287, %v2947
  %v2949 = vpop.f32.mrf.mxu0
  %v2950 = vadd.f32 %v1292, %v2949
  %2951 = vmatmul.bf16.gmra.mxu0 %v2437
  %v2952 = vpop.f32.mrf.mxu0
  %v2953 = vadd.f32 %v1297, %v2952
  %v2954 = vpop.f32.mrf.mxu0
  %v2955 = vadd.f32 %v1302, %v2954
  %2956 = vmatmul.bf16.gmra.mxu0 %v2440
  %v2957 = vpop.f32.mrf.mxu0
  %v2958 = vadd.f32 %v1307, %v2957
  %v2959 = vpop.f32.mrf.mxu0
  %v2960 = vadd.f32 %v1312, %v2959
  %2961 = vmatmul.bf16.gmra.mxu0 %v2443
  %v2962 = vpop.f32.mrf.mxu0
  %v2963 = vadd.f32 %v1317, %v2962
  %v2964 = vpop.f32.mrf.mxu0
  %v2965 = vadd.f32 %v1322, %v2964
  %2966 = vmatmul.bf16.gmra.mxu0 %v2446
  %v2967 = vpop.f32.mrf.mxu0
  %v2968 = vadd.f32 %v1327, %v2967
  %v2969 = vpop.f32.mrf.mxu0
  %v2970 = vadd.f32 %v1332, %v2969
  %2971 = vmatmul.bf16.gmra.mxu0 %v2449
  %v2972 = vpop.f32.mrf.mxu0
  %v2973 = vadd.f32 %v1337, %v2972
  %v2974 = vpop.f32.mrf.mxu0
  %v2975 = vadd.f32 %v1342, %v2974
  %2976 = vmatmul.bf16.gmra.mxu0 %v2452
  %v2977 = vpop.f32.mrf.mxu0
  %v2978 = vadd.f32 %v1347, %v2977
  %v2979 = vpop.f32.mrf.mxu0
  %v2980 = vadd.f32 %v1352, %v2979
  %2981 = vmatmul.bf16.gmra.mxu0 %v2455
  %v2982 = vpop.f32.mrf.mxu0
  %v2983 = vadd.f32 %v1357, %v2982
  %v2984 = vpop.f32.mrf.mxu0
  %v2985 = vadd.f32 %v1362, %v2984
  %2986 = vmatmul.bf16.gmra.mxu0 %v2458
  %v2987 = vpop.f32.mrf.mxu0
  %v2988 = vadd.f32 %v1367, %v2987
  %v2989 = vpop.f32.mrf.mxu0
  %v2990 = vadd.f32 %v1372, %v2989
  %2991 = vmatmul.bf16.gmra.mxu0 %v2461
  %v2992 = vpop.f32.mrf.mxu0
  %v2993 = vadd.f32 %v1377, %v2992
  %v2994 = vpop.f32.mrf.mxu0
  %v2995 = vadd.f32 %v1382, %v2994
  %2996 = vmatmul.bf16.gmra.mxu0 %v2464
  %v2997 = vpop.f32.mrf.mxu0
  %v2998 = vadd.f32 %v1387, %v2997
  %v2999 = vpop.f32.mrf.mxu0
  %v3000 = vadd.f32 %v1392, %v2999
  %3001 = vmatmul.bf16.gmra.mxu0 %v2467
  %v3002 = vpop.f32.mrf.mxu0
  %v3003 = vadd.f32 %v1397, %v3002
  %v3004 = vpop.f32.mrf.mxu0
  %v3005 = vadd.f32 %v1402, %v3004
  %3006 = vmatmul.bf16.gmra.mxu0 %v2470
  %v3007 = vpop.f32.mrf.mxu0
  %v3008 = vadd.f32 %v1407, %v3007
  %v3009 = vpop.f32.mrf.mxu0
  %v3010 = vadd.f32 %v1412, %v3009
  %3011 = vmatmul.bf16.gmra.mxu0 %v2473
  %v3012 = vpop.f32.mrf.mxu0
  %v3013 = vadd.f32 %v1417, %v3012
  %v3014 = vpop.f32.mrf.mxu0
  %v3015 = vadd.f32 %v1422, %v3014
  %3016 = vmatmul.bf16.gmra.mxu0 %v2476
  %v3017 = vpop.f32.mrf.mxu0
  %v3018 = vadd.f32 %v1427, %v3017
  %v3019 = vpop.f32.mrf.mxu0
  %v3020 = vadd.f32 %v1432, %v3019
  %3021 = vmatmul.bf16.gmra.mxu0 %v2479
  %v3022 = vpop.f32.mrf.mxu0
  %v3023 = vadd.f32 %v1437, %v3022
  %v3024 = vpop.f32.mrf.mxu0
  %v3025 = vadd.f32 %v1442, %v3024
  %3026 = vmatmul.bf16.gmra.mxu0 %v2482
  %v3027 = vpop.f32.mrf.mxu0
  %v3028 = vadd.f32 %v1447, %v3027
  %v3029 = vpop.f32.mrf.mxu0
  %v3030 = vadd.f32 %v1452, %v3029
  %3031 = vmatmul.bf16.gmra.mxu0 %v2485
  %v3032 = vpop.f32.mrf.mxu0
  %v3033 = vadd.f32 %v1457, %v3032
  %v3034 = vpop.f32.mrf.mxu0
  %v3035 = vadd.f32 %v1462, %v3034
  %3036 = vmatmul.bf16.gmra.mxu0 %v2488
  %v3037 = vpop.f32.mrf.mxu0
  %v3038 = vadd.f32 %v1467, %v3037
  %v3039 = vpop.f32.mrf.mxu0
  %v3040 = vadd.f32 %v1472, %v3039
  %3041 = vmatmul.bf16.gmra.mxu0 %v2491
  %v3042 = vpop.f32.mrf.mxu0
  %v3043 = vadd.f32 %v1477, %v3042
  %v3044 = vpop.f32.mrf.mxu0
  %v3045 = vadd.f32 %v1482, %v3044
  %3046 = vmatmul.bf16.gmra.mxu0 %v2494
  %v3047 = vpop.f32.mrf.mxu0
  %v3048 = vadd.f32 %v1487, %v3047
  %v3049 = vpop.f32.mrf.mxu0
  %v3050 = vadd.f32 %v1492, %v3049
  %3051 = vmatmul.bf16.gmra.mxu0 %v2497
  %v3052 = vpop.f32.mrf.mxu0
  %v3053 = vadd.f32 %v1497, %v3052
  %v3054 = vpop.f32.mrf.mxu0
  %v3055 = vadd.f32 %v1502, %v3054
  %3056 = vmatmul.bf16.gmra.mxu0 %v2500
  %v3057 = vpop.f32.mrf.mxu0
  %v3058 = vadd.f32 %v1507, %v3057
  %v3059 = vpop.f32.mrf.mxu0
  %v3060 = vadd.f32 %v1512, %v3059
  %3061 = vmatmul.bf16.gmra.mxu0 %v2503
  %v3062 = vpop.f32.mrf.mxu0
  %v3063 = vadd.f32 %v1517, %v3062
  %v3064 = vpop.f32.mrf.mxu0
  %v3065 = vadd.f32 %v1522, %v3064
  %3066 = vmatmul.bf16.gmra.mxu0 %v2506
  %v3067 = vpop.f32.mrf.mxu0
  %v3068 = vadd.f32 %v1527, %v3067
  %v3069 = vpop.f32.mrf.mxu0
  %v3070 = vadd.f32 %v1532, %v3069
  %3071 = vmatmul.bf16.gmra.mxu0 %v2509
  %v3072 = vpop.f32.mrf.mxu0
  %v3073 = vadd.f32 %v1537, %v3072
  %v3074 = vpop.f32.mrf.mxu0
  %v3075 = vadd.f32 %v1542, %v3074
  %3076 = vmatmul.bf16.gmra.mxu0 %v2512
  %v3077 = vpop.f32.mrf.mxu0
  %v3078 = vadd.f32 %v1547, %v3077
  %v3079 = vpop.f32.mrf.mxu0
  %v3080 = vadd.f32 %v1552, %v3079
  %3081 = vmatmul.bf16.gmra.mxu0 %v2515
  %v3082 = vpop.f32.mrf.mxu0
  %v3083 = vadd.f32 %v1557, %v3082
  %v3084 = vpop.f32.mrf.mxu0
  %v3085 = vadd.f32 %v1562, %v3084
  %3086 = vmatmul.bf16.gmra.mxu0 %v2518
  %v3087 = vpop.f32.mrf.mxu0
  %v3088 = vadd.f32 %v1567, %v3087
  %v3089 = vpop.f32.mrf.mxu0
  %v3090 = vadd.f32 %v1572, %v3089
  %3091 = vmatmul.bf16.gmra.mxu0 %v2521
  %v3092 = vpop.f32.mrf.mxu0
  %v3093 = vadd.f32 %v1577, %v3092
  %v3094 = vpop.f32.mrf.mxu0
  %v3095 = vadd.f32 %v1582, %v3094
  %3096 = vmatmul.bf16.gmra.mxu0 %v2524
  %v3097 = vpop.f32.mrf.mxu0
  %v3098 = vadd.f32 %v1587, %v3097
  %v3099 = vpop.f32.mrf.mxu0
  %v3100 = vadd.f32 %v1592, %v3099
  %3101 = vmatmul.bf16.gmra.mxu0 %v2527
  %v3102 = vpop.f32.mrf.mxu0
  %v3103 = vadd.f32 %v1597, %v3102
  %v3104 = vpop.f32.mrf.mxu0
  %3105 = vdwg.mxu0
  %vm3106 = vcmask 64512
  %3107 = vst.msk [vmem:[%s3] sm:$0xff] %vm3106, %v2543
  %3108 = vst.msk [vmem:[%s3 + $0x8] sm:$0xff] %vm3106, %v2545
  %3109 = vst.msk [vmem:[%s3 + $0x10] sm:$0xff] %vm3106, %v2548
  %3110 = vst.msk [vmem:[%s3 + $0x18] sm:$0xff] %vm3106, %v2550
  %3111 = vst.msk [vmem:[%s3 + $0x20] sm:$0xff] %vm3106, %v2553
  %3112 = vst.msk [vmem:[%s3 + $0x28] sm:$0xff] %vm3106, %v2555
  %3113 = vst.msk [vmem:[%s3 + $0x30] sm:$0xff] %vm3106, %v2558
  %3114 = vst.msk [vmem:[%s3 + $0x38] sm:$0xff] %vm3106, %v2560
  %3115 = vst.msk [vmem:[%s3 + $0x40] sm:$0xff] %vm3106, %v2563
  %3116 = vst.msk [vmem:[%s3 + $0x48] sm:$0xff] %vm3106, %v2565
  %3117 = vst.msk [vmem:[%s3 + $0x50] sm:$0xff] %vm3106, %v2568
  %3118 = vst.msk [vmem:[%s3 + $0x58] sm:$0xff] %vm3106, %v2570
  %3119 = vst.msk [vmem:[%s3 + $0x60] sm:$0xff] %vm3106, %v2573
  %3120 = vst.msk [vmem:[%s3 + $0x68] sm:$0xff] %vm3106, %v2575
  %3121 = vst.msk [vmem:[%s3 + $0x70] sm:$0xff] %vm3106, %v2578
  %3122 = vst.msk [vmem:[%s3 + $0x78] sm:$0xff] %vm3106, %v2580
  %3123 = vst.msk [vmem:[%s3 + $0x80] sm:$0xff] %vm3106, %v2583
  %3124 = vst.msk [vmem:[%s3 + $0x88] sm:$0xff] %vm3106, %v2585
  %3125 = vst.msk [vmem:[%s3 + $0x90] sm:$0xff] %vm3106, %v2588
  %3126 = vst.msk [vmem:[%s3 + $0x98] sm:$0xff] %vm3106, %v2590
  %3127 = vst.msk [vmem:[%s3 + $0xa0] sm:$0xff] %vm3106, %v2593
  %3128 = vst.msk [vmem:[%s3 + $0xa8] sm:$0xff] %vm3106, %v2595
  %3129 = vst.msk [vmem:[%s3 + $0xb0] sm:$0xff] %vm3106, %v2598
  %3130 = vst.msk [vmem:[%s3 + $0xb8] sm:$0xff] %vm3106, %v2600
  %3131 = vst.msk [vmem:[%s3 + $0xc0] sm:$0xff] %vm3106, %v2603
  %3132 = vst.msk [vmem:[%s3 + $0xc8] sm:$0xff] %vm3106, %v2605
  %3133 = vst.msk [vmem:[%s3 + $0xd0] sm:$0xff] %vm3106, %v2608
  %3134 = vst.msk [vmem:[%s3 + $0xd8] sm:$0xff] %vm3106, %v2610
  %3135 = vst.msk [vmem:[%s3 + $0xe0] sm:$0xff] %vm3106, %v2613
  %3136 = vst.msk [vmem:[%s3 + $0xe8] sm:$0xff] %vm3106, %v2615
  %3137 = vst.msk [vmem:[%s3 + $0xf0] sm:$0xff] %vm3106, %v2618
  %3138 = vst.msk [vmem:[%s3 + $0xf8] sm:$0xff] %vm3106, %v2620
  %3139 = vst.msk [vmem:[%s3 + $0x100] sm:$0xff] %vm3106, %v2623
  %3140 = vst.msk [vmem:[%s3 + $0x108] sm:$0xff] %vm3106, %v2625
  %3141 = vst.msk [vmem:[%s3 + $0x110] sm:$0xff] %vm3106, %v2628
  %3142 = vst.msk [vmem:[%s3 + $0x118] sm:$0xff] %vm3106, %v2630
  %3143 = vst.msk [vmem:[%s3 + $0x120] sm:$0xff] %vm3106, %v2633
  %3144 = vst.msk [vmem:[%s3 + $0x128] sm:$0xff] %vm3106, %v2635
  %3145 = vst.msk [vmem:[%s3 + $0x130] sm:$0xff] %vm3106, %v2638
  %3146 = vst.msk [vmem:[%s3 + $0x138] sm:$0xff] %vm3106, %v2640
  %3147 = vst.msk [vmem:[%s3 + $0x140] sm:$0xff] %vm3106, %v2643
  %3148 = vst.msk [vmem:[%s3 + $0x148] sm:$0xff] %vm3106, %v2645
  %3149 = vst.msk [vmem:[%s3 + $0x150] sm:$0xff] %vm3106, %v2648
  %3150 = vst.msk [vmem:[%s3 + $0x158] sm:$0xff] %vm3106, %v2650
  %3151 = vst.msk [vmem:[%s3 + $0x160] sm:$0xff] %vm3106, %v2653
  %3152 = vst.msk [vmem:[%s3 + $0x168] sm:$0xff] %vm3106, %v2655
  %3153 = vst.msk [vmem:[%s3 + $0x170] sm:$0xff] %vm3106, %v2658
  %3154 = vst.msk [vmem:[%s3 + $0x178] sm:$0xff] %vm3106, %v2660
  %3155 = vst.msk [vmem:[%s3 + $0x180] sm:$0xff] %vm3106, %v2663
  %3156 = vst.msk [vmem:[%s3 + $0x188] sm:$0xff] %vm3106, %v2665
  %3157 = vst.msk [vmem:[%s3 + $0x190] sm:$0xff] %vm3106, %v2668
  %3158 = vst.msk [vmem:[%s3 + $0x198] sm:$0xff] %vm3106, %v2670
  %3159 = vst.msk [vmem:[%s3 + $0x1a0] sm:$0xff] %vm3106, %v2673
  %3160 = vst.msk [vmem:[%s3 + $0x1a8] sm:$0xff] %vm3106, %v2675
  %3161 = vst.msk [vmem:[%s3 + $0x1b0] sm:$0xff] %vm3106, %v2678
  %3162 = vst.msk [vmem:[%s3 + $0x1b8] sm:$0xff] %vm3106, %v2680
  %3163 = vst.msk [vmem:[%s3 + $0x1c0] sm:$0xff] %vm3106, %v2683
  %3164 = vst.msk [vmem:[%s3 + $0x1c8] sm:$0xff] %vm3106, %v2685
  %3165 = vst.msk [vmem:[%s3 + $0x1d0] sm:$0xff] %vm3106, %v2688
  %3166 = vst.msk [vmem:[%s3 + $0x1d8] sm:$0xff] %vm3106, %v2690
  %3167 = vst.msk [vmem:[%s3 + $0x1e0] sm:$0xff] %vm3106, %v2693
  %3168 = vst.msk [vmem:[%s3 + $0x1e8] sm:$0xff] %vm3106, %v2695
  %3169 = vst.msk [vmem:[%s3 + $0x1f0] sm:$0xff] %vm3106, %v2698
  %3170 = vst.msk [vmem:[%s3 + $0x1f8] sm:$0xff] %vm3106, %v2700
  %3171 = vst.msk [vmem:[%s3 + $0x200] sm:$0xff] %vm3106, %v2703
  %3172 = vst.msk [vmem:[%s3 + $0x208] sm:$0xff] %vm3106, %v2705
  %3173 = vst.msk [vmem:[%s3 + $0x210] sm:$0xff] %vm3106, %v2708
  %3174 = vst.msk [vmem:[%s3 + $0x218] sm:$0xff] %vm3106, %v2710
  %3175 = vst.msk [vmem:[%s3 + $0x220] sm:$0xff] %vm3106, %v2713
  %3176 = vst.msk [vmem:[%s3 + $0x228] sm:$0xff] %vm3106, %v2715
  %3177 = vst.msk [vmem:[%s3 + $0x230] sm:$0xff] %vm3106, %v2718
  %3178 = vst.msk [vmem:[%s3 + $0x238] sm:$0xff] %vm3106, %v2720
  %3179 = vst.msk [vmem:[%s3 + $0x240] sm:$0xff] %vm3106, %v2723
  %3180 = vst.msk [vmem:[%s3 + $0x248] sm:$0xff] %vm3106, %v2725
  %3181 = vst.msk [vmem:[%s3 + $0x250] sm:$0xff] %vm3106, %v2728
  %3182 = vst.msk [vmem:[%s3 + $0x258] sm:$0xff] %vm3106, %v2730
  %3183 = vst.msk [vmem:[%s3 + $0x260] sm:$0xff] %vm3106, %v2733
  %3184 = vst.msk [vmem:[%s3 + $0x268] sm:$0xff] %vm3106, %v2735
  %3185 = vst.msk [vmem:[%s3 + $0x270] sm:$0xff] %vm3106, %v2738
  %3186 = vst.msk [vmem:[%s3 + $0x278] sm:$0xff] %vm3106, %v2740
  %3187 = vst.msk [vmem:[%s3 + $0x280] sm:$0xff] %vm3106, %v2743
  %3188 = vst.msk [vmem:[%s3 + $0x288] sm:$0xff] %vm3106, %v2745
  %3189 = vst.msk [vmem:[%s3 + $0x290] sm:$0xff] %vm3106, %v2748
  %3190 = vst.msk [vmem:[%s3 + $0x298] sm:$0xff] %vm3106, %v2750
  %3191 = vst.msk [vmem:[%s3 + $0x2a0] sm:$0xff] %vm3106, %v2753
  %3192 = vst.msk [vmem:[%s3 + $0x2a8] sm:$0xff] %vm3106, %v2755
  %3193 = vst.msk [vmem:[%s3 + $0x2b0] sm:$0xff] %vm3106, %v2758
  %3194 = vst.msk [vmem:[%s3 + $0x2b8] sm:$0xff] %vm3106, %v2760
  %3195 = vst.msk [vmem:[%s3 + $0x2c0] sm:$0xff] %vm3106, %v2763
  %3196 = vst.msk [vmem:[%s3 + $0x2c8] sm:$0xff] %vm3106, %v2765
  %3197 = vst.msk [vmem:[%s3 + $0x2d0] sm:$0xff] %vm3106, %v2768
  %3198 = vst.msk [vmem:[%s3 + $0x2d8] sm:$0xff] %vm3106, %v2770
  %3199 = vst.msk [vmem:[%s3 + $0x2e0] sm:$0xff] %vm3106, %v2773
  %3200 = vst.msk [vmem:[%s3 + $0x2e8] sm:$0xff] %vm3106, %v2775
  %3201 = vst.msk [vmem:[%s3 + $0x2f0] sm:$0xff] %vm3106, %v2778
  %3202 = vst.msk [vmem:[%s3 + $0x2f8] sm:$0xff] %vm3106, %v2780
  %3203 = vst.msk [vmem:[%s3 + $0x300] sm:$0xff] %vm3106, %v2783
  %3204 = vst.msk [vmem:[%s3 + $0x308] sm:$0xff] %vm3106, %v2785
  %3205 = vst.msk [vmem:[%s3 + $0x310] sm:$0xff] %vm3106, %v2788
  %3206 = vst.msk [vmem:[%s3 + $0x318] sm:$0xff] %vm3106, %v2790
  %3207 = vst.msk [vmem:[%s3 + $0x320] sm:$0xff] %vm3106, %v2793
  %3208 = vst.msk [vmem:[%s3 + $0x328] sm:$0xff] %vm3106, %v2795
  %3209 = vst.msk [vmem:[%s3 + $0x330] sm:$0xff] %vm3106, %v2798
  %3210 = vst.msk [vmem:[%s3 + $0x338] sm:$0xff] %vm3106, %v2800
  %3211 = vst.msk [vmem:[%s3 + $0x340] sm:$0xff] %vm3106, %v2803
  %3212 = vst.msk [vmem:[%s3 + $0x348] sm:$0xff] %vm3106, %v2805
  %3213 = vst.msk [vmem:[%s3 + $0x350] sm:$0xff] %vm3106, %v2808
  %3214 = vst.msk [vmem:[%s3 + $0x358] sm:$0xff] %vm3106, %v2810
  %3215 = vst.msk [vmem:[%s3 + $0x360] sm:$0xff] %vm3106, %v2813
  %3216 = vst.msk [vmem:[%s3 + $0x368] sm:$0xff] %vm3106, %v2815
  %3217 = vst.msk [vmem:[%s3 + $0x370] sm:$0xff] %vm3106, %v2818
  %3218 = vst.msk [vmem:[%s3 + $0x378] sm:$0xff] %vm3106, %v2820
  %3219 = vst.msk [vmem:[%s3 + $0x380] sm:$0xff] %vm3106, %v2823
  %3220 = vst.msk [vmem:[%s3 + $0x388] sm:$0xff] %vm3106, %v2825
  %3221 = vst.msk [vmem:[%s3 + $0x390] sm:$0xff] %vm3106, %v2828
  %3222 = vst.msk [vmem:[%s3 + $0x398] sm:$0xff] %vm3106, %v2830
  %3223 = vst.msk [vmem:[%s3 + $0x3a0] sm:$0xff] %vm3106, %v2833
  %3224 = vst.msk [vmem:[%s3 + $0x3a8] sm:$0xff] %vm3106, %v2835
  %3225 = vst.msk [vmem:[%s3 + $0x3b0] sm:$0xff] %vm3106, %v2838
  %3226 = vst.msk [vmem:[%s3 + $0x3b8] sm:$0xff] %vm3106, %v2840
  %3227 = vst.msk [vmem:[%s3 + $0x3c0] sm:$0xff] %vm3106, %v2843
  %3228 = vst.msk [vmem:[%s3 + $0x3c8] sm:$0xff] %vm3106, %v2845
  %3229 = vst.msk [vmem:[%s3 + $0x3d0] sm:$0xff] %vm3106, %v2848
  %3230 = vst.msk [vmem:[%s3 + $0x3d8] sm:$0xff] %vm3106, %v2850
  %3231 = vst.msk [vmem:[%s3 + $0x3e0] sm:$0xff] %vm3106, %v2853
  %3232 = vst.msk [vmem:[%s3 + $0x3e8] sm:$0xff] %vm3106, %v2855
  %3233 = vst.msk [vmem:[%s3 + $0x3f0] sm:$0xff] %vm3106, %v2858
  %3234 = vst.msk [vmem:[%s3 + $0x3f8] sm:$0xff] %vm3106, %v2860
  %3235 = vst.msk [vmem:[%s3 + $0x400] sm:$0xff] %vm3106, %v2863
  %3236 = vst.msk [vmem:[%s3 + $0x408] sm:$0xff] %vm3106, %v2865
  %3237 = vst.msk [vmem:[%s3 + $0x410] sm:$0xff] %vm3106, %v2868
  %3238 = vst.msk [vmem:[%s3 + $0x418] sm:$0xff] %vm3106, %v2870
  %3239 = vst.msk [vmem:[%s3 + $0x420] sm:$0xff] %vm3106, %v2873
  %3240 = vst.msk [vmem:[%s3 + $0x428] sm:$0xff] %vm3106, %v2875
  %3241 = vst.msk [vmem:[%s3 + $0x430] sm:$0xff] %vm3106, %v2878
  %3242 = vst.msk [vmem:[%s3 + $0x438] sm:$0xff] %vm3106, %v2880
  %3243 = vst.msk [vmem:[%s3 + $0x440] sm:$0xff] %vm3106, %v2883
  %3244 = vst.msk [vmem:[%s3 + $0x448] sm:$0xff] %vm3106, %v2885
  %3245 = vst.msk [vmem:[%s3 + $0x450] sm:$0xff] %vm3106, %v2888
  %3246 = vst.msk [vmem:[%s3 + $0x458] sm:$0xff] %vm3106, %v2890
  %3247 = vst.msk [vmem:[%s3 + $0x460] sm:$0xff] %vm3106, %v2893
  %3248 = vst.msk [vmem:[%s3 + $0x468] sm:$0xff] %vm3106, %v2895
  %3249 = vst.msk [vmem:[%s3 + $0x470] sm:$0xff] %vm3106, %v2898
  %3250 = vst.msk [vmem:[%s3 + $0x478] sm:$0xff] %vm3106, %v2900
  %3251 = vst.msk [vmem:[%s3 + $0x480] sm:$0xff] %vm3106, %v2903
  %3252 = vst.msk [vmem:[%s3 + $0x488] sm:$0xff] %vm3106, %v2905
  %3253 = vst.msk [vmem:[%s3 + $0x490] sm:$0xff] %vm3106, %v2908
  %3254 = vst.msk [vmem:[%s3 + $0x498] sm:$0xff] %vm3106, %v2910
  %3255 = vst.msk [vmem:[%s3 + $0x4a0] sm:$0xff] %vm3106, %v2913
  %3256 = vst.msk [vmem:[%s3 + $0x4a8] sm:$0xff] %vm3106, %v2915
  %3257 = vst.msk [vmem:[%s3 + $0x4b0] sm:$0xff] %vm3106, %v2918
  %3258 = vst.msk [vmem:[%s3 + $0x4b8] sm:$0xff] %vm3106, %v2920
  %3259 = vst.msk [vmem:[%s3 + $0x4c0] sm:$0xff] %vm3106, %v2923
  %3260 = vst.msk [vmem:[%s3 + $0x4c8] sm:$0xff] %vm3106, %v2925
  %3261 = vst.msk [vmem:[%s3 + $0x4d0] sm:$0xff] %vm3106, %v2928
  %3262 = vst.msk [vmem:[%s3 + $0x4d8] sm:$0xff] %vm3106, %v2930
  %3263 = vst.msk [vmem:[%s3 + $0x4e0] sm:$0xff] %vm3106, %v2933
  %3264 = vst.msk [vmem:[%s3 + $0x4e8] sm:$0xff] %vm3106, %v2935
  %3265 = vst.msk [vmem:[%s3 + $0x4f0] sm:$0xff] %vm3106, %v2938
  %3266 = vst.msk [vmem:[%s3 + $0x4f8] sm:$0xff] %vm3106, %v2940
  %3267 = vst.msk [vmem:[%s3 + $0x500] sm:$0xff] %vm3106, %v2943
  %3268 = vst.msk [vmem:[%s3 + $0x508] sm:$0xff] %vm3106, %v2945
  %3269 = vst.msk [vmem:[%s3 + $0x510] sm:$0xff] %vm3106, %v2948
  %3270 = vst.msk [vmem:[%s3 + $0x518] sm:$0xff] %vm3106, %v2950
  %3271 = vst.msk [vmem:[%s3 + $0x520] sm:$0xff] %vm3106, %v2953
  %3272 = vst.msk [vmem:[%s3 + $0x528] sm:$0xff] %vm3106, %v2955
  %3273 = vst.msk [vmem:[%s3 + $0x530] sm:$0xff] %vm3106, %v2958
  %3274 = vst.msk [vmem:[%s3 + $0x538] sm:$0xff] %vm3106, %v2960
  %3275 = vst.msk [vmem:[%s3 + $0x540] sm:$0xff] %vm3106, %v2963
  %3276 = vst.msk [vmem:[%s3 + $0x548] sm:$0xff] %vm3106, %v2965
  %3277 = vst.msk [vmem:[%s3 + $0x550] sm:$0xff] %vm3106, %v2968
  %3278 = vst.msk [vmem:[%s3 + $0x558] sm:$0xff] %vm3106, %v2970
  %3279 = vst.msk [vmem:[%s3 + $0x560] sm:$0xff] %vm3106, %v2973
  %3280 = vst.msk [vmem:[%s3 + $0x568] sm:$0xff] %vm3106, %v2975
  %3281 = vst.msk [vmem:[%s3 + $0x570] sm:$0xff] %vm3106, %v2978
  %3282 = vst.msk [vmem:[%s3 + $0x578] sm:$0xff] %vm3106, %v2980
  %3283 = vst.msk [vmem:[%s3 + $0x580] sm:$0xff] %vm3106, %v2983
  %3284 = vst.msk [vmem:[%s3 + $0x588] sm:$0xff] %vm3106, %v2985
  %3285 = vst.msk [vmem:[%s3 + $0x590] sm:$0xff] %vm3106, %v2988
  %3286 = vst.msk [vmem:[%s3 + $0x598] sm:$0xff] %vm3106, %v2990
  %3287 = vst.msk [vmem:[%s3 + $0x5a0] sm:$0xff] %vm3106, %v2993
  %3288 = vst.msk [vmem:[%s3 + $0x5a8] sm:$0xff] %vm3106, %v2995
  %3289 = vst.msk [vmem:[%s3 + $0x5b0] sm:$0xff] %vm3106, %v2998
  %3290 = vst.msk [vmem:[%s3 + $0x5b8] sm:$0xff] %vm3106, %v3000
  %3291 = vst.msk [vmem:[%s3 + $0x5c0] sm:$0xff] %vm3106, %v3003
  %3292 = vst.msk [vmem:[%s3 + $0x5c8] sm:$0xff] %vm3106, %v3005
  %3293 = vst.msk [vmem:[%s3 + $0x5d0] sm:$0xff] %vm3106, %v3008
  %3294 = vst.msk [vmem:[%s3 + $0x5d8] sm:$0xff] %vm3106, %v3010
  %3295 = vst.msk [vmem:[%s3 + $0x5e0] sm:$0xff] %vm3106, %v3013
  %3296 = vst.msk [vmem:[%s3 + $0x5e8] sm:$0xff] %vm3106, %v3015
  %3297 = vst.msk [vmem:[%s3 + $0x5f0] sm:$0xff] %vm3106, %v3018
  %3298 = vst.msk [vmem:[%s3 + $0x5f8] sm:$0xff] %vm3106, %v3020
  %3299 = vst.msk [vmem:[%s3 + $0x600] sm:$0xff] %vm3106, %v3023
  %3300 = vst.msk [vmem:[%s3 + $0x608] sm:$0xff] %vm3106, %v3025
  %3301 = vst.msk [vmem:[%s3 + $0x610] sm:$0xff] %vm3106, %v3028
  %3302 = vst.msk [vmem:[%s3 + $0x618] sm:$0xff] %vm3106, %v3030
  %3303 = vst.msk [vmem:[%s3 + $0x620] sm:$0xff] %vm3106, %v3033
  %3304 = vst.msk [vmem:[%s3 + $0x628] sm:$0xff] %vm3106, %v3035
  %3305 = vst.msk [vmem:[%s3 + $0x630] sm:$0xff] %vm3106, %v3038
  %3306 = vst.msk [vmem:[%s3 + $0x638] sm:$0xff] %vm3106, %v3040
  %3307 = vst.msk [vmem:[%s3 + $0x640] sm:$0xff] %vm3106, %v3043
  %3308 = vst.msk [vmem:[%s3 + $0x648] sm:$0xff] %vm3106, %v3045
  %3309 = vst.msk [vmem:[%s3 + $0x650] sm:$0xff] %vm3106, %v3048
  %3310 = vst.msk [vmem:[%s3 + $0x658] sm:$0xff] %vm3106, %v3050
  %3311 = vst.msk [vmem:[%s3 + $0x660] sm:$0xff] %vm3106, %v3053
  %3312 = vst.msk [vmem:[%s3 + $0x668] sm:$0xff] %vm3106, %v3055
  %3313 = vst.msk [vmem:[%s3 + $0x670] sm:$0xff] %vm3106, %v3058
  %3314 = vst.msk [vmem:[%s3 + $0x678] sm:$0xff] %vm3106, %v3060
  %3315 = vst.msk [vmem:[%s3 + $0x680] sm:$0xff] %vm3106, %v3063
  %3316 = vst.msk [vmem:[%s3 + $0x688] sm:$0xff] %vm3106, %v3065
  %3317 = vst.msk [vmem:[%s3 + $0x690] sm:$0xff] %vm3106, %v3068
  %3318 = vst.msk [vmem:[%s3 + $0x698] sm:$0xff] %vm3106, %v3070
  %3319 = vst.msk [vmem:[%s3 + $0x6a0] sm:$0xff] %vm3106, %v3073
  %3320 = vst.msk [vmem:[%s3 + $0x6a8] sm:$0xff] %vm3106, %v3075
  %3321 = vst.msk [vmem:[%s3 + $0x6b0] sm:$0xff] %vm3106, %v3078
  %3322 = vst.msk [vmem:[%s3 + $0x6b8] sm:$0xff] %vm3106, %v3080
  %3323 = vst.msk [vmem:[%s3 + $0x6c0] sm:$0xff] %vm3106, %v3083
  %3324 = vst.msk [vmem:[%s3 + $0x6c8] sm:$0xff] %vm3106, %v3085
  %3325 = vst.msk [vmem:[%s3 + $0x6d0] sm:$0xff] %vm3106, %v3088
  %3326 = vst.msk [vmem:[%s3 + $0x6d8] sm:$0xff] %vm3106, %v3090
  %3327 = vst.msk [vmem:[%s3 + $0x6e0] sm:$0xff] %vm3106, %v3093
  %3328 = vst.msk [vmem:[%s3 + $0x6e8] sm:$0xff] %vm3106, %v3095
  %3329 = vst.msk [vmem:[%s3 + $0x6f0] sm:$0xff] %vm3106, %v3098
  %3330 = vst.msk [vmem:[%s3 + $0x6f8] sm:$0xff] %vm3106, %v3100
  %3331 = vst.msk [vmem:[%s3 + $0x700] sm:$0xff] %vm3106, %v3103
  // Predicated region
  $region14: #{_lambda_.46} parent=0 // pred_check
    _
  $region15: #{_lambda_.46} parent=0 // pred_check_branch
    %3333 = sbr.rel (0) target = $region17
  $region16: #{_lambda_.46} parent=0 // pred_region
    _
  $region17: #{_lambda_.46} parent=0 // pred_fallthru
    _
  // Predicated region
  $region18: #{_lambda_.46} parent=0 // pred_check
    _
  $region19: #{_lambda_.46} parent=0 // pred_check_branch
    %3335 = sbr.rel (0) target = $region21
  $region20: #{_lambda_.46} parent=0 // pred_region
    _
  $region21: #{_lambda_.46} parent=0 // pred_fallthru
    _

// kernel: tile.33
$region0: #{tile.33}
  #allocation0 [shape = 's32[1]{0}', space=sflag, size = 0x4, scoped, tag = 'scoped memory for tile.33']
  %s0 = inlined_call_operand.vmem [shape: f32[8], index: 0, kind: input, shape index: {}]
  %s1 = inlined_call_operand.vmem [shape: f32[49,8], index: 1, kind: output, shape index: {}]
  // Predicated region
  $region2: #{tile.33} parent=0 // pred_check
    _
  $region3: #{tile.33} parent=0 // pred_check_branch
    %3 = sbr.rel (0) target = $region5
  $region4: #{tile.33} parent=0 // pred_region
    _
  $region5: #{tile.33} parent=0 // pred_fallthru
    _
  %v4 = vld [vmem:[%s0] ss:$0 sm:$0xff]
  %5 = vst [vmem:[%s1] sm:$0xff] %v4
  %s6 = scalar_lea.vmem %s1, 8
  %7 = vst [vmem:[%s6] sm:$0xff] %v4
  %s8 = scalar_lea.vmem %s1, 16
  %9 = vst [vmem:[%s8] sm:$0xff] %v4
  %s10 = scalar_lea.vmem %s1, 24
  %11 = vst [vmem:[%s10] sm:$0xff] %v4
  %s12 = scalar_lea.vmem %s1, 32
  %13 = vst [vmem:[%s12] sm:$0xff] %v4
  %s14 = scalar_lea.vmem %s1, 40
  %15 = vst [vmem:[%s14] sm:$0xff] %v4
  %s16 = scalar_lea.vmem %s1, 48
  %17 = vst [vmem:[%s16] sm:$0xff] %v4

// kernel: tile.2
$region0: #{tile.2}
  %s0 = inlined_call_operand.vmem [shape: f32[49,8], index: 0, kind: input, shape index: {}]
  %s1 = inlined_call_operand.vmem [shape: f32[392,1], index: 1, kind: output, shape index: {}]
  %v2 = vld [vmem:[%s0] sm:$0xff]
  %vm3 = vcmask 7168
  %4 = vst.msk [vmem:[%s1] ss:$8 sm:$0xf] %vm3, %v2
  %5 = vst.msk [vmem:[%s1] ss:$8 sm:$0xf0] %vm3, %v2
  %s6 = scalar_lea.vmem %s0, 8
  %v7 = vld [vmem:[%s6] sm:$0xff]
  %vm8 = vcmask 7168
  %s9 = scalar_lea.vmem %s1, 64
  %10 = vst.msk [vmem:[%s9] ss:$8 sm:$0xf] %vm8, %v7
  %s11 = scalar_lea.vmem %s1, 64
  %12 = vst.msk [vmem:[%s11] ss:$8 sm:$0xf0] %vm8, %v7
  %s13 = scalar_lea.vmem %s0, 16
  %v14 = vld [vmem:[%s13] sm:$0xff]
  %vm15 = vcmask 7168
  %s16 = scalar_lea.vmem %s1, 128
  %17 = vst.msk [vmem:[%s16] ss:$8 sm:$0xf] %vm15, %v14
  %s18 = scalar_lea.vmem %s1, 128
  %19 = vst.msk [vmem:[%s18] ss:$8 sm:$0xf0] %vm15, %v14
  %s20 = scalar_lea.vmem %s0, 24
  %v21 = vld [vmem:[%s20] sm:$0xff]
  %vm22 = vcmask 7168
  %s23 = scalar_lea.vmem %s1, 192
  %24 = vst.msk [vmem:[%s23] ss:$8 sm:$0xf] %vm22, %v21
  %s25 = scalar_lea.vmem %s1, 192
  %26 = vst.msk [vmem:[%s25] ss:$8 sm:$0xf0] %vm22, %v21
  %s27 = scalar_lea.vmem %s0, 32
  %v28 = vld [vmem:[%s27] sm:$0xff]
  %vm29 = vcmask 7168
  %s30 = scalar_lea.vmem %s1, 256
  %31 = vst.msk [vmem:[%s30] ss:$8 sm:$0xf] %vm29, %v28
  %s32 = scalar_lea.vmem %s1, 256
  %33 = vst.msk [vmem:[%s32] ss:$8 sm:$0xf0] %vm29, %v28
  %s34 = scalar_lea.vmem %s0, 40
  %v35 = vld [vmem:[%s34] sm:$0xff]
  %vm36 = vcmask 7168
  %s37 = scalar_lea.vmem %s1, 320
  %38 = vst.msk [vmem:[%s37] ss:$8 sm:$0xf] %vm36, %v35
  %s39 = scalar_lea.vmem %s1, 320
  %40 = vst.msk [vmem:[%s39] ss:$8 sm:$0xf0] %vm36, %v35
  %s41 = scalar_lea.vmem %s0, 48
  %v42 = vld [vmem:[%s41] sm:$0x1]
  %vm43 = vcmask 7168
  %s44 = scalar_lea.vmem %s1, 384
  %45 = vst.msk [vmem:[%s44] sm:$0x1] %vm43, %v42
  %v46 = vld [vmem:[%s0] sm:$0xff]
  %47 = vrot.lane.b32.xlu0 %v46, 127
  %v48 = vpop.permute.xlu0 %47
  %vm49 = vcmask 7168
  %s50 = scalar_lea.vmem %s1, 1
  %51 = vst.msk [vmem:[%s50] ss:$8 sm:$0xf] %vm49, %v48
  %s52 = scalar_lea.vmem %s1, 1
  %53 = vst.msk [vmem:[%s52] ss:$8 sm:$0xf0] %vm49, %v48
  %s54 = scalar_lea.vmem %s0, 8
  %v55 = vld [vmem:[%s54] sm:$0xff]
  %56 = vrot.lane.b32.xlu0 %v55, 127
  %v57 = vpop.permute.xlu0 %56
  %vm58 = vcmask 7168
  %s59 = scalar_lea.vmem %s1, 65
  %60 = vst.msk [vmem:[%s59] ss:$8 sm:$0xf] %vm58, %v57
  %s61 = scalar_lea.vmem %s1, 65
  %62 = vst.msk [vmem:[%s61] ss:$8 sm:$0xf0] %vm58, %v57
  %s63 = scalar_lea.vmem %s0, 16
  %v64 = vld [vmem:[%s63] sm:$0xff]
  %65 = vrot.lane.b32.xlu0 %v64, 127
  %v66 = vpop.permute.xlu0 %65
  %vm67 = vcmask 7168
  %s68 = scalar_lea.vmem %s1, 129
  %69 = vst.msk [vmem:[%s68] ss:$8 sm:$0xf] %vm67, %v66
  %s70 = scalar_lea.vmem %s1, 129
  %71 = vst.msk [vmem:[%s70] ss:$8 sm:$0xf0] %vm67, %v66
  %s72 = scalar_lea.vmem %s0, 24
  %v73 = vld [vmem:[%s72] sm:$0xff]
  %74 = vrot.lane.b32.xlu0 %v73, 127
  %v75 = vpop.permute.xlu0 %74
  %vm76 = vcmask 7168
  %s77 = scalar_lea.vmem %s1, 193
  %78 = vst.msk [vmem:[%s77] ss:$8 sm:$0xf] %vm76, %v75
  %s79 = scalar_lea.vmem %s1, 193
  %80 = vst.msk [vmem:[%s79] ss:$8 sm:$0xf0] %vm76, %v75
  %s81 = scalar_lea.vmem %s0, 32
  %v82 = vld [vmem:[%s81] sm:$0xff]
  %83 = vrot.lane.b32.xlu0 %v82, 127
  %v84 = vpop.permute.xlu0 %83
  %vm85 = vcmask 7168
  %s86 = scalar_lea.vmem %s1, 257
  %87 = vst.msk [vmem:[%s86] ss:$8 sm:$0xf] %vm85, %v84
  %s88 = scalar_lea.vmem %s1, 257
  %89 = vst.msk [vmem:[%s88] ss:$8 sm:$0xf0] %vm85, %v84
  %s90 = scalar_lea.vmem %s0, 40
  %v91 = vld [vmem:[%s90] sm:$0xff]
  %92 = vrot.lane.b32.xlu0 %v91, 127
  %v93 = vpop.permute.xlu0 %92
  %vm94 = vcmask 7168
  %s95 = scalar_lea.vmem %s1, 321
  %96 = vst.msk [vmem:[%s95] ss:$8 sm:$0xf] %vm94, %v93
  %s97 = scalar_lea.vmem %s1, 321
  %98 = vst.msk [vmem:[%s97] ss:$8 sm:$0xf0] %vm94, %v93
  %s99 = scalar_lea.vmem %s0, 48
  %v100 = vld [vmem:[%s99] sm:$0x1]
  %101 = vrot.lane.b32.xlu0 %v100, 127
  %v102 = vpop.permute.xlu0 %101
  %vm103 = vcmask 7168
  %s104 = scalar_lea.vmem %s1, 385
  %105 = vst.msk [vmem:[%s104] sm:$0x1] %vm103, %v102
  %v106 = vld [vmem:[%s0] sm:$0xff]
  %107 = vrot.lane.b32.xlu0 %v106, 126
  %v108 = vpop.permute.xlu0 %107
  %vm109 = vcmask 7168
  %s110 = scalar_lea.vmem %s1, 2
  %111 = vst.msk [vmem:[%s110] ss:$8 sm:$0xf] %vm109, %v108
  %s112 = scalar_lea.vmem %s1, 2
  %113 = vst.msk [vmem:[%s112] ss:$8 sm:$0xf0] %vm109, %v108
  %s114 = scalar_lea.vmem %s0, 8
  %v115 = vld [vmem:[%s114] sm:$0xff]
  %116 = vrot.lane.b32.xlu0 %v115, 126
  %v117 = vpop.permute.xlu0 %116
  %vm118 = vcmask 7168
  %s119 = scalar_lea.vmem %s1, 66
  %120 = vst.msk [vmem:[%s119] ss:$8 sm:$0xf] %vm118, %v117
  %s121 = scalar_lea.vmem %s1, 66
  %122 = vst.msk [vmem:[%s121] ss:$8 sm:$0xf0] %vm118, %v117
  %s123 = scalar_lea.vmem %s0, 16
  %v124 = vld [vmem:[%s123] sm:$0xff]
  %125 = vrot.lane.b32.xlu0 %v124, 126
  %v126 = vpop.permute.xlu0 %125
  %vm127 = vcmask 7168
  %s128 = scalar_lea.vmem %s1, 130
  %129 = vst.msk [vmem:[%s128] ss:$8 sm:$0xf] %vm127, %v126
  %s130 = scalar_lea.vmem %s1, 130
  %131 = vst.msk [vmem:[%s130] ss:$8 sm:$0xf0] %vm127, %v126
  %s132 = scalar_lea.vmem %s0, 24
  %v133 = vld [vmem:[%s132] sm:$0xff]
  %134 = vrot.lane.b32.xlu0 %v133, 126
  %v135 = vpop.permute.xlu0 %134
  %vm136 = vcmask 7168
  %s137 = scalar_lea.vmem %s1, 194
  %138 = vst.msk [vmem:[%s137] ss:$8 sm:$0xf] %vm136, %v135
  %s139 = scalar_lea.vmem %s1, 194
  %140 = vst.msk [vmem:[%s139] ss:$8 sm:$0xf0] %vm136, %v135
  %s141 = scalar_lea.vmem %s0, 32
  %v142 = vld [vmem:[%s141] sm:$0xff]
  %143 = vrot.lane.b32.xlu0 %v142, 126
  %v144 = vpop.permute.xlu0 %143
  %vm145 = vcmask 7168
  %s146 = scalar_lea.vmem %s1, 258
  %147 = vst.msk [vmem:[%s146] ss:$8 sm:$0xf] %vm145, %v144
  %s148 = scalar_lea.vmem %s1, 258
  %149 = vst.msk [vmem:[%s148] ss:$8 sm:$0xf0] %vm145, %v144
  %s150 = scalar_lea.vmem %s0, 40
  %v151 = vld [vmem:[%s150] sm:$0xff]
  %152 = vrot.lane.b32.xlu0 %v151, 126
  %v153 = vpop.permute.xlu0 %152
  %vm154 = vcmask 7168
  %s155 = scalar_lea.vmem %s1, 322
  %156 = vst.msk [vmem:[%s155] ss:$8 sm:$0xf] %vm154, %v153
  %s157 = scalar_lea.vmem %s1, 322
  %158 = vst.msk [vmem:[%s157] ss:$8 sm:$0xf0] %vm154, %v153
  %s159 = scalar_lea.vmem %s0, 48
  %v160 = vld [vmem:[%s159] sm:$0x1]
  %161 = vrot.lane.b32.xlu0 %v160, 126
  %v162 = vpop.permute.xlu0 %161
  %vm163 = vcmask 7168
  %s164 = scalar_lea.vmem %s1, 386
  %165 = vst.msk [vmem:[%s164] sm:$0x1] %vm163, %v162
  %v166 = vld [vmem:[%s0] sm:$0xff]
  %167 = vrot.lane.b32.xlu0 %v166, 125
  %v168 = vpop.permute.xlu0 %167
  %vm169 = vcmask 7168
  %s170 = scalar_lea.vmem %s1, 3
  %171 = vst.msk [vmem:[%s170] ss:$8 sm:$0xf] %vm169, %v168
  %s172 = scalar_lea.vmem %s1, 3
  %173 = vst.msk [vmem:[%s172] ss:$8 sm:$0xf0] %vm169, %v168
  %s174 = scalar_lea.vmem %s0, 8
  %v175 = vld [vmem:[%s174] sm:$0xff]
  %176 = vrot.lane.b32.xlu0 %v175, 125
  %v177 = vpop.permute.xlu0 %176
  %vm178 = vcmask 7168
  %s179 = scalar_lea.vmem %s1, 67
  %180 = vst.msk [vmem:[%s179] ss:$8 sm:$0xf] %vm178, %v177
  %s181 = scalar_lea.vmem %s1, 67
  %182 = vst.msk [vmem:[%s181] ss:$8 sm:$0xf0] %vm178, %v177
  %s183 = scalar_lea.vmem %s0, 16
  %v184 = vld [vmem:[%s183] sm:$0xff]
  %185 = vrot.lane.b32.xlu0 %v184, 125
  %v186 = vpop.permute.xlu0 %185
  %vm187 = vcmask 7168
  %s188 = scalar_lea.vmem %s1, 131
  %189 = vst.msk [vmem:[%s188] ss:$8 sm:$0xf] %vm187, %v186
  %s190 = scalar_lea.vmem %s1, 131
  %191 = vst.msk [vmem:[%s190] ss:$8 sm:$0xf0] %vm187, %v186
  %s192 = scalar_lea.vmem %s0, 24
  %v193 = vld [vmem:[%s192] sm:$0xff]
  %194 = vrot.lane.b32.xlu0 %v193, 125
  %v195 = vpop.permute.xlu0 %194
  %vm196 = vcmask 7168
  %s197 = scalar_lea.vmem %s1, 195
  %198 = vst.msk [vmem:[%s197] ss:$8 sm:$0xf] %vm196, %v195
  %s199 = scalar_lea.vmem %s1, 195
  %200 = vst.msk [vmem:[%s199] ss:$8 sm:$0xf0] %vm196, %v195
  %s201 = scalar_lea.vmem %s0, 32
  %v202 = vld [vmem:[%s201] sm:$0xff]
  %203 = vrot.lane.b32.xlu0 %v202, 125
  %v204 = vpop.permute.xlu0 %203
  %vm205 = vcmask 7168
  %s206 = scalar_lea.vmem %s1, 259
  %207 = vst.msk [vmem:[%s206] ss:$8 sm:$0xf] %vm205, %v204
  %s208 = scalar_lea.vmem %s1, 259
  %209 = vst.msk [vmem:[%s208] ss:$8 sm:$0xf0] %vm205, %v204
  %s210 = scalar_lea.vmem %s0, 40
  %v211 = vld [vmem:[%s210] sm:$0xff]
  %212 = vrot.lane.b32.xlu0 %v211, 125
  %v213 = vpop.permute.xlu0 %212
  %vm214 = vcmask 7168
  %s215 = scalar_lea.vmem %s1, 323
  %216 = vst.msk [vmem:[%s215] ss:$8 sm:$0xf] %vm214, %v213
  %s217 = scalar_lea.vmem %s1, 323
  %218 = vst.msk [vmem:[%s217] ss:$8 sm:$0xf0] %vm214, %v213
  %s219 = scalar_lea.vmem %s0, 48
  %v220 = vld [vmem:[%s219] sm:$0x1]
  %221 = vrot.lane.b32.xlu0 %v220, 125
  %v222 = vpop.permute.xlu0 %221
  %vm223 = vcmask 7168
  %s224 = scalar_lea.vmem %s1, 387
  %225 = vst.msk [vmem:[%s224] sm:$0x1] %vm223, %v222
  %v226 = vld [vmem:[%s0] sm:$0xff]
  %227 = vrot.lane.b32.xlu0 %v226, 124
  %v228 = vpop.permute.xlu0 %227
  %vm229 = vcmask 7168
  %s230 = scalar_lea.vmem %s1, 4
  %231 = vst.msk [vmem:[%s230] ss:$8 sm:$0xf] %vm229, %v228
  %s232 = scalar_lea.vmem %s1, 4
  %233 = vst.msk [vmem:[%s232] ss:$8 sm:$0xf0] %vm229, %v228
  %s234 = scalar_lea.vmem %s0, 8
  %v235 = vld [vmem:[%s234] sm:$0xff]
  %236 = vrot.lane.b32.xlu0 %v235, 124
  %v237 = vpop.permute.xlu0 %236
  %vm238 = vcmask 7168
  %s239 = scalar_lea.vmem %s1, 68
  %240 = vst.msk [vmem:[%s239] ss:$8 sm:$0xf] %vm238, %v237
  %s241 = scalar_lea.vmem %s1, 68
  %242 = vst.msk [vmem:[%s241] ss:$8 sm:$0xf0] %vm238, %v237
  %s243 = scalar_lea.vmem %s0, 16
  %v244 = vld [vmem:[%s243] sm:$0xff]
  %245 = vrot.lane.b32.xlu0 %v244, 124
  %v246 = vpop.permute.xlu0 %245
  %vm247 = vcmask 7168
  %s248 = scalar_lea.vmem %s1, 132
  %249 = vst.msk [vmem:[%s248] ss:$8 sm:$0xf] %vm247, %v246
  %s250 = scalar_lea.vmem %s1, 132
  %251 = vst.msk [vmem:[%s250] ss:$8 sm:$0xf0] %vm247, %v246
  %s252 = scalar_lea.vmem %s0, 24
  %v253 = vld [vmem:[%s252] sm:$0xff]
  %254 = vrot.lane.b32.xlu0 %v253, 124
  %v255 = vpop.permute.xlu0 %254
  %vm256 = vcmask 7168
  %s257 = scalar_lea.vmem %s1, 196
  %258 = vst.msk [vmem:[%s257] ss:$8 sm:$0xf] %vm256, %v255
  %s259 = scalar_lea.vmem %s1, 196
  %260 = vst.msk [vmem:[%s259] ss:$8 sm:$0xf0] %vm256, %v255
  %s261 = scalar_lea.vmem %s0, 32
  %v262 = vld [vmem:[%s261] sm:$0xff]
  %263 = vrot.lane.b32.xlu0 %v262, 124
  %v264 = vpop.permute.xlu0 %263
  %vm265 = vcmask 7168
  %s266 = scalar_lea.vmem %s1, 260
  %267 = vst.msk [vmem:[%s266] ss:$8 sm:$0xf] %vm265, %v264
  %s268 = scalar_lea.vmem %s1, 260
  %269 = vst.msk [vmem:[%s268] ss:$8 sm:$0xf0] %vm265, %v264
  %s270 = scalar_lea.vmem %s0, 40
  %v271 = vld [vmem:[%s270] sm:$0xff]
  %272 = vrot.lane.b32.xlu0 %v271, 124
  %v273 = vpop.permute.xlu0 %272
  %vm274 = vcmask 7168
  %s275 = scalar_lea.vmem %s1, 324
  %276 = vst.msk [vmem:[%s275] ss:$8 sm:$0xf] %vm274, %v273
  %s277 = scalar_lea.vmem %s1, 324
  %278 = vst.msk [vmem:[%s277] ss:$8 sm:$0xf0] %vm274, %v273
  %s279 = scalar_lea.vmem %s0, 48
  %v280 = vld [vmem:[%s279] sm:$0x1]
  %281 = vrot.lane.b32.xlu0 %v280, 124
  %v282 = vpop.permute.xlu0 %281
  %vm283 = vcmask 7168
  %s284 = scalar_lea.vmem %s1, 388
  %285 = vst.msk [vmem:[%s284] sm:$0x1] %vm283, %v282
  %v286 = vld [vmem:[%s0] sm:$0xff]
  %287 = vrot.lane.b32.xlu0 %v286, 123
  %v288 = vpop.permute.xlu0 %287
  %vm289 = vcmask 7168
  %s290 = scalar_lea.vmem %s1, 5
  %291 = vst.msk [vmem:[%s290] ss:$8 sm:$0xf] %vm289, %v288
  %s292 = scalar_lea.vmem %s1, 5
  %293 = vst.msk [vmem:[%s292] ss:$8 sm:$0xf0] %vm289, %v288
  %s294 = scalar_lea.vmem %s0, 8
  %v295 = vld [vmem:[%s294] sm:$0xff]
  %296 = vrot.lane.b32.xlu0 %v295, 123
  %v297 = vpop.permute.xlu0 %296
  %vm298 = vcmask 7168
  %s299 = scalar_lea.vmem %s1, 69
  %300 = vst.msk [vmem:[%s299] ss:$8 sm:$0xf] %vm298, %v297
  %s301 = scalar_lea.vmem %s1, 69
  %302 = vst.msk [vmem:[%s301] ss:$8 sm:$0xf0] %vm298, %v297
  %s303 = scalar_lea.vmem %s0, 16
  %v304 = vld [vmem:[%s303] sm:$0xff]
  %305 = vrot.lane.b32.xlu0 %v304, 123
  %v306 = vpop.permute.xlu0 %305
  %vm307 = vcmask 7168
  %s308 = scalar_lea.vmem %s1, 133
  %309 = vst.msk [vmem:[%s308] ss:$8 sm:$0xf] %vm307, %v306
  %s310 = scalar_lea.vmem %s1, 133
  %311 = vst.msk [vmem:[%s310] ss:$8 sm:$0xf0] %vm307, %v306
  %s312 = scalar_lea.vmem %s0, 24
  %v313 = vld [vmem:[%s312] sm:$0xff]
  %314 = vrot.lane.b32.xlu0 %v313, 123
  %v315 = vpop.permute.xlu0 %314
  %vm316 = vcmask 7168
  %s317 = scalar_lea.vmem %s1, 197
  %318 = vst.msk [vmem:[%s317] ss:$8 sm:$0xf] %vm316, %v315
  %s319 = scalar_lea.vmem %s1, 197
  %320 = vst.msk [vmem:[%s319] ss:$8 sm:$0xf0] %vm316, %v315
  %s321 = scalar_lea.vmem %s0, 32
  %v322 = vld [vmem:[%s321] sm:$0xff]
  %323 = vrot.lane.b32.xlu0 %v322, 123
  %v324 = vpop.permute.xlu0 %323
  %vm325 = vcmask 7168
  %s326 = scalar_lea.vmem %s1, 261
  %327 = vst.msk [vmem:[%s326] ss:$8 sm:$0xf] %vm325, %v324
  %s328 = scalar_lea.vmem %s1, 261
  %329 = vst.msk [vmem:[%s328] ss:$8 sm:$0xf0] %vm325, %v324
  %s330 = scalar_lea.vmem %s0, 40
  %v331 = vld [vmem:[%s330] sm:$0xff]
  %332 = vrot.lane.b32.xlu0 %v331, 123
  %v333 = vpop.permute.xlu0 %332
  %vm334 = vcmask 7168
  %s335 = scalar_lea.vmem %s1, 325
  %336 = vst.msk [vmem:[%s335] ss:$8 sm:$0xf] %vm334, %v333
  %s337 = scalar_lea.vmem %s1, 325
  %338 = vst.msk [vmem:[%s337] ss:$8 sm:$0xf0] %vm334, %v333
  %s339 = scalar_lea.vmem %s0, 48
  %v340 = vld [vmem:[%s339] sm:$0x1]
  %341 = vrot.lane.b32.xlu0 %v340, 123
  %v342 = vpop.permute.xlu0 %341
  %vm343 = vcmask 7168
  %s344 = scalar_lea.vmem %s1, 389
  %345 = vst.msk [vmem:[%s344] sm:$0x1] %vm343, %v342
  %v346 = vld [vmem:[%s0] sm:$0xff]
  %347 = vrot.lane.b32.xlu0 %v346, 122
  %v348 = vpop.permute.xlu0 %347
  %vm349 = vcmask 7168
  %s350 = scalar_lea.vmem %s1, 6
  %351 = vst.msk [vmem:[%s350] ss:$8 sm:$0xf] %vm349, %v348
  %s352 = scalar_lea.vmem %s1, 6
  %353 = vst.msk [vmem:[%s352] ss:$8 sm:$0xf0] %vm349, %v348
  %s354 = scalar_lea.vmem %s0, 8
  %v355 = vld [vmem:[%s354] sm:$0xff]
  %356 = vrot.lane.b32.xlu0 %v355, 122
  %v357 = vpop.permute.xlu0 %356
  %vm358 = vcmask 7168
  %s359 = scalar_lea.vmem %s1, 70
  %360 = vst.msk [vmem:[%s359] ss:$8 sm:$0xf] %vm358, %v357
  %s361 = scalar_lea.vmem %s1, 70
  %362 = vst.msk [vmem:[%s361] ss:$8 sm:$0xf0] %vm358, %v357
  %s363 = scalar_lea.vmem %s0, 16
  %v364 = vld [vmem:[%s363] sm:$0xff]
  %365 = vrot.lane.b32.xlu0 %v364, 122
  %v366 = vpop.permute.xlu0 %365
  %vm367 = vcmask 7168
  %s368 = scalar_lea.vmem %s1, 134
  %369 = vst.msk [vmem:[%s368] ss:$8 sm:$0xf] %vm367, %v366
  %s370 = scalar_lea.vmem %s1, 134
  %371 = vst.msk [vmem:[%s370] ss:$8 sm:$0xf0] %vm367, %v366
  %s372 = scalar_lea.vmem %s0, 24
  %v373 = vld [vmem:[%s372] sm:$0xff]
  %374 = vrot.lane.b32.xlu0 %v373, 122
  %v375 = vpop.permute.xlu0 %374
  %vm376 = vcmask 7168
  %s377 = scalar_lea.vmem %s1, 198
  %378 = vst.msk [vmem:[%s377] ss:$8 sm:$0xf] %vm376, %v375
  %s379 = scalar_lea.vmem %s1, 198
  %380 = vst.msk [vmem:[%s379] ss:$8 sm:$0xf0] %vm376, %v375
  %s381 = scalar_lea.vmem %s0, 32
  %v382 = vld [vmem:[%s381] sm:$0xff]
  %383 = vrot.lane.b32.xlu0 %v382, 122
  %v384 = vpop.permute.xlu0 %383
  %vm385 = vcmask 7168
  %s386 = scalar_lea.vmem %s1, 262
  %387 = vst.msk [vmem:[%s386] ss:$8 sm:$0xf] %vm385, %v384
  %s388 = scalar_lea.vmem %s1, 262
  %389 = vst.msk [vmem:[%s388] ss:$8 sm:$0xf0] %vm385, %v384
  %s390 = scalar_lea.vmem %s0, 40
  %v391 = vld [vmem:[%s390] sm:$0xff]
  %392 = vrot.lane.b32.xlu0 %v391, 122
  %v393 = vpop.permute.xlu0 %392
  %vm394 = vcmask 7168
  %s395 = scalar_lea.vmem %s1, 326
  %396 = vst.msk [vmem:[%s395] ss:$8 sm:$0xf] %vm394, %v393
  %s397 = scalar_lea.vmem %s1, 326
  %398 = vst.msk [vmem:[%s397] ss:$8 sm:$0xf0] %vm394, %v393
  %s399 = scalar_lea.vmem %s0, 48
  %v400 = vld [vmem:[%s399] sm:$0x1]
  %401 = vrot.lane.b32.xlu0 %v400, 122
  %v402 = vpop.permute.xlu0 %401
  %vm403 = vcmask 7168
  %s404 = scalar_lea.vmem %s1, 390
  %405 = vst.msk [vmem:[%s404] sm:$0x1] %vm403, %v402
  %v406 = vld [vmem:[%s0] sm:$0xff]
  %407 = vrot.lane.b32.xlu0 %v406, 121
  %v408 = vpop.permute.xlu0 %407
  %vm409 = vcmask 7168
  %s410 = scalar_lea.vmem %s1, 7
  %411 = vst.msk [vmem:[%s410] ss:$8 sm:$0xf] %vm409, %v408
  %s412 = scalar_lea.vmem %s1, 7
  %413 = vst.msk [vmem:[%s412] ss:$8 sm:$0xf0] %vm409, %v408
  %s414 = scalar_lea.vmem %s0, 8
  %v415 = vld [vmem:[%s414] sm:$0xff]
  %416 = vrot.lane.b32.xlu0 %v415, 121
  %v417 = vpop.permute.xlu0 %416
  %vm418 = vcmask 7168
  %s419 = scalar_lea.vmem %s1, 71
  %420 = vst.msk [vmem:[%s419] ss:$8 sm:$0xf] %vm418, %v417
  %s421 = scalar_lea.vmem %s1, 71
  %422 = vst.msk [vmem:[%s421] ss:$8 sm:$0xf0] %vm418, %v417
  %s423 = scalar_lea.vmem %s0, 16
  %v424 = vld [vmem:[%s423] sm:$0xff]
  %425 = vrot.lane.b32.xlu0 %v424, 121
  %v426 = vpop.permute.xlu0 %425
  %vm427 = vcmask 7168
  %s428 = scalar_lea.vmem %s1, 135
  %429 = vst.msk [vmem:[%s428] ss:$8 sm:$0xf] %vm427, %v426
  %s430 = scalar_lea.vmem %s1, 135
  %431 = vst.msk [vmem:[%s430] ss:$8 sm:$0xf0] %vm427, %v426
  %s432 = scalar_lea.vmem %s0, 24
  %v433 = vld [vmem:[%s432] sm:$0xff]
  %434 = vrot.lane.b32.xlu0 %v433, 121
  %v435 = vpop.permute.xlu0 %434
  %vm436 = vcmask 7168
  %s437 = scalar_lea.vmem %s1, 199
  %438 = vst.msk [vmem:[%s437] ss:$8 sm:$0xf] %vm436, %v435
  %s439 = scalar_lea.vmem %s1, 199
  %440 = vst.msk [vmem:[%s439] ss:$8 sm:$0xf0] %vm436, %v435
  %s441 = scalar_lea.vmem %s0, 32
  %v442 = vld [vmem:[%s441] sm:$0xff]
  %443 = vrot.lane.b32.xlu0 %v442, 121
  %v444 = vpop.permute.xlu0 %443
  %vm445 = vcmask 7168
  %s446 = scalar_lea.vmem %s1, 263
  %447 = vst.msk [vmem:[%s446] ss:$8 sm:$0xf] %vm445, %v444
  %s448 = scalar_lea.vmem %s1, 263
  %449 = vst.msk [vmem:[%s448] ss:$8 sm:$0xf0] %vm445, %v444
  %s450 = scalar_lea.vmem %s0, 40
  %v451 = vld [vmem:[%s450] sm:$0xff]
  %452 = vrot.lane.b32.xlu0 %v451, 121
  %v453 = vpop.permute.xlu0 %452
  %vm454 = vcmask 7168
  %s455 = scalar_lea.vmem %s1, 327
  %456 = vst.msk [vmem:[%s455] ss:$8 sm:$0xf] %vm454, %v453
  %s457 = scalar_lea.vmem %s1, 327
  %458 = vst.msk [vmem:[%s457] ss:$8 sm:$0xf0] %vm454, %v453
  %s459 = scalar_lea.vmem %s0, 48
  %v460 = vld [vmem:[%s459] sm:$0x1]
  %461 = vrot.lane.b32.xlu0 %v460, 121
  %v462 = vpop.permute.xlu0 %461
  %vm463 = vcmask 7168
  %s464 = scalar_lea.vmem %s1, 391
  %465 = vst.msk [vmem:[%s464] sm:$0x1] %vm463, %v462

// kernel: _lambda_.44
$region0: #{_lambda_.44}
  #allocation0 [shape = 'u32[]', space=smem, size = 0x4, offset = 0x4, fixed_abs, tag = 'smem constant byte address 0x4 - core index']
  #allocation1 [shape = 'u32[72,128]{1,0:T(1,128)}', space=vmem, size = 0x9000, scoped, tag = 'internal scratch']
  %s0 = inlined_call_operand.vmem [shape: bf16[392,72], index: 0, kind: input, shape index: {}]
  %s1 = inlined_call_operand.vmem [shape: bf16[72,18], index: 1, kind: input, shape index: {}]
  %s2 = inlined_call_operand.vmem [shape: f32[392,1], index: 2, kind: input, shape index: {}]
  %s3 = inlined_call_operand.vmem [shape: f32[392,18], index: 3, kind: output, shape index: {}]
  %s4 = sld [smem:[#allocation0]]
  $region22: #{_lambda_.44} parent=0
    _
  %s6 = ssub.s32 1, %s4
  %s7 = scalar_select 0, %s6, %s4
  // Predicated region
  $region2: #{_lambda_.44} parent=0 // pred_check
    _
  $region3: #{_lambda_.44} parent=0 // pred_check_branch
    %9 = sbr.rel (0) target = $region5
  $region4: #{_lambda_.44} parent=0 // pred_region
    _
  $region5: #{_lambda_.44} parent=0 // pred_fallthru
    _
  // Predicated region
  $region6: #{_lambda_.44} parent=0 // pred_check
    _
  $region7: #{_lambda_.44} parent=0 // pred_check_branch
    %11 = sbr.rel (0) target = $region9
  $region8: #{_lambda_.44} parent=0 // pred_region
    _
  $region9: #{_lambda_.44} parent=0 // pred_fallthru
    _
  // Predicated region
  $region10: #{_lambda_.44} parent=0 // pred_check
    _
  $region11: #{_lambda_.44} parent=0 // pred_check_branch
    %13 = sbr.rel (0) target = $region13
  $region12: #{_lambda_.44} parent=0 // pred_region
    _
  $region13: #{_lambda_.44} parent=0 // pred_fallthru
    _
  %v15 = vld [vmem:[%s0] sm:$0xf]
  %v16 = vld [vmem:[%s0 + $0x4] sm:$0xf]
  %v17 = vld [vmem:[%s0 + $0x8] sm:$0xf]
  %v18 = vld [vmem:[%s0 + $0xc] sm:$0xf]
  %v19 = vld [vmem:[%s0 + $0x10] sm:$0xf]
  %v20 = vld [vmem:[%s0 + $0x14] sm:$0xf]
  %v21 = vld [vmem:[%s0 + $0x18] sm:$0xf]
  %v22 = vld [vmem:[%s0 + $0x1c] sm:$0xf]
  %v23 = vld [vmem:[%s0 + $0x20] sm:$0xf]
  %v24 = vld [vmem:[%s0 + $0x24] sm:$0xf]
  %v25 = vld [vmem:[%s0 + $0x28] sm:$0xf]
  %v26 = vld [vmem:[%s0 + $0x2c] sm:$0xf]
  %v27 = vld [vmem:[%s0 + $0x30] sm:$0xf]
  %v28 = vld [vmem:[%s0 + $0x34] sm:$0xf]
  %v29 = vld [vmem:[%s0 + $0x38] sm:$0xf]
  %v30 = vld [vmem:[%s0 + $0x3c] sm:$0xf]
  %v31 = vld [vmem:[%s0 + $0x40] sm:$0xf]
  %v32 = vld [vmem:[%s0 + $0x44] sm:$0xf]
  %v33 = vld [vmem:[%s0 + $0x48] sm:$0xf]
  %v34 = vld [vmem:[%s0 + $0x4c] sm:$0xf]
  %v35 = vld [vmem:[%s0 + $0x50] sm:$0xf]
  %v36 = vld [vmem:[%s0 + $0x54] sm:$0xf]
  %v37 = vld [vmem:[%s0 + $0x58] sm:$0xf]
  %v38 = vld [vmem:[%s0 + $0x5c] sm:$0xf]
  %v39 = vld [vmem:[%s0 + $0x60] sm:$0xf]
  %v40 = vld [vmem:[%s0 + $0x64] sm:$0xf]
  %v41 = vld [vmem:[%s0 + $0x68] sm:$0xf]
  %v42 = vld [vmem:[%s0 + $0x6c] sm:$0xf]
  %v43 = vld [vmem:[%s0 + $0x70] sm:$0xf]
  %v44 = vld [vmem:[%s0 + $0x74] sm:$0xf]
  %v45 = vld [vmem:[%s0 + $0x78] sm:$0xf]
  %v46 = vld [vmem:[%s0 + $0x7c] sm:$0xf]
  %v47 = vld [vmem:[%s0 + $0x80] sm:$0xf]
  %v48 = vld [vmem:[%s0 + $0x84] sm:$0xf]
  %v49 = vld [vmem:[%s0 + $0x88] sm:$0xf]
  %v50 = vld [vmem:[%s0 + $0x8c] sm:$0xf]
  %v51 = vld [vmem:[%s0 + $0x90] sm:$0xf]
  %v52 = vld [vmem:[%s0 + $0x94] sm:$0xf]
  %v53 = vld [vmem:[%s0 + $0x98] sm:$0xf]
  %v54 = vld [vmem:[%s0 + $0x9c] sm:$0xf]
  %v55 = vld [vmem:[%s0 + $0xa0] sm:$0xf]
  %v56 = vld [vmem:[%s0 + $0xa4] sm:$0xf]
  %v57 = vld [vmem:[%s0 + $0xa8] sm:$0xf]
  %v58 = vld [vmem:[%s0 + $0xac] sm:$0xf]
  %v59 = vld [vmem:[%s0 + $0xb0] sm:$0xf]
  %v60 = vld [vmem:[%s0 + $0xb4] sm:$0xf]
  %v61 = vld [vmem:[%s0 + $0xb8] sm:$0xf]
  %v62 = vld [vmem:[%s0 + $0xbc] sm:$0xf]
  %v63 = vld [vmem:[%s0 + $0xc0] sm:$0xf]
  %v64 = vld [vmem:[%s1] sm:$0xf]
  %v65 = vld [vmem:[%s1 + $0x4] sm:$0xf]
  %v66 = vld [vmem:[%s1 + $0x8] sm:$0xf]
  %v67 = vld [vmem:[%s1 + $0xc] sm:$0xf]
  %v68 = vld [vmem:[%s1 + $0x10] sm:$0xf]
  %v69 = vld [vmem:[%s1 + $0x14] sm:$0xf]
  %v70 = vld [vmem:[%s1 + $0x18] sm:$0xf]
  %v71 = vld [vmem:[%s1 + $0x1c] sm:$0xf]
  %v72 = vld [vmem:[%s1 + $0x20] sm:$0xf]
  %v73 = vld [vmem:[%s2] sm:$0xff]
  %v74 = vld [vmem:[%s2 + $0x8] sm:$0xff]
  %v75 = vld [vmem:[%s2 + $0x10] sm:$0xff]
  %v76 = vld [vmem:[%s2 + $0x18] sm:$0xff]
  %v77 = vld [vmem:[%s2 + $0x20] sm:$0xff]
  %v78 = vld [vmem:[%s2 + $0x28] sm:$0xff]
  %v79 = vld [vmem:[%s2 + $0x30] sm:$0xff]
  %v80 = vld [vmem:[%s2 + $0x38] sm:$0xff]
  %v81 = vld [vmem:[%s2 + $0x40] sm:$0xff]
  %v82 = vld [vmem:[%s2 + $0x48] sm:$0xff]
  %v83 = vld [vmem:[%s2 + $0x50] sm:$0xff]
  %v84 = vld [vmem:[%s2 + $0x58] sm:$0xff]
  %v85 = vld [vmem:[%s2 + $0x60] sm:$0xff]
  %v86 = vld [vmem:[%s2 + $0x68] sm:$0xff]
  %v87 = vld [vmem:[%s2 + $0x70] sm:$0xff]
  %v88 = vld [vmem:[%s2 + $0x78] sm:$0xff]
  %v89 = vld [vmem:[%s2 + $0x80] sm:$0xff]
  %v90 = vld [vmem:[%s2 + $0x88] sm:$0xff]
  %v91 = vld [vmem:[%s2 + $0x90] sm:$0xff]
  %v92 = vld [vmem:[%s2 + $0x98] sm:$0xff]
  %v93 = vld [vmem:[%s2 + $0xa0] sm:$0xff]
  %v94 = vld [vmem:[%s2 + $0xa8] sm:$0xff]
  %v95 = vld [vmem:[%s2 + $0xb0] sm:$0xff]
  %v96 = vld [vmem:[%s2 + $0xb8] sm:$0xff]
  %v97 = vld [vmem:[%s2 + $0xc0] sm:$0xff]
  %v98 = vld [vmem:[%s2 + $0xc8] sm:$0xff]
  %v99 = vld [vmem:[%s2 + $0xd0] sm:$0xff]
  %v100 = vld [vmem:[%s2 + $0xd8] sm:$0xff]
  %v101 = vld [vmem:[%s2 + $0xe0] sm:$0xff]
  %v102 = vld [vmem:[%s2 + $0xe8] sm:$0xff]
  %v103 = vld [vmem:[%s2 + $0xf0] sm:$0xff]
  %v104 = vld [vmem:[%s2 + $0xf8] sm:$0xff]
  %v105 = vld [vmem:[%s2 + $0x100] sm:$0xff]
  %v106 = vld [vmem:[%s2 + $0x108] sm:$0xff]
  %v107 = vld [vmem:[%s2 + $0x110] sm:$0xff]
  %v108 = vld [vmem:[%s2 + $0x118] sm:$0xff]
  %v109 = vld [vmem:[%s2 + $0x120] sm:$0xff]
  %v110 = vld [vmem:[%s2 + $0x128] sm:$0xff]
  %v111 = vld [vmem:[%s2 + $0x130] sm:$0xff]
  %v112 = vld [vmem:[%s2 + $0x138] sm:$0xff]
  %v113 = vld [vmem:[%s2 + $0x140] sm:$0xff]
  %v114 = vld [vmem:[%s2 + $0x148] sm:$0xff]
  %v115 = vld [vmem:[%s2 + $0x150] sm:$0xff]
  %v116 = vld [vmem:[%s2 + $0x158] sm:$0xff]
  %v117 = vld [vmem:[%s2 + $0x160] sm:$0xff]
  %v118 = vld [vmem:[%s2 + $0x168] sm:$0xff]
  %v119 = vld [vmem:[%s2 + $0x170] sm:$0xff]
  %v120 = vld [vmem:[%s2 + $0x178] sm:$0xff]
  %v121 = vld [vmem:[%s2 + $0x180] sm:$0xff]
  %123 = vset.pattern.permute.xlu0 0
  %124 = vperm.xlu0 %123, %v73
  %v125 = vpop.permute.xlu0 %124
  %128 = vset.pattern.permute.xlu0 0
  %129 = vperm.xlu0 %128, %v74
  %v130 = vpop.permute.xlu0 %129
  %133 = vset.pattern.permute.xlu0 0
  %134 = vperm.xlu0 %133, %v75
  %v135 = vpop.permute.xlu0 %134
  %138 = vset.pattern.permute.xlu0 0
  %139 = vperm.xlu0 %138, %v76
  %v140 = vpop.permute.xlu0 %139
  %143 = vset.pattern.permute.xlu0 0
  %144 = vperm.xlu0 %143, %v77
  %v145 = vpop.permute.xlu0 %144
  %148 = vset.pattern.permute.xlu0 0
  %149 = vperm.xlu0 %148, %v78
  %v150 = vpop.permute.xlu0 %149
  %153 = vset.pattern.permute.xlu0 0
  %154 = vperm.xlu0 %153, %v79
  %v155 = vpop.permute.xlu0 %154
  %158 = vset.pattern.permute.xlu0 0
  %159 = vperm.xlu0 %158, %v80
  %v160 = vpop.permute.xlu0 %159
  %163 = vset.pattern.permute.xlu0 0
  %164 = vperm.xlu0 %163, %v81
  %v165 = vpop.permute.xlu0 %164
  %168 = vset.pattern.permute.xlu0 0
  %169 = vperm.xlu0 %168, %v82
  %v170 = vpop.permute.xlu0 %169
  %173 = vset.pattern.permute.xlu0 0
  %174 = vperm.xlu0 %173, %v83
  %v175 = vpop.permute.xlu0 %174
  %178 = vset.pattern.permute.xlu0 0
  %179 = vperm.xlu0 %178, %v84
  %v180 = vpop.permute.xlu0 %179
  %183 = vset.pattern.permute.xlu0 0
  %184 = vperm.xlu0 %183, %v85
  %v185 = vpop.permute.xlu0 %184
  %188 = vset.pattern.permute.xlu0 0
  %189 = vperm.xlu0 %188, %v86
  %v190 = vpop.permute.xlu0 %189
  %193 = vset.pattern.permute.xlu0 0
  %194 = vperm.xlu0 %193, %v87
  %v195 = vpop.permute.xlu0 %194
  %198 = vset.pattern.permute.xlu0 0
  %199 = vperm.xlu0 %198, %v88
  %v200 = vpop.permute.xlu0 %199
  %203 = vset.pattern.permute.xlu0 0
  %204 = vperm.xlu0 %203, %v89
  %v205 = vpop.permute.xlu0 %204
  %208 = vset.pattern.permute.xlu0 0
  %209 = vperm.xlu0 %208, %v90
  %v210 = vpop.permute.xlu0 %209
  %213 = vset.pattern.permute.xlu0 0
  %214 = vperm.xlu0 %213, %v91
  %v215 = vpop.permute.xlu0 %214
  %218 = vset.pattern.permute.xlu0 0
  %219 = vperm.xlu0 %218, %v92
  %v220 = vpop.permute.xlu0 %219
  %223 = vset.pattern.permute.xlu0 0
  %224 = vperm.xlu0 %223, %v93
  %v225 = vpop.permute.xlu0 %224
  %228 = vset.pattern.permute.xlu0 0
  %229 = vperm.xlu0 %228, %v94
  %v230 = vpop.permute.xlu0 %229
  %233 = vset.pattern.permute.xlu0 0
  %234 = vperm.xlu0 %233, %v95
  %v235 = vpop.permute.xlu0 %234
  %238 = vset.pattern.permute.xlu0 0
  %239 = vperm.xlu0 %238, %v96
  %v240 = vpop.permute.xlu0 %239
  %243 = vset.pattern.permute.xlu0 0
  %244 = vperm.xlu0 %243, %v97
  %v245 = vpop.permute.xlu0 %244
  %248 = vset.pattern.permute.xlu0 0
  %249 = vperm.xlu0 %248, %v98
  %v250 = vpop.permute.xlu0 %249
  %253 = vset.pattern.permute.xlu0 0
  %254 = vperm.xlu0 %253, %v99
  %v255 = vpop.permute.xlu0 %254
  %258 = vset.pattern.permute.xlu0 0
  %259 = vperm.xlu0 %258, %v100
  %v260 = vpop.permute.xlu0 %259
  %263 = vset.pattern.permute.xlu0 0
  %264 = vperm.xlu0 %263, %v101
  %v265 = vpop.permute.xlu0 %264
  %268 = vset.pattern.permute.xlu0 0
  %269 = vperm.xlu0 %268, %v102
  %v270 = vpop.permute.xlu0 %269
  %273 = vset.pattern.permute.xlu0 0
  %274 = vperm.xlu0 %273, %v103
  %v275 = vpop.permute.xlu0 %274
  %278 = vset.pattern.permute.xlu0 0
  %279 = vperm.xlu0 %278, %v104
  %v280 = vpop.permute.xlu0 %279
  %283 = vset.pattern.permute.xlu0 0
  %284 = vperm.xlu0 %283, %v105
  %v285 = vpop.permute.xlu0 %284
  %288 = vset.pattern.permute.xlu0 0
  %289 = vperm.xlu0 %288, %v106
  %v290 = vpop.permute.xlu0 %289
  %293 = vset.pattern.permute.xlu0 0
  %294 = vperm.xlu0 %293, %v107
  %v295 = vpop.permute.xlu0 %294
  %298 = vset.pattern.permute.xlu0 0
  %299 = vperm.xlu0 %298, %v108
  %v300 = vpop.permute.xlu0 %299
  %303 = vset.pattern.permute.xlu0 0
  %304 = vperm.xlu0 %303, %v109
  %v305 = vpop.permute.xlu0 %304
  %308 = vset.pattern.permute.xlu0 0
  %309 = vperm.xlu0 %308, %v110
  %v310 = vpop.permute.xlu0 %309
  %313 = vset.pattern.permute.xlu0 0
  %314 = vperm.xlu0 %313, %v111
  %v315 = vpop.permute.xlu0 %314
  %318 = vset.pattern.permute.xlu0 0
  %319 = vperm.xlu0 %318, %v112
  %v320 = vpop.permute.xlu0 %319
  %323 = vset.pattern.permute.xlu0 0
  %324 = vperm.xlu0 %323, %v113
  %v325 = vpop.permute.xlu0 %324
  %328 = vset.pattern.permute.xlu0 0
  %329 = vperm.xlu0 %328, %v114
  %v330 = vpop.permute.xlu0 %329
  %333 = vset.pattern.permute.xlu0 0
  %334 = vperm.xlu0 %333, %v115
  %v335 = vpop.permute.xlu0 %334
  %338 = vset.pattern.permute.xlu0 0
  %339 = vperm.xlu0 %338, %v116
  %v340 = vpop.permute.xlu0 %339
  %343 = vset.pattern.permute.xlu0 0
  %344 = vperm.xlu0 %343, %v117
  %v345 = vpop.permute.xlu0 %344
  %348 = vset.pattern.permute.xlu0 0
  %349 = vperm.xlu0 %348, %v118
  %v350 = vpop.permute.xlu0 %349
  %353 = vset.pattern.permute.xlu0 0
  %354 = vperm.xlu0 %353, %v119
  %v355 = vpop.permute.xlu0 %354
  %358 = vset.pattern.permute.xlu0 0
  %359 = vperm.xlu0 %358, %v120
  %v360 = vpop.permute.xlu0 %359
  %363 = vset.pattern.permute.xlu0 0
  %364 = vperm.xlu0 %363, %v121
  %v365 = vpop.permute.xlu0 %364
  %v416 = vunpack.c.l.b16 %v15
  %v417 = vunpack.c.l.b16 %v16
  %v418 = vunpack.c.l.b16 %v17
  %v419 = vunpack.c.l.b16 %v18
  %v420 = vunpack.c.l.b16 %v19
  %v421 = vunpack.c.l.b16 %v20
  %v422 = vunpack.c.l.b16 %v21
  %v423 = vunpack.c.l.b16 %v22
  %v424 = vunpack.c.l.b16 %v23
  %v425 = vunpack.c.l.b16 %v24
  %v426 = vunpack.c.l.b16 %v25
  %v427 = vunpack.c.l.b16 %v26
  %v428 = vunpack.c.l.b16 %v27
  %v429 = vunpack.c.l.b16 %v28
  %v430 = vunpack.c.l.b16 %v29
  %v431 = vunpack.c.l.b16 %v30
  %v432 = vunpack.c.l.b16 %v31
  %v433 = vunpack.c.l.b16 %v32
  %v434 = vunpack.c.l.b16 %v33
  %v435 = vunpack.c.l.b16 %v34
  %v436 = vunpack.c.l.b16 %v35
  %v437 = vunpack.c.l.b16 %v36
  %v438 = vunpack.c.l.b16 %v37
  %v439 = vunpack.c.l.b16 %v38
  %v440 = vunpack.c.l.b16 %v39
  %v441 = vunpack.c.l.b16 %v40
  %v442 = vunpack.c.l.b16 %v41
  %v443 = vunpack.c.l.b16 %v42
  %v444 = vunpack.c.l.b16 %v43
  %v445 = vunpack.c.l.b16 %v44
  %v446 = vunpack.c.l.b16 %v45
  %v447 = vunpack.c.l.b16 %v46
  %v448 = vunpack.c.l.b16 %v47
  %v449 = vunpack.c.l.b16 %v48
  %v450 = vunpack.c.l.b16 %v49
  %v451 = vunpack.c.l.b16 %v50
  %v452 = vunpack.c.l.b16 %v51
  %v453 = vunpack.c.l.b16 %v52
  %v454 = vunpack.c.l.b16 %v53
  %v455 = vunpack.c.l.b16 %v54
  %v456 = vunpack.c.l.b16 %v55
  %v457 = vunpack.c.l.b16 %v56
  %v458 = vunpack.c.l.b16 %v57
  %v459 = vunpack.c.l.b16 %v58
  %v460 = vunpack.c.l.b16 %v59
  %v461 = vunpack.c.l.b16 %v60
  %v462 = vunpack.c.l.b16 %v61
  %v463 = vunpack.c.l.b16 %v62
  %v464 = vunpack.c.l.b16 %v63
  %v465 = vpack.c.b16 %v417, %v416
  %v466 = vpack.c.b16 %v419, %v418
  %v467 = vpack.c.b16 %v421, %v420
  %v468 = vpack.c.b16 %v423, %v422
  %v469 = vpack.c.b16 %v425, %v424
  %v470 = vpack.c.b16 %v427, %v426
  %v471 = vpack.c.b16 %v429, %v428
  %v472 = vpack.c.b16 %v431, %v430
  %v473 = vpack.c.b16 %v433, %v432
  %v474 = vpack.c.b16 %v435, %v434
  %v475 = vpack.c.b16 %v437, %v436
  %v476 = vpack.c.b16 %v439, %v438
  %v477 = vpack.c.b16 %v441, %v440
  %v478 = vpack.c.b16 %v443, %v442
  %v479 = vpack.c.b16 %v445, %v444
  %v480 = vpack.c.b16 %v447, %v446
  %v481 = vpack.c.b16 %v449, %v448
  %v482 = vpack.c.b16 %v451, %v450
  %v483 = vpack.c.b16 %v453, %v452
  %v484 = vpack.c.b16 %v455, %v454
  %v485 = vpack.c.b16 %v457, %v456
  %v486 = vpack.c.b16 %v459, %v458
  %v487 = vpack.c.b16 %v461, %v460
  %v488 = vpack.c.b16 %v463, %v462
  %v489 = vpack.c.b16 %v464, %v464
  %v499 = vunpack.c.l.b16 %v64
  %v500 = vunpack.c.l.b16 %v65
  %v501 = vunpack.c.l.b16 %v66
  %v502 = vunpack.c.l.b16 %v67
  %v503 = vunpack.c.l.b16 %v68
  %v504 = vunpack.c.l.b16 %v69
  %v505 = vunpack.c.l.b16 %v70
  %v506 = vunpack.c.l.b16 %v71
  %v507 = vunpack.c.l.b16 %v72
  %v508 = vpack.c.b16 %v500, %v499
  %v509 = vpack.c.b16 %v502, %v501
  %v510 = vpack.c.b16 %v504, %v503
  %v511 = vpack.c.b16 %v506, %v505
  %v512 = vpack.c.b16 %v507, %v507
  %vm517 = vcmask 588800
  %v519 = vsel %vm517, %v465, 0
  %v522 = vsel %vm517, %v466, 0
  %v525 = vsel %vm517, %v467, 0
  %v528 = vsel %vm517, %v468, 0
  %v531 = vsel %vm517, %v469, 0
  %v534 = vsel %vm517, %v470, 0
  %v537 = vsel %vm517, %v471, 0
  %v540 = vsel %vm517, %v472, 0
  %v543 = vsel %vm517, %v473, 0
  %v546 = vsel %vm517, %v474, 0
  %v549 = vsel %vm517, %v475, 0
  %v552 = vsel %vm517, %v476, 0
  %v555 = vsel %vm517, %v477, 0
  %v558 = vsel %vm517, %v478, 0
  %v561 = vsel %vm517, %v479, 0
  %v564 = vsel %vm517, %v480, 0
  %v567 = vsel %vm517, %v481, 0
  %v570 = vsel %vm517, %v482, 0
  %v573 = vsel %vm517, %v483, 0
  %v576 = vsel %vm517, %v484, 0
  %v579 = vsel %vm517, %v485, 0
  %v582 = vsel %vm517, %v486, 0
  %v585 = vsel %vm517, %v487, 0
  %v588 = vsel %vm517, %v488, 0
  %v591 = vsel %vm517, %v489, 0
  %vm593 = vcmask 1043456
  %v595 = vsel %vm593, %v512, 0
  %597 = vmatpush.bf16.msra.mxu0 0
  %598 = vmatpush.bf16.msra.mxu0 0
  %599 = vmatpush.bf16.msra.mxu0 0
  %600 = vmatpush.bf16.msra.mxu0 %v595
  %601 = vmatpush.bf16.msra.mxu0 %v511
  %602 = vmatpush.bf16.msra.mxu0 %v510
  %603 = vmatpush.bf16.msra.mxu0 %v509
  %604 = vmatpush.bf16.msra.mxu0 %v508
  %605 = vmatmul.bf16.gmra.mxu0 %v519
  %v606 = vpop.f32.mrf.mxu0
  %v607 = vadd.f32 %v125, %v606
  %v608 = vpop.f32.mrf.mxu0
  %v609 = vadd.f32 %v130, %v608
  %610 = vmatmul.bf16.gmra.mxu0 %v522
  %v611 = vpop.f32.mrf.mxu0
  %v612 = vadd.f32 %v135, %v611
  %v613 = vpop.f32.mrf.mxu0
  %v614 = vadd.f32 %v140, %v613
  %615 = vmatmul.bf16.gmra.mxu0 %v525
  %v616 = vpop.f32.mrf.mxu0
  %v617 = vadd.f32 %v145, %v616
  %v618 = vpop.f32.mrf.mxu0
  %v619 = vadd.f32 %v150, %v618
  %620 = vmatmul.bf16.gmra.mxu0 %v528
  %v621 = vpop.f32.mrf.mxu0
  %v622 = vadd.f32 %v155, %v621
  %v623 = vpop.f32.mrf.mxu0
  %v624 = vadd.f32 %v160, %v623
  %625 = vmatmul.bf16.gmra.mxu0 %v531
  %v626 = vpop.f32.mrf.mxu0
  %v627 = vadd.f32 %v165, %v626
  %v628 = vpop.f32.mrf.mxu0
  %v629 = vadd.f32 %v170, %v628
  %630 = vmatmul.bf16.gmra.mxu0 %v534
  %v631 = vpop.f32.mrf.mxu0
  %v632 = vadd.f32 %v175, %v631
  %v633 = vpop.f32.mrf.mxu0
  %v634 = vadd.f32 %v180, %v633
  %635 = vmatmul.bf16.gmra.mxu0 %v537
  %v636 = vpop.f32.mrf.mxu0
  %v637 = vadd.f32 %v185, %v636
  %v638 = vpop.f32.mrf.mxu0
  %v639 = vadd.f32 %v190, %v638
  %640 = vmatmul.bf16.gmra.mxu0 %v540
  %v641 = vpop.f32.mrf.mxu0
  %v642 = vadd.f32 %v195, %v641
  %v643 = vpop.f32.mrf.mxu0
  %v644 = vadd.f32 %v200, %v643
  %645 = vmatmul.bf16.gmra.mxu0 %v543
  %v646 = vpop.f32.mrf.mxu0
  %v647 = vadd.f32 %v205, %v646
  %v648 = vpop.f32.mrf.mxu0
  %v649 = vadd.f32 %v210, %v648
  %650 = vmatmul.bf16.gmra.mxu0 %v546
  %v651 = vpop.f32.mrf.mxu0
  %v652 = vadd.f32 %v215, %v651
  %v653 = vpop.f32.mrf.mxu0
  %v654 = vadd.f32 %v220, %v653
  %655 = vmatmul.bf16.gmra.mxu0 %v549
  %v656 = vpop.f32.mrf.mxu0
  %v657 = vadd.f32 %v225, %v656
  %v658 = vpop.f32.mrf.mxu0
  %v659 = vadd.f32 %v230, %v658
  %660 = vmatmul.bf16.gmra.mxu0 %v552
  %v661 = vpop.f32.mrf.mxu0
  %v662 = vadd.f32 %v235, %v661
  %v663 = vpop.f32.mrf.mxu0
  %v664 = vadd.f32 %v240, %v663
  %665 = vmatmul.bf16.gmra.mxu0 %v555
  %v666 = vpop.f32.mrf.mxu0
  %v667 = vadd.f32 %v245, %v666
  %v668 = vpop.f32.mrf.mxu0
  %v669 = vadd.f32 %v250, %v668
  %670 = vmatmul.bf16.gmra.mxu0 %v558
  %v671 = vpop.f32.mrf.mxu0
  %v672 = vadd.f32 %v255, %v671
  %v673 = vpop.f32.mrf.mxu0
  %v674 = vadd.f32 %v260, %v673
  %675 = vmatmul.bf16.gmra.mxu0 %v561
  %v676 = vpop.f32.mrf.mxu0
  %v677 = vadd.f32 %v265, %v676
  %v678 = vpop.f32.mrf.mxu0
  %v679 = vadd.f32 %v270, %v678
  %680 = vmatmul.bf16.gmra.mxu0 %v564
  %v681 = vpop.f32.mrf.mxu0
  %v682 = vadd.f32 %v275, %v681
  %v683 = vpop.f32.mrf.mxu0
  %v684 = vadd.f32 %v280, %v683
  %685 = vmatmul.bf16.gmra.mxu0 %v567
  %v686 = vpop.f32.mrf.mxu0
  %v687 = vadd.f32 %v285, %v686
  %v688 = vpop.f32.mrf.mxu0
  %v689 = vadd.f32 %v290, %v688
  %690 = vmatmul.bf16.gmra.mxu0 %v570
  %v691 = vpop.f32.mrf.mxu0
  %v692 = vadd.f32 %v295, %v691
  %v693 = vpop.f32.mrf.mxu0
  %v694 = vadd.f32 %v300, %v693
  %695 = vmatmul.bf16.gmra.mxu0 %v573
  %v696 = vpop.f32.mrf.mxu0
  %v697 = vadd.f32 %v305, %v696
  %v698 = vpop.f32.mrf.mxu0
  %v699 = vadd.f32 %v310, %v698
  %700 = vmatmul.bf16.gmra.mxu0 %v576
  %v701 = vpop.f32.mrf.mxu0
  %v702 = vadd.f32 %v315, %v701
  %v703 = vpop.f32.mrf.mxu0
  %v704 = vadd.f32 %v320, %v703
  %705 = vmatmul.bf16.gmra.mxu0 %v579
  %v706 = vpop.f32.mrf.mxu0
  %v707 = vadd.f32 %v325, %v706
  %v708 = vpop.f32.mrf.mxu0
  %v709 = vadd.f32 %v330, %v708
  %710 = vmatmul.bf16.gmra.mxu0 %v582
  %v711 = vpop.f32.mrf.mxu0
  %v712 = vadd.f32 %v335, %v711
  %v713 = vpop.f32.mrf.mxu0
  %v714 = vadd.f32 %v340, %v713
  %715 = vmatmul.bf16.gmra.mxu0 %v585
  %v716 = vpop.f32.mrf.mxu0
  %v717 = vadd.f32 %v345, %v716
  %v718 = vpop.f32.mrf.mxu0
  %v719 = vadd.f32 %v350, %v718
  %720 = vmatmul.bf16.gmra.mxu0 %v588
  %v721 = vpop.f32.mrf.mxu0
  %v722 = vadd.f32 %v355, %v721
  %v723 = vpop.f32.mrf.mxu0
  %v724 = vadd.f32 %v360, %v723
  %725 = vmatmul.bf16.gmra.mxu0 %v591
  %v726 = vpop.f32.mrf.mxu0
  %v727 = vadd.f32 %v365, %v726
  %v728 = vpop.f32.mrf.mxu0
  %729 = vdwg.mxu0
  %vm730 = vcmask 146432
  %731 = vst.msk [vmem:[%s3] sm:$0xff] %vm730, %v607
  %732 = vst.msk [vmem:[%s3 + $0x8] sm:$0xff] %vm730, %v609
  %733 = vst.msk [vmem:[%s3 + $0x10] sm:$0xff] %vm730, %v612
  %734 = vst.msk [vmem:[%s3 + $0x18] sm:$0xff] %vm730, %v614
  %735 = vst.msk [vmem:[%s3 + $0x20] sm:$0xff] %vm730, %v617
  %736 = vst.msk [vmem:[%s3 + $0x28] sm:$0xff] %vm730, %v619
  %737 = vst.msk [vmem:[%s3 + $0x30] sm:$0xff] %vm730, %v622
  %738 = vst.msk [vmem:[%s3 + $0x38] sm:$0xff] %vm730, %v624
  %739 = vst.msk [vmem:[%s3 + $0x40] sm:$0xff] %vm730, %v627
  %740 = vst.msk [vmem:[%s3 + $0x48] sm:$0xff] %vm730, %v629
  %741 = vst.msk [vmem:[%s3 + $0x50] sm:$0xff] %vm730, %v632
  %742 = vst.msk [vmem:[%s3 + $0x58] sm:$0xff] %vm730, %v634
  %743 = vst.msk [vmem:[%s3 + $0x60] sm:$0xff] %vm730, %v637
  %744 = vst.msk [vmem:[%s3 + $0x68] sm:$0xff] %vm730, %v639
  %745 = vst.msk [vmem:[%s3 + $0x70] sm:$0xff] %vm730, %v642
  %746 = vst.msk [vmem:[%s3 + $0x78] sm:$0xff] %vm730, %v644
  %747 = vst.msk [vmem:[%s3 + $0x80] sm:$0xff] %vm730, %v647
  %748 = vst.msk [vmem:[%s3 + $0x88] sm:$0xff] %vm730, %v649
  %749 = vst.msk [vmem:[%s3 + $0x90] sm:$0xff] %vm730, %v652
  %750 = vst.msk [vmem:[%s3 + $0x98] sm:$0xff] %vm730, %v654
  %751 = vst.msk [vmem:[%s3 + $0xa0] sm:$0xff] %vm730, %v657
  %752 = vst.msk [vmem:[%s3 + $0xa8] sm:$0xff] %vm730, %v659
  %753 = vst.msk [vmem:[%s3 + $0xb0] sm:$0xff] %vm730, %v662
  %754 = vst.msk [vmem:[%s3 + $0xb8] sm:$0xff] %vm730, %v664
  %755 = vst.msk [vmem:[%s3 + $0xc0] sm:$0xff] %vm730, %v667
  %756 = vst.msk [vmem:[%s3 + $0xc8] sm:$0xff] %vm730, %v669
  %757 = vst.msk [vmem:[%s3 + $0xd0] sm:$0xff] %vm730, %v672
  %758 = vst.msk [vmem:[%s3 + $0xd8] sm:$0xff] %vm730, %v674
  %759 = vst.msk [vmem:[%s3 + $0xe0] sm:$0xff] %vm730, %v677
  %760 = vst.msk [vmem:[%s3 + $0xe8] sm:$0xff] %vm730, %v679
  %761 = vst.msk [vmem:[%s3 + $0xf0] sm:$0xff] %vm730, %v682
  %762 = vst.msk [vmem:[%s3 + $0xf8] sm:$0xff] %vm730, %v684
  %763 = vst.msk [vmem:[%s3 + $0x100] sm:$0xff] %vm730, %v687
  %764 = vst.msk [vmem:[%s3 + $0x108] sm:$0xff] %vm730, %v689
  %765 = vst.msk [vmem:[%s3 + $0x110] sm:$0xff] %vm730, %v692
  %766 = vst.msk [vmem:[%s3 + $0x118] sm:$0xff] %vm730, %v694
  %767 = vst.msk [vmem:[%s3 + $0x120] sm:$0xff] %vm730, %v697
  %768 = vst.msk [vmem:[%s3 + $0x128] sm:$0xff] %vm730, %v699
  %769 = vst.msk [vmem:[%s3 + $0x130] sm:$0xff] %vm730, %v702
  %770 = vst.msk [vmem:[%s3 + $0x138] sm:$0xff] %vm730, %v704
  %771 = vst.msk [vmem:[%s3 + $0x140] sm:$0xff] %vm730, %v707
  %772 = vst.msk [vmem:[%s3 + $0x148] sm:$0xff] %vm730, %v709
  %773 = vst.msk [vmem:[%s3 + $0x150] sm:$0xff] %vm730, %v712
  %774 = vst.msk [vmem:[%s3 + $0x158] sm:$0xff] %vm730, %v714
  %775 = vst.msk [vmem:[%s3 + $0x160] sm:$0xff] %vm730, %v717
  %776 = vst.msk [vmem:[%s3 + $0x168] sm:$0xff] %vm730, %v719
  %777 = vst.msk [vmem:[%s3 + $0x170] sm:$0xff] %vm730, %v722
  %778 = vst.msk [vmem:[%s3 + $0x178] sm:$0xff] %vm730, %v724
  %779 = vst.msk [vmem:[%s3 + $0x180] sm:$0xff] %vm730, %v727
  // Predicated region
  $region14: #{_lambda_.44} parent=0 // pred_check
    _
  $region15: #{_lambda_.44} parent=0 // pred_check_branch
    %781 = sbr.rel (0) target = $region17
  $region16: #{_lambda_.44} parent=0 // pred_region
    _
  $region17: #{_lambda_.44} parent=0 // pred_fallthru
    _
  // Predicated region
  $region18: #{_lambda_.44} parent=0 // pred_check
    _
  $region19: #{_lambda_.44} parent=0 // pred_check_branch
    %783 = sbr.rel (0) target = $region21
  $region20: #{_lambda_.44} parent=0 // pred_region
    _
  $region21: #{_lambda_.44} parent=0 // pred_fallthru
    _

// kernel: tile.28
$region0: #{tile.28}
  #allocation0 [shape = 's32[1]{0}', space=sflag, size = 0x4, scoped, tag = 'scoped memory for tile.28']
  %s0 = inlined_call_operand.vmem [shape: f32[8], index: 0, kind: input, shape index: {}]
  %s1 = inlined_call_operand.vmem [shape: f32[16,8], index: 1, kind: output, shape index: {}]
  // Predicated region
  $region2: #{tile.28} parent=0 // pred_check
    _
  $region3: #{tile.28} parent=0 // pred_check_branch
    %3 = sbr.rel (0) target = $region5
  $region4: #{tile.28} parent=0 // pred_region
    _
  $region5: #{tile.28} parent=0 // pred_fallthru
    _
  %v4 = vld [vmem:[%s0] ss:$0 sm:$0xff]
  %5 = vst [vmem:[%s1] sm:$0xff] %v4
  %s6 = scalar_lea.vmem %s1, 8
  %7 = vst [vmem:[%s6] sm:$0xff] %v4

// kernel: tile.1
$region0: #{tile.1}
  %s0 = inlined_call_operand.vmem [shape: f32[16,8], index: 0, kind: input, shape index: {}]
  %s1 = inlined_call_operand.vmem [shape: f32[128,1], index: 1, kind: output, shape index: {}]
  %v2 = vld [vmem:[%s0] sm:$0xff]
  %vm3 = vcmask 7168
  %4 = vst.msk [vmem:[%s1] ss:$8 sm:$0xf] %vm3, %v2
  %5 = vst.msk [vmem:[%s1] ss:$8 sm:$0xf0] %vm3, %v2
  %s6 = scalar_lea.vmem %s0, 8
  %v7 = vld [vmem:[%s6] sm:$0xff]
  %vm8 = vcmask 7168
  %s9 = scalar_lea.vmem %s1, 64
  %10 = vst.msk [vmem:[%s9] ss:$8 sm:$0xf] %vm8, %v7
  %s11 = scalar_lea.vmem %s1, 64
  %12 = vst.msk [vmem:[%s11] ss:$8 sm:$0xf0] %vm8, %v7
  %v13 = vld [vmem:[%s0] sm:$0xff]
  %14 = vrot.lane.b32.xlu0 %v13, 127
  %v15 = vpop.permute.xlu0 %14
  %vm16 = vcmask 7168
  %s17 = scalar_lea.vmem %s1, 1
  %18 = vst.msk [vmem:[%s17] ss:$8 sm:$0xf] %vm16, %v15
  %s19 = scalar_lea.vmem %s1, 1
  %20 = vst.msk [vmem:[%s19] ss:$8 sm:$0xf0] %vm16, %v15
  %s21 = scalar_lea.vmem %s0, 8
  %v22 = vld [vmem:[%s21] sm:$0xff]
  %23 = vrot.lane.b32.xlu0 %v22, 127
  %v24 = vpop.permute.xlu0 %23
  %vm25 = vcmask 7168
  %s26 = scalar_lea.vmem %s1, 65
  %27 = vst.msk [vmem:[%s26] ss:$8 sm:$0xf] %vm25, %v24
  %s28 = scalar_lea.vmem %s1, 65
  %29 = vst.msk [vmem:[%s28] ss:$8 sm:$0xf0] %vm25, %v24
  %v30 = vld [vmem:[%s0] sm:$0xff]
  %31 = vrot.lane.b32.xlu0 %v30, 126
  %v32 = vpop.permute.xlu0 %31
  %vm33 = vcmask 7168
  %s34 = scalar_lea.vmem %s1, 2
  %35 = vst.msk [vmem:[%s34] ss:$8 sm:$0xf] %vm33, %v32
  %s36 = scalar_lea.vmem %s1, 2
  %37 = vst.msk [vmem:[%s36] ss:$8 sm:$0xf0] %vm33, %v32
  %s38 = scalar_lea.vmem %s0, 8
  %v39 = vld [vmem:[%s38] sm:$0xff]
  %40 = vrot.lane.b32.xlu0 %v39, 126
  %v41 = vpop.permute.xlu0 %40
  %vm42 = vcmask 7168
  %s43 = scalar_lea.vmem %s1, 66
  %44 = vst.msk [vmem:[%s43] ss:$8 sm:$0xf] %vm42, %v41
  %s45 = scalar_lea.vmem %s1, 66
  %46 = vst.msk [vmem:[%s45] ss:$8 sm:$0xf0] %vm42, %v41
  %v47 = vld [vmem:[%s0] sm:$0xff]
  %48 = vrot.lane.b32.xlu0 %v47, 125
  %v49 = vpop.permute.xlu0 %48
  %vm50 = vcmask 7168
  %s51 = scalar_lea.vmem %s1, 3
  %52 = vst.msk [vmem:[%s51] ss:$8 sm:$0xf] %vm50, %v49
  %s53 = scalar_lea.vmem %s1, 3
  %54 = vst.msk [vmem:[%s53] ss:$8 sm:$0xf0] %vm50, %v49
  %s55 = scalar_lea.vmem %s0, 8
  %v56 = vld [vmem:[%s55] sm:$0xff]
  %57 = vrot.lane.b32.xlu0 %v56, 125
  %v58 = vpop.permute.xlu0 %57
  %vm59 = vcmask 7168
  %s60 = scalar_lea.vmem %s1, 67
  %61 = vst.msk [vmem:[%s60] ss:$8 sm:$0xf] %vm59, %v58
  %s62 = scalar_lea.vmem %s1, 67
  %63 = vst.msk [vmem:[%s62] ss:$8 sm:$0xf0] %vm59, %v58
  %v64 = vld [vmem:[%s0] sm:$0xff]
  %65 = vrot.lane.b32.xlu0 %v64, 124
  %v66 = vpop.permute.xlu0 %65
  %vm67 = vcmask 7168
  %s68 = scalar_lea.vmem %s1, 4
  %69 = vst.msk [vmem:[%s68] ss:$8 sm:$0xf] %vm67, %v66
  %s70 = scalar_lea.vmem %s1, 4
  %71 = vst.msk [vmem:[%s70] ss:$8 sm:$0xf0] %vm67, %v66
  %s72 = scalar_lea.vmem %s0, 8
  %v73 = vld [vmem:[%s72] sm:$0xff]
  %74 = vrot.lane.b32.xlu0 %v73, 124
  %v75 = vpop.permute.xlu0 %74
  %vm76 = vcmask 7168
  %s77 = scalar_lea.vmem %s1, 68
  %78 = vst.msk [vmem:[%s77] ss:$8 sm:$0xf] %vm76, %v75
  %s79 = scalar_lea.vmem %s1, 68
  %80 = vst.msk [vmem:[%s79] ss:$8 sm:$0xf0] %vm76, %v75
  %v81 = vld [vmem:[%s0] sm:$0xff]
  %82 = vrot.lane.b32.xlu0 %v81, 123
  %v83 = vpop.permute.xlu0 %82
  %vm84 = vcmask 7168
  %s85 = scalar_lea.vmem %s1, 5
  %86 = vst.msk [vmem:[%s85] ss:$8 sm:$0xf] %vm84, %v83
  %s87 = scalar_lea.vmem %s1, 5
  %88 = vst.msk [vmem:[%s87] ss:$8 sm:$0xf0] %vm84, %v83
  %s89 = scalar_lea.vmem %s0, 8
  %v90 = vld [vmem:[%s89] sm:$0xff]
  %91 = vrot.lane.b32.xlu0 %v90, 123
  %v92 = vpop.permute.xlu0 %91
  %vm93 = vcmask 7168
  %s94 = scalar_lea.vmem %s1, 69
  %95 = vst.msk [vmem:[%s94] ss:$8 sm:$0xf] %vm93, %v92
  %s96 = scalar_lea.vmem %s1, 69
  %97 = vst.msk [vmem:[%s96] ss:$8 sm:$0xf0] %vm93, %v92
  %v98 = vld [vmem:[%s0] sm:$0xff]
  %99 = vrot.lane.b32.xlu0 %v98, 122
  %v100 = vpop.permute.xlu0 %99
  %vm101 = vcmask 7168
  %s102 = scalar_lea.vmem %s1, 6
  %103 = vst.msk [vmem:[%s102] ss:$8 sm:$0xf] %vm101, %v100
  %s104 = scalar_lea.vmem %s1, 6
  %105 = vst.msk [vmem:[%s104] ss:$8 sm:$0xf0] %vm101, %v100
  %s106 = scalar_lea.vmem %s0, 8
  %v107 = vld [vmem:[%s106] sm:$0xff]
  %108 = vrot.lane.b32.xlu0 %v107, 122
  %v109 = vpop.permute.xlu0 %108
  %vm110 = vcmask 7168
  %s111 = scalar_lea.vmem %s1, 70
  %112 = vst.msk [vmem:[%s111] ss:$8 sm:$0xf] %vm110, %v109
  %s113 = scalar_lea.vmem %s1, 70
  %114 = vst.msk [vmem:[%s113] ss:$8 sm:$0xf0] %vm110, %v109
  %v115 = vld [vmem:[%s0] sm:$0xff]
  %116 = vrot.lane.b32.xlu0 %v115, 121
  %v117 = vpop.permute.xlu0 %116
  %vm118 = vcmask 7168
  %s119 = scalar_lea.vmem %s1, 7
  %120 = vst.msk [vmem:[%s119] ss:$8 sm:$0xf] %vm118, %v117
  %s121 = scalar_lea.vmem %s1, 7
  %122 = vst.msk [vmem:[%s121] ss:$8 sm:$0xf0] %vm118, %v117
  %s123 = scalar_lea.vmem %s0, 8
  %v124 = vld [vmem:[%s123] sm:$0xff]
  %125 = vrot.lane.b32.xlu0 %v124, 121
  %v126 = vpop.permute.xlu0 %125
  %vm127 = vcmask 7168
  %s128 = scalar_lea.vmem %s1, 71
  %129 = vst.msk [vmem:[%s128] ss:$8 sm:$0xf] %vm127, %v126
  %s130 = scalar_lea.vmem %s1, 71
  %131 = vst.msk [vmem:[%s130] ss:$8 sm:$0xf0] %vm127, %v126

// kernel: _lambda_.42
$region0: #{_lambda_.42}
  #allocation0 [shape = 'u32[]', space=smem, size = 0x4, offset = 0x4, fixed_abs, tag = 'smem constant byte address 0x4 - core index']
  #allocation1 [shape = 'u32[72,128]{1,0:T(1,128)}', space=vmem, size = 0x9000, scoped, tag = 'internal scratch']
  %s0 = inlined_call_operand.vmem [shape: bf16[128,32], index: 0, kind: input, shape index: {}]
  %s1 = inlined_call_operand.vmem [shape: bf16[32,50], index: 1, kind: input, shape index: {}]
  %s2 = inlined_call_operand.vmem [shape: f32[128,1], index: 2, kind: input, shape index: {}]
  %s3 = inlined_call_operand.vmem [shape: f32[128,50], index: 3, kind: output, shape index: {}]
  %s4 = sld [smem:[#allocation0]]
  $region22: #{_lambda_.42} parent=0
    _
  %s6 = ssub.s32 1, %s4
  %s7 = scalar_select 0, %s6, %s4
  // Predicated region
  $region2: #{_lambda_.42} parent=0 // pred_check
    _
  $region3: #{_lambda_.42} parent=0 // pred_check_branch
    %9 = sbr.rel (0) target = $region5
  $region4: #{_lambda_.42} parent=0 // pred_region
    _
  $region5: #{_lambda_.42} parent=0 // pred_fallthru
    _
  // Predicated region
  $region6: #{_lambda_.42} parent=0 // pred_check
    _
  $region7: #{_lambda_.42} parent=0 // pred_check_branch
    %11 = sbr.rel (0) target = $region9
  $region8: #{_lambda_.42} parent=0 // pred_region
    _
  $region9: #{_lambda_.42} parent=0 // pred_fallthru
    _
  // Predicated region
  $region10: #{_lambda_.42} parent=0 // pred_check
    _
  $region11: #{_lambda_.42} parent=0 // pred_check_branch
    %13 = sbr.rel (0) target = $region13
  $region12: #{_lambda_.42} parent=0 // pred_region
    _
  $region13: #{_lambda_.42} parent=0 // pred_fallthru
    _
  %v15 = vld [vmem:[%s0] sm:$0xf]
  %v16 = vld [vmem:[%s0 + $0x4] sm:$0xf]
  %v17 = vld [vmem:[%s0 + $0x8] sm:$0xf]
  %v18 = vld [vmem:[%s0 + $0xc] sm:$0xf]
  %v19 = vld [vmem:[%s0 + $0x10] sm:$0xf]
  %v20 = vld [vmem:[%s0 + $0x14] sm:$0xf]
  %v21 = vld [vmem:[%s0 + $0x18] sm:$0xf]
  %v22 = vld [vmem:[%s0 + $0x1c] sm:$0xf]
  %v23 = vld [vmem:[%s0 + $0x20] sm:$0xf]
  %v24 = vld [vmem:[%s0 + $0x24] sm:$0xf]
  %v25 = vld [vmem:[%s0 + $0x28] sm:$0xf]
  %v26 = vld [vmem:[%s0 + $0x2c] sm:$0xf]
  %v27 = vld [vmem:[%s0 + $0x30] sm:$0xf]
  %v28 = vld [vmem:[%s0 + $0x34] sm:$0xf]
  %v29 = vld [vmem:[%s0 + $0x38] sm:$0xf]
  %v30 = vld [vmem:[%s0 + $0x3c] sm:$0xf]
  %v31 = vld [vmem:[%s1] sm:$0xf]
  %v32 = vld [vmem:[%s1 + $0x4] sm:$0xf]
  %v33 = vld [vmem:[%s1 + $0x8] sm:$0xf]
  %v34 = vld [vmem:[%s1 + $0xc] sm:$0xf]
  %v35 = vld [vmem:[%s2] sm:$0xff]
  %v36 = vld [vmem:[%s2 + $0x8] sm:$0xff]
  %v37 = vld [vmem:[%s2 + $0x10] sm:$0xff]
  %v38 = vld [vmem:[%s2 + $0x18] sm:$0xff]
  %v39 = vld [vmem:[%s2 + $0x20] sm:$0xff]
  %v40 = vld [vmem:[%s2 + $0x28] sm:$0xff]
  %v41 = vld [vmem:[%s2 + $0x30] sm:$0xff]
  %v42 = vld [vmem:[%s2 + $0x38] sm:$0xff]
  %v43 = vld [vmem:[%s2 + $0x40] sm:$0xff]
  %v44 = vld [vmem:[%s2 + $0x48] sm:$0xff]
  %v45 = vld [vmem:[%s2 + $0x50] sm:$0xff]
  %v46 = vld [vmem:[%s2 + $0x58] sm:$0xff]
  %v47 = vld [vmem:[%s2 + $0x60] sm:$0xff]
  %v48 = vld [vmem:[%s2 + $0x68] sm:$0xff]
  %v49 = vld [vmem:[%s2 + $0x70] sm:$0xff]
  %v50 = vld [vmem:[%s2 + $0x78] sm:$0xff]
  %52 = vset.pattern.permute.xlu0 0
  %53 = vperm.xlu0 %52, %v35
  %v54 = vpop.permute.xlu0 %53
  %57 = vset.pattern.permute.xlu0 0
  %58 = vperm.xlu0 %57, %v36
  %v59 = vpop.permute.xlu0 %58
  %62 = vset.pattern.permute.xlu0 0
  %63 = vperm.xlu0 %62, %v37
  %v64 = vpop.permute.xlu0 %63
  %67 = vset.pattern.permute.xlu0 0
  %68 = vperm.xlu0 %67, %v38
  %v69 = vpop.permute.xlu0 %68
  %72 = vset.pattern.permute.xlu0 0
  %73 = vperm.xlu0 %72, %v39
  %v74 = vpop.permute.xlu0 %73
  %77 = vset.pattern.permute.xlu0 0
  %78 = vperm.xlu0 %77, %v40
  %v79 = vpop.permute.xlu0 %78
  %82 = vset.pattern.permute.xlu0 0
  %83 = vperm.xlu0 %82, %v41
  %v84 = vpop.permute.xlu0 %83
  %87 = vset.pattern.permute.xlu0 0
  %88 = vperm.xlu0 %87, %v42
  %v89 = vpop.permute.xlu0 %88
  %92 = vset.pattern.permute.xlu0 0
  %93 = vperm.xlu0 %92, %v43
  %v94 = vpop.permute.xlu0 %93
  %97 = vset.pattern.permute.xlu0 0
  %98 = vperm.xlu0 %97, %v44
  %v99 = vpop.permute.xlu0 %98
  %102 = vset.pattern.permute.xlu0 0
  %103 = vperm.xlu0 %102, %v45
  %v104 = vpop.permute.xlu0 %103
  %107 = vset.pattern.permute.xlu0 0
  %108 = vperm.xlu0 %107, %v46
  %v109 = vpop.permute.xlu0 %108
  %112 = vset.pattern.permute.xlu0 0
  %113 = vperm.xlu0 %112, %v47
  %v114 = vpop.permute.xlu0 %113
  %117 = vset.pattern.permute.xlu0 0
  %118 = vperm.xlu0 %117, %v48
  %v119 = vpop.permute.xlu0 %118
  %122 = vset.pattern.permute.xlu0 0
  %123 = vperm.xlu0 %122, %v49
  %v124 = vpop.permute.xlu0 %123
  %127 = vset.pattern.permute.xlu0 0
  %128 = vperm.xlu0 %127, %v50
  %v129 = vpop.permute.xlu0 %128
  %v147 = vunpack.c.l.b16 %v15
  %v148 = vunpack.c.l.b16 %v16
  %v149 = vunpack.c.l.b16 %v17
  %v150 = vunpack.c.l.b16 %v18
  %v151 = vunpack.c.l.b16 %v19
  %v152 = vunpack.c.l.b16 %v20
  %v153 = vunpack.c.l.b16 %v21
  %v154 = vunpack.c.l.b16 %v22
  %v155 = vunpack.c.l.b16 %v23
  %v156 = vunpack.c.l.b16 %v24
  %v157 = vunpack.c.l.b16 %v25
  %v158 = vunpack.c.l.b16 %v26
  %v159 = vunpack.c.l.b16 %v27
  %v160 = vunpack.c.l.b16 %v28
  %v161 = vunpack.c.l.b16 %v29
  %v162 = vunpack.c.l.b16 %v30
  %v163 = vpack.c.b16 %v148, %v147
  %v164 = vpack.c.b16 %v150, %v149
  %v165 = vpack.c.b16 %v152, %v151
  %v166 = vpack.c.b16 %v154, %v153
  %v167 = vpack.c.b16 %v156, %v155
  %v168 = vpack.c.b16 %v158, %v157
  %v169 = vpack.c.b16 %v160, %v159
  %v170 = vpack.c.b16 %v162, %v161
  %v175 = vunpack.c.l.b16 %v31
  %v176 = vunpack.c.l.b16 %v32
  %v177 = vunpack.c.l.b16 %v33
  %v178 = vunpack.c.l.b16 %v34
  %v179 = vpack.c.b16 %v176, %v175
  %v180 = vpack.c.b16 %v178, %v177
  %vm183 = vcmask 261120
  %v185 = vsel %vm183, %v163, 0
  %v188 = vsel %vm183, %v164, 0
  %v191 = vsel %vm183, %v165, 0
  %v194 = vsel %vm183, %v166, 0
  %v197 = vsel %vm183, %v167, 0
  %v200 = vsel %vm183, %v168, 0
  %v203 = vsel %vm183, %v169, 0
  %v206 = vsel %vm183, %v170, 0
  %208 = vmatpush.bf16.msra.mxu0 0
  %209 = vmatpush.bf16.msra.mxu0 0
  %210 = vmatpush.bf16.msra.mxu0 0
  %211 = vmatpush.bf16.msra.mxu0 0
  %212 = vmatpush.bf16.msra.mxu0 0
  %213 = vmatpush.bf16.msra.mxu0 0
  %214 = vmatpush.bf16.msra.mxu0 %v180
  %215 = vmatpush.bf16.msra.mxu0 %v179
  %216 = vmatmul.bf16.gmra.mxu0 %v185
  %v217 = vpop.f32.mrf.mxu0
  %v218 = vadd.f32 %v54, %v217
  %v219 = vpop.f32.mrf.mxu0
  %v220 = vadd.f32 %v59, %v219
  %221 = vmatmul.bf16.gmra.mxu0 %v188
  %v222 = vpop.f32.mrf.mxu0
  %v223 = vadd.f32 %v64, %v222
  %v224 = vpop.f32.mrf.mxu0
  %v225 = vadd.f32 %v69, %v224
  %226 = vmatmul.bf16.gmra.mxu0 %v191
  %v227 = vpop.f32.mrf.mxu0
  %v228 = vadd.f32 %v74, %v227
  %v229 = vpop.f32.mrf.mxu0
  %v230 = vadd.f32 %v79, %v229
  %231 = vmatmul.bf16.gmra.mxu0 %v194
  %v232 = vpop.f32.mrf.mxu0
  %v233 = vadd.f32 %v84, %v232
  %v234 = vpop.f32.mrf.mxu0
  %v235 = vadd.f32 %v89, %v234
  %236 = vmatmul.bf16.gmra.mxu0 %v197
  %v237 = vpop.f32.mrf.mxu0
  %v238 = vadd.f32 %v94, %v237
  %v239 = vpop.f32.mrf.mxu0
  %v240 = vadd.f32 %v99, %v239
  %241 = vmatmul.bf16.gmra.mxu0 %v200
  %v242 = vpop.f32.mrf.mxu0
  %v243 = vadd.f32 %v104, %v242
  %v244 = vpop.f32.mrf.mxu0
  %v245 = vadd.f32 %v109, %v244
  %246 = vmatmul.bf16.gmra.mxu0 %v203
  %v247 = vpop.f32.mrf.mxu0
  %v248 = vadd.f32 %v114, %v247
  %v249 = vpop.f32.mrf.mxu0
  %v250 = vadd.f32 %v119, %v249
  %251 = vmatmul.bf16.gmra.mxu0 %v206
  %v252 = vpop.f32.mrf.mxu0
  %v253 = vadd.f32 %v124, %v252
  %v254 = vpop.f32.mrf.mxu0
  %v255 = vadd.f32 %v129, %v254
  %256 = vdwg.mxu0
  %vm257 = vcmask 408576
  %258 = vst.msk [vmem:[%s3] sm:$0xff] %vm257, %v218
  %259 = vst.msk [vmem:[%s3 + $0x8] sm:$0xff] %vm257, %v220
  %260 = vst.msk [vmem:[%s3 + $0x10] sm:$0xff] %vm257, %v223
  %261 = vst.msk [vmem:[%s3 + $0x18] sm:$0xff] %vm257, %v225
  %262 = vst.msk [vmem:[%s3 + $0x20] sm:$0xff] %vm257, %v228
  %263 = vst.msk [vmem:[%s3 + $0x28] sm:$0xff] %vm257, %v230
  %264 = vst.msk [vmem:[%s3 + $0x30] sm:$0xff] %vm257, %v233
  %265 = vst.msk [vmem:[%s3 + $0x38] sm:$0xff] %vm257, %v235
  %266 = vst.msk [vmem:[%s3 + $0x40] sm:$0xff] %vm257, %v238
  %267 = vst.msk [vmem:[%s3 + $0x48] sm:$0xff] %vm257, %v240
  %268 = vst.msk [vmem:[%s3 + $0x50] sm:$0xff] %vm257, %v243
  %269 = vst.msk [vmem:[%s3 + $0x58] sm:$0xff] %vm257, %v245
  %270 = vst.msk [vmem:[%s3 + $0x60] sm:$0xff] %vm257, %v248
  %271 = vst.msk [vmem:[%s3 + $0x68] sm:$0xff] %vm257, %v250
  %272 = vst.msk [vmem:[%s3 + $0x70] sm:$0xff] %vm257, %v253
  %273 = vst.msk [vmem:[%s3 + $0x78] sm:$0xff] %vm257, %v255
  // Predicated region
  $region14: #{_lambda_.42} parent=0 // pred_check
    _
  $region15: #{_lambda_.42} parent=0 // pred_check_branch
    %275 = sbr.rel (0) target = $region17
  $region16: #{_lambda_.42} parent=0 // pred_region
    _
  $region17: #{_lambda_.42} parent=0 // pred_fallthru
    _
  // Predicated region
  $region18: #{_lambda_.42} parent=0 // pred_check
    _
  $region19: #{_lambda_.42} parent=0 // pred_check_branch
    %277 = sbr.rel (0) target = $region21
  $region20: #{_lambda_.42} parent=0 // pred_region
    _
  $region21: #{_lambda_.42} parent=0 // pred_fallthru
    _

// kernel: tile.23
$region0: #{tile.23}
  #allocation0 [shape = 's32[1]{0}', space=sflag, size = 0x4, scoped, tag = 'scoped memory for tile.23']
  %s0 = inlined_call_operand.vmem [shape: f32[8], index: 0, kind: input, shape index: {}]
  %s1 = inlined_call_operand.vmem [shape: f32[4,8], index: 1, kind: output, shape index: {}]
  // Predicated region
  $region2: #{tile.23} parent=0 // pred_check
    _
  $region3: #{tile.23} parent=0 // pred_check_branch
    %3 = sbr.rel (0) target = $region5
  $region4: #{tile.23} parent=0 // pred_region
    _
  $region5: #{tile.23} parent=0 // pred_fallthru
    _
  %v4 = vld [vmem:[%s0] ss:$0 sm:$0xff]
  %5 = vst [vmem:[%s1] sm:$0xf] %v4

// kernel: tile.0
$region0: #{tile.0}
  %s0 = inlined_call_operand.vmem [shape: f32[4,8], index: 0, kind: input, shape index: {}]
  %s1 = inlined_call_operand.vmem [shape: f32[32,1], index: 1, kind: output, shape index: {}]
  $region1: #{tile.0} parent=0
    #allocation0 [shape = 'u8[4096]{0}', space=vmem, size = 0x1000, scoped, tag = 'scoped mem for input reshape']
    %s3 = ssub.s32 16, 1
    %v4 = vld [vmem:[%s0] sm:%s3]
    %5 = vst [vmem:[#allocation0] sm:%s3] %v4
    %v6 = vld [vmem:[#allocation0] sm:$0xf]
    %vm7 = vcmask 7168
    %8 = vst.msk [vmem:[%s1] ss:$8 sm:$0xf] %vm7, %v6
    %v9 = vld [vmem:[#allocation0] sm:$0xf]
    %10 = vrot.lane.b32.xlu0 %v9, 127
    %v11 = vpop.permute.xlu0 %10
    %vm12 = vcmask 7168
    %s13 = scalar_lea.vmem %s1, 1
    %14 = vst.msk [vmem:[%s13] ss:$8 sm:$0xf] %vm12, %v11
    %v15 = vld [vmem:[#allocation0] sm:$0xf]
    %16 = vrot.lane.b32.xlu0 %v15, 126
    %v17 = vpop.permute.xlu0 %16
    %vm18 = vcmask 7168
    %s19 = scalar_lea.vmem %s1, 2
    %20 = vst.msk [vmem:[%s19] ss:$8 sm:$0xf] %vm18, %v17
    %v21 = vld [vmem:[#allocation0] sm:$0xf]
    %22 = vrot.lane.b32.xlu0 %v21, 125
    %v23 = vpop.permute.xlu0 %22
    %vm24 = vcmask 7168
    %s25 = scalar_lea.vmem %s1, 3
    %26 = vst.msk [vmem:[%s25] ss:$8 sm:$0xf] %vm24, %v23
    %v27 = vld [vmem:[#allocation0] sm:$0xf]
    %28 = vrot.lane.b32.xlu0 %v27, 124
    %v29 = vpop.permute.xlu0 %28
    %vm30 = vcmask 7168
    %s31 = scalar_lea.vmem %s1, 4
    %32 = vst.msk [vmem:[%s31] ss:$8 sm:$0xf] %vm30, %v29
    %v33 = vld [vmem:[#allocation0] sm:$0xf]
    %34 = vrot.lane.b32.xlu0 %v33, 123
    %v35 = vpop.permute.xlu0 %34
    %vm36 = vcmask 7168
    %s37 = scalar_lea.vmem %s1, 5
    %38 = vst.msk [vmem:[%s37] ss:$8 sm:$0xf] %vm36, %v35
    %v39 = vld [vmem:[#allocation0] sm:$0xf]
    %40 = vrot.lane.b32.xlu0 %v39, 122
    %v41 = vpop.permute.xlu0 %40
    %vm42 = vcmask 7168
    %s43 = scalar_lea.vmem %s1, 6
    %44 = vst.msk [vmem:[%s43] ss:$8 sm:$0xf] %vm42, %v41
    %v45 = vld [vmem:[#allocation0] sm:$0xf]
    %46 = vrot.lane.b32.xlu0 %v45, 121
    %v47 = vpop.permute.xlu0 %46
    %vm48 = vcmask 7168
    %s49 = scalar_lea.vmem %s1, 7
    %50 = vst.msk [vmem:[%s49] ss:$8 sm:$0xf] %vm48, %v47

// kernel: _lambda_.40
$region0: #{_lambda_.40}
  #allocation0 [shape = 'u32[]', space=smem, size = 0x4, offset = 0x4, fixed_abs, tag = 'smem constant byte address 0x4 - core index']
  #allocation1 [shape = 'u32[72,128]{1,0:T(1,128)}', space=vmem, size = 0x9000, scoped, tag = 'internal scratch']
  %s0 = inlined_call_operand.vmem [shape: bf16[32,32], index: 0, kind: input, shape index: {}]
  %s1 = inlined_call_operand.vmem [shape: bf16[32,162], index: 1, kind: input, shape index: {}]
  %s2 = inlined_call_operand.vmem [shape: f32[32,1], index: 2, kind: input, shape index: {}]
  %s3 = inlined_call_operand.vmem [shape: f32[32,162], index: 3, kind: output, shape index: {}]
  %s4 = sld [smem:[#allocation0]]
  $region22: #{_lambda_.40} parent=0
    _
  %s6 = ssub.s32 1, %s4
  %s7 = scalar_select 0, %s6, %s4
  // Predicated region
  $region2: #{_lambda_.40} parent=0 // pred_check
    _
  $region3: #{_lambda_.40} parent=0 // pred_check_branch
    %9 = sbr.rel (0) target = $region5
  $region4: #{_lambda_.40} parent=0 // pred_region
    _
  $region5: #{_lambda_.40} parent=0 // pred_fallthru
    _
  // Predicated region
  $region6: #{_lambda_.40} parent=0 // pred_check
    _
  $region7: #{_lambda_.40} parent=0 // pred_check_branch
    %11 = sbr.rel (0) target = $region9
  $region8: #{_lambda_.40} parent=0 // pred_region
    _
  $region9: #{_lambda_.40} parent=0 // pred_fallthru
    _
  // Predicated region
  $region10: #{_lambda_.40} parent=0 // pred_check
    _
  $region11: #{_lambda_.40} parent=0 // pred_check_branch
    %13 = sbr.rel (0) target = $region13
  $region12: #{_lambda_.40} parent=0 // pred_region
    _
  $region13: #{_lambda_.40} parent=0 // pred_fallthru
    _
  %v15 = vld [vmem:[%s0] sm:$0xf]
  %v16 = vld [vmem:[%s0 + $0x4] sm:$0xf]
  %v17 = vld [vmem:[%s0 + $0x8] sm:$0xf]
  %v18 = vld [vmem:[%s0 + $0xc] sm:$0xf]
  %v19 = vld [vmem:[%s1] sm:$0xff]
  %v20 = vld [vmem:[%s1 + $0x8] sm:$0xff]
  %v21 = vld [vmem:[%s1 + $0x10] sm:$0xff]
  %v22 = vld [vmem:[%s1 + $0x18] sm:$0xff]
  %v23 = vld [vmem:[%s2] sm:$0xff]
  %v24 = vld [vmem:[%s2 + $0x8] sm:$0xff]
  %v25 = vld [vmem:[%s2 + $0x10] sm:$0xff]
  %v26 = vld [vmem:[%s2 + $0x18] sm:$0xff]
  %28 = vset.pattern.permute.xlu0 0
  %29 = vperm.xlu0 %28, %v23
  %v30 = vpop.permute.xlu0 %29
  %33 = vset.pattern.permute.xlu0 0
  %34 = vperm.xlu0 %33, %v24
  %v35 = vpop.permute.xlu0 %34
  %38 = vset.pattern.permute.xlu0 0
  %39 = vperm.xlu0 %38, %v25
  %v40 = vpop.permute.xlu0 %39
  %43 = vset.pattern.permute.xlu0 0
  %44 = vperm.xlu0 %43, %v26
  %v45 = vpop.permute.xlu0 %44
  %v51 = vunpack.c.l.b16 %v15
  %v52 = vunpack.c.l.b16 %v16
  %v53 = vunpack.c.l.b16 %v17
  %v54 = vunpack.c.l.b16 %v18
  %v55 = vpack.c.b16 %v52, %v51
  %v56 = vpack.c.b16 %v54, %v53
  %v61 = vunpack.c.l.b16 %v19
  %v62 = vunpack.c.h.b16 %v19
  %v63 = vunpack.c.l.b16 %v20
  %v64 = vunpack.c.h.b16 %v20
  %v65 = vunpack.c.l.b16 %v21
  %v66 = vunpack.c.h.b16 %v21
  %v67 = vunpack.c.l.b16 %v22
  %v68 = vunpack.c.h.b16 %v22
  %v69 = vpack.c.b16 %v63, %v61
  %v70 = vpack.c.b16 %v64, %v62
  %v71 = vpack.c.b16 %v67, %v65
  %v72 = vpack.c.b16 %v68, %v66
  %vm77 = vcmask 261120
  %v79 = vsel %vm77, %v55, 0
  %v82 = vsel %vm77, %v56, 0
  %84 = vmatpush.bf16.msra.mxu0 0
  %85 = vmatpush.bf16.msra.mxu0 0
  %86 = vmatpush.bf16.msra.mxu0 0
  %87 = vmatpush.bf16.msra.mxu0 0
  %88 = vmatpush.bf16.msra.mxu0 0
  %89 = vmatpush.bf16.msra.mxu0 0
  %90 = vmatpush.bf16.msra.mxu0 %v71
  %91 = vmatpush.bf16.msra.mxu0 %v69
  %92 = vmatmul.bf16.gmra.mxu0 %v79
  %v93 = vpop.f32.mrf.mxu0
  %v94 = vadd.f32 %v30, %v93
  %v95 = vpop.f32.mrf.mxu0
  %v96 = vadd.f32 %v35, %v95
  %97 = vmatmul.bf16.gmra.mxu0 %v82
  %v98 = vpop.f32.mrf.mxu0
  %v99 = vadd.f32 %v40, %v98
  %v100 = vpop.f32.mrf.mxu0
  %v101 = vadd.f32 %v45, %v100
  %102 = vdwg.mxu0
  %103 = vmatpush.bf16.msra.mxu0 0
  %104 = vmatpush.bf16.msra.mxu0 0
  %105 = vmatpush.bf16.msra.mxu0 0
  %106 = vmatpush.bf16.msra.mxu0 0
  %107 = vmatpush.bf16.msra.mxu0 0
  %108 = vmatpush.bf16.msra.mxu0 0
  %109 = vmatpush.bf16.msra.mxu0 %v72
  %110 = vmatpush.bf16.msra.mxu0 %v70
  %111 = vmatmul.bf16.gmra.mxu0 %v79
  %v112 = vpop.f32.mrf.mxu0
  %v113 = vadd.f32 %v30, %v112
  %v114 = vpop.f32.mrf.mxu0
  %v115 = vadd.f32 %v35, %v114
  %116 = vmatmul.bf16.gmra.mxu0 %v82
  %v117 = vpop.f32.mrf.mxu0
  %v118 = vadd.f32 %v40, %v117
  %v119 = vpop.f32.mrf.mxu0
  %v120 = vadd.f32 %v45, %v119
  %121 = vdwg.mxu0
  %122 = vst [vmem:[%s3] sm:$0xff] %v94
  %vm123 = vcmask 277504
  %124 = vst.msk [vmem:[%s3 + $0x8] sm:$0xff] %vm123, %v113
  %125 = vst [vmem:[%s3 + $0x10] sm:$0xff] %v96
  %126 = vst.msk [vmem:[%s3 + $0x18] sm:$0xff] %vm123, %v115
  %127 = vst [vmem:[%s3 + $0x20] sm:$0xff] %v99
  %128 = vst.msk [vmem:[%s3 + $0x28] sm:$0xff] %vm123, %v118
  %129 = vst [vmem:[%s3 + $0x30] sm:$0xff] %v101
  %130 = vst.msk [vmem:[%s3 + $0x38] sm:$0xff] %vm123, %v120
  // Predicated region
  $region14: #{_lambda_.40} parent=0 // pred_check
    _
  $region15: #{_lambda_.40} parent=0 // pred_check_branch
    %132 = sbr.rel (0) target = $region17
  $region16: #{_lambda_.40} parent=0 // pred_region
    _
  $region17: #{_lambda_.40} parent=0 // pred_fallthru
    _
  // Predicated region
  $region18: #{_lambda_.40} parent=0 // pred_check
    _
  $region19: #{_lambda_.40} parent=0 // pred_check_branch
    %134 = sbr.rel (0) target = $region21
  $region20: #{_lambda_.40} parent=0 // pred_region
    _
  $region21: #{_lambda_.40} parent=0 // pred_fallthru
    _

// kernel: _lambda_.47
$region0: #{_lambda_.47}
  #allocation0 [shape = 'u32[]', space=smem, size = 0x4, offset = 0x4, fixed_abs, tag = 'smem constant byte address 0x4 - core index']
  #allocation1 [shape = 'u32[72,128]{1,0:T(1,128)}', space=vmem, size = 0x9000, scoped, tag = 'internal scratch']
  %s0 = inlined_call_operand.vmem [shape: bf16[16,360], index: 0, kind: input, shape index: {}]
  %s1 = inlined_call_operand.vmem [shape: bf16[360,512], index: 1, kind: input, shape index: {}]
  %s2 = inlined_call_operand.vmem [shape: f32[16,1], index: 2, kind: input, shape index: {}]
  %s3 = inlined_call_operand.vmem [shape: f32[16,512], index: 3, kind: output, shape index: {}]
  %s4 = sld [smem:[#allocation0]]
  $region22: #{_lambda_.47} parent=0
    _
  %s6 = ssub.s32 1, %s4
  %s7 = scalar_select 0, %s6, %s4
  // Predicated region
  $region2: #{_lambda_.47} parent=0 // pred_check
    _
  $region3: #{_lambda_.47} parent=0 // pred_check_branch
    %9 = sbr.rel (0) target = $region5
  $region4: #{_lambda_.47} parent=0 // pred_region
    _
  $region5: #{_lambda_.47} parent=0 // pred_fallthru
    _
  // Predicated region
  $region6: #{_lambda_.47} parent=0 // pred_check
    _
  $region7: #{_lambda_.47} parent=0 // pred_check_branch
    %11 = sbr.rel (0) target = $region9
  $region8: #{_lambda_.47} parent=0 // pred_region
    _
  $region9: #{_lambda_.47} parent=0 // pred_fallthru
    _
  // Predicated region
  $region10: #{_lambda_.47} parent=0 // pred_check
    _
  $region11: #{_lambda_.47} parent=0 // pred_check_branch
    %13 = sbr.rel (0) target = $region13
  $region12: #{_lambda_.47} parent=0 // pred_region
    _
  $region13: #{_lambda_.47} parent=0 // pred_fallthru
    _
  %v15 = vld [vmem:[%s0] sm:$0xff]
  %v16 = vld [vmem:[%s0 + $0x8] sm:$0xf]
  %v17 = vld [vmem:[%s0 + $0xc] sm:$0xff]
  %v18 = vld [vmem:[%s0 + $0x14] sm:$0xf]
  %v19 = vld [vmem:[%s1] sm:$0xff]
  %v20 = vld [vmem:[%s1 + $0x8] sm:$0xff]
  %v21 = vld [vmem:[%s1 + $0x10] sm:$0xff]
  %v22 = vld [vmem:[%s1 + $0x18] sm:$0xff]
  %v23 = vld [vmem:[%s1 + $0x20] sm:$0xff]
  %v24 = vld [vmem:[%s1 + $0x28] sm:$0xff]
  %v25 = vld [vmem:[%s1 + $0x30] sm:$0xff]
  %v26 = vld [vmem:[%s1 + $0x38] sm:$0xff]
  %v27 = vld [vmem:[%s1 + $0x40] sm:$0xff]
  %v28 = vld [vmem:[%s1 + $0x48] sm:$0xff]
  %v29 = vld [vmem:[%s1 + $0x50] sm:$0xff]
  %v30 = vld [vmem:[%s1 + $0x58] sm:$0xff]
  %v31 = vld [vmem:[%s1 + $0x60] sm:$0xff]
  %v32 = vld [vmem:[%s1 + $0x68] sm:$0xff]
  %v33 = vld [vmem:[%s1 + $0x70] sm:$0xff]
  %v34 = vld [vmem:[%s1 + $0x78] sm:$0xff]
  %v35 = vld [vmem:[%s1 + $0x80] sm:$0xff]
  %v36 = vld [vmem:[%s1 + $0x88] sm:$0xff]
  %v37 = vld [vmem:[%s1 + $0x90] sm:$0xff]
  %v38 = vld [vmem:[%s1 + $0x98] sm:$0xff]
  %v39 = vld [vmem:[%s1 + $0xa0] sm:$0xff]
  %v40 = vld [vmem:[%s1 + $0xa8] sm:$0xff]
  %v41 = vld [vmem:[%s1 + $0xb0] sm:$0xff]
  %v42 = vld [vmem:[%s1 + $0xb8] sm:$0xff]
  %v43 = vld [vmem:[%s1 + $0xc0] sm:$0xff]
  %v44 = vld [vmem:[%s1 + $0xc8] sm:$0xff]
  %v45 = vld [vmem:[%s1 + $0xd0] sm:$0xff]
  %v46 = vld [vmem:[%s1 + $0xd8] sm:$0xff]
  %v47 = vld [vmem:[%s1 + $0xe0] sm:$0xff]
  %v48 = vld [vmem:[%s1 + $0xe8] sm:$0xff]
  %v49 = vld [vmem:[%s1 + $0xf0] sm:$0xff]
  %v50 = vld [vmem:[%s1 + $0xf8] sm:$0xff]
  %v51 = vld [vmem:[%s1 + $0x100] sm:$0xff]
  %v52 = vld [vmem:[%s1 + $0x108] sm:$0xff]
  %v53 = vld [vmem:[%s1 + $0x110] sm:$0xff]
  %v54 = vld [vmem:[%s1 + $0x118] sm:$0xff]
  %v55 = vld [vmem:[%s1 + $0x120] sm:$0xff]
  %v56 = vld [vmem:[%s1 + $0x128] sm:$0xff]
  %v57 = vld [vmem:[%s1 + $0x130] sm:$0xff]
  %v58 = vld [vmem:[%s1 + $0x138] sm:$0xff]
  %v59 = vld [vmem:[%s1 + $0x140] sm:$0xff]
  %v60 = vld [vmem:[%s1 + $0x148] sm:$0xff]
  %v61 = vld [vmem:[%s1 + $0x150] sm:$0xff]
  %v62 = vld [vmem:[%s1 + $0x158] sm:$0xff]
  %v63 = vld [vmem:[%s1 + $0x160] sm:$0xff]
  %v64 = vld [vmem:[%s1 + $0x168] sm:$0xff]
  %v65 = vld [vmem:[%s1 + $0x170] sm:$0xff]
  %v66 = vld [vmem:[%s1 + $0x178] sm:$0xff]
  %v67 = vld [vmem:[%s1 + $0x180] sm:$0xff]
  %v68 = vld [vmem:[%s1 + $0x188] sm:$0xff]
  %v69 = vld [vmem:[%s1 + $0x190] sm:$0xff]
  %v70 = vld [vmem:[%s1 + $0x198] sm:$0xff]
  %v71 = vld [vmem:[%s1 + $0x1a0] sm:$0xff]
  %v72 = vld [vmem:[%s1 + $0x1a8] sm:$0xff]
  %v73 = vld [vmem:[%s1 + $0x1b0] sm:$0xff]
  %v74 = vld [vmem:[%s1 + $0x1b8] sm:$0xff]
  %v75 = vld [vmem:[%s1 + $0x1c0] sm:$0xff]
  %v76 = vld [vmem:[%s1 + $0x1c8] sm:$0xff]
  %v77 = vld [vmem:[%s1 + $0x1d0] sm:$0xff]
  %v78 = vld [vmem:[%s1 + $0x1d8] sm:$0xff]
  %v79 = vld [vmem:[%s1 + $0x1e0] sm:$0xff]
  %v80 = vld [vmem:[%s1 + $0x1e8] sm:$0xff]
  %v81 = vld [vmem:[%s1 + $0x1f0] sm:$0xff]
  %v82 = vld [vmem:[%s1 + $0x1f8] sm:$0xff]
  %v83 = vld [vmem:[%s1 + $0x200] sm:$0xff]
  %v84 = vld [vmem:[%s1 + $0x208] sm:$0xff]
  %v85 = vld [vmem:[%s1 + $0x210] sm:$0xff]
  %v86 = vld [vmem:[%s1 + $0x218] sm:$0xff]
  %v87 = vld [vmem:[%s1 + $0x220] sm:$0xff]
  %v88 = vld [vmem:[%s1 + $0x228] sm:$0xff]
  %v89 = vld [vmem:[%s1 + $0x230] sm:$0xff]
  %v90 = vld [vmem:[%s1 + $0x238] sm:$0xff]
  %v91 = vld [vmem:[%s1 + $0x240] sm:$0xff]
  %v92 = vld [vmem:[%s1 + $0x248] sm:$0xff]
  %v93 = vld [vmem:[%s1 + $0x250] sm:$0xff]
  %v94 = vld [vmem:[%s1 + $0x258] sm:$0xff]
  %v95 = vld [vmem:[%s1 + $0x260] sm:$0xff]
  %v96 = vld [vmem:[%s1 + $0x268] sm:$0xff]
  %v97 = vld [vmem:[%s1 + $0x270] sm:$0xff]
  %v98 = vld [vmem:[%s1 + $0x278] sm:$0xff]
  %v99 = vld [vmem:[%s1 + $0x280] sm:$0xff]
  %v100 = vld [vmem:[%s1 + $0x288] sm:$0xff]
  %v101 = vld [vmem:[%s1 + $0x290] sm:$0xff]
  %v102 = vld [vmem:[%s1 + $0x298] sm:$0xff]
  %v103 = vld [vmem:[%s1 + $0x2a0] sm:$0xff]
  %v104 = vld [vmem:[%s1 + $0x2a8] sm:$0xff]
  %v105 = vld [vmem:[%s1 + $0x2b0] sm:$0xff]
  %v106 = vld [vmem:[%s1 + $0x2b8] sm:$0xff]
  %v107 = vld [vmem:[%s1 + $0x2c0] sm:$0xff]
  %v108 = vld [vmem:[%s1 + $0x2c8] sm:$0xff]
  %v109 = vld [vmem:[%s2] sm:$0xff]
  %v110 = vld [vmem:[%s2 + $0x8] sm:$0xff]
  %112 = vset.pattern.permute.xlu0 0
  %113 = vperm.xlu0 %112, %v109
  %v114 = vpop.permute.xlu0 %113
  %117 = vset.pattern.permute.xlu0 0
  %118 = vperm.xlu0 %117, %v110
  %v119 = vpop.permute.xlu0 %118
  %v125 = vunpack.c.l.b16 %v15
  %v126 = vunpack.c.h.b16 %v15
  %v127 = vunpack.c.l.b16 %v16
  %v128 = vunpack.c.l.b16 %v17
  %v129 = vunpack.c.h.b16 %v17
  %v130 = vunpack.c.l.b16 %v18
  %v131 = vpack.c.b16 %v128, %v125
  %v132 = vpack.c.b16 %v129, %v126
  %v133 = vpack.c.b16 %v130, %v127
  %v226 = vunpack.c.l.b16 %v19
  %v227 = vunpack.c.h.b16 %v19
  %v228 = vunpack.c.l.b16 %v20
  %v229 = vunpack.c.h.b16 %v20
  %v230 = vunpack.c.l.b16 %v21
  %v231 = vunpack.c.h.b16 %v21
  %v232 = vunpack.c.l.b16 %v22
  %v233 = vunpack.c.h.b16 %v22
  %v234 = vunpack.c.l.b16 %v23
  %v235 = vunpack.c.h.b16 %v23
  %v236 = vunpack.c.l.b16 %v24
  %v237 = vunpack.c.h.b16 %v24
  %v238 = vunpack.c.l.b16 %v25
  %v239 = vunpack.c.h.b16 %v25
  %v240 = vunpack.c.l.b16 %v26
  %v241 = vunpack.c.h.b16 %v26
  %v242 = vunpack.c.l.b16 %v27
  %v243 = vunpack.c.h.b16 %v27
  %v244 = vunpack.c.l.b16 %v28
  %v245 = vunpack.c.h.b16 %v28
  %v246 = vunpack.c.l.b16 %v29
  %v247 = vunpack.c.h.b16 %v29
  %v248 = vunpack.c.l.b16 %v30
  %v249 = vunpack.c.h.b16 %v30
  %v250 = vunpack.c.l.b16 %v31
  %v251 = vunpack.c.h.b16 %v31
  %v252 = vunpack.c.l.b16 %v32
  %v253 = vunpack.c.h.b16 %v32
  %v254 = vunpack.c.l.b16 %v33
  %v255 = vunpack.c.h.b16 %v33
  %v256 = vunpack.c.l.b16 %v34
  %v257 = vunpack.c.h.b16 %v34
  %v258 = vunpack.c.l.b16 %v35
  %v259 = vunpack.c.h.b16 %v35
  %v260 = vunpack.c.l.b16 %v36
  %v261 = vunpack.c.h.b16 %v36
  %v262 = vunpack.c.l.b16 %v37
  %v263 = vunpack.c.h.b16 %v37
  %v264 = vunpack.c.l.b16 %v38
  %v265 = vunpack.c.h.b16 %v38
  %v266 = vunpack.c.l.b16 %v39
  %v267 = vunpack.c.h.b16 %v39
  %v268 = vunpack.c.l.b16 %v40
  %v269 = vunpack.c.h.b16 %v40
  %v270 = vunpack.c.l.b16 %v41
  %v271 = vunpack.c.h.b16 %v41
  %v272 = vunpack.c.l.b16 %v42
  %v273 = vunpack.c.h.b16 %v42
  %v274 = vunpack.c.l.b16 %v43
  %v275 = vunpack.c.h.b16 %v43
  %v276 = vunpack.c.l.b16 %v44
  %v277 = vunpack.c.h.b16 %v44
  %v278 = vunpack.c.l.b16 %v45
  %v279 = vunpack.c.h.b16 %v45
  %v280 = vunpack.c.l.b16 %v46
  %v281 = vunpack.c.h.b16 %v46
  %v282 = vunpack.c.l.b16 %v47
  %v283 = vunpack.c.h.b16 %v47
  %v284 = vunpack.c.l.b16 %v48
  %v285 = vunpack.c.h.b16 %v48
  %v286 = vunpack.c.l.b16 %v49
  %v287 = vunpack.c.h.b16 %v49
  %v288 = vunpack.c.l.b16 %v50
  %v289 = vunpack.c.h.b16 %v50
  %v290 = vunpack.c.l.b16 %v51
  %v291 = vunpack.c.h.b16 %v51
  %v292 = vunpack.c.l.b16 %v52
  %v293 = vunpack.c.h.b16 %v52
  %v294 = vunpack.c.l.b16 %v53
  %v295 = vunpack.c.h.b16 %v53
  %v296 = vunpack.c.l.b16 %v54
  %v297 = vunpack.c.h.b16 %v54
  %v298 = vunpack.c.l.b16 %v55
  %v299 = vunpack.c.h.b16 %v55
  %v300 = vunpack.c.l.b16 %v56
  %v301 = vunpack.c.h.b16 %v56
  %v302 = vunpack.c.l.b16 %v57
  %v303 = vunpack.c.h.b16 %v57
  %v304 = vunpack.c.l.b16 %v58
  %v305 = vunpack.c.h.b16 %v58
  %v306 = vunpack.c.l.b16 %v59
  %v307 = vunpack.c.h.b16 %v59
  %v308 = vunpack.c.l.b16 %v60
  %v309 = vunpack.c.h.b16 %v60
  %v310 = vunpack.c.l.b16 %v61
  %v311 = vunpack.c.h.b16 %v61
  %v312 = vunpack.c.l.b16 %v62
  %v313 = vunpack.c.h.b16 %v62
  %v314 = vunpack.c.l.b16 %v63
  %v315 = vunpack.c.h.b16 %v63
  %v316 = vunpack.c.l.b16 %v64
  %v317 = vunpack.c.h.b16 %v64
  %v318 = vunpack.c.l.b16 %v65
  %v319 = vunpack.c.h.b16 %v65
  %v320 = vunpack.c.l.b16 %v66
  %v321 = vunpack.c.h.b16 %v66
  %v322 = vunpack.c.l.b16 %v67
  %v323 = vunpack.c.h.b16 %v67
  %v324 = vunpack.c.l.b16 %v68
  %v325 = vunpack.c.h.b16 %v68
  %v326 = vunpack.c.l.b16 %v69
  %v327 = vunpack.c.h.b16 %v69
  %v328 = vunpack.c.l.b16 %v70
  %v329 = vunpack.c.h.b16 %v70
  %v330 = vunpack.c.l.b16 %v71
  %v331 = vunpack.c.h.b16 %v71
  %v332 = vunpack.c.l.b16 %v72
  %v333 = vunpack.c.h.b16 %v72
  %v334 = vunpack.c.l.b16 %v73
  %v335 = vunpack.c.h.b16 %v73
  %v336 = vunpack.c.l.b16 %v74
  %v337 = vunpack.c.h.b16 %v74
  %v338 = vunpack.c.l.b16 %v75
  %v339 = vunpack.c.h.b16 %v75
  %v340 = vunpack.c.l.b16 %v76
  %v341 = vunpack.c.h.b16 %v76
  %v342 = vunpack.c.l.b16 %v77
  %v343 = vunpack.c.h.b16 %v77
  %v344 = vunpack.c.l.b16 %v78
  %v345 = vunpack.c.h.b16 %v78
  %v346 = vunpack.c.l.b16 %v79
  %v347 = vunpack.c.h.b16 %v79
  %v348 = vunpack.c.l.b16 %v80
  %v349 = vunpack.c.h.b16 %v80
  %v350 = vunpack.c.l.b16 %v81
  %v351 = vunpack.c.h.b16 %v81
  %v352 = vunpack.c.l.b16 %v82
  %v353 = vunpack.c.h.b16 %v82
  %v354 = vunpack.c.l.b16 %v83
  %v355 = vunpack.c.h.b16 %v83
  %v356 = vunpack.c.l.b16 %v84
  %v357 = vunpack.c.h.b16 %v84
  %v358 = vunpack.c.l.b16 %v85
  %v359 = vunpack.c.h.b16 %v85
  %v360 = vunpack.c.l.b16 %v86
  %v361 = vunpack.c.h.b16 %v86
  %v362 = vunpack.c.l.b16 %v87
  %v363 = vunpack.c.h.b16 %v87
  %v364 = vunpack.c.l.b16 %v88
  %v365 = vunpack.c.h.b16 %v88
  %v366 = vunpack.c.l.b16 %v89
  %v367 = vunpack.c.h.b16 %v89
  %v368 = vunpack.c.l.b16 %v90
  %v369 = vunpack.c.h.b16 %v90
  %v370 = vunpack.c.l.b16 %v91
  %v371 = vunpack.c.h.b16 %v91
  %v372 = vunpack.c.l.b16 %v92
  %v373 = vunpack.c.h.b16 %v92
  %v374 = vunpack.c.l.b16 %v93
  %v375 = vunpack.c.h.b16 %v93
  %v376 = vunpack.c.l.b16 %v94
  %v377 = vunpack.c.h.b16 %v94
  %v378 = vunpack.c.l.b16 %v95
  %v379 = vunpack.c.h.b16 %v95
  %v380 = vunpack.c.l.b16 %v96
  %v381 = vunpack.c.h.b16 %v96
  %v382 = vunpack.c.l.b16 %v97
  %v383 = vunpack.c.h.b16 %v97
  %v384 = vunpack.c.l.b16 %v98
  %v385 = vunpack.c.h.b16 %v98
  %v386 = vunpack.c.l.b16 %v99
  %v387 = vunpack.c.h.b16 %v99
  %v388 = vunpack.c.l.b16 %v100
  %v389 = vunpack.c.h.b16 %v100
  %v390 = vunpack.c.l.b16 %v101
  %v391 = vunpack.c.h.b16 %v101
  %v392 = vunpack.c.l.b16 %v102
  %v393 = vunpack.c.h.b16 %v102
  %v394 = vunpack.c.l.b16 %v103
  %v395 = vunpack.c.h.b16 %v103
  %v396 = vunpack.c.l.b16 %v104
  %v397 = vunpack.c.h.b16 %v104
  %v398 = vunpack.c.l.b16 %v105
  %v399 = vunpack.c.h.b16 %v105
  %v400 = vunpack.c.l.b16 %v106
  %v401 = vunpack.c.h.b16 %v106
  %v402 = vunpack.c.l.b16 %v107
  %v403 = vunpack.c.h.b16 %v107
  %v404 = vunpack.c.l.b16 %v108
  %v405 = vunpack.c.h.b16 %v108
  %v406 = vpack.c.b16 %v230, %v226
  %v407 = vpack.c.b16 %v231, %v227
  %v408 = vpack.c.b16 %v232, %v228
  %v409 = vpack.c.b16 %v233, %v229
  %v410 = vpack.c.b16 %v238, %v234
  %v411 = vpack.c.b16 %v239, %v235
  %v412 = vpack.c.b16 %v240, %v236
  %v413 = vpack.c.b16 %v241, %v237
  %v414 = vpack.c.b16 %v246, %v242
  %v415 = vpack.c.b16 %v247, %v243
  %v416 = vpack.c.b16 %v248, %v244
  %v417 = vpack.c.b16 %v249, %v245
  %v418 = vpack.c.b16 %v254, %v250
  %v419 = vpack.c.b16 %v255, %v251
  %v420 = vpack.c.b16 %v256, %v252
  %v421 = vpack.c.b16 %v257, %v253
  %v422 = vpack.c.b16 %v262, %v258
  %v423 = vpack.c.b16 %v263, %v259
  %v424 = vpack.c.b16 %v264, %v260
  %v425 = vpack.c.b16 %v265, %v261
  %v426 = vpack.c.b16 %v270, %v266
  %v427 = vpack.c.b16 %v271, %v267
  %v428 = vpack.c.b16 %v272, %v268
  %v429 = vpack.c.b16 %v273, %v269
  %v430 = vpack.c.b16 %v278, %v274
  %v431 = vpack.c.b16 %v279, %v275
  %v432 = vpack.c.b16 %v280, %v276
  %v433 = vpack.c.b16 %v281, %v277
  %v434 = vpack.c.b16 %v286, %v282
  %v435 = vpack.c.b16 %v287, %v283
  %v436 = vpack.c.b16 %v288, %v284
  %v437 = vpack.c.b16 %v289, %v285
  %v438 = vpack.c.b16 %v294, %v290
  %v439 = vpack.c.b16 %v295, %v291
  %v440 = vpack.c.b16 %v296, %v292
  %v441 = vpack.c.b16 %v297, %v293
  %v442 = vpack.c.b16 %v302, %v298
  %v443 = vpack.c.b16 %v303, %v299
  %v444 = vpack.c.b16 %v304, %v300
  %v445 = vpack.c.b16 %v305, %v301
  %v446 = vpack.c.b16 %v310, %v306
  %v447 = vpack.c.b16 %v311, %v307
  %v448 = vpack.c.b16 %v312, %v308
  %v449 = vpack.c.b16 %v313, %v309
  %v450 = vpack.c.b16 %v318, %v314
  %v451 = vpack.c.b16 %v319, %v315
  %v452 = vpack.c.b16 %v320, %v316
  %v453 = vpack.c.b16 %v321, %v317
  %v454 = vpack.c.b16 %v326, %v322
  %v455 = vpack.c.b16 %v327, %v323
  %v456 = vpack.c.b16 %v328, %v324
  %v457 = vpack.c.b16 %v329, %v325
  %v458 = vpack.c.b16 %v334, %v330
  %v459 = vpack.c.b16 %v335, %v331
  %v460 = vpack.c.b16 %v336, %v332
  %v461 = vpack.c.b16 %v337, %v333
  %v462 = vpack.c.b16 %v342, %v338
  %v463 = vpack.c.b16 %v343, %v339
  %v464 = vpack.c.b16 %v344, %v340
  %v465 = vpack.c.b16 %v345, %v341
  %v466 = vpack.c.b16 %v350, %v346
  %v467 = vpack.c.b16 %v351, %v347
  %v468 = vpack.c.b16 %v352, %v348
  %v469 = vpack.c.b16 %v353, %v349
  %v470 = vpack.c.b16 %v358, %v354
  %v471 = vpack.c.b16 %v359, %v355
  %v472 = vpack.c.b16 %v360, %v356
  %v473 = vpack.c.b16 %v361, %v357
  %v474 = vpack.c.b16 %v366, %v362
  %v475 = vpack.c.b16 %v367, %v363
  %v476 = vpack.c.b16 %v368, %v364
  %v477 = vpack.c.b16 %v369, %v365
  %v478 = vpack.c.b16 %v374, %v370
  %v479 = vpack.c.b16 %v375, %v371
  %v480 = vpack.c.b16 %v376, %v372
  %v481 = vpack.c.b16 %v377, %v373
  %v482 = vpack.c.b16 %v382, %v378
  %v483 = vpack.c.b16 %v383, %v379
  %v484 = vpack.c.b16 %v384, %v380
  %v485 = vpack.c.b16 %v385, %v381
  %v486 = vpack.c.b16 %v390, %v386
  %v487 = vpack.c.b16 %v391, %v387
  %v488 = vpack.c.b16 %v392, %v388
  %v489 = vpack.c.b16 %v393, %v389
  %v490 = vpack.c.b16 %v398, %v394
  %v491 = vpack.c.b16 %v399, %v395
  %v492 = vpack.c.b16 %v400, %v396
  %v493 = vpack.c.b16 %v401, %v397
  %v494 = vpack.c.b16 %v402, %v402
  %v495 = vpack.c.b16 %v403, %v403
  %v496 = vpack.c.b16 %v404, %v404
  %v497 = vpack.c.b16 %v405, %v405
  %vm586 = vcmask 850944
  %v588 = vsel %vm586, %v133, 0
  %vm590 = vcmask 1043456
  %v592 = vsel %vm590, %v494, 0
  %v595 = vsel %vm590, %v495, 0
  %v598 = vsel %vm590, %v496, 0
  %v601 = vsel %vm590, %v497, 0
  %603 = vmatpush.bf16.msra.mxu0 %v434
  %604 = vmatpush.bf16.msra.mxu0 %v430
  %605 = vmatpush.bf16.msra.mxu0 %v426
  %606 = vmatpush.bf16.msra.mxu0 %v422
  %607 = vmatpush.bf16.msra.mxu0 %v418
  %608 = vmatpush.bf16.msra.mxu0 %v414
  %609 = vmatpush.bf16.msra.mxu0 %v410
  %610 = vmatpush.bf16.msra.mxu0 %v406
  %611 = vmatmul.bf16.gmra.mxu0 %v131
  %v612 = vpop.f32.mrf.mxu0
  %v613 = vadd.f32 %v114, %v612
  %v614 = vpop.f32.mrf.mxu0
  %v615 = vadd.f32 %v119, %v614
  %616 = vdwg.mxu0
  %617 = vmatpush.bf16.msra.mxu0 %v466
  %618 = vmatpush.bf16.msra.mxu0 %v462
  %619 = vmatpush.bf16.msra.mxu0 %v458
  %620 = vmatpush.bf16.msra.mxu0 %v454
  %621 = vmatpush.bf16.msra.mxu0 %v450
  %622 = vmatpush.bf16.msra.mxu0 %v446
  %623 = vmatpush.bf16.msra.mxu0 %v442
  %624 = vmatpush.bf16.msra.mxu0 %v438
  %625 = vmatmul.bf16.gmra.mxu0 %v132
  %v626 = vpop.f32.mrf.mxu0
  %v627 = vadd.f32 %v613, %v626
  %v628 = vpop.f32.mrf.mxu0
  %v629 = vadd.f32 %v615, %v628
  %630 = vdwg.mxu0
  %631 = vmatpush.bf16.msra.mxu0 0
  %632 = vmatpush.bf16.msra.mxu0 %v592
  %633 = vmatpush.bf16.msra.mxu0 %v490
  %634 = vmatpush.bf16.msra.mxu0 %v486
  %635 = vmatpush.bf16.msra.mxu0 %v482
  %636 = vmatpush.bf16.msra.mxu0 %v478
  %637 = vmatpush.bf16.msra.mxu0 %v474
  %638 = vmatpush.bf16.msra.mxu0 %v470
  %639 = vmatmul.bf16.gmra.mxu0 %v588
  %v640 = vpop.f32.mrf.mxu0
  %v641 = vadd.f32 %v627, %v640
  %v642 = vpop.f32.mrf.mxu0
  %v643 = vadd.f32 %v629, %v642
  %644 = vdwg.mxu0
  %645 = vmatpush.bf16.msra.mxu0 %v435
  %646 = vmatpush.bf16.msra.mxu0 %v431
  %647 = vmatpush.bf16.msra.mxu0 %v427
  %648 = vmatpush.bf16.msra.mxu0 %v423
  %649 = vmatpush.bf16.msra.mxu0 %v419
  %650 = vmatpush.bf16.msra.mxu0 %v415
  %651 = vmatpush.bf16.msra.mxu0 %v411
  %652 = vmatpush.bf16.msra.mxu0 %v407
  %653 = vmatmul.bf16.gmra.mxu0 %v131
  %v654 = vpop.f32.mrf.mxu0
  %v655 = vadd.f32 %v114, %v654
  %v656 = vpop.f32.mrf.mxu0
  %v657 = vadd.f32 %v119, %v656
  %658 = vdwg.mxu0
  %659 = vmatpush.bf16.msra.mxu0 %v467
  %660 = vmatpush.bf16.msra.mxu0 %v463
  %661 = vmatpush.bf16.msra.mxu0 %v459
  %662 = vmatpush.bf16.msra.mxu0 %v455
  %663 = vmatpush.bf16.msra.mxu0 %v451
  %664 = vmatpush.bf16.msra.mxu0 %v447
  %665 = vmatpush.bf16.msra.mxu0 %v443
  %666 = vmatpush.bf16.msra.mxu0 %v439
  %667 = vmatmul.bf16.gmra.mxu0 %v132
  %v668 = vpop.f32.mrf.mxu0
  %v669 = vadd.f32 %v655, %v668
  %v670 = vpop.f32.mrf.mxu0
  %v671 = vadd.f32 %v657, %v670
  %672 = vdwg.mxu0
  %673 = vmatpush.bf16.msra.mxu0 0
  %674 = vmatpush.bf16.msra.mxu0 %v595
  %675 = vmatpush.bf16.msra.mxu0 %v491
  %676 = vmatpush.bf16.msra.mxu0 %v487
  %677 = vmatpush.bf16.msra.mxu0 %v483
  %678 = vmatpush.bf16.msra.mxu0 %v479
  %679 = vmatpush.bf16.msra.mxu0 %v475
  %680 = vmatpush.bf16.msra.mxu0 %v471
  %681 = vmatmul.bf16.gmra.mxu0 %v588
  %v682 = vpop.f32.mrf.mxu0
  %v683 = vadd.f32 %v669, %v682
  %v684 = vpop.f32.mrf.mxu0
  %v685 = vadd.f32 %v671, %v684
  %686 = vdwg.mxu0
  %687 = vmatpush.bf16.msra.mxu0 %v436
  %688 = vmatpush.bf16.msra.mxu0 %v432
  %689 = vmatpush.bf16.msra.mxu0 %v428
  %690 = vmatpush.bf16.msra.mxu0 %v424
  %691 = vmatpush.bf16.msra.mxu0 %v420
  %692 = vmatpush.bf16.msra.mxu0 %v416
  %693 = vmatpush.bf16.msra.mxu0 %v412
  %694 = vmatpush.bf16.msra.mxu0 %v408
  %695 = vmatmul.bf16.gmra.mxu0 %v131
  %v696 = vpop.f32.mrf.mxu0
  %v697 = vadd.f32 %v114, %v696
  %v698 = vpop.f32.mrf.mxu0
  %v699 = vadd.f32 %v119, %v698
  %700 = vdwg.mxu0
  %701 = vmatpush.bf16.msra.mxu0 %v468
  %702 = vmatpush.bf16.msra.mxu0 %v464
  %703 = vmatpush.bf16.msra.mxu0 %v460
  %704 = vmatpush.bf16.msra.mxu0 %v456
  %705 = vmatpush.bf16.msra.mxu0 %v452
  %706 = vmatpush.bf16.msra.mxu0 %v448
  %707 = vmatpush.bf16.msra.mxu0 %v444
  %708 = vmatpush.bf16.msra.mxu0 %v440
  %709 = vmatmul.bf16.gmra.mxu0 %v132
  %v710 = vpop.f32.mrf.mxu0
  %v711 = vadd.f32 %v697, %v710
  %v712 = vpop.f32.mrf.mxu0
  %v713 = vadd.f32 %v699, %v712
  %714 = vdwg.mxu0
  %715 = vmatpush.bf16.msra.mxu0 0
  %716 = vmatpush.bf16.msra.mxu0 %v598
  %717 = vmatpush.bf16.msra.mxu0 %v492
  %718 = vmatpush.bf16.msra.mxu0 %v488
  %719 = vmatpush.bf16.msra.mxu0 %v484
  %720 = vmatpush.bf16.msra.mxu0 %v480
  %721 = vmatpush.bf16.msra.mxu0 %v476
  %722 = vmatpush.bf16.msra.mxu0 %v472
  %723 = vmatmul.bf16.gmra.mxu0 %v588
  %v724 = vpop.f32.mrf.mxu0
  %v725 = vadd.f32 %v711, %v724
  %v726 = vpop.f32.mrf.mxu0
  %v727 = vadd.f32 %v713, %v726
  %728 = vdwg.mxu0
  %729 = vmatpush.bf16.msra.mxu0 %v437
  %730 = vmatpush.bf16.msra.mxu0 %v433
  %731 = vmatpush.bf16.msra.mxu0 %v429
  %732 = vmatpush.bf16.msra.mxu0 %v425
  %733 = vmatpush.bf16.msra.mxu0 %v421
  %734 = vmatpush.bf16.msra.mxu0 %v417
  %735 = vmatpush.bf16.msra.mxu0 %v413
  %736 = vmatpush.bf16.msra.mxu0 %v409
  %737 = vmatmul.bf16.gmra.mxu0 %v131
  %v738 = vpop.f32.mrf.mxu0
  %v739 = vadd.f32 %v114, %v738
  %v740 = vpop.f32.mrf.mxu0
  %v741 = vadd.f32 %v119, %v740
  %742 = vdwg.mxu0
  %743 = vmatpush.bf16.msra.mxu0 %v469
  %744 = vmatpush.bf16.msra.mxu0 %v465
  %745 = vmatpush.bf16.msra.mxu0 %v461
  %746 = vmatpush.bf16.msra.mxu0 %v457
  %747 = vmatpush.bf16.msra.mxu0 %v453
  %748 = vmatpush.bf16.msra.mxu0 %v449
  %749 = vmatpush.bf16.msra.mxu0 %v445
  %750 = vmatpush.bf16.msra.mxu0 %v441
  %751 = vmatmul.bf16.gmra.mxu0 %v132
  %v752 = vpop.f32.mrf.mxu0
  %v753 = vadd.f32 %v739, %v752
  %v754 = vpop.f32.mrf.mxu0
  %v755 = vadd.f32 %v741, %v754
  %756 = vdwg.mxu0
  %757 = vmatpush.bf16.msra.mxu0 0
  %758 = vmatpush.bf16.msra.mxu0 %v601
  %759 = vmatpush.bf16.msra.mxu0 %v493
  %760 = vmatpush.bf16.msra.mxu0 %v489
  %761 = vmatpush.bf16.msra.mxu0 %v485
  %762 = vmatpush.bf16.msra.mxu0 %v481
  %763 = vmatpush.bf16.msra.mxu0 %v477
  %764 = vmatpush.bf16.msra.mxu0 %v473
  %765 = vmatmul.bf16.gmra.mxu0 %v588
  %v766 = vpop.f32.mrf.mxu0
  %v767 = vadd.f32 %v753, %v766
  %v768 = vpop.f32.mrf.mxu0
  %v769 = vadd.f32 %v755, %v768
  %770 = vdwg.mxu0
  %v771 = vmax.f32 %v641, 0.0
  %v772 = vmax.f32 %v683, 0.0
  %v773 = vmax.f32 %v725, 0.0
  %v774 = vmax.f32 %v767, 0.0
  %v775 = vmax.f32 %v643, 0.0
  %v776 = vmax.f32 %v685, 0.0
  %v777 = vmax.f32 %v727, 0.0
  %v778 = vmax.f32 %v769, 0.0
  %779 = vst [vmem:[%s3] sm:$0xff] %v771
  %780 = vst [vmem:[%s3 + $0x8] sm:$0xff] %v772
  %781 = vst [vmem:[%s3 + $0x10] sm:$0xff] %v773
  %782 = vst [vmem:[%s3 + $0x18] sm:$0xff] %v774
  %783 = vst [vmem:[%s3 + $0x20] sm:$0xff] %v775
  %784 = vst [vmem:[%s3 + $0x28] sm:$0xff] %v776
  %785 = vst [vmem:[%s3 + $0x30] sm:$0xff] %v777
  %786 = vst [vmem:[%s3 + $0x38] sm:$0xff] %v778
  // Predicated region
  $region14: #{_lambda_.47} parent=0 // pred_check
    _
  $region15: #{_lambda_.47} parent=0 // pred_check_branch
    %788 = sbr.rel (0) target = $region17
  $region16: #{_lambda_.47} parent=0 // pred_region
    _
  $region17: #{_lambda_.47} parent=0 // pred_fallthru
    _
  // Predicated region
  $region18: #{_lambda_.47} parent=0 // pred_check
    _
  $region19: #{_lambda_.47} parent=0 // pred_check_branch
    %790 = sbr.rel (0) target = $region21
  $region20: #{_lambda_.47} parent=0 // pred_region
    _
  $region21: #{_lambda_.47} parent=0 // pred_fallthru
    _

// kernel: _lambda_.49
$region0: #{_lambda_.49}
  #allocation0 [shape = 'u32[]', space=smem, size = 0x4, offset = 0x4, fixed_abs, tag = 'smem constant byte address 0x4 - core index']
  #allocation1 [shape = 'u32[72,128]{1,0:T(1,128)}', space=vmem, size = 0x9000, scoped, tag = 'internal scratch']
  %s0 = inlined_call_operand.vmem [shape: bf16[12,16], index: 0, kind: input, shape index: {}]
  %s1 = inlined_call_operand.vmem [shape: bf16[16,512], index: 1, kind: input, shape index: {}]
  %s2 = inlined_call_operand.vmem [shape: f32[12,1], index: 2, kind: input, shape index: {}]
  %s3 = inlined_call_operand.vmem [shape: f32[12,512], index: 3, kind: output, shape index: {}]
  %s4 = sld [smem:[#allocation0]]
  $region22: #{_lambda_.49} parent=0
    _
  %s6 = ssub.s32 1, %s4
  %s7 = scalar_select 0, %s6, %s4
  // Predicated region
  $region2: #{_lambda_.49} parent=0 // pred_check
    _
  $region3: #{_lambda_.49} parent=0 // pred_check_branch
    %9 = sbr.rel (0) target = $region5
  $region4: #{_lambda_.49} parent=0 // pred_region
    _
  $region5: #{_lambda_.49} parent=0 // pred_fallthru
    _
  // Predicated region
  $region6: #{_lambda_.49} parent=0 // pred_check
    _
  $region7: #{_lambda_.49} parent=0 // pred_check_branch
    %11 = sbr.rel (0) target = $region9
  $region8: #{_lambda_.49} parent=0 // pred_region
    _
  $region9: #{_lambda_.49} parent=0 // pred_fallthru
    _
  // Predicated region
  $region10: #{_lambda_.49} parent=0 // pred_check
    _
  $region11: #{_lambda_.49} parent=0 // pred_check_branch
    %13 = sbr.rel (0) target = $region13
  $region12: #{_lambda_.49} parent=0 // pred_region
    _
  $region13: #{_lambda_.49} parent=0 // pred_fallthru
    _
  %v15 = vld [vmem:[%s0] sm:$0xf]
  %v16 = vld [vmem:[%s0 + $0x4] sm:$0x3]
  %v17 = vld [vmem:[%s1] sm:$0xff]
  %v18 = vld [vmem:[%s1 + $0x8] sm:$0xff]
  %v19 = vld [vmem:[%s1 + $0x10] sm:$0xff]
  %v20 = vld [vmem:[%s1 + $0x18] sm:$0xff]
  %v21 = vld [vmem:[%s2] sm:$0xff]
  %v22 = vld [vmem:[%s2 + $0x8] sm:$0xf]
  %24 = vset.pattern.permute.xlu0 0
  %25 = vperm.xlu0 %24, %v21
  %v26 = vpop.permute.xlu0 %25
  %29 = vset.pattern.permute.xlu0 0
  %30 = vperm.xlu0 %29, %v22
  %v31 = vpop.permute.xlu0 %30
  %v35 = vunpack.c.l.b16 %v15
  %v36 = vunpack.c.l.b16 %v16
  %v37 = vpack.c.b16 %v36, %v35
  %v42 = vunpack.c.l.b16 %v17
  %v43 = vunpack.c.h.b16 %v17
  %v44 = vunpack.c.l.b16 %v18
  %v45 = vunpack.c.h.b16 %v18
  %v46 = vunpack.c.l.b16 %v19
  %v47 = vunpack.c.h.b16 %v19
  %v48 = vunpack.c.l.b16 %v20
  %v49 = vunpack.c.h.b16 %v20
  %v50 = vpack.c.b16 %v46, %v42
  %v51 = vpack.c.b16 %v47, %v43
  %v52 = vpack.c.b16 %v48, %v44
  %v53 = vpack.c.b16 %v49, %v45
  %vm58 = vcmask 130048
  %v60 = vsel %vm58, %v37, 0
  %62 = vmatpush.bf16.msra.mxu0 0
  %63 = vmatpush.bf16.msra.mxu0 0
  %64 = vmatpush.bf16.msra.mxu0 0
  %65 = vmatpush.bf16.msra.mxu0 0
  %66 = vmatpush.bf16.msra.mxu0 0
  %67 = vmatpush.bf16.msra.mxu0 0
  %68 = vmatpush.bf16.msra.mxu0 0
  %69 = vmatpush.bf16.msra.mxu0 %v50
  %70 = vmatmul.bf16.gmra.mxu0 %v60
  %v71 = vpop.f32.mrf.mxu0
  %v72 = vadd.f32 %v26, %v71
  %v73 = vpop.f32.mrf.mxu0
  %v74 = vadd.f32 %v31, %v73
  %75 = vdwg.mxu0
  %76 = vmatpush.bf16.msra.mxu0 0
  %77 = vmatpush.bf16.msra.mxu0 0
  %78 = vmatpush.bf16.msra.mxu0 0
  %79 = vmatpush.bf16.msra.mxu0 0
  %80 = vmatpush.bf16.msra.mxu0 0
  %81 = vmatpush.bf16.msra.mxu0 0
  %82 = vmatpush.bf16.msra.mxu0 0
  %83 = vmatpush.bf16.msra.mxu0 %v51
  %84 = vmatmul.bf16.gmra.mxu0 %v60
  %v85 = vpop.f32.mrf.mxu0
  %v86 = vadd.f32 %v26, %v85
  %v87 = vpop.f32.mrf.mxu0
  %v88 = vadd.f32 %v31, %v87
  %89 = vdwg.mxu0
  %90 = vmatpush.bf16.msra.mxu0 0
  %91 = vmatpush.bf16.msra.mxu0 0
  %92 = vmatpush.bf16.msra.mxu0 0
  %93 = vmatpush.bf16.msra.mxu0 0
  %94 = vmatpush.bf16.msra.mxu0 0
  %95 = vmatpush.bf16.msra.mxu0 0
  %96 = vmatpush.bf16.msra.mxu0 0
  %97 = vmatpush.bf16.msra.mxu0 %v52
  %98 = vmatmul.bf16.gmra.mxu0 %v60
  %v99 = vpop.f32.mrf.mxu0
  %v100 = vadd.f32 %v26, %v99
  %v101 = vpop.f32.mrf.mxu0
  %v102 = vadd.f32 %v31, %v101
  %103 = vdwg.mxu0
  %104 = vmatpush.bf16.msra.mxu0 0
  %105 = vmatpush.bf16.msra.mxu0 0
  %106 = vmatpush.bf16.msra.mxu0 0
  %107 = vmatpush.bf16.msra.mxu0 0
  %108 = vmatpush.bf16.msra.mxu0 0
  %109 = vmatpush.bf16.msra.mxu0 0
  %110 = vmatpush.bf16.msra.mxu0 0
  %111 = vmatpush.bf16.msra.mxu0 %v53
  %112 = vmatmul.bf16.gmra.mxu0 %v60
  %v113 = vpop.f32.mrf.mxu0
  %v114 = vadd.f32 %v26, %v113
  %v115 = vpop.f32.mrf.mxu0
  %v116 = vadd.f32 %v31, %v115
  %117 = vdwg.mxu0
  %118 = vst [vmem:[%s3] sm:$0xff] %v72
  %119 = vst [vmem:[%s3 + $0x8] sm:$0xff] %v86
  %120 = vst [vmem:[%s3 + $0x10] sm:$0xff] %v100
  %121 = vst [vmem:[%s3 + $0x18] sm:$0xff] %v114
  %122 = vst [vmem:[%s3 + $0x20] sm:$0xf] %v74
  %123 = vst [vmem:[%s3 + $0x28] sm:$0xf] %v88
  %124 = vst [vmem:[%s3 + $0x30] sm:$0xf] %v102
  %125 = vst [vmem:[%s3 + $0x38] sm:$0xf] %v116
  // Predicated region
  $region14: #{_lambda_.49} parent=0 // pred_check
    _
  $region15: #{_lambda_.49} parent=0 // pred_check_branch
    %127 = sbr.rel (0) target = $region17
  $region16: #{_lambda_.49} parent=0 // pred_region
    _
  $region17: #{_lambda_.49} parent=0 // pred_fallthru
    _
  // Predicated region
  $region18: #{_lambda_.49} parent=0 // pred_check
    _
  $region19: #{_lambda_.49} parent=0 // pred_check_branch
    %129 = sbr.rel (0) target = $region21
  $region20: #{_lambda_.49} parent=0 // pred_region
    _
  $region21: #{_lambda_.49} parent=0 // pred_fallthru
    _

</llo_original>
